<compile_context>
chip_gen: v6e
topology: v6e:2x2x1
jax: 0.10.0
libtpu: 0.0.40
codegen_flags: <defaults>
</compile_context>

<pallas_src>
import jax
import jax.numpy as jnp
from jax import lax
from jax.experimental import pallas as pl
from jax.experimental.pallas import tpu as pltpu

# ---------------------------------------------------------------------------
# Equivalent of config_data['model_structure'] (fixed in-script, small shapes).
# ---------------------------------------------------------------------------
MODEL_STRUCTURE = [
    ('conv', 4, 8, 3, 1, 1),      # Conv2d(in=4, out=8, k=3, s=1, p=1)
    ('batchnorm', 8),             # BatchNorm2d(8)            (eval-mode stats)
    ('relu',),
    ('maxpool', 2, 2),            # MaxPool2d(k=2, s=2)
    ('conv', 8, 16, 3, 1, 1),     # Conv2d(in=8, out=16, k=3, s=1, p=1)
    ('relu',),
    ('maxpool', 2, 2),
    ('flatten',),
    ('linear', 16 * 4 * 4, 32),   # Linear(256 -> 32)
    ('relu',),
    ('dropout', 0.5),             # identity in eval mode
    ('linear', None, 10),         # Linear(32 -> 10)
]

_BN_EPS = 1e-5

# Fixed sizes implied by MODEL_STRUCTURE and the (2, 4, 16, 16) input.
BATCH = 2
C0, C1, C2 = 4, 8, 16
H1 = W1 = 16       # conv1 output spatial
HP1 = WP1 = 8      # pool1 output spatial
H2 = W2 = 8        # conv2 output spatial
HP2 = WP2 = 4      # pool2 output spatial
F1, F2 = 32, 10    # linear output features
PADW = 16          # padded-W canvas for the conv2 input (>= WP1 + 2, mult of 8)
NPAD = 8           # sublane-aligned row block per pooled position in pool2


# ---------------------------------------------------------------------------
# Single fused kernel: the whole forward pass in VMEM.
# ---------------------------------------------------------------------------
def _cnn_fused_kernel(xp_ref, w1_ref, s1_ref, t1_ref, w2_ref, b2_ref,
                      wl1_ref, bl1_ref, wl2_ref, bl2_ref, out_ref):
    f32 = jnp.float32

    # ---------------- conv1 (3x3, pad=1 pre-applied) + BN + ReLU -----------
    xp = xp_ref[...]                                     # (N, 18, 18, C0)
    acc1 = jnp.zeros((BATCH * H1 * W1, C1), f32)         # rows = (n, h, w)
    for di in range(3):
        for dj in range(3):
            xs = xp[:, di:di + H1, dj:dj + W1, :].reshape(BATCH * H1 * W1, C0)
            acc1 = acc1 + jnp.dot(xs, w1_ref[di * 3 + dj],
                                  preferred_element_type=f32)
    # Fused BatchNorm (eval-mode scale/shift, conv bias folded in) + ReLU.
    h1 = jnp.maximum(acc1 * s1_ref[...] + t1_ref[...], 0.0)      # (512, C1)

    # ---------------- maxpool1 (2x2/2) fused with conv2 zero-padding --------
    # H direction: leading-dim reshape + elementwise max (layout no-op).
    h1r = h1.reshape(BATCH, HP1, 2, W1, C1)
    hmax1 = jnp.maximum(h1r[:, :, 0, :, :], h1r[:, :, 1, :, :])
    hmax1 = hmax1.reshape(BATCH * HP1 * W1, C1)          # rows = (n, ho, w)

    # W direction + zero padding: one-hot selection matmuls built from iotas
    # (avoids sublane-strided access / relayout-heavy reshapes).  The iota and
    # interior-mask work is shared between the even- and odd-column selectors.
    srows = BATCH * HP1 * W1                             # 256 source rows
    sh = (BATCH, HP1 + 2, PADW, srows)
    n_i = lax.broadcasted_iota(jnp.int32, sh, 0)
    hp = lax.broadcasted_iota(jnp.int32, sh, 1)
    wp = lax.broadcasted_iota(jnp.int32, sh, 2)
    jj = lax.broadcasted_iota(jnp.int32, sh, 3)
    interior = (hp >= 1) & (hp <= HP1) & (wp >= 1) & (wp <= WP1)
    diff = jj - (n_i * (HP1 * W1) + (hp - 1) * W1 + 2 * (wp - 1))
    sel0 = jnp.where(interior & (diff == 0), 1.0, 0.0).reshape(
        BATCH * (HP1 + 2) * PADW, srows)
    sel1 = jnp.where(interior & (diff == 1), 1.0, 0.0).reshape(
        BATCH * (HP1 + 2) * PADW, srows)
    xp2 = jnp.maximum(jnp.dot(sel0, hmax1, preferred_element_type=f32),
                      jnp.dot(sel1, hmax1, preferred_element_type=f32))
    xp2 = xp2.reshape(BATCH, HP1 + 2, PADW, C1)          # zero-padded conv2 input

    # ---------------- conv2 (3x3, pad=1) + ReLU -----------------------------
    # Bias is pre-loaded into the accumulator so the epilogue is just max().
    acc2 = jnp.broadcast_to(b2_ref[...], (BATCH * H2 * W2, C2)).astype(f32)
    for di in range(3):
        for dj in range(3):
            xs = xp2[:, di:di + H2, dj:dj + W2, :].reshape(BATCH * H2 * W2, C1)
            acc2 = acc2 + jnp.dot(xs, w2_ref[di * 3 + dj],
                                  preferred_element_type=f32)
    h2 = jnp.maximum(acc2, 0.0)                          # (128, C2), rows (n,h2,w2)

    # ---------------- maxpool2 (2x2/2) --------------------------------------
    h2r = h2.reshape(BATCH, HP2, 2, W2, C2)
    hmax2 = jnp.maximum(h2r[:, :, 0, :, :], h2r[:, :, 1, :, :])
    hmax2 = hmax2.reshape(BATCH * HP2 * W2, C2)          # rows = (n, ho2, w2)

    srows2 = BATCH * HP2 * W2                            # 64 source rows
    sh2 = (HP2, WP2, NPAD, srows2)                       # output rows ordered (s, n)
    ho2 = lax.broadcasted_iota(jnp.int32, sh2, 0)
    wo2 = lax.broadcasted_iota(jnp.int32, sh2, 1)
    n2 = lax.broadcasted_iota(jnp.int32, sh2, 2)         # rows n >= BATCH stay zero
    jj2 = lax.broadcasted_iota(jnp.int32, sh2, 3)
    diff2 = jj2 - (n2 * (HP2 * W2) + ho2 * W2 + 2 * wo2)
    q0 = jnp.where(diff2 == 0, 1.0, 0.0).reshape(HP2 * WP2 * NPAD, srows2)
    q1 = jnp.where(diff2 == 1, 1.0, 0.0).reshape(HP2 * WP2 * NPAD, srows2)
    p2 = jnp.maximum(jnp.dot(q0, hmax2, preferred_element_type=f32),
                     jnp.dot(q1, hmax2, preferred_element_type=f32))
    # p2: (HP2*WP2*NPAD, C2); rows [8*s, 8*s + BATCH) hold pooled pixel s.

    # ------- flatten (PyTorch NCHW order baked into wl1) + linear1 + ReLU ---
    y1 = jnp.broadcast_to(bl1_ref[...], (BATCH, F1)).astype(f32)
    for s in range(HP2 * WP2):
        blk = p2[s * NPAD:s * NPAD + BATCH, :]           # (BATCH, C2)
        y1 = y1 + jnp.dot(blk, wl1_ref[s], preferred_element_type=f32)
    y1 = jnp.maximum(y1, 0.0)

    # dropout(p=0.5): identity in eval/inference mode (matches nn.Dropout.eval()).

    # ---------------- linear2 -----------------------------------------------
    out = jnp.dot(y1, wl2_ref[...], preferred_element_type=f32) + bl2_ref[...]
    out_ref[...] = out.astype(out_ref.dtype)


# ---------------------------------------------------------------------------
# Deterministic parameter construction (mirrors nn.Module __init__ shapes)
# ---------------------------------------------------------------------------
def init_params(structure, key):
    params = []
    in_features = None
    for layer in structure:
        if layer[0] == 'conv':
            cin, cout, k = layer[1], layer[2], layer[3]
            key, kw, kb = jax.random.split(key, 3)
            params.append({
                'w': 0.1 * jax.random.normal(kw, (cout, cin, k, k), jnp.float32),
                'b': 0.1 * jax.random.normal(kb, (cout,), jnp.float32),
            })
        elif layer[0] == 'linear':
            in_features = layer[1] if layer[1] is not None else in_features
            out_features = layer[2]
            key, kw, kb = jax.random.split(key, 3)
            params.append({
                # PyTorch stores Linear weight as (out_features, in_features)
                'w': 0.1 * jax.random.normal(kw, (out_features, in_features), jnp.float32),
                'b': 0.1 * jax.random.normal(kb, (out_features,), jnp.float32),
            })
            in_features = out_features
        elif layer[0] == 'batchnorm':
            c = layer[1]
            key, kg, kb = jax.random.split(key, 3)
            params.append({
                'gamma': 1.0 + 0.1 * jax.random.normal(kg, (c,), jnp.float32),
                'beta': 0.1 * jax.random.normal(kb, (c,), jnp.float32),
                'running_mean': jnp.zeros((c,), jnp.float32),
                'running_var': jnp.ones((c,), jnp.float32),
            })
        else:
            params.append(None)
    return params


def prepare_fused_params(params):
    """One-time weight preparation (PyTorch layouts -> kernel layouts)."""
    conv1, bn, conv2 = params[0], params[1], params[4]
    lin1, lin2 = params[8], params[11]
    # Conv weights (Cout, Cin, k, k) -> per-tap (Cin, Cout) matrices, tap = di*3+dj.
    w1t = jnp.transpose(conv1['w'], (2, 3, 1, 0)).reshape(9, C0, C1)
    w2t = jnp.transpose(conv2['w'], (2, 3, 1, 0)).reshape(9, C1, C2)
    # Fold conv1 bias + eval-mode BatchNorm into a single scale/shift.
    scale = bn['gamma'] * lax.rsqrt(bn['running_var'] + _BN_EPS)
    shift = (conv1['b'] - bn['running_mean']) * scale + bn['beta']
    # Linear1 weight (F1, 256) with PyTorch flatten index k = c*16 + s
    #   -> (s, c, F1) so the kernel consumes channels-last pooled rows directly.
    wl1 = jnp.transpose(lin1['w'].reshape(F1, C2, HP2 * WP2), (2, 1, 0))
    # Linear2 weight stored (in, out).
    wl2 = lin2['w'].T
    return (w1t, scale.reshape(1, C1), shift.reshape(1, C1),
            w2t, conv2['b'].reshape(1, C2),
            wl1, lin1['b'].reshape(1, F1),
            wl2, lin2['b'].reshape(1, F2))


@jax.jit
def cnn_forward(x_nchw, fused_params):
    # NCHW -> NHWC (channels on lanes) and zero-pad H/W once for conv1.
    # XLA fuses these two tiny ops into a single prologue fusion.
    x = jnp.transpose(x_nchw, (0, 2, 3, 1)).astype(jnp.float32)
    xp = jnp.pad(x, ((0, 0), (1, 1), (1, 1), (0, 0)))
    args = (xp,) + tuple(fused_params)
    vmem = pl.BlockSpec(memory_space=pltpu.MemorySpace.VMEM)
    # Single fused kernel, no grid (whole arrays live in VMEM for the pass).
    # TODO(synk): if the batch ever grows, grid over batch tiles with
    # dimension_semantics=("parallel",) so v7x's second TensorCore is used.
    return pl.pallas_call(
        _cnn_fused_kernel,
        in_specs=[vmem] * len(args),
        out_specs=vmem,
        out_shape=jax.ShapeDtypeStruct((BATCH, F2), jnp.float32),
        compiler_params=pltpu.CompilerParams(vmem_limit_bytes=32 * 1024 * 1024),
    )(*args)


# ---------------------------------------------------------------------------
# Pure-JAX reference (eval-mode semantics) for a correctness sanity check.
# ---------------------------------------------------------------------------
def reference_forward(x_nchw, params):
    conv1, bn, conv2 = params[0], params[1], params[4]
    lin1, lin2 = params[8], params[11]
    hi = lax.Precision.HIGHEST
    x = x_nchw.astype(jnp.float32)
    y = lax.conv_general_dilated(x, conv1['w'], (1, 1), ((1, 1), (1, 1)),
                                 dimension_numbers=('NCHW', 'OIHW', 'NCHW'),
                                 precision=hi)
    y = y + conv1['b'][None, :, None, None]
    scale = bn['gamma'] * lax.rsqrt(bn['running_var'] + _BN_EPS)
    y = (y - bn['running_mean'][None, :, None, None]) * scale[None, :, None, None] \
        + bn['beta'][None, :, None, None]
    y = jnp.maximum(y, 0.0)
    y = lax.reduce_window(y, -jnp.inf, lax.max, (1, 1, 2, 2), (1, 1, 2, 2), 'VALID')
    y = lax.conv_general_dilated(y, conv2['w'], (1, 1), ((1, 1), (1, 1)),
                                 dimension_numbers=('NCHW', 'OIHW', 'NCHW'),
                                 precision=hi)
    y = jnp.maximum(y + conv2['b'][None, :, None, None], 0.0)
    y = lax.reduce_window(y, -jnp.inf, lax.max, (1, 1, 2, 2), (1, 1, 2, 2), 'VALID')
    y = y.reshape(y.shape[0], -1)                         # PyTorch flatten (C,H,W)
    y = jnp.maximum(jnp.dot(y, lin1['w'].T, precision=hi) + lin1['b'], 0.0)
    y = jnp.dot(y, lin2['w'].T, precision=hi) + lin2['b']  # dropout = identity (eval)
    return y


if __name__ == "__main__":
    key = jax.random.PRNGKey(0)
    pkey, xkey = jax.random.split(key)
    params = init_params(MODEL_STRUCTURE, pkey)
    fused = prepare_fused_params(params)          # one-time weight prep
    x = jax.random.normal(xkey, (BATCH, 4, 16, 16), jnp.float32)  # NCHW input
    out = cnn_forward(x, fused)
    out = jax.block_until_ready(out)
    assert out.shape == (BATCH, F2), out.shape
    ref = jax.block_until_ready(reference_forward(x, params))
    assert jnp.allclose(out, ref, atol=1e-2, rtol=1e-2), \
        f"max abs diff {float(jnp.max(jnp.abs(out - ref)))}"
    print("KERNEL_OK")
</pallas_src>

<mosaic_0001>
module attributes {stable_mosaic.version = 11 : i64} {
  func.func @_cnn_fused_kernel(%arg0: memref<2x18x18x4xf32, #tpu.memory_space<vmem>>, %arg1: memref<9x4x8xf32, #tpu.memory_space<vmem>>, %arg2: memref<1x8xf32, #tpu.memory_space<vmem>>, %arg3: memref<1x8xf32, #tpu.memory_space<vmem>>, %arg4: memref<9x8x16xf32, #tpu.memory_space<vmem>>, %arg5: memref<1x16xf32, #tpu.memory_space<vmem>>, %arg6: memref<16x16x32xf32, #tpu.memory_space<vmem>>, %arg7: memref<1x32xf32, #tpu.memory_space<vmem>>, %arg8: memref<32x10xf32, #tpu.memory_space<vmem>>, %arg9: memref<1x10xf32, #tpu.memory_space<vmem>>, %arg10: memref<2x10xf32, #tpu.memory_space<vmem>>) attributes {dimension_semantics = [], scalar_prefetch = 0 : i64, scratch_operands = 0 : i64, tpu.core_type = #tpu.core_type<tc>} {
    %c0 = arith.constant 0 : index
    %c0_0 = arith.constant 0 : index
    %c0_1 = arith.constant 0 : index
    %c0_2 = arith.constant 0 : index
    %0 = vector.load %arg0[%c0, %c0_0, %c0_1, %c0_2] : memref<2x18x18x4xf32, #tpu.memory_space<vmem>>, vector<2x18x18x4xf32>
    %cst = arith.constant 0.000000e+00 : f32
    %1 = vector.broadcast %cst : f32 to vector<512x8xf32>
    %2 = vector.extract_strided_slice %0 {offsets = [0, 0, 0, 0], sizes = [2, 16, 16, 4], strides = [1, 1, 1, 1]} : vector<2x18x18x4xf32> to vector<2x16x16x4xf32>
    %3 = vector.shape_cast %2 : vector<2x16x16x4xf32> to vector<512x4xf32>
    %c0_3 = arith.constant 0 : index
    %c0_4 = arith.constant 0 : index
    %c0_5 = arith.constant 0 : index
    %4 = vector.load %arg1[%c0_3, %c0_4, %c0_5] : memref<9x4x8xf32, #tpu.memory_space<vmem>>, vector<1x4x8xf32>
    %5 = vector.shape_cast %4 : vector<1x4x8xf32> to vector<4x8xf32>
    %cst_6 = arith.constant dense<0.000000e+00> : vector<512x8xf32>
    %6 = tpu.matmul %3, %5, %cst_6 {dimension_numbers = #tpu.dot_dimension_numbers<[1], [0], [0], [1], [0, 0, 1, 1], [], []>} : vector<512x4xf32>, vector<4x8xf32>, vector<512x8xf32> -> vector<512x8xf32>
    %7 = arith.addf %1, %6 : vector<512x8xf32>
    %8 = vector.extract_strided_slice %0 {offsets = [0, 0, 1, 0], sizes = [2, 16, 16, 4], strides = [1, 1, 1, 1]} : vector<2x18x18x4xf32> to vector<2x16x16x4xf32>
    %9 = vector.shape_cast %8 : vector<2x16x16x4xf32> to vector<512x4xf32>
    %c1 = arith.constant 1 : index
    %c0_7 = arith.constant 0 : index
    %c0_8 = arith.constant 0 : index
    %10 = vector.load %arg1[%c1, %c0_7, %c0_8] : memref<9x4x8xf32, #tpu.memory_space<vmem>>, vector<1x4x8xf32>
    %11 = vector.shape_cast %10 : vector<1x4x8xf32> to vector<4x8xf32>
    %cst_9 = arith.constant dense<0.000000e+00> : vector<512x8xf32>
    %12 = tpu.matmul %9, %11, %cst_9 {dimension_numbers = #tpu.dot_dimension_numbers<[1], [0], [0], [1], [0, 0, 1, 1], [], []>} : vector<512x4xf32>, vector<4x8xf32>, vector<512x8xf32> -> vector<512x8xf32>
    %13 = arith.addf %7, %12 : vector<512x8xf32>
    %14 = vector.extract_strided_slice %0 {offsets = [0, 0, 2, 0], sizes = [2, 16, 16, 4], strides = [1, 1, 1, 1]} : vector<2x18x18x4xf32> to vector<2x16x16x4xf32>
    %15 = vector.shape_cast %14 : vector<2x16x16x4xf32> to vector<512x4xf32>
    %c2 = arith.constant 2 : index
    %c0_10 = arith.constant 0 : index
    %c0_11 = arith.constant 0 : index
    %16 = vector.load %arg1[%c2, %c0_10, %c0_11] : memref<9x4x8xf32, #tpu.memory_space<vmem>>, vector<1x4x8xf32>
    %17 = vector.shape_cast %16 : vector<1x4x8xf32> to vector<4x8xf32>
    %cst_12 = arith.constant dense<0.000000e+00> : vector<512x8xf32>
    %18 = tpu.matmul %15, %17, %cst_12 {dimension_numbers = #tpu.dot_dimension_numbers<[1], [0], [0], [1], [0, 0, 1, 1], [], []>} : vector<512x4xf32>, vector<4x8xf32>, vector<512x8xf32> -> vector<512x8xf32>
    %19 = arith.addf %13, %18 : vector<512x8xf32>
    %20 = vector.extract_strided_slice %0 {offsets = [0, 1, 0, 0], sizes = [2, 16, 16, 4], strides = [1, 1, 1, 1]} : vector<2x18x18x4xf32> to vector<2x16x16x4xf32>
    %21 = vector.shape_cast %20 : vector<2x16x16x4xf32> to vector<512x4xf32>
    %c3 = arith.constant 3 : index
    %c0_13 = arith.constant 0 : index
    %c0_14 = arith.constant 0 : index
    %22 = vector.load %arg1[%c3, %c0_13, %c0_14] : memref<9x4x8xf32, #tpu.memory_space<vmem>>, vector<1x4x8xf32>
    %23 = vector.shape_cast %22 : vector<1x4x8xf32> to vector<4x8xf32>
    %cst_15 = arith.constant dense<0.000000e+00> : vector<512x8xf32>
    %24 = tpu.matmul %21, %23, %cst_15 {dimension_numbers = #tpu.dot_dimension_numbers<[1], [0], [0], [1], [0, 0, 1, 1], [], []>} : vector<512x4xf32>, vector<4x8xf32>, vector<512x8xf32> -> vector<512x8xf32>
    %25 = arith.addf %19, %24 : vector<512x8xf32>
    %26 = vector.extract_strided_slice %0 {offsets = [0, 1, 1, 0], sizes = [2, 16, 16, 4], strides = [1, 1, 1, 1]} : vector<2x18x18x4xf32> to vector<2x16x16x4xf32>
    %27 = vector.shape_cast %26 : vector<2x16x16x4xf32> to vector<512x4xf32>
    %c4 = arith.constant 4 : index
    %c0_16 = arith.constant 0 : index
    %c0_17 = arith.constant 0 : index
    %28 = vector.load %arg1[%c4, %c0_16, %c0_17] : memref<9x4x8xf32, #tpu.memory_space<vmem>>, vector<1x4x8xf32>
    %29 = vector.shape_cast %28 : vector<1x4x8xf32> to vector<4x8xf32>
    %cst_18 = arith.constant dense<0.000000e+00> : vector<512x8xf32>
    %30 = tpu.matmul %27, %29, %cst_18 {dimension_numbers = #tpu.dot_dimension_numbers<[1], [0], [0], [1], [0, 0, 1, 1], [], []>} : vector<512x4xf32>, vector<4x8xf32>, vector<512x8xf32> -> vector<512x8xf32>
    %31 = arith.addf %25, %30 : vector<512x8xf32>
    %32 = vector.extract_strided_slice %0 {offsets = [0, 1, 2, 0], sizes = [2, 16, 16, 4], strides = [1, 1, 1, 1]} : vector<2x18x18x4xf32> to vector<2x16x16x4xf32>
    %33 = vector.shape_cast %32 : vector<2x16x16x4xf32> to vector<512x4xf32>
    %c5 = arith.constant 5 : index
    %c0_19 = arith.constant 0 : index
    %c0_20 = arith.constant 0 : index
    %34 = vector.load %arg1[%c5, %c0_19, %c0_20] : memref<9x4x8xf32, #tpu.memory_space<vmem>>, vector<1x4x8xf32>
    %35 = vector.shape_cast %34 : vector<1x4x8xf32> to vector<4x8xf32>
    %cst_21 = arith.constant dense<0.000000e+00> : vector<512x8xf32>
    %36 = tpu.matmul %33, %35, %cst_21 {dimension_numbers = #tpu.dot_dimension_numbers<[1], [0], [0], [1], [0, 0, 1, 1], [], []>} : vector<512x4xf32>, vector<4x8xf32>, vector<512x8xf32> -> vector<512x8xf32>
    %37 = arith.addf %31, %36 : vector<512x8xf32>
    %38 = vector.extract_strided_slice %0 {offsets = [0, 2, 0, 0], sizes = [2, 16, 16, 4], strides = [1, 1, 1, 1]} : vector<2x18x18x4xf32> to vector<2x16x16x4xf32>
    %39 = vector.shape_cast %38 : vector<2x16x16x4xf32> to vector<512x4xf32>
    %c6 = arith.constant 6 : index
    %c0_22 = arith.constant 0 : index
    %c0_23 = arith.constant 0 : index
    %40 = vector.load %arg1[%c6, %c0_22, %c0_23] : memref<9x4x8xf32, #tpu.memory_space<vmem>>, vector<1x4x8xf32>
    %41 = vector.shape_cast %40 : vector<1x4x8xf32> to vector<4x8xf32>
    %cst_24 = arith.constant dense<0.000000e+00> : vector<512x8xf32>
    %42 = tpu.matmul %39, %41, %cst_24 {dimension_numbers = #tpu.dot_dimension_numbers<[1], [0], [0], [1], [0, 0, 1, 1], [], []>} : vector<512x4xf32>, vector<4x8xf32>, vector<512x8xf32> -> vector<512x8xf32>
    %43 = arith.addf %37, %42 : vector<512x8xf32>
    %44 = vector.extract_strided_slice %0 {offsets = [0, 2, 1, 0], sizes = [2, 16, 16, 4], strides = [1, 1, 1, 1]} : vector<2x18x18x4xf32> to vector<2x16x16x4xf32>
    %45 = vector.shape_cast %44 : vector<2x16x16x4xf32> to vector<512x4xf32>
    %c7 = arith.constant 7 : index
    %c0_25 = arith.constant 0 : index
    %c0_26 = arith.constant 0 : index
    %46 = vector.load %arg1[%c7, %c0_25, %c0_26] : memref<9x4x8xf32, #tpu.memory_space<vmem>>, vector<1x4x8xf32>
    %47 = vector.shape_cast %46 : vector<1x4x8xf32> to vector<4x8xf32>
    %cst_27 = arith.constant dense<0.000000e+00> : vector<512x8xf32>
    %48 = tpu.matmul %45, %47, %cst_27 {dimension_numbers = #tpu.dot_dimension_numbers<[1], [0], [0], [1], [0, 0, 1, 1], [], []>} : vector<512x4xf32>, vector<4x8xf32>, vector<512x8xf32> -> vector<512x8xf32>
    %49 = arith.addf %43, %48 : vector<512x8xf32>
    %50 = vector.extract_strided_slice %0 {offsets = [0, 2, 2, 0], sizes = [2, 16, 16, 4], strides = [1, 1, 1, 1]} : vector<2x18x18x4xf32> to vector<2x16x16x4xf32>
    %51 = vector.shape_cast %50 : vector<2x16x16x4xf32> to vector<512x4xf32>
    %c8 = arith.constant 8 : index
    %c0_28 = arith.constant 0 : index
    %c0_29 = arith.constant 0 : index
    %52 = vector.load %arg1[%c8, %c0_28, %c0_29] : memref<9x4x8xf32, #tpu.memory_space<vmem>>, vector<1x4x8xf32>
    %53 = vector.shape_cast %52 : vector<1x4x8xf32> to vector<4x8xf32>
    %cst_30 = arith.constant dense<0.000000e+00> : vector<512x8xf32>
    %54 = tpu.matmul %51, %53, %cst_30 {dimension_numbers = #tpu.dot_dimension_numbers<[1], [0], [0], [1], [0, 0, 1, 1], [], []>} : vector<512x4xf32>, vector<4x8xf32>, vector<512x8xf32> -> vector<512x8xf32>
    %55 = arith.addf %49, %54 : vector<512x8xf32>
    %c0_31 = arith.constant 0 : index
    %c0_32 = arith.constant 0 : index
    %56 = vector.load %arg2[%c0_31, %c0_32] : memref<1x8xf32, #tpu.memory_space<vmem>>, vector<1x8xf32>
    %57 = vector.broadcast %56 : vector<1x8xf32> to vector<512x8xf32>
    %58 = arith.mulf %55, %57 : vector<512x8xf32>
    %c0_33 = arith.constant 0 : index
    %c0_34 = arith.constant 0 : index
    %59 = vector.load %arg3[%c0_33, %c0_34] : memref<1x8xf32, #tpu.memory_space<vmem>>, vector<1x8xf32>
    %60 = vector.broadcast %59 : vector<1x8xf32> to vector<512x8xf32>
    %61 = arith.addf %58, %60 : vector<512x8xf32>
    %cst_35 = arith.constant 0.000000e+00 : f32
    %62 = vector.broadcast %cst_35 : f32 to vector<512x8xf32>
    %63 = arith.maximumf %61, %62 : vector<512x8xf32>
    %64 = vector.shape_cast %63 : vector<512x8xf32> to vector<2x8x2x16x8xf32>
    %65 = vector.extract_strided_slice %64 {offsets = [0, 0, 0, 0, 0], sizes = [2, 8, 1, 16, 8], strides = [1, 1, 1, 1, 1]} : vector<2x8x2x16x8xf32> to vector<2x8x1x16x8xf32>
    %66 = vector.shape_cast %65 : vector<2x8x1x16x8xf32> to vector<2x8x16x8xf32>
    %67 = vector.extract_strided_slice %64 {offsets = [0, 0, 1, 0, 0], sizes = [2, 8, 1, 16, 8], strides = [1, 1, 1, 1, 1]} : vector<2x8x2x16x8xf32> to vector<2x8x1x16x8xf32>
    %68 = vector.shape_cast %67 : vector<2x8x1x16x8xf32> to vector<2x8x16x8xf32>
    %69 = arith.maximumf %66, %68 : vector<2x8x16x8xf32>
    %70 = vector.shape_cast %69 : vector<2x8x16x8xf32> to vector<256x8xf32>
    %71 = tpu.iota {dimensions = array<i32: 0>} : vector<2x10x16x256xi32>
    %72 = tpu.iota {dimensions = array<i32: 1>} : vector<2x10x16x256xi32>
    %73 = tpu.iota {dimensions = array<i32: 2>} : vector<2x10x16x256xi32>
    %74 = tpu.iota {dimensions = array<i32: 3>} : vector<2x10x16x256xi32>
    %c1_i32 = arith.constant 1 : i32
    %75 = vector.broadcast %c1_i32 : i32 to vector<2x10x16x256xi32>
    %76 = arith.cmpi sge, %72, %75 : vector<2x10x16x256xi32>
    %c8_i32 = arith.constant 8 : i32
    %77 = vector.broadcast %c8_i32 : i32 to vector<2x10x16x256xi32>
    %78 = arith.cmpi sle, %72, %77 : vector<2x10x16x256xi32>
    %79 = arith.andi %76, %78 : vector<2x10x16x256xi1>
    %c1_i32_36 = arith.constant 1 : i32
    %80 = vector.broadcast %c1_i32_36 : i32 to vector<2x10x16x256xi32>
    %81 = arith.cmpi sge, %73, %80 : vector<2x10x16x256xi32>
    %82 = arith.andi %79, %81 : vector<2x10x16x256xi1>
    %c8_i32_37 = arith.constant 8 : i32
    %83 = vector.broadcast %c8_i32_37 : i32 to vector<2x10x16x256xi32>
    %84 = arith.cmpi sle, %73, %83 : vector<2x10x16x256xi32>
    %85 = arith.andi %82, %84 : vector<2x10x16x256xi1>
    %c128_i32 = arith.constant 128 : i32
    %86 = vector.broadcast %c128_i32 : i32 to vector<2x10x16x256xi32>
    %87 = arith.muli %71, %86 : vector<2x10x16x256xi32>
    %c1_i32_38 = arith.constant 1 : i32
    %88 = vector.broadcast %c1_i32_38 : i32 to vector<2x10x16x256xi32>
    %89 = arith.subi %72, %88 : vector<2x10x16x256xi32>
    %c16_i32 = arith.constant 16 : i32
    %90 = vector.broadcast %c16_i32 : i32 to vector<2x10x16x256xi32>
    %91 = arith.muli %89, %90 : vector<2x10x16x256xi32>
    %92 = arith.addi %87, %91 : vector<2x10x16x256xi32>
    %c1_i32_39 = arith.constant 1 : i32
    %93 = vector.broadcast %c1_i32_39 : i32 to vector<2x10x16x256xi32>
    %94 = arith.subi %73, %93 : vector<2x10x16x256xi32>
    %c2_i32 = arith.constant 2 : i32
    %95 = vector.broadcast %c2_i32 : i32 to vector<2x10x16x256xi32>
    %96 = arith.muli %95, %94 : vector<2x10x16x256xi32>
    %97 = arith.addi %92, %96 : vector<2x10x16x256xi32>
    %98 = arith.subi %74, %97 : vector<2x10x16x256xi32>
    %c0_i32 = arith.constant 0 : i32
    %99 = vector.broadcast %c0_i32 : i32 to vector<2x10x16x256xi32>
    %100 = arith.cmpi eq, %98, %99 : vector<2x10x16x256xi32>
    %101 = arith.andi %85, %100 : vector<2x10x16x256xi1>
    %cst_40 = arith.constant 1.000000e+00 : f32
    %cst_41 = arith.constant 0.000000e+00 : f32
    %102 = vector.broadcast %cst_40 : f32 to vector<2x10x16x256xf32>
    %103 = vector.broadcast %cst_41 : f32 to vector<2x10x16x256xf32>
    %104 = arith.select %101, %102, %103 : vector<2x10x16x256xi1>, vector<2x10x16x256xf32>
    %105 = vector.shape_cast %104 : vector<2x10x16x256xf32> to vector<320x256xf32>
    %c1_i32_42 = arith.constant 1 : i32
    %106 = vector.broadcast %c1_i32_42 : i32 to vector<2x10x16x256xi32>
    %107 = arith.cmpi eq, %98, %106 : vector<2x10x16x256xi32>
    %108 = arith.andi %85, %107 : vector<2x10x16x256xi1>
    %cst_43 = arith.constant 1.000000e+00 : f32
    %cst_44 = arith.constant 0.000000e+00 : f32
    %109 = vector.broadcast %cst_43 : f32 to vector<2x10x16x256xf32>
    %110 = vector.broadcast %cst_44 : f32 to vector<2x10x16x256xf32>
    %111 = arith.select %108, %109, %110 : vector<2x10x16x256xi1>, vector<2x10x16x256xf32>
    %112 = vector.shape_cast %111 : vector<2x10x16x256xf32> to vector<320x256xf32>
    %cst_45 = arith.constant dense<0.000000e+00> : vector<320x8xf32>
    %113 = tpu.matmul %105, %70, %cst_45 {dimension_numbers = #tpu.dot_dimension_numbers<[1], [0], [0], [1], [0, 0, 1, 1], [], []>} : vector<320x256xf32>, vector<256x8xf32>, vector<320x8xf32> -> vector<320x8xf32>
    %cst_46 = arith.constant dense<0.000000e+00> : vector<320x8xf32>
    %114 = tpu.matmul %112, %70, %cst_46 {dimension_numbers = #tpu.dot_dimension_numbers<[1], [0], [0], [1], [0, 0, 1, 1], [], []>} : vector<320x256xf32>, vector<256x8xf32>, vector<320x8xf32> -> vector<320x8xf32>
    %115 = arith.maximumf %113, %114 : vector<320x8xf32>
    %116 = vector.shape_cast %115 : vector<320x8xf32> to vector<2x10x16x8xf32>
    %c0_47 = arith.constant 0 : index
    %c0_48 = arith.constant 0 : index
    %117 = vector.load %arg5[%c0_47, %c0_48] : memref<1x16xf32, #tpu.memory_space<vmem>>, vector<1x16xf32>
    %118 = vector.shape_cast %117 : vector<1x16xf32> to vector<1x16xf32>
    %119 = vector.broadcast %118 : vector<1x16xf32> to vector<128x16xf32>
    %120 = vector.extract_strided_slice %116 {offsets = [0, 0, 0, 0], sizes = [2, 8, 8, 8], strides = [1, 1, 1, 1]} : vector<2x10x16x8xf32> to vector<2x8x8x8xf32>
    %121 = vector.shape_cast %120 : vector<2x8x8x8xf32> to vector<128x8xf32>
    %c0_49 = arith.constant 0 : index
    %c0_50 = arith.constant 0 : index
    %c0_51 = arith.constant 0 : index
    %122 = vector.load %arg4[%c0_49, %c0_50, %c0_51] : memref<9x8x16xf32, #tpu.memory_space<vmem>>, vector<1x8x16xf32>
    %123 = vector.shape_cast %122 : vector<1x8x16xf32> to vector<8x16xf32>
    %cst_52 = arith.constant dense<0.000000e+00> : vector<128x16xf32>
    %124 = tpu.matmul %121, %123, %cst_52 {dimension_numbers = #tpu.dot_dimension_numbers<[1], [0], [0], [1], [0, 0, 1, 1], [], []>} : vector<128x8xf32>, vector<8x16xf32>, vector<128x16xf32> -> vector<128x16xf32>
    %125 = arith.addf %119, %124 : vector<128x16xf32>
    %126 = vector.extract_strided_slice %116 {offsets = [0, 0, 1, 0], sizes = [2, 8, 8, 8], strides = [1, 1, 1, 1]} : vector<2x10x16x8xf32> to vector<2x8x8x8xf32>
    %127 = vector.shape_cast %126 : vector<2x8x8x8xf32> to vector<128x8xf32>
    %c1_53 = arith.constant 1 : index
    %c0_54 = arith.constant 0 : index
    %c0_55 = arith.constant 0 : index
    %128 = vector.load %arg4[%c1_53, %c0_54, %c0_55] : memref<9x8x16xf32, #tpu.memory_space<vmem>>, vector<1x8x16xf32>
    %129 = vector.shape_cast %128 : vector<1x8x16xf32> to vector<8x16xf32>
    %cst_56 = arith.constant dense<0.000000e+00> : vector<128x16xf32>
    %130 = tpu.matmul %127, %129, %cst_56 {dimension_numbers = #tpu.dot_dimension_numbers<[1], [0], [0], [1], [0, 0, 1, 1], [], []>} : vector<128x8xf32>, vector<8x16xf32>, vector<128x16xf32> -> vector<128x16xf32>
    %131 = arith.addf %125, %130 : vector<128x16xf32>
    %132 = vector.extract_strided_slice %116 {offsets = [0, 0, 2, 0], sizes = [2, 8, 8, 8], strides = [1, 1, 1, 1]} : vector<2x10x16x8xf32> to vector<2x8x8x8xf32>
    %133 = vector.shape_cast %132 : vector<2x8x8x8xf32> to vector<128x8xf32>
    %c2_57 = arith.constant 2 : index
    %c0_58 = arith.constant 0 : index
    %c0_59 = arith.constant 0 : index
    %134 = vector.load %arg4[%c2_57, %c0_58, %c0_59] : memref<9x8x16xf32, #tpu.memory_space<vmem>>, vector<1x8x16xf32>
    %135 = vector.shape_cast %134 : vector<1x8x16xf32> to vector<8x16xf32>
    %cst_60 = arith.constant dense<0.000000e+00> : vector<128x16xf32>
    %136 = tpu.matmul %133, %135, %cst_60 {dimension_numbers = #tpu.dot_dimension_numbers<[1], [0], [0], [1], [0, 0, 1, 1], [], []>} : vector<128x8xf32>, vector<8x16xf32>, vector<128x16xf32> -> vector<128x16xf32>
    %137 = arith.addf %131, %136 : vector<128x16xf32>
    %138 = vector.extract_strided_slice %116 {offsets = [0, 1, 0, 0], sizes = [2, 8, 8, 8], strides = [1, 1, 1, 1]} : vector<2x10x16x8xf32> to vector<2x8x8x8xf32>
    %139 = vector.shape_cast %138 : vector<2x8x8x8xf32> to vector<128x8xf32>
    %c3_61 = arith.constant 3 : index
    %c0_62 = arith.constant 0 : index
    %c0_63 = arith.constant 0 : index
    %140 = vector.load %arg4[%c3_61, %c0_62, %c0_63] : memref<9x8x16xf32, #tpu.memory_space<vmem>>, vector<1x8x16xf32>
    %141 = vector.shape_cast %140 : vector<1x8x16xf32> to vector<8x16xf32>
    %cst_64 = arith.constant dense<0.000000e+00> : vector<128x16xf32>
    %142 = tpu.matmul %139, %141, %cst_64 {dimension_numbers = #tpu.dot_dimension_numbers<[1], [0], [0], [1], [0, 0, 1, 1], [], []>} : vector<128x8xf32>, vector<8x16xf32>, vector<128x16xf32> -> vector<128x16xf32>
    %143 = arith.addf %137, %142 : vector<128x16xf32>
    %144 = vector.extract_strided_slice %116 {offsets = [0, 1, 1, 0], sizes = [2, 8, 8, 8], strides = [1, 1, 1, 1]} : vector<2x10x16x8xf32> to vector<2x8x8x8xf32>
    %145 = vector.shape_cast %144 : vector<2x8x8x8xf32> to vector<128x8xf32>
    %c4_65 = arith.constant 4 : index
    %c0_66 = arith.constant 0 : index
    %c0_67 = arith.constant 0 : index
    %146 = vector.load %arg4[%c4_65, %c0_66, %c0_67] : memref<9x8x16xf32, #tpu.memory_space<vmem>>, vector<1x8x16xf32>
    %147 = vector.shape_cast %146 : vector<1x8x16xf32> to vector<8x16xf32>
    %cst_68 = arith.constant dense<0.000000e+00> : vector<128x16xf32>
    %148 = tpu.matmul %145, %147, %cst_68 {dimension_numbers = #tpu.dot_dimension_numbers<[1], [0], [0], [1], [0, 0, 1, 1], [], []>} : vector<128x8xf32>, vector<8x16xf32>, vector<128x16xf32> -> vector<128x16xf32>
    %149 = arith.addf %143, %148 : vector<128x16xf32>
    %150 = vector.extract_strided_slice %116 {offsets = [0, 1, 2, 0], sizes = [2, 8, 8, 8], strides = [1, 1, 1, 1]} : vector<2x10x16x8xf32> to vector<2x8x8x8xf32>
    %151 = vector.shape_cast %150 : vector<2x8x8x8xf32> to vector<128x8xf32>
    %c5_69 = arith.constant 5 : index
    %c0_70 = arith.constant 0 : index
    %c0_71 = arith.constant 0 : index
    %152 = vector.load %arg4[%c5_69, %c0_70, %c0_71] : memref<9x8x16xf32, #tpu.memory_space<vmem>>, vector<1x8x16xf32>
    %153 = vector.shape_cast %152 : vector<1x8x16xf32> to vector<8x16xf32>
    %cst_72 = arith.constant dense<0.000000e+00> : vector<128x16xf32>
    %154 = tpu.matmul %151, %153, %cst_72 {dimension_numbers = #tpu.dot_dimension_numbers<[1], [0], [0], [1], [0, 0, 1, 1], [], []>} : vector<128x8xf32>, vector<8x16xf32>, vector<128x16xf32> -> vector<128x16xf32>
    %155 = arith.addf %149, %154 : vector<128x16xf32>
    %156 = vector.extract_strided_slice %116 {offsets = [0, 2, 0, 0], sizes = [2, 8, 8, 8], strides = [1, 1, 1, 1]} : vector<2x10x16x8xf32> to vector<2x8x8x8xf32>
    %157 = vector.shape_cast %156 : vector<2x8x8x8xf32> to vector<128x8xf32>
    %c6_73 = arith.constant 6 : index
    %c0_74 = arith.constant 0 : index
    %c0_75 = arith.constant 0 : index
    %158 = vector.load %arg4[%c6_73, %c0_74, %c0_75] : memref<9x8x16xf32, #tpu.memory_space<vmem>>, vector<1x8x16xf32>
    %159 = vector.shape_cast %158 : vector<1x8x16xf32> to vector<8x16xf32>
    %cst_76 = arith.constant dense<0.000000e+00> : vector<128x16xf32>
    %160 = tpu.matmul %157, %159, %cst_76 {dimension_numbers = #tpu.dot_dimension_numbers<[1], [0], [0], [1], [0, 0, 1, 1], [], []>} : vector<128x8xf32>, vector<8x16xf32>, vector<128x16xf32> -> vector<128x16xf32>
    %161 = arith.addf %155, %160 : vector<128x16xf32>
    %162 = vector.extract_strided_slice %116 {offsets = [0, 2, 1, 0], sizes = [2, 8, 8, 8], strides = [1, 1, 1, 1]} : vector<2x10x16x8xf32> to vector<2x8x8x8xf32>
    %163 = vector.shape_cast %162 : vector<2x8x8x8xf32> to vector<128x8xf32>
    %c7_77 = arith.constant 7 : index
    %c0_78 = arith.constant 0 : index
    %c0_79 = arith.constant 0 : index
    %164 = vector.load %arg4[%c7_77, %c0_78, %c0_79] : memref<9x8x16xf32, #tpu.memory_space<vmem>>, vector<1x8x16xf32>
    %165 = vector.shape_cast %164 : vector<1x8x16xf32> to vector<8x16xf32>
    %cst_80 = arith.constant dense<0.000000e+00> : vector<128x16xf32>
    %166 = tpu.matmul %163, %165, %cst_80 {dimension_numbers = #tpu.dot_dimension_numbers<[1], [0], [0], [1], [0, 0, 1, 1], [], []>} : vector<128x8xf32>, vector<8x16xf32>, vector<128x16xf32> -> vector<128x16xf32>
    %167 = arith.addf %161, %166 : vector<128x16xf32>
    %168 = vector.extract_strided_slice %116 {offsets = [0, 2, 2, 0], sizes = [2, 8, 8, 8], strides = [1, 1, 1, 1]} : vector<2x10x16x8xf32> to vector<2x8x8x8xf32>
    %169 = vector.shape_cast %168 : vector<2x8x8x8xf32> to vector<128x8xf32>
    %c8_81 = arith.constant 8 : index
    %c0_82 = arith.constant 0 : index
    %c0_83 = arith.constant 0 : index
    %170 = vector.load %arg4[%c8_81, %c0_82, %c0_83] : memref<9x8x16xf32, #tpu.memory_space<vmem>>, vector<1x8x16xf32>
    %171 = vector.shape_cast %170 : vector<1x8x16xf32> to vector<8x16xf32>
    %cst_84 = arith.constant dense<0.000000e+00> : vector<128x16xf32>
    %172 = tpu.matmul %169, %171, %cst_84 {dimension_numbers = #tpu.dot_dimension_numbers<[1], [0], [0], [1], [0, 0, 1, 1], [], []>} : vector<128x8xf32>, vector<8x16xf32>, vector<128x16xf32> -> vector<128x16xf32>
    %173 = arith.addf %167, %172 : vector<128x16xf32>
    %cst_85 = arith.constant 0.000000e+00 : f32
    %174 = vector.broadcast %cst_85 : f32 to vector<128x16xf32>
    %175 = arith.maximumf %173, %174 : vector<128x16xf32>
    %176 = vector.shape_cast %175 : vector<128x16xf32> to vector<2x4x2x8x16xf32>
    %177 = vector.extract_strided_slice %176 {offsets = [0, 0, 0, 0, 0], sizes = [2, 4, 1, 8, 16], strides = [1, 1, 1, 1, 1]} : vector<2x4x2x8x16xf32> to vector<2x4x1x8x16xf32>
    %178 = vector.shape_cast %177 : vector<2x4x1x8x16xf32> to vector<2x4x8x16xf32>
    %179 = vector.extract_strided_slice %176 {offsets = [0, 0, 1, 0, 0], sizes = [2, 4, 1, 8, 16], strides = [1, 1, 1, 1, 1]} : vector<2x4x2x8x16xf32> to vector<2x4x1x8x16xf32>
    %180 = vector.shape_cast %179 : vector<2x4x1x8x16xf32> to vector<2x4x8x16xf32>
    %181 = arith.maximumf %178, %180 : vector<2x4x8x16xf32>
    %182 = vector.shape_cast %181 : vector<2x4x8x16xf32> to vector<64x16xf32>
    %183 = tpu.iota {dimensions = array<i32: 0>} : vector<4x4x8x64xi32>
    %184 = tpu.iota {dimensions = array<i32: 1>} : vector<4x4x8x64xi32>
    %185 = tpu.iota {dimensions = array<i32: 2>} : vector<4x4x8x64xi32>
    %186 = tpu.iota {dimensions = array<i32: 3>} : vector<4x4x8x64xi32>
    %c32_i32 = arith.constant 32 : i32
    %187 = vector.broadcast %c32_i32 : i32 to vector<4x4x8x64xi32>
    %188 = arith.muli %185, %187 : vector<4x4x8x64xi32>
    %c8_i32_86 = arith.constant 8 : i32
    %189 = vector.broadcast %c8_i32_86 : i32 to vector<4x4x8x64xi32>
    %190 = arith.muli %183, %189 : vector<4x4x8x64xi32>
    %191 = arith.addi %188, %190 : vector<4x4x8x64xi32>
    %c2_i32_87 = arith.constant 2 : i32
    %192 = vector.broadcast %c2_i32_87 : i32 to vector<4x4x8x64xi32>
    %193 = arith.muli %192, %184 : vector<4x4x8x64xi32>
    %194 = arith.addi %191, %193 : vector<4x4x8x64xi32>
    %195 = arith.subi %186, %194 : vector<4x4x8x64xi32>
    %c0_i32_88 = arith.constant 0 : i32
    %196 = vector.broadcast %c0_i32_88 : i32 to vector<4x4x8x64xi32>
    %197 = arith.cmpi eq, %195, %196 : vector<4x4x8x64xi32>
    %cst_89 = arith.constant 1.000000e+00 : f32
    %cst_90 = arith.constant 0.000000e+00 : f32
    %198 = vector.broadcast %cst_89 : f32 to vector<4x4x8x64xf32>
    %199 = vector.broadcast %cst_90 : f32 to vector<4x4x8x64xf32>
    %200 = arith.select %197, %198, %199 : vector<4x4x8x64xi1>, vector<4x4x8x64xf32>
    %201 = vector.shape_cast %200 : vector<4x4x8x64xf32> to vector<128x64xf32>
    %c1_i32_91 = arith.constant 1 : i32
    %202 = vector.broadcast %c1_i32_91 : i32 to vector<4x4x8x64xi32>
    %203 = arith.cmpi eq, %195, %202 : vector<4x4x8x64xi32>
    %cst_92 = arith.constant 1.000000e+00 : f32
    %cst_93 = arith.constant 0.000000e+00 : f32
    %204 = vector.broadcast %cst_92 : f32 to vector<4x4x8x64xf32>
    %205 = vector.broadcast %cst_93 : f32 to vector<4x4x8x64xf32>
    %206 = arith.select %203, %204, %205 : vector<4x4x8x64xi1>, vector<4x4x8x64xf32>
    %207 = vector.shape_cast %206 : vector<4x4x8x64xf32> to vector<128x64xf32>
    %cst_94 = arith.constant dense<0.000000e+00> : vector<128x16xf32>
    %208 = tpu.matmul %201, %182, %cst_94 {dimension_numbers = #tpu.dot_dimension_numbers<[1], [0], [0], [1], [0, 0, 1, 1], [], []>} : vector<128x64xf32>, vector<64x16xf32>, vector<128x16xf32> -> vector<128x16xf32>
    %cst_95 = arith.constant dense<0.000000e+00> : vector<128x16xf32>
    %209 = tpu.matmul %207, %182, %cst_95 {dimension_numbers = #tpu.dot_dimension_numbers<[1], [0], [0], [1], [0, 0, 1, 1], [], []>} : vector<128x64xf32>, vector<64x16xf32>, vector<128x16xf32> -> vector<128x16xf32>
    %210 = arith.maximumf %208, %209 : vector<128x16xf32>
    %c0_96 = arith.constant 0 : index
    %c0_97 = arith.constant 0 : index
    %211 = vector.load %arg7[%c0_96, %c0_97] : memref<1x32xf32, #tpu.memory_space<vmem>>, vector<1x32xf32>
    %212 = vector.shape_cast %211 : vector<1x32xf32> to vector<1x32xf32>
    %213 = vector.broadcast %212 : vector<1x32xf32> to vector<2x32xf32>
    %214 = vector.extract_strided_slice %210 {offsets = [0, 0], sizes = [2, 16], strides = [1, 1]} : vector<128x16xf32> to vector<2x16xf32>
    %c0_98 = arith.constant 0 : index
    %c0_99 = arith.constant 0 : index
    %c0_100 = arith.constant 0 : index
    %215 = vector.load %arg6[%c0_98, %c0_99, %c0_100] : memref<16x16x32xf32, #tpu.memory_space<vmem>>, vector<1x16x32xf32>
    %216 = vector.shape_cast %215 : vector<1x16x32xf32> to vector<16x32xf32>
    %cst_101 = arith.constant dense<0.000000e+00> : vector<2x32xf32>
    %217 = tpu.matmul %214, %216, %cst_101 {dimension_numbers = #tpu.dot_dimension_numbers<[1], [0], [0], [1], [0, 0, 1, 1], [], []>} : vector<2x16xf32>, vector<16x32xf32>, vector<2x32xf32> -> vector<2x32xf32>
    %218 = arith.addf %213, %217 : vector<2x32xf32>
    %219 = vector.extract_strided_slice %210 {offsets = [8, 0], sizes = [2, 16], strides = [1, 1]} : vector<128x16xf32> to vector<2x16xf32>
    %c1_102 = arith.constant 1 : index
    %c0_103 = arith.constant 0 : index
    %c0_104 = arith.constant 0 : index
    %220 = vector.load %arg6[%c1_102, %c0_103, %c0_104] : memref<16x16x32xf32, #tpu.memory_space<vmem>>, vector<1x16x32xf32>
    %221 = vector.shape_cast %220 : vector<1x16x32xf32> to vector<16x32xf32>
    %cst_105 = arith.constant dense<0.000000e+00> : vector<2x32xf32>
    %222 = tpu.matmul %219, %221, %cst_105 {dimension_numbers = #tpu.dot_dimension_numbers<[1], [0], [0], [1], [0, 0, 1, 1], [], []>} : vector<2x16xf32>, vector<16x32xf32>, vector<2x32xf32> -> vector<2x32xf32>
    %223 = arith.addf %218, %222 : vector<2x32xf32>
    %224 = vector.extract_strided_slice %210 {offsets = [16, 0], sizes = [2, 16], strides = [1, 1]} : vector<128x16xf32> to vector<2x16xf32>
    %c2_106 = arith.constant 2 : index
    %c0_107 = arith.constant 0 : index
    %c0_108 = arith.constant 0 : index
    %225 = vector.load %arg6[%c2_106, %c0_107, %c0_108] : memref<16x16x32xf32, #tpu.memory_space<vmem>>, vector<1x16x32xf32>
    %226 = vector.shape_cast %225 : vector<1x16x32xf32> to vector<16x32xf32>
    %cst_109 = arith.constant dense<0.000000e+00> : vector<2x32xf32>
    %227 = tpu.matmul %224, %226, %cst_109 {dimension_numbers = #tpu.dot_dimension_numbers<[1], [0], [0], [1], [0, 0, 1, 1], [], []>} : vector<2x16xf32>, vector<16x32xf32>, vector<2x32xf32> -> vector<2x32xf32>
    %228 = arith.addf %223, %227 : vector<2x32xf32>
    %229 = vector.extract_strided_slice %210 {offsets = [24, 0], sizes = [2, 16], strides = [1, 1]} : vector<128x16xf32> to vector<2x16xf32>
    %c3_110 = arith.constant 3 : index
    %c0_111 = arith.constant 0 : index
    %c0_112 = arith.constant 0 : index
    %230 = vector.load %arg6[%c3_110, %c0_111, %c0_112] : memref<16x16x32xf32, #tpu.memory_space<vmem>>, vector<1x16x32xf32>
    %231 = vector.shape_cast %230 : vector<1x16x32xf32> to vector<16x32xf32>
    %cst_113 = arith.constant dense<0.000000e+00> : vector<2x32xf32>
    %232 = tpu.matmul %229, %231, %cst_113 {dimension_numbers = #tpu.dot_dimension_numbers<[1], [0], [0], [1], [0, 0, 1, 1], [], []>} : vector<2x16xf32>, vector<16x32xf32>, vector<2x32xf32> -> vector<2x32xf32>
    %233 = arith.addf %228, %232 : vector<2x32xf32>
    %234 = vector.extract_strided_slice %210 {offsets = [32, 0], sizes = [2, 16], strides = [1, 1]} : vector<128x16xf32> to vector<2x16xf32>
    %c4_114 = arith.constant 4 : index
    %c0_115 = arith.constant 0 : index
    %c0_116 = arith.constant 0 : index
    %235 = vector.load %arg6[%c4_114, %c0_115, %c0_116] : memref<16x16x32xf32, #tpu.memory_space<vmem>>, vector<1x16x32xf32>
    %236 = vector.shape_cast %235 : vector<1x16x32xf32> to vector<16x32xf32>
    %cst_117 = arith.constant dense<0.000000e+00> : vector<2x32xf32>
    %237 = tpu.matmul %234, %236, %cst_117 {dimension_numbers = #tpu.dot_dimension_numbers<[1], [0], [0], [1], [0, 0, 1, 1], [], []>} : vector<2x16xf32>, vector<16x32xf32>, vector<2x32xf32> -> vector<2x32xf32>
    %238 = arith.addf %233, %237 : vector<2x32xf32>
    %239 = vector.extract_strided_slice %210 {offsets = [40, 0], sizes = [2, 16], strides = [1, 1]} : vector<128x16xf32> to vector<2x16xf32>
    %c5_118 = arith.constant 5 : index
    %c0_119 = arith.constant 0 : index
    %c0_120 = arith.constant 0 : index
    %240 = vector.load %arg6[%c5_118, %c0_119, %c0_120] : memref<16x16x32xf32, #tpu.memory_space<vmem>>, vector<1x16x32xf32>
    %241 = vector.shape_cast %240 : vector<1x16x32xf32> to vector<16x32xf32>
    %cst_121 = arith.constant dense<0.000000e+00> : vector<2x32xf32>
    %242 = tpu.matmul %239, %241, %cst_121 {dimension_numbers = #tpu.dot_dimension_numbers<[1], [0], [0], [1], [0, 0, 1, 1], [], []>} : vector<2x16xf32>, vector<16x32xf32>, vector<2x32xf32> -> vector<2x32xf32>
    %243 = arith.addf %238, %242 : vector<2x32xf32>
    %244 = vector.extract_strided_slice %210 {offsets = [48, 0], sizes = [2, 16], strides = [1, 1]} : vector<128x16xf32> to vector<2x16xf32>
    %c6_122 = arith.constant 6 : index
    %c0_123 = arith.constant 0 : index
    %c0_124 = arith.constant 0 : index
    %245 = vector.load %arg6[%c6_122, %c0_123, %c0_124] : memref<16x16x32xf32, #tpu.memory_space<vmem>>, vector<1x16x32xf32>
    %246 = vector.shape_cast %245 : vector<1x16x32xf32> to vector<16x32xf32>
    %cst_125 = arith.constant dense<0.000000e+00> : vector<2x32xf32>
    %247 = tpu.matmul %244, %246, %cst_125 {dimension_numbers = #tpu.dot_dimension_numbers<[1], [0], [0], [1], [0, 0, 1, 1], [], []>} : vector<2x16xf32>, vector<16x32xf32>, vector<2x32xf32> -> vector<2x32xf32>
    %248 = arith.addf %243, %247 : vector<2x32xf32>
    %249 = vector.extract_strided_slice %210 {offsets = [56, 0], sizes = [2, 16], strides = [1, 1]} : vector<128x16xf32> to vector<2x16xf32>
    %c7_126 = arith.constant 7 : index
    %c0_127 = arith.constant 0 : index
    %c0_128 = arith.constant 0 : index
    %250 = vector.load %arg6[%c7_126, %c0_127, %c0_128] : memref<16x16x32xf32, #tpu.memory_space<vmem>>, vector<1x16x32xf32>
    %251 = vector.shape_cast %250 : vector<1x16x32xf32> to vector<16x32xf32>
    %cst_129 = arith.constant dense<0.000000e+00> : vector<2x32xf32>
    %252 = tpu.matmul %249, %251, %cst_129 {dimension_numbers = #tpu.dot_dimension_numbers<[1], [0], [0], [1], [0, 0, 1, 1], [], []>} : vector<2x16xf32>, vector<16x32xf32>, vector<2x32xf32> -> vector<2x32xf32>
    %253 = arith.addf %248, %252 : vector<2x32xf32>
    %254 = vector.extract_strided_slice %210 {offsets = [64, 0], sizes = [2, 16], strides = [1, 1]} : vector<128x16xf32> to vector<2x16xf32>
    %c8_130 = arith.constant 8 : index
    %c0_131 = arith.constant 0 : index
    %c0_132 = arith.constant 0 : index
    %255 = vector.load %arg6[%c8_130, %c0_131, %c0_132] : memref<16x16x32xf32, #tpu.memory_space<vmem>>, vector<1x16x32xf32>
    %256 = vector.shape_cast %255 : vector<1x16x32xf32> to vector<16x32xf32>
    %cst_133 = arith.constant dense<0.000000e+00> : vector<2x32xf32>
    %257 = tpu.matmul %254, %256, %cst_133 {dimension_numbers = #tpu.dot_dimension_numbers<[1], [0], [0], [1], [0, 0, 1, 1], [], []>} : vector<2x16xf32>, vector<16x32xf32>, vector<2x32xf32> -> vector<2x32xf32>
    %258 = arith.addf %253, %257 : vector<2x32xf32>
    %259 = vector.extract_strided_slice %210 {offsets = [72, 0], sizes = [2, 16], strides = [1, 1]} : vector<128x16xf32> to vector<2x16xf32>
    %c9 = arith.constant 9 : index
    %c0_134 = arith.constant 0 : index
    %c0_135 = arith.constant 0 : index
    %260 = vector.load %arg6[%c9, %c0_134, %c0_135] : memref<16x16x32xf32, #tpu.memory_space<vmem>>, vector<1x16x32xf32>
    %261 = vector.shape_cast %260 : vector<1x16x32xf32> to vector<16x32xf32>
    %cst_136 = arith.constant dense<0.000000e+00> : vector<2x32xf32>
    %262 = tpu.matmul %259, %261, %cst_136 {dimension_numbers = #tpu.dot_dimension_numbers<[1], [0], [0], [1], [0, 0, 1, 1], [], []>} : vector<2x16xf32>, vector<16x32xf32>, vector<2x32xf32> -> vector<2x32xf32>
    %263 = arith.addf %258, %262 : vector<2x32xf32>
    %264 = vector.extract_strided_slice %210 {offsets = [80, 0], sizes = [2, 16], strides = [1, 1]} : vector<128x16xf32> to vector<2x16xf32>
    %c10 = arith.constant 10 : index
    %c0_137 = arith.constant 0 : index
    %c0_138 = arith.constant 0 : index
    %265 = vector.load %arg6[%c10, %c0_137, %c0_138] : memref<16x16x32xf32, #tpu.memory_space<vmem>>, vector<1x16x32xf32>
    %266 = vector.shape_cast %265 : vector<1x16x32xf32> to vector<16x32xf32>
    %cst_139 = arith.constant dense<0.000000e+00> : vector<2x32xf32>
    %267 = tpu.matmul %264, %266, %cst_139 {dimension_numbers = #tpu.dot_dimension_numbers<[1], [0], [0], [1], [0, 0, 1, 1], [], []>} : vector<2x16xf32>, vector<16x32xf32>, vector<2x32xf32> -> vector<2x32xf32>
    %268 = arith.addf %263, %267 : vector<2x32xf32>
    %269 = vector.extract_strided_slice %210 {offsets = [88, 0], sizes = [2, 16], strides = [1, 1]} : vector<128x16xf32> to vector<2x16xf32>
    %c11 = arith.constant 11 : index
    %c0_140 = arith.constant 0 : index
    %c0_141 = arith.constant 0 : index
    %270 = vector.load %arg6[%c11, %c0_140, %c0_141] : memref<16x16x32xf32, #tpu.memory_space<vmem>>, vector<1x16x32xf32>
    %271 = vector.shape_cast %270 : vector<1x16x32xf32> to vector<16x32xf32>
    %cst_142 = arith.constant dense<0.000000e+00> : vector<2x32xf32>
    %272 = tpu.matmul %269, %271, %cst_142 {dimension_numbers = #tpu.dot_dimension_numbers<[1], [0], [0], [1], [0, 0, 1, 1], [], []>} : vector<2x16xf32>, vector<16x32xf32>, vector<2x32xf32> -> vector<2x32xf32>
    %273 = arith.addf %268, %272 : vector<2x32xf32>
    %274 = vector.extract_strided_slice %210 {offsets = [96, 0], sizes = [2, 16], strides = [1, 1]} : vector<128x16xf32> to vector<2x16xf32>
    %c12 = arith.constant 12 : index
    %c0_143 = arith.constant 0 : index
    %c0_144 = arith.constant 0 : index
    %275 = vector.load %arg6[%c12, %c0_143, %c0_144] : memref<16x16x32xf32, #tpu.memory_space<vmem>>, vector<1x16x32xf32>
    %276 = vector.shape_cast %275 : vector<1x16x32xf32> to vector<16x32xf32>
    %cst_145 = arith.constant dense<0.000000e+00> : vector<2x32xf32>
    %277 = tpu.matmul %274, %276, %cst_145 {dimension_numbers = #tpu.dot_dimension_numbers<[1], [0], [0], [1], [0, 0, 1, 1], [], []>} : vector<2x16xf32>, vector<16x32xf32>, vector<2x32xf32> -> vector<2x32xf32>
    %278 = arith.addf %273, %277 : vector<2x32xf32>
    %279 = vector.extract_strided_slice %210 {offsets = [104, 0], sizes = [2, 16], strides = [1, 1]} : vector<128x16xf32> to vector<2x16xf32>
    %c13 = arith.constant 13 : index
    %c0_146 = arith.constant 0 : index
    %c0_147 = arith.constant 0 : index
    %280 = vector.load %arg6[%c13, %c0_146, %c0_147] : memref<16x16x32xf32, #tpu.memory_space<vmem>>, vector<1x16x32xf32>
    %281 = vector.shape_cast %280 : vector<1x16x32xf32> to vector<16x32xf32>
    %cst_148 = arith.constant dense<0.000000e+00> : vector<2x32xf32>
    %282 = tpu.matmul %279, %281, %cst_148 {dimension_numbers = #tpu.dot_dimension_numbers<[1], [0], [0], [1], [0, 0, 1, 1], [], []>} : vector<2x16xf32>, vector<16x32xf32>, vector<2x32xf32> -> vector<2x32xf32>
    %283 = arith.addf %278, %282 : vector<2x32xf32>
    %284 = vector.extract_strided_slice %210 {offsets = [112, 0], sizes = [2, 16], strides = [1, 1]} : vector<128x16xf32> to vector<2x16xf32>
    %c14 = arith.constant 14 : index
    %c0_149 = arith.constant 0 : index
    %c0_150 = arith.constant 0 : index
    %285 = vector.load %arg6[%c14, %c0_149, %c0_150] : memref<16x16x32xf32, #tpu.memory_space<vmem>>, vector<1x16x32xf32>
    %286 = vector.shape_cast %285 : vector<1x16x32xf32> to vector<16x32xf32>
    %cst_151 = arith.constant dense<0.000000e+00> : vector<2x32xf32>
    %287 = tpu.matmul %284, %286, %cst_151 {dimension_numbers = #tpu.dot_dimension_numbers<[1], [0], [0], [1], [0, 0, 1, 1], [], []>} : vector<2x16xf32>, vector<16x32xf32>, vector<2x32xf32> -> vector<2x32xf32>
    %288 = arith.addf %283, %287 : vector<2x32xf32>
    %289 = vector.extract_strided_slice %210 {offsets = [120, 0], sizes = [2, 16], strides = [1, 1]} : vector<128x16xf32> to vector<2x16xf32>
    %c15 = arith.constant 15 : index
    %c0_152 = arith.constant 0 : index
    %c0_153 = arith.constant 0 : index
    %290 = vector.load %arg6[%c15, %c0_152, %c0_153] : memref<16x16x32xf32, #tpu.memory_space<vmem>>, vector<1x16x32xf32>
    %291 = vector.shape_cast %290 : vector<1x16x32xf32> to vector<16x32xf32>
    %cst_154 = arith.constant dense<0.000000e+00> : vector<2x32xf32>
    %292 = tpu.matmul %289, %291, %cst_154 {dimension_numbers = #tpu.dot_dimension_numbers<[1], [0], [0], [1], [0, 0, 1, 1], [], []>} : vector<2x16xf32>, vector<16x32xf32>, vector<2x32xf32> -> vector<2x32xf32>
    %293 = arith.addf %288, %292 : vector<2x32xf32>
    %cst_155 = arith.constant 0.000000e+00 : f32
    %294 = vector.broadcast %cst_155 : f32 to vector<2x32xf32>
    %295 = arith.maximumf %293, %294 : vector<2x32xf32>
    %c0_156 = arith.constant 0 : index
    %c0_157 = arith.constant 0 : index
    %296 = vector.load %arg8[%c0_156, %c0_157] : memref<32x10xf32, #tpu.memory_space<vmem>>, vector<32x10xf32>
    %cst_158 = arith.constant dense<0.000000e+00> : vector<2x10xf32>
    %297 = tpu.matmul %295, %296, %cst_158 {dimension_numbers = #tpu.dot_dimension_numbers<[1], [0], [0], [1], [0, 0, 1, 1], [], []>} : vector<2x32xf32>, vector<32x10xf32>, vector<2x10xf32> -> vector<2x10xf32>
    %c0_159 = arith.constant 0 : index
    %c0_160 = arith.constant 0 : index
    %298 = vector.load %arg9[%c0_159, %c0_160] : memref<1x10xf32, #tpu.memory_space<vmem>>, vector<1x10xf32>
    %299 = vector.broadcast %298 : vector<1x10xf32> to vector<2x10xf32>
    %300 = arith.addf %297, %299 : vector<2x10xf32>
    %c0_161 = arith.constant 0 : index
    %c0_162 = arith.constant 0 : index
    %301 = vector.load %arg10[%c0_161, %c0_162] : memref<2x10xf32, #tpu.memory_space<vmem>>, vector<2x10xf32>
    tpu.vector_store %arg10[%c0_161, %c0_162], %300 {strides = array<i32>} : memref<2x10xf32, #tpu.memory_space<vmem>>, vector<2x10xf32>,
    return
  }
}

</mosaic_0001>

<llo_original>
// kernel: cnn_forward.1
$region0: #{cnn_forward.1}
  #allocation0 [shape = 'u32[]', space=smem, size = 0x4, offset = 0x4, fixed_abs, tag = 'smem constant byte address 0x4 - core index']
  #allocation1 [shape = 'u32[144,128]{1,0:T(1,128)}', space=vmem, size = 0x12000, scoped, tag = 'internal scratch']
  %s0 = inlined_call_operand.vmem [shape: f32[2,18,18,4], index: 0, kind: input, shape index: {}]
  %s1 = inlined_call_operand.vmem [shape: f32[9,4,8], index: 1, kind: input, shape index: {}]
  %s2 = inlined_call_operand.vmem [shape: f32[1,8], index: 2, kind: input, shape index: {}]
  %s3 = inlined_call_operand.vmem [shape: f32[1,8], index: 3, kind: input, shape index: {}]
  %s4 = inlined_call_operand.vmem [shape: f32[9,8,16], index: 4, kind: input, shape index: {}]
  %s5 = inlined_call_operand.vmem [shape: f32[1,16], index: 5, kind: input, shape index: {}]
  %s6 = inlined_call_operand.vmem [shape: f32[16,16,32], index: 6, kind: input, shape index: {}]
  %s7 = inlined_call_operand.vmem [shape: f32[1,32], index: 7, kind: input, shape index: {}]
  %s8 = inlined_call_operand.vmem [shape: f32[32,10], index: 8, kind: input, shape index: {}]
  %s9 = inlined_call_operand.vmem [shape: f32[1,10], index: 9, kind: input, shape index: {}]
  %s10 = inlined_call_operand.hbm [shape: f32[2,10], index: 10, kind: output, shape index: {}]
  %s11 = sld [smem:[#allocation0]]
  $region50: #{cnn_forward.1} parent=0
    _
  %s13 = ssub.s32 1, %s11
  %s14 = scalar_select 0, %s13, %s11
  $region1: #{cnn_forward.1} parent=0
    #allocation2 [shape = 'u8[1024]{0}', space=vmem, size = 0x400, scoped, tag = 'output window, operand 0, single buffered']
    #allocation3 [shape = 's32[1]{0}', space=sflag, size = 0x4, scoped, tag = 'scoped memory for cnn_forward.1']
    %15 = vsyncpa [#allocation3], 0
    // Predicated region
    $region2: #{cnn_forward.1} parent=1 // pred_check
      _
    $region3: #{cnn_forward.1} parent=1 // pred_check_branch
      %17 = sbr.rel (0) target = $region5
    $region4: #{cnn_forward.1} parent=1 // pred_region
      _
    $region5: #{cnn_forward.1} parent=1 // pred_fallthru
      _
    // Predicated region
    $region6: #{cnn_forward.1} parent=1 // pred_check
      _
    $region7: #{cnn_forward.1} parent=1 // pred_check_branch
      %19 = sbr.rel (0) target = $region9
    $region8: #{cnn_forward.1} parent=1 // pred_region
      _
    $region9: #{cnn_forward.1} parent=1 // pred_fallthru
      _
    // Predicated region
    $region10: #{cnn_forward.1} parent=1 // pred_check
      _
    $region11: #{cnn_forward.1} parent=1 // pred_check_branch
      %21 = sbr.rel (0) target = $region13
    $region12: #{cnn_forward.1} parent=1 // pred_region
      _
    $region13: #{cnn_forward.1} parent=1 // pred_fallthru
      _
    // Predicated region
    $region14: #{cnn_forward.1} parent=1 // pred_check
      _
    $region15: #{cnn_forward.1} parent=1 // pred_check_branch
      %23 = sbr.rel (0) target = $region17
    $region16: #{cnn_forward.1} parent=1 // pred_region
      _
    $region17: #{cnn_forward.1} parent=1 // pred_fallthru
      _
    // Predicated region
    $region18: #{cnn_forward.1} parent=1 // pred_check
      _
    $region19: #{cnn_forward.1} parent=1 // pred_check_branch
      %25 = sbr.rel (0) target = $region21
    $region20: #{cnn_forward.1} parent=1 // pred_region
      _
    $region21: #{cnn_forward.1} parent=1 // pred_fallthru
      _
    // Predicated region
    $region22: #{cnn_forward.1} parent=1 // pred_check
      _
    $region23: #{cnn_forward.1} parent=1 // pred_check_branch
      %27 = sbr.rel (0) target = $region25
    $region24: #{cnn_forward.1} parent=1 // pred_region
      _
    $region25: #{cnn_forward.1} parent=1 // pred_fallthru
      _
    // Predicated region
    $region26: #{cnn_forward.1} parent=1 // pred_check
      _
    $region27: #{cnn_forward.1} parent=1 // pred_check_branch
      %29 = sbr.rel (0) target = $region29
    $region28: #{cnn_forward.1} parent=1 // pred_region
      _
    $region29: #{cnn_forward.1} parent=1 // pred_fallthru
      _
    // Predicated region
    $region30: #{cnn_forward.1} parent=1 // pred_check
      _
    $region31: #{cnn_forward.1} parent=1 // pred_check_branch
      %31 = sbr.rel (0) target = $region33
    $region32: #{cnn_forward.1} parent=1 // pred_region
      _
    $region33: #{cnn_forward.1} parent=1 // pred_fallthru
      _
    // Predicated region
    $region34: #{cnn_forward.1} parent=1 // pred_check
      _
    $region35: #{cnn_forward.1} parent=1 // pred_check_branch
      %33 = sbr.rel (0) target = $region37
    $region36: #{cnn_forward.1} parent=1 // pred_region
      _
    $region37: #{cnn_forward.1} parent=1 // pred_fallthru
      _
    // Predicated region
    $region38: #{cnn_forward.1} parent=1 // pred_check
      _
    $region39: #{cnn_forward.1} parent=1 // pred_check_branch
      %35 = sbr.rel (0) target = $region41
    $region40: #{cnn_forward.1} parent=1 // pred_region
      _
    $region41: #{cnn_forward.1} parent=1 // pred_fallthru
      _
    %v36 = vld [vmem:[%s0] sm:$0xff]
    %v37 = vld [vmem:[%s0 + $0x8] sm:$0xff]
    %v38 = vld [vmem:[%s0 + $0x10] sm:$0x3]
    %v39 = vld [vmem:[%s0 + $0x18] sm:$0xff]
    %v40 = vld [vmem:[%s0 + $0x20] sm:$0xff]
    %v41 = vld [vmem:[%s0 + $0x28] sm:$0x3]
    %v42 = vld [vmem:[%s0 + $0x30] sm:$0xff]
    %v43 = vld [vmem:[%s0 + $0x38] sm:$0xff]
    %v44 = vld [vmem:[%s0 + $0x40] sm:$0x3]
    %v45 = vld [vmem:[%s0 + $0x48] sm:$0xff]
    %v46 = vld [vmem:[%s0 + $0x50] sm:$0xff]
    %v47 = vld [vmem:[%s0 + $0x58] sm:$0x3]
    %v48 = vld [vmem:[%s0 + $0x60] sm:$0xff]
    %v49 = vld [vmem:[%s0 + $0x68] sm:$0xff]
    %v50 = vld [vmem:[%s0 + $0x70] sm:$0x3]
    %v51 = vld [vmem:[%s0 + $0x78] sm:$0xff]
    %v52 = vld [vmem:[%s0 + $0x80] sm:$0xff]
    %v53 = vld [vmem:[%s0 + $0x88] sm:$0x3]
    %v54 = vld [vmem:[%s0 + $0x90] sm:$0xff]
    %v55 = vld [vmem:[%s0 + $0x98] sm:$0xff]
    %v56 = vld [vmem:[%s0 + $0xa0] sm:$0x3]
    %v57 = vld [vmem:[%s0 + $0xa8] sm:$0xff]
    %v58 = vld [vmem:[%s0 + $0xb0] sm:$0xff]
    %v59 = vld [vmem:[%s0 + $0xb8] sm:$0x3]
    %v60 = vld [vmem:[%s0 + $0xc0] sm:$0xff]
    %v61 = vld [vmem:[%s0 + $0xc8] sm:$0xff]
    %v62 = vld [vmem:[%s0 + $0xd0] sm:$0x3]
    %v63 = vld [vmem:[%s0 + $0xd8] sm:$0xff]
    %v64 = vld [vmem:[%s0 + $0xe0] sm:$0xff]
    %v65 = vld [vmem:[%s0 + $0xe8] sm:$0x3]
    %v66 = vld [vmem:[%s0 + $0xf0] sm:$0xff]
    %v67 = vld [vmem:[%s0 + $0xf8] sm:$0xff]
    %v68 = vld [vmem:[%s0 + $0x100] sm:$0x3]
    %v69 = vld [vmem:[%s0 + $0x108] sm:$0xff]
    %v70 = vld [vmem:[%s0 + $0x110] sm:$0xff]
    %v71 = vld [vmem:[%s0 + $0x118] sm:$0x3]
    %v72 = vld [vmem:[%s0 + $0x120] sm:$0xff]
    %v73 = vld [vmem:[%s0 + $0x128] sm:$0xff]
    %v74 = vld [vmem:[%s0 + $0x130] sm:$0x3]
    %v75 = vld [vmem:[%s0 + $0x138] sm:$0xff]
    %v76 = vld [vmem:[%s0 + $0x140] sm:$0xff]
    %v77 = vld [vmem:[%s0 + $0x148] sm:$0x3]
    %v78 = vld [vmem:[%s0 + $0x150] sm:$0xff]
    %v79 = vld [vmem:[%s0 + $0x158] sm:$0xff]
    %v80 = vld [vmem:[%s0 + $0x160] sm:$0x3]
    %v81 = vld [vmem:[%s0 + $0x168] sm:$0xff]
    %v82 = vld [vmem:[%s0 + $0x170] sm:$0xff]
    %v83 = vld [vmem:[%s0 + $0x178] sm:$0x3]
    %v84 = vld [vmem:[%s0 + $0x180] sm:$0xff]
    %v85 = vld [vmem:[%s0 + $0x188] sm:$0xff]
    %v86 = vld [vmem:[%s0 + $0x190] sm:$0x3]
    %v87 = vld [vmem:[%s0 + $0x198] sm:$0xff]
    %v88 = vld [vmem:[%s0 + $0x1a0] sm:$0xff]
    %v89 = vld [vmem:[%s0 + $0x1a8] sm:$0x3]
    %v90 = vld [vmem:[%s0 + $0x1b0] sm:$0xff]
    %v91 = vld [vmem:[%s0 + $0x1b8] sm:$0xff]
    %v92 = vld [vmem:[%s0 + $0x1c0] sm:$0x3]
    %v93 = vld [vmem:[%s0 + $0x1c8] sm:$0xff]
    %v94 = vld [vmem:[%s0 + $0x1d0] sm:$0xff]
    %v95 = vld [vmem:[%s0 + $0x1d8] sm:$0x3]
    %v96 = vld [vmem:[%s0 + $0x1e0] sm:$0xff]
    %v97 = vld [vmem:[%s0 + $0x1e8] sm:$0xff]
    %v98 = vld [vmem:[%s0 + $0x1f0] sm:$0x3]
    %v99 = vld [vmem:[%s0 + $0x1f8] sm:$0xff]
    %v100 = vld [vmem:[%s0 + $0x200] sm:$0xff]
    %v101 = vld [vmem:[%s0 + $0x208] sm:$0x3]
    %v102 = vld [vmem:[%s0 + $0x210] sm:$0xff]
    %v103 = vld [vmem:[%s0 + $0x218] sm:$0xff]
    %v104 = vld [vmem:[%s0 + $0x220] sm:$0x3]
    %v105 = vld [vmem:[%s0 + $0x228] sm:$0xff]
    %v106 = vld [vmem:[%s0 + $0x230] sm:$0xff]
    %v107 = vld [vmem:[%s0 + $0x238] sm:$0x3]
    %v108 = vld [vmem:[%s0 + $0x240] sm:$0xff]
    %v109 = vld [vmem:[%s0 + $0x248] sm:$0xff]
    %v110 = vld [vmem:[%s0 + $0x250] sm:$0x3]
    %v111 = vld [vmem:[%s0 + $0x258] sm:$0xff]
    %v112 = vld [vmem:[%s0 + $0x260] sm:$0xff]
    %v113 = vld [vmem:[%s0 + $0x268] sm:$0x3]
    %v114 = vld [vmem:[%s0 + $0x270] sm:$0xff]
    %v115 = vld [vmem:[%s0 + $0x278] sm:$0xff]
    %v116 = vld [vmem:[%s0 + $0x280] sm:$0x3]
    %v117 = vld [vmem:[%s0 + $0x288] sm:$0xff]
    %v118 = vld [vmem:[%s0 + $0x290] sm:$0xff]
    %v119 = vld [vmem:[%s0 + $0x298] sm:$0x3]
    %v120 = vld [vmem:[%s0 + $0x2a0] sm:$0xff]
    %v121 = vld [vmem:[%s0 + $0x2a8] sm:$0xff]
    %v122 = vld [vmem:[%s0 + $0x2b0] sm:$0x3]
    %v123 = vld [vmem:[%s0 + $0x2b8] sm:$0xff]
    %v124 = vld [vmem:[%s0 + $0x2c0] sm:$0xff]
    %v125 = vld [vmem:[%s0 + $0x2c8] sm:$0x3]
    %v126 = vld [vmem:[%s0 + $0x2d0] sm:$0xff]
    %v127 = vld [vmem:[%s0 + $0x2d8] sm:$0xff]
    %v128 = vld [vmem:[%s0 + $0x2e0] sm:$0x3]
    %v129 = vld [vmem:[%s0 + $0x2e8] sm:$0xff]
    %v130 = vld [vmem:[%s0 + $0x2f0] sm:$0xff]
    %v131 = vld [vmem:[%s0 + $0x2f8] sm:$0x3]
    %v132 = vld [vmem:[%s0 + $0x300] sm:$0xff]
    %v133 = vld [vmem:[%s0 + $0x308] sm:$0xff]
    %v134 = vld [vmem:[%s0 + $0x310] sm:$0x3]
    %v135 = vld [vmem:[%s0 + $0x318] sm:$0xff]
    %v136 = vld [vmem:[%s0 + $0x320] sm:$0xff]
    %v137 = vld [vmem:[%s0 + $0x328] sm:$0x3]
    %v138 = vld [vmem:[%s0 + $0x330] sm:$0xff]
    %v139 = vld [vmem:[%s0 + $0x338] sm:$0xff]
    %v140 = vld [vmem:[%s0 + $0x340] sm:$0x3]
    %v141 = vld [vmem:[%s0 + $0x348] sm:$0xff]
    %v142 = vld [vmem:[%s0 + $0x350] sm:$0xff]
    %v143 = vld [vmem:[%s0 + $0x358] sm:$0x3]
    %v144 = vld [vmem:[%s1] sm:$0xf]
    %vm241 = vcmask 1046528
    %v242 = vrot.slane %v36, 1
    %v243 = vrot.slane %v37, 1
    %v244 = vsel %vm241, %v242, %v243
    %v245 = vrot.slane %v38, 1
    %v246 = vsel %vm241, %v243, %v245
    %v247 = vrot.slane %v39, 1
    %v248 = vrot.slane %v40, 1
    %v249 = vsel %vm241, %v247, %v248
    %v250 = vrot.slane %v41, 1
    %v251 = vsel %vm241, %v248, %v250
    %v252 = vrot.slane %v42, 1
    %v253 = vrot.slane %v43, 1
    %v254 = vsel %vm241, %v252, %v253
    %v255 = vrot.slane %v44, 1
    %v256 = vsel %vm241, %v253, %v255
    %v257 = vrot.slane %v45, 1
    %v258 = vrot.slane %v46, 1
    %v259 = vsel %vm241, %v257, %v258
    %v260 = vrot.slane %v47, 1
    %v261 = vsel %vm241, %v258, %v260
    %v262 = vrot.slane %v48, 1
    %v263 = vrot.slane %v49, 1
    %v264 = vsel %vm241, %v262, %v263
    %v265 = vrot.slane %v50, 1
    %v266 = vsel %vm241, %v263, %v265
    %v267 = vrot.slane %v51, 1
    %v268 = vrot.slane %v52, 1
    %v269 = vsel %vm241, %v267, %v268
    %v270 = vrot.slane %v53, 1
    %v271 = vsel %vm241, %v268, %v270
    %v272 = vrot.slane %v54, 1
    %v273 = vrot.slane %v55, 1
    %v274 = vsel %vm241, %v272, %v273
    %v275 = vrot.slane %v56, 1
    %v276 = vsel %vm241, %v273, %v275
    %v277 = vrot.slane %v57, 1
    %v278 = vrot.slane %v58, 1
    %v279 = vsel %vm241, %v277, %v278
    %v280 = vrot.slane %v59, 1
    %v281 = vsel %vm241, %v278, %v280
    %v282 = vrot.slane %v60, 1
    %v283 = vrot.slane %v61, 1
    %v284 = vsel %vm241, %v282, %v283
    %v285 = vrot.slane %v62, 1
    %v286 = vsel %vm241, %v283, %v285
    %v287 = vrot.slane %v63, 1
    %v288 = vrot.slane %v64, 1
    %v289 = vsel %vm241, %v287, %v288
    %v290 = vrot.slane %v65, 1
    %v291 = vsel %vm241, %v288, %v290
    %v292 = vrot.slane %v66, 1
    %v293 = vrot.slane %v67, 1
    %v294 = vsel %vm241, %v292, %v293
    %v295 = vrot.slane %v68, 1
    %v296 = vsel %vm241, %v293, %v295
    %v297 = vrot.slane %v69, 1
    %v298 = vrot.slane %v70, 1
    %v299 = vsel %vm241, %v297, %v298
    %v300 = vrot.slane %v71, 1
    %v301 = vsel %vm241, %v298, %v300
    %v302 = vrot.slane %v72, 1
    %v303 = vrot.slane %v73, 1
    %v304 = vsel %vm241, %v302, %v303
    %v305 = vrot.slane %v74, 1
    %v306 = vsel %vm241, %v303, %v305
    %v307 = vrot.slane %v75, 1
    %v308 = vrot.slane %v76, 1
    %v309 = vsel %vm241, %v307, %v308
    %v310 = vrot.slane %v77, 1
    %v311 = vsel %vm241, %v308, %v310
    %v312 = vrot.slane %v78, 1
    %v313 = vrot.slane %v79, 1
    %v314 = vsel %vm241, %v312, %v313
    %v315 = vrot.slane %v80, 1
    %v316 = vsel %vm241, %v313, %v315
    %v317 = vrot.slane %v81, 1
    %v318 = vrot.slane %v82, 1
    %v319 = vsel %vm241, %v317, %v318
    %v320 = vrot.slane %v83, 1
    %v321 = vsel %vm241, %v318, %v320
    %v322 = vrot.slane %v90, 1
    %v323 = vrot.slane %v91, 1
    %v324 = vsel %vm241, %v322, %v323
    %v325 = vrot.slane %v92, 1
    %v326 = vsel %vm241, %v323, %v325
    %v327 = vrot.slane %v93, 1
    %v328 = vrot.slane %v94, 1
    %v329 = vsel %vm241, %v327, %v328
    %v330 = vrot.slane %v95, 1
    %v331 = vsel %vm241, %v328, %v330
    %v332 = vrot.slane %v96, 1
    %v333 = vrot.slane %v97, 1
    %v334 = vsel %vm241, %v332, %v333
    %v335 = vrot.slane %v98, 1
    %v336 = vsel %vm241, %v333, %v335
    %v337 = vrot.slane %v99, 1
    %v338 = vrot.slane %v100, 1
    %v339 = vsel %vm241, %v337, %v338
    %v340 = vrot.slane %v101, 1
    %v341 = vsel %vm241, %v338, %v340
    %v342 = vrot.slane %v102, 1
    %v343 = vrot.slane %v103, 1
    %v344 = vsel %vm241, %v342, %v343
    %v345 = vrot.slane %v104, 1
    %v346 = vsel %vm241, %v343, %v345
    %v347 = vrot.slane %v105, 1
    %v348 = vrot.slane %v106, 1
    %v349 = vsel %vm241, %v347, %v348
    %v350 = vrot.slane %v107, 1
    %v351 = vsel %vm241, %v348, %v350
    %v352 = vrot.slane %v108, 1
    %v353 = vrot.slane %v109, 1
    %v354 = vsel %vm241, %v352, %v353
    %v355 = vrot.slane %v110, 1
    %v356 = vsel %vm241, %v353, %v355
    %v357 = vrot.slane %v111, 1
    %v358 = vrot.slane %v112, 1
    %v359 = vsel %vm241, %v357, %v358
    %v360 = vrot.slane %v113, 1
    %v361 = vsel %vm241, %v358, %v360
    %v362 = vrot.slane %v114, 1
    %v363 = vrot.slane %v115, 1
    %v364 = vsel %vm241, %v362, %v363
    %v365 = vrot.slane %v116, 1
    %v366 = vsel %vm241, %v363, %v365
    %v367 = vrot.slane %v117, 1
    %v368 = vrot.slane %v118, 1
    %v369 = vsel %vm241, %v367, %v368
    %v370 = vrot.slane %v119, 1
    %v371 = vsel %vm241, %v368, %v370
    %v372 = vrot.slane %v120, 1
    %v373 = vrot.slane %v121, 1
    %v374 = vsel %vm241, %v372, %v373
    %v375 = vrot.slane %v122, 1
    %v376 = vsel %vm241, %v373, %v375
    %v377 = vrot.slane %v123, 1
    %v378 = vrot.slane %v124, 1
    %v379 = vsel %vm241, %v377, %v378
    %v380 = vrot.slane %v125, 1
    %v381 = vsel %vm241, %v378, %v380
    %v382 = vrot.slane %v126, 1
    %v383 = vrot.slane %v127, 1
    %v384 = vsel %vm241, %v382, %v383
    %v385 = vrot.slane %v128, 1
    %v386 = vsel %vm241, %v383, %v385
    %v387 = vrot.slane %v129, 1
    %v388 = vrot.slane %v130, 1
    %v389 = vsel %vm241, %v387, %v388
    %v390 = vrot.slane %v131, 1
    %v391 = vsel %vm241, %v388, %v390
    %v392 = vrot.slane %v132, 1
    %v393 = vrot.slane %v133, 1
    %v394 = vsel %vm241, %v392, %v393
    %v395 = vrot.slane %v134, 1
    %v396 = vsel %vm241, %v393, %v395
    %v397 = vrot.slane %v135, 1
    %v398 = vrot.slane %v136, 1
    %v399 = vsel %vm241, %v397, %v398
    %v400 = vrot.slane %v137, 1
    %v401 = vsel %vm241, %v398, %v400
    %s402 = scalar_lea.vmem %s1, 4
    %v403 = vld [vmem:[%s402] sm:$0xf]
    %vm404 = vcmask 31744
    %v405 = vsel %vm404, %v244, 0
    %v407 = vsel %vm404, %v246, 0
    %v409 = vsel %vm404, %v249, 0
    %v411 = vsel %vm404, %v251, 0
    %v413 = vsel %vm404, %v254, 0
    %v415 = vsel %vm404, %v256, 0
    %v417 = vsel %vm404, %v259, 0
    %v419 = vsel %vm404, %v261, 0
    %v421 = vsel %vm404, %v264, 0
    %v423 = vsel %vm404, %v266, 0
    %v425 = vsel %vm404, %v269, 0
    %v427 = vsel %vm404, %v271, 0
    %v429 = vsel %vm404, %v274, 0
    %v431 = vsel %vm404, %v276, 0
    %v433 = vsel %vm404, %v279, 0
    %v435 = vsel %vm404, %v281, 0
    %v437 = vsel %vm404, %v284, 0
    %v439 = vsel %vm404, %v286, 0
    %v441 = vsel %vm404, %v289, 0
    %v443 = vsel %vm404, %v291, 0
    %v445 = vsel %vm404, %v294, 0
    %v447 = vsel %vm404, %v296, 0
    %v449 = vsel %vm404, %v299, 0
    %v451 = vsel %vm404, %v301, 0
    %v453 = vsel %vm404, %v304, 0
    %v455 = vsel %vm404, %v306, 0
    %v457 = vsel %vm404, %v309, 0
    %v459 = vsel %vm404, %v311, 0
    %v461 = vsel %vm404, %v314, 0
    %v463 = vsel %vm404, %v316, 0
    %v465 = vsel %vm404, %v319, 0
    %v467 = vsel %vm404, %v321, 0
    %v469 = vsel %vm404, %v324, 0
    %v471 = vsel %vm404, %v326, 0
    %v473 = vsel %vm404, %v329, 0
    %v475 = vsel %vm404, %v331, 0
    %v477 = vsel %vm404, %v334, 0
    %v479 = vsel %vm404, %v336, 0
    %v481 = vsel %vm404, %v339, 0
    %v483 = vsel %vm404, %v341, 0
    %v485 = vsel %vm404, %v344, 0
    %v487 = vsel %vm404, %v346, 0
    %v489 = vsel %vm404, %v349, 0
    %v491 = vsel %vm404, %v351, 0
    %v493 = vsel %vm404, %v354, 0
    %v495 = vsel %vm404, %v356, 0
    %v497 = vsel %vm404, %v359, 0
    %v499 = vsel %vm404, %v361, 0
    %v501 = vsel %vm404, %v364, 0
    %v503 = vsel %vm404, %v366, 0
    %v505 = vsel %vm404, %v369, 0
    %v507 = vsel %vm404, %v371, 0
    %v509 = vsel %vm404, %v374, 0
    %v511 = vsel %vm404, %v376, 0
    %v513 = vsel %vm404, %v379, 0
    %v515 = vsel %vm404, %v381, 0
    %v517 = vsel %vm404, %v384, 0
    %v519 = vsel %vm404, %v386, 0
    %v521 = vsel %vm404, %v389, 0
    %v523 = vsel %vm404, %v391, 0
    %v525 = vsel %vm404, %v394, 0
    %v527 = vsel %vm404, %v396, 0
    %v529 = vsel %vm404, %v399, 0
    %v531 = vsel %vm404, %v401, 0
    %vm533 = vcmask 1043456
    %v535 = vsel %vm533, %v403, 0
    %537 = vmatprep.subr.mxu0 0.0
    %538 = vmatpush1.msra.mxu0 0.0
    %539 = vmatprep.subr.mxu0 0.0
    %540 = vmatpush1.msra.mxu0 0.0
    %541 = vmatprep.subr.mxu0 0.0
    %542 = vmatpush1.msra.mxu0 0.0
    %543 = vmatprep.subr.mxu0 0.0
    %544 = vmatpush1.msra.mxu0 0.0
    %545 = vmatprep.subr.mxu0 0.0
    %546 = vmatpush1.msra.mxu0 0.0
    %547 = vmatprep.subr.mxu0 0.0
    %548 = vmatpush1.msra.mxu0 0.0
    %549 = vmatprep.subr.mxu0 0.0
    %550 = vmatpush1.msra.mxu0 0.0
    %551 = vmatprep.subr.mxu0 0.0
    %552 = vmatpush1.msra.mxu0 0.0
    %553 = vmatprep.subr.mxu0 0.0
    %554 = vmatpush1.msra.mxu0 0.0
    %555 = vmatprep.subr.mxu0 0.0
    %556 = vmatpush1.msra.mxu0 0.0
    %557 = vmatprep.subr.mxu0 0.0
    %558 = vmatpush1.msra.mxu0 0.0
    %559 = vmatprep.subr.mxu0 0.0
    %560 = vmatpush1.msra.mxu0 0.0
    %561 = vmatprep.subr.mxu0 0.0
    %562 = vmatpush1.msra.mxu0 0.0
    %563 = vmatprep.subr.mxu0 0.0
    %564 = vmatpush1.msra.mxu0 0.0
    %565 = vmatprep.subr.mxu0 0.0
    %566 = vmatpush1.msra.mxu0 0.0
    %567 = vmatprep.subr.mxu0 0.0
    %568 = vmatpush1.msra.mxu0 %v535
    %569 = vmatprep.subr.mxu0 0.0
    %570 = vmatpush2.msra.mxu0 0.0
    %571 = vmatprep.subr.mxu0 0.0
    %572 = vmatpush2.msra.mxu0 0.0
    %573 = vmatprep.subr.mxu0 0.0
    %574 = vmatpush2.msra.mxu0 0.0
    %575 = vmatprep.subr.mxu0 0.0
    %576 = vmatpush2.msra.mxu0 0.0
    %577 = vmatprep.subr.mxu0 0.0
    %578 = vmatpush2.msra.mxu0 0.0
    %579 = vmatprep.subr.mxu0 0.0
    %580 = vmatpush2.msra.mxu0 0.0
    %581 = vmatprep.subr.mxu0 0.0
    %582 = vmatpush2.msra.mxu0 0.0
    %583 = vmatprep.subr.mxu0 0.0
    %584 = vmatpush2.msra.mxu0 0.0
    %585 = vmatprep.subr.mxu0 0.0
    %586 = vmatpush2.msra.mxu0 0.0
    %587 = vmatprep.subr.mxu0 0.0
    %588 = vmatpush2.msra.mxu0 0.0
    %589 = vmatprep.subr.mxu0 0.0
    %590 = vmatpush2.msra.mxu0 0.0
    %591 = vmatprep.subr.mxu0 0.0
    %592 = vmatpush2.msra.mxu0 0.0
    %593 = vmatprep.subr.mxu0 0.0
    %594 = vmatpush2.msra.mxu0 0.0
    %595 = vmatprep.subr.mxu0 0.0
    %596 = vmatpush2.msra.mxu0 0.0
    %597 = vmatprep.subr.mxu0 0.0
    %598 = vmatpush2.msra.mxu0 0.0
    %599 = vmatprep.subr.mxu0 0.0
    %600 = vmatpush2.msra.mxu0 0.0
    %601 = vmatprep.mubr.f32.mxu0 0.0
    %602 = vmatmul.mubr.f32.gmra.mxu0 %v405
    %v603 = vpop.f32.mrf.mxu0
    %v604 = vadd.f32 0.0, %v603
    %v605 = vpop.f32.mrf.mxu0
    %606 = vmatprep.mubr.f32.mxu0 0.0
    %607 = vmatmul.mubr.f32.gmra.mxu0 %v407
    %v608 = vpop.f32.mrf.mxu0
    %v609 = vadd.f32 0.0, %v608
    %v610 = vpop.f32.mrf.mxu0
    %611 = vmatprep.mubr.f32.mxu0 0.0
    %612 = vmatmul.mubr.f32.gmra.mxu0 %v409
    %v613 = vpop.f32.mrf.mxu0
    %v614 = vadd.f32 0.0, %v613
    %v615 = vpop.f32.mrf.mxu0
    %616 = vmatprep.mubr.f32.mxu0 0.0
    %617 = vmatmul.mubr.f32.gmra.mxu0 %v411
    %v618 = vpop.f32.mrf.mxu0
    %v619 = vadd.f32 0.0, %v618
    %v620 = vpop.f32.mrf.mxu0
    %621 = vmatprep.mubr.f32.mxu0 0.0
    %622 = vmatmul.mubr.f32.gmra.mxu0 %v413
    %v623 = vpop.f32.mrf.mxu0
    %v624 = vadd.f32 0.0, %v623
    %v625 = vpop.f32.mrf.mxu0
    %626 = vmatprep.mubr.f32.mxu0 0.0
    %627 = vmatmul.mubr.f32.gmra.mxu0 %v415
    %v628 = vpop.f32.mrf.mxu0
    %v629 = vadd.f32 0.0, %v628
    %v630 = vpop.f32.mrf.mxu0
    %631 = vmatprep.mubr.f32.mxu0 0.0
    %632 = vmatmul.mubr.f32.gmra.mxu0 %v417
    %v633 = vpop.f32.mrf.mxu0
    %v634 = vadd.f32 0.0, %v633
    %v635 = vpop.f32.mrf.mxu0
    %636 = vmatprep.mubr.f32.mxu0 0.0
    %637 = vmatmul.mubr.f32.gmra.mxu0 %v419
    %v638 = vpop.f32.mrf.mxu0
    %v639 = vadd.f32 0.0, %v638
    %v640 = vpop.f32.mrf.mxu0
    %641 = vmatprep.mubr.f32.mxu0 0.0
    %642 = vmatmul.mubr.f32.gmra.mxu0 %v421
    %v643 = vpop.f32.mrf.mxu0
    %v644 = vadd.f32 0.0, %v643
    %v645 = vpop.f32.mrf.mxu0
    %646 = vmatprep.mubr.f32.mxu0 0.0
    %647 = vmatmul.mubr.f32.gmra.mxu0 %v423
    %v648 = vpop.f32.mrf.mxu0
    %v649 = vadd.f32 0.0, %v648
    %v650 = vpop.f32.mrf.mxu0
    %651 = vmatprep.mubr.f32.mxu0 0.0
    %652 = vmatmul.mubr.f32.gmra.mxu0 %v425
    %v653 = vpop.f32.mrf.mxu0
    %v654 = vadd.f32 0.0, %v653
    %v655 = vpop.f32.mrf.mxu0
    %656 = vmatprep.mubr.f32.mxu0 0.0
    %657 = vmatmul.mubr.f32.gmra.mxu0 %v427
    %v658 = vpop.f32.mrf.mxu0
    %v659 = vadd.f32 0.0, %v658
    %v660 = vpop.f32.mrf.mxu0
    %661 = vmatprep.mubr.f32.mxu0 0.0
    %662 = vmatmul.mubr.f32.gmra.mxu0 %v429
    %v663 = vpop.f32.mrf.mxu0
    %v664 = vadd.f32 0.0, %v663
    %v665 = vpop.f32.mrf.mxu0
    %666 = vmatprep.mubr.f32.mxu0 0.0
    %667 = vmatmul.mubr.f32.gmra.mxu0 %v431
    %v668 = vpop.f32.mrf.mxu0
    %v669 = vadd.f32 0.0, %v668
    %v670 = vpop.f32.mrf.mxu0
    %671 = vmatprep.mubr.f32.mxu0 0.0
    %672 = vmatmul.mubr.f32.gmra.mxu0 %v433
    %v673 = vpop.f32.mrf.mxu0
    %v674 = vadd.f32 0.0, %v673
    %v675 = vpop.f32.mrf.mxu0
    %676 = vmatprep.mubr.f32.mxu0 0.0
    %677 = vmatmul.mubr.f32.gmra.mxu0 %v435
    %v678 = vpop.f32.mrf.mxu0
    %v679 = vadd.f32 0.0, %v678
    %v680 = vpop.f32.mrf.mxu0
    %681 = vmatprep.mubr.f32.mxu0 0.0
    %682 = vmatmul.mubr.f32.gmra.mxu0 %v437
    %v683 = vpop.f32.mrf.mxu0
    %v684 = vadd.f32 0.0, %v683
    %v685 = vpop.f32.mrf.mxu0
    %686 = vmatprep.mubr.f32.mxu0 0.0
    %687 = vmatmul.mubr.f32.gmra.mxu0 %v439
    %v688 = vpop.f32.mrf.mxu0
    %v689 = vadd.f32 0.0, %v688
    %v690 = vpop.f32.mrf.mxu0
    %691 = vmatprep.mubr.f32.mxu0 0.0
    %692 = vmatmul.mubr.f32.gmra.mxu0 %v441
    %v693 = vpop.f32.mrf.mxu0
    %v694 = vadd.f32 0.0, %v693
    %v695 = vpop.f32.mrf.mxu0
    %696 = vmatprep.mubr.f32.mxu0 0.0
    %697 = vmatmul.mubr.f32.gmra.mxu0 %v443
    %v698 = vpop.f32.mrf.mxu0
    %v699 = vadd.f32 0.0, %v698
    %v700 = vpop.f32.mrf.mxu0
    %701 = vmatprep.mubr.f32.mxu0 0.0
    %702 = vmatmul.mubr.f32.gmra.mxu0 %v445
    %v703 = vpop.f32.mrf.mxu0
    %v704 = vadd.f32 0.0, %v703
    %v705 = vpop.f32.mrf.mxu0
    %706 = vmatprep.mubr.f32.mxu0 0.0
    %707 = vmatmul.mubr.f32.gmra.mxu0 %v447
    %v708 = vpop.f32.mrf.mxu0
    %v709 = vadd.f32 0.0, %v708
    %v710 = vpop.f32.mrf.mxu0
    %711 = vmatprep.mubr.f32.mxu0 0.0
    %712 = vmatmul.mubr.f32.gmra.mxu0 %v449
    %v713 = vpop.f32.mrf.mxu0
    %v714 = vadd.f32 0.0, %v713
    %v715 = vpop.f32.mrf.mxu0
    %716 = vmatprep.mubr.f32.mxu0 0.0
    %717 = vmatmul.mubr.f32.gmra.mxu0 %v451
    %v718 = vpop.f32.mrf.mxu0
    %v719 = vadd.f32 0.0, %v718
    %v720 = vpop.f32.mrf.mxu0
    %721 = vmatprep.mubr.f32.mxu0 0.0
    %722 = vmatmul.mubr.f32.gmra.mxu0 %v453
    %v723 = vpop.f32.mrf.mxu0
    %v724 = vadd.f32 0.0, %v723
    %v725 = vpop.f32.mrf.mxu0
    %726 = vmatprep.mubr.f32.mxu0 0.0
    %727 = vmatmul.mubr.f32.gmra.mxu0 %v455
    %v728 = vpop.f32.mrf.mxu0
    %v729 = vadd.f32 0.0, %v728
    %v730 = vpop.f32.mrf.mxu0
    %731 = vmatprep.mubr.f32.mxu0 0.0
    %732 = vmatmul.mubr.f32.gmra.mxu0 %v457
    %v733 = vpop.f32.mrf.mxu0
    %v734 = vadd.f32 0.0, %v733
    %v735 = vpop.f32.mrf.mxu0
    %736 = vmatprep.mubr.f32.mxu0 0.0
    %737 = vmatmul.mubr.f32.gmra.mxu0 %v459
    %v738 = vpop.f32.mrf.mxu0
    %v739 = vadd.f32 0.0, %v738
    %v740 = vpop.f32.mrf.mxu0
    %741 = vmatprep.mubr.f32.mxu0 0.0
    %742 = vmatmul.mubr.f32.gmra.mxu0 %v461
    %v743 = vpop.f32.mrf.mxu0
    %v744 = vadd.f32 0.0, %v743
    %v745 = vpop.f32.mrf.mxu0
    %746 = vmatprep.mubr.f32.mxu0 0.0
    %747 = vmatmul.mubr.f32.gmra.mxu0 %v463
    %v748 = vpop.f32.mrf.mxu0
    %v749 = vadd.f32 0.0, %v748
    %v750 = vpop.f32.mrf.mxu0
    %751 = vmatprep.mubr.f32.mxu0 0.0
    %752 = vmatmul.mubr.f32.gmra.mxu0 %v465
    %v753 = vpop.f32.mrf.mxu0
    %v754 = vadd.f32 0.0, %v753
    %v755 = vpop.f32.mrf.mxu0
    %756 = vmatprep.mubr.f32.mxu0 0.0
    %757 = vmatmul.mubr.f32.gmra.mxu0 %v467
    %v758 = vpop.f32.mrf.mxu0
    %v759 = vadd.f32 0.0, %v758
    %v760 = vpop.f32.mrf.mxu0
    %761 = vmatprep.mubr.f32.mxu0 0.0
    %762 = vmatmul.mubr.f32.gmra.mxu0 %v469
    %v763 = vpop.f32.mrf.mxu0
    %v764 = vadd.f32 0.0, %v763
    %v765 = vpop.f32.mrf.mxu0
    %766 = vmatprep.mubr.f32.mxu0 0.0
    %767 = vmatmul.mubr.f32.gmra.mxu0 %v471
    %v768 = vpop.f32.mrf.mxu0
    %v769 = vadd.f32 0.0, %v768
    %v770 = vpop.f32.mrf.mxu0
    %771 = vmatprep.mubr.f32.mxu0 0.0
    %772 = vmatmul.mubr.f32.gmra.mxu0 %v473
    %v773 = vpop.f32.mrf.mxu0
    %v774 = vadd.f32 0.0, %v773
    %v775 = vpop.f32.mrf.mxu0
    %776 = vmatprep.mubr.f32.mxu0 0.0
    %777 = vmatmul.mubr.f32.gmra.mxu0 %v475
    %v778 = vpop.f32.mrf.mxu0
    %v779 = vadd.f32 0.0, %v778
    %v780 = vpop.f32.mrf.mxu0
    %781 = vmatprep.mubr.f32.mxu0 0.0
    %782 = vmatmul.mubr.f32.gmra.mxu0 %v477
    %v783 = vpop.f32.mrf.mxu0
    %v784 = vadd.f32 0.0, %v783
    %v785 = vpop.f32.mrf.mxu0
    %786 = vmatprep.mubr.f32.mxu0 0.0
    %787 = vmatmul.mubr.f32.gmra.mxu0 %v479
    %v788 = vpop.f32.mrf.mxu0
    %v789 = vadd.f32 0.0, %v788
    %v790 = vpop.f32.mrf.mxu0
    %791 = vmatprep.mubr.f32.mxu0 0.0
    %792 = vmatmul.mubr.f32.gmra.mxu0 %v481
    %v793 = vpop.f32.mrf.mxu0
    %v794 = vadd.f32 0.0, %v793
    %v795 = vpop.f32.mrf.mxu0
    %796 = vmatprep.mubr.f32.mxu0 0.0
    %797 = vmatmul.mubr.f32.gmra.mxu0 %v483
    %v798 = vpop.f32.mrf.mxu0
    %v799 = vadd.f32 0.0, %v798
    %v800 = vpop.f32.mrf.mxu0
    %801 = vmatprep.mubr.f32.mxu0 0.0
    %802 = vmatmul.mubr.f32.gmra.mxu0 %v485
    %v803 = vpop.f32.mrf.mxu0
    %v804 = vadd.f32 0.0, %v803
    %v805 = vpop.f32.mrf.mxu0
    %806 = vmatprep.mubr.f32.mxu0 0.0
    %807 = vmatmul.mubr.f32.gmra.mxu0 %v487
    %v808 = vpop.f32.mrf.mxu0
    %v809 = vadd.f32 0.0, %v808
    %v810 = vpop.f32.mrf.mxu0
    %811 = vmatprep.mubr.f32.mxu0 0.0
    %812 = vmatmul.mubr.f32.gmra.mxu0 %v489
    %v813 = vpop.f32.mrf.mxu0
    %v814 = vadd.f32 0.0, %v813
    %v815 = vpop.f32.mrf.mxu0
    %816 = vmatprep.mubr.f32.mxu0 0.0
    %817 = vmatmul.mubr.f32.gmra.mxu0 %v491
    %v818 = vpop.f32.mrf.mxu0
    %v819 = vadd.f32 0.0, %v818
    %v820 = vpop.f32.mrf.mxu0
    %821 = vmatprep.mubr.f32.mxu0 0.0
    %822 = vmatmul.mubr.f32.gmra.mxu0 %v493
    %v823 = vpop.f32.mrf.mxu0
    %v824 = vadd.f32 0.0, %v823
    %v825 = vpop.f32.mrf.mxu0
    %826 = vmatprep.mubr.f32.mxu0 0.0
    %827 = vmatmul.mubr.f32.gmra.mxu0 %v495
    %v828 = vpop.f32.mrf.mxu0
    %v829 = vadd.f32 0.0, %v828
    %v830 = vpop.f32.mrf.mxu0
    %831 = vmatprep.mubr.f32.mxu0 0.0
    %832 = vmatmul.mubr.f32.gmra.mxu0 %v497
    %v833 = vpop.f32.mrf.mxu0
    %v834 = vadd.f32 0.0, %v833
    %v835 = vpop.f32.mrf.mxu0
    %836 = vmatprep.mubr.f32.mxu0 0.0
    %837 = vmatmul.mubr.f32.gmra.mxu0 %v499
    %v838 = vpop.f32.mrf.mxu0
    %v839 = vadd.f32 0.0, %v838
    %v840 = vpop.f32.mrf.mxu0
    %841 = vmatprep.mubr.f32.mxu0 0.0
    %842 = vmatmul.mubr.f32.gmra.mxu0 %v501
    %v843 = vpop.f32.mrf.mxu0
    %v844 = vadd.f32 0.0, %v843
    %v845 = vpop.f32.mrf.mxu0
    %846 = vmatprep.mubr.f32.mxu0 0.0
    %847 = vmatmul.mubr.f32.gmra.mxu0 %v503
    %v848 = vpop.f32.mrf.mxu0
    %v849 = vadd.f32 0.0, %v848
    %v850 = vpop.f32.mrf.mxu0
    %851 = vmatprep.mubr.f32.mxu0 0.0
    %852 = vmatmul.mubr.f32.gmra.mxu0 %v505
    %v853 = vpop.f32.mrf.mxu0
    %v854 = vadd.f32 0.0, %v853
    %v855 = vpop.f32.mrf.mxu0
    %856 = vmatprep.mubr.f32.mxu0 0.0
    %857 = vmatmul.mubr.f32.gmra.mxu0 %v507
    %v858 = vpop.f32.mrf.mxu0
    %v859 = vadd.f32 0.0, %v858
    %v860 = vpop.f32.mrf.mxu0
    %861 = vmatprep.mubr.f32.mxu0 0.0
    %862 = vmatmul.mubr.f32.gmra.mxu0 %v509
    %v863 = vpop.f32.mrf.mxu0
    %v864 = vadd.f32 0.0, %v863
    %v865 = vpop.f32.mrf.mxu0
    %866 = vmatprep.mubr.f32.mxu0 0.0
    %867 = vmatmul.mubr.f32.gmra.mxu0 %v511
    %v868 = vpop.f32.mrf.mxu0
    %v869 = vadd.f32 0.0, %v868
    %v870 = vpop.f32.mrf.mxu0
    %871 = vmatprep.mubr.f32.mxu0 0.0
    %872 = vmatmul.mubr.f32.gmra.mxu0 %v513
    %v873 = vpop.f32.mrf.mxu0
    %v874 = vadd.f32 0.0, %v873
    %v875 = vpop.f32.mrf.mxu0
    %876 = vmatprep.mubr.f32.mxu0 0.0
    %877 = vmatmul.mubr.f32.gmra.mxu0 %v515
    %v878 = vpop.f32.mrf.mxu0
    %v879 = vadd.f32 0.0, %v878
    %v880 = vpop.f32.mrf.mxu0
    %881 = vmatprep.mubr.f32.mxu0 0.0
    %882 = vmatmul.mubr.f32.gmra.mxu0 %v517
    %v883 = vpop.f32.mrf.mxu0
    %v884 = vadd.f32 0.0, %v883
    %v885 = vpop.f32.mrf.mxu0
    %886 = vmatprep.mubr.f32.mxu0 0.0
    %887 = vmatmul.mubr.f32.gmra.mxu0 %v519
    %v888 = vpop.f32.mrf.mxu0
    %v889 = vadd.f32 0.0, %v888
    %v890 = vpop.f32.mrf.mxu0
    %891 = vmatprep.mubr.f32.mxu0 0.0
    %892 = vmatmul.mubr.f32.gmra.mxu0 %v521
    %v893 = vpop.f32.mrf.mxu0
    %v894 = vadd.f32 0.0, %v893
    %v895 = vpop.f32.mrf.mxu0
    %896 = vmatprep.mubr.f32.mxu0 0.0
    %897 = vmatmul.mubr.f32.gmra.mxu0 %v523
    %v898 = vpop.f32.mrf.mxu0
    %v899 = vadd.f32 0.0, %v898
    %v900 = vpop.f32.mrf.mxu0
    %901 = vmatprep.mubr.f32.mxu0 0.0
    %902 = vmatmul.mubr.f32.gmra.mxu0 %v525
    %v903 = vpop.f32.mrf.mxu0
    %v904 = vadd.f32 0.0, %v903
    %v905 = vpop.f32.mrf.mxu0
    %906 = vmatprep.mubr.f32.mxu0 0.0
    %907 = vmatmul.mubr.f32.gmra.mxu0 %v527
    %v908 = vpop.f32.mrf.mxu0
    %v909 = vadd.f32 0.0, %v908
    %v910 = vpop.f32.mrf.mxu0
    %911 = vmatprep.mubr.f32.mxu0 0.0
    %912 = vmatmul.mubr.f32.gmra.mxu0 %v529
    %v913 = vpop.f32.mrf.mxu0
    %v914 = vadd.f32 0.0, %v913
    %v915 = vpop.f32.mrf.mxu0
    %916 = vmatprep.mubr.f32.mxu0 0.0
    %917 = vmatmul.mubr.f32.gmra.mxu0 %v531
    %v918 = vpop.f32.mrf.mxu0
    %v919 = vadd.f32 0.0, %v918
    %v920 = vpop.f32.mrf.mxu0
    %921 = vdwg.mxu0
    %v922 = vsel %vm404, %v36, 0
    %v924 = vsel %vm404, %v37, 0
    %v926 = vsel %vm404, %v39, 0
    %v928 = vsel %vm404, %v40, 0
    %v930 = vsel %vm404, %v42, 0
    %v932 = vsel %vm404, %v43, 0
    %v934 = vsel %vm404, %v45, 0
    %v936 = vsel %vm404, %v46, 0
    %v938 = vsel %vm404, %v48, 0
    %v940 = vsel %vm404, %v49, 0
    %v942 = vsel %vm404, %v51, 0
    %v944 = vsel %vm404, %v52, 0
    %v946 = vsel %vm404, %v54, 0
    %v948 = vsel %vm404, %v55, 0
    %v950 = vsel %vm404, %v57, 0
    %v952 = vsel %vm404, %v58, 0
    %v954 = vsel %vm404, %v60, 0
    %v956 = vsel %vm404, %v61, 0
    %v958 = vsel %vm404, %v63, 0
    %v960 = vsel %vm404, %v64, 0
    %v962 = vsel %vm404, %v66, 0
    %v964 = vsel %vm404, %v67, 0
    %v966 = vsel %vm404, %v69, 0
    %v968 = vsel %vm404, %v70, 0
    %v970 = vsel %vm404, %v72, 0
    %v972 = vsel %vm404, %v73, 0
    %v974 = vsel %vm404, %v75, 0
    %v976 = vsel %vm404, %v76, 0
    %v978 = vsel %vm404, %v78, 0
    %v980 = vsel %vm404, %v79, 0
    %v982 = vsel %vm404, %v81, 0
    %v984 = vsel %vm404, %v82, 0
    %v986 = vsel %vm404, %v90, 0
    %v988 = vsel %vm404, %v91, 0
    %v990 = vsel %vm404, %v93, 0
    %v992 = vsel %vm404, %v94, 0
    %v994 = vsel %vm404, %v96, 0
    %v996 = vsel %vm404, %v97, 0
    %v998 = vsel %vm404, %v99, 0
    %v1000 = vsel %vm404, %v100, 0
    %v1002 = vsel %vm404, %v102, 0
    %v1004 = vsel %vm404, %v103, 0
    %v1006 = vsel %vm404, %v105, 0
    %v1008 = vsel %vm404, %v106, 0
    %v1010 = vsel %vm404, %v108, 0
    %v1012 = vsel %vm404, %v109, 0
    %v1014 = vsel %vm404, %v111, 0
    %v1016 = vsel %vm404, %v112, 0
    %v1018 = vsel %vm404, %v114, 0
    %v1020 = vsel %vm404, %v115, 0
    %v1022 = vsel %vm404, %v117, 0
    %v1024 = vsel %vm404, %v118, 0
    %v1026 = vsel %vm404, %v120, 0
    %v1028 = vsel %vm404, %v121, 0
    %v1030 = vsel %vm404, %v123, 0
    %v1032 = vsel %vm404, %v124, 0
    %v1034 = vsel %vm404, %v126, 0
    %v1036 = vsel %vm404, %v127, 0
    %v1038 = vsel %vm404, %v129, 0
    %v1040 = vsel %vm404, %v130, 0
    %v1042 = vsel %vm404, %v132, 0
    %v1044 = vsel %vm404, %v133, 0
    %v1046 = vsel %vm404, %v135, 0
    %v1048 = vsel %vm404, %v136, 0
    %v1051 = vsel %vm533, %v144, 0
    %1053 = vmatprep.subr.mxu0 0.0
    %1054 = vmatpush1.msra.mxu0 0.0
    %1055 = vmatprep.subr.mxu0 0.0
    %1056 = vmatpush1.msra.mxu0 0.0
    %1057 = vmatprep.subr.mxu0 0.0
    %1058 = vmatpush1.msra.mxu0 0.0
    %1059 = vmatprep.subr.mxu0 0.0
    %1060 = vmatpush1.msra.mxu0 0.0
    %1061 = vmatprep.subr.mxu0 0.0
    %1062 = vmatpush1.msra.mxu0 0.0
    %1063 = vmatprep.subr.mxu0 0.0
    %1064 = vmatpush1.msra.mxu0 0.0
    %1065 = vmatprep.subr.mxu0 0.0
    %1066 = vmatpush1.msra.mxu0 0.0
    %1067 = vmatprep.subr.mxu0 0.0
    %1068 = vmatpush1.msra.mxu0 0.0
    %1069 = vmatprep.subr.mxu0 0.0
    %1070 = vmatpush1.msra.mxu0 0.0
    %1071 = vmatprep.subr.mxu0 0.0
    %1072 = vmatpush1.msra.mxu0 0.0
    %1073 = vmatprep.subr.mxu0 0.0
    %1074 = vmatpush1.msra.mxu0 0.0
    %1075 = vmatprep.subr.mxu0 0.0
    %1076 = vmatpush1.msra.mxu0 0.0
    %1077 = vmatprep.subr.mxu0 0.0
    %1078 = vmatpush1.msra.mxu0 0.0
    %1079 = vmatprep.subr.mxu0 0.0
    %1080 = vmatpush1.msra.mxu0 0.0
    %1081 = vmatprep.subr.mxu0 0.0
    %1082 = vmatpush1.msra.mxu0 0.0
    %1083 = vmatprep.subr.mxu0 0.0
    %1084 = vmatpush1.msra.mxu0 %v1051
    %1085 = vmatprep.subr.mxu0 0.0
    %1086 = vmatpush2.msra.mxu0 0.0
    %1087 = vmatprep.subr.mxu0 0.0
    %1088 = vmatpush2.msra.mxu0 0.0
    %1089 = vmatprep.subr.mxu0 0.0
    %1090 = vmatpush2.msra.mxu0 0.0
    %1091 = vmatprep.subr.mxu0 0.0
    %1092 = vmatpush2.msra.mxu0 0.0
    %1093 = vmatprep.subr.mxu0 0.0
    %1094 = vmatpush2.msra.mxu0 0.0
    %1095 = vmatprep.subr.mxu0 0.0
    %1096 = vmatpush2.msra.mxu0 0.0
    %1097 = vmatprep.subr.mxu0 0.0
    %1098 = vmatpush2.msra.mxu0 0.0
    %1099 = vmatprep.subr.mxu0 0.0
    %1100 = vmatpush2.msra.mxu0 0.0
    %1101 = vmatprep.subr.mxu0 0.0
    %1102 = vmatpush2.msra.mxu0 0.0
    %1103 = vmatprep.subr.mxu0 0.0
    %1104 = vmatpush2.msra.mxu0 0.0
    %1105 = vmatprep.subr.mxu0 0.0
    %1106 = vmatpush2.msra.mxu0 0.0
    %1107 = vmatprep.subr.mxu0 0.0
    %1108 = vmatpush2.msra.mxu0 0.0
    %1109 = vmatprep.subr.mxu0 0.0
    %1110 = vmatpush2.msra.mxu0 0.0
    %1111 = vmatprep.subr.mxu0 0.0
    %1112 = vmatpush2.msra.mxu0 0.0
    %1113 = vmatprep.subr.mxu0 0.0
    %1114 = vmatpush2.msra.mxu0 0.0
    %1115 = vmatprep.subr.mxu0 0.0
    %1116 = vmatpush2.msra.mxu0 0.0
    %1117 = vmatprep.mubr.f32.mxu0 0.0
    %1118 = vmatmul.mubr.f32.gmra.mxu0 %v922
    %v1119 = vpop.f32.mrf.mxu0
    %v1120 = vadd.f32 %v604, %v1119
    %v1121 = vpop.f32.mrf.mxu0
    %1122 = vmatprep.mubr.f32.mxu0 0.0
    %1123 = vmatmul.mubr.f32.gmra.mxu0 %v924
    %v1124 = vpop.f32.mrf.mxu0
    %v1125 = vadd.f32 %v609, %v1124
    %v1126 = vpop.f32.mrf.mxu0
    %1127 = vmatprep.mubr.f32.mxu0 0.0
    %1128 = vmatmul.mubr.f32.gmra.mxu0 %v926
    %v1129 = vpop.f32.mrf.mxu0
    %v1130 = vadd.f32 %v614, %v1129
    %v1131 = vpop.f32.mrf.mxu0
    %1132 = vmatprep.mubr.f32.mxu0 0.0
    %1133 = vmatmul.mubr.f32.gmra.mxu0 %v928
    %v1134 = vpop.f32.mrf.mxu0
    %v1135 = vadd.f32 %v619, %v1134
    %v1136 = vpop.f32.mrf.mxu0
    %1137 = vmatprep.mubr.f32.mxu0 0.0
    %1138 = vmatmul.mubr.f32.gmra.mxu0 %v930
    %v1139 = vpop.f32.mrf.mxu0
    %v1140 = vadd.f32 %v624, %v1139
    %v1141 = vpop.f32.mrf.mxu0
    %1142 = vmatprep.mubr.f32.mxu0 0.0
    %1143 = vmatmul.mubr.f32.gmra.mxu0 %v932
    %v1144 = vpop.f32.mrf.mxu0
    %v1145 = vadd.f32 %v629, %v1144
    %v1146 = vpop.f32.mrf.mxu0
    %1147 = vmatprep.mubr.f32.mxu0 0.0
    %1148 = vmatmul.mubr.f32.gmra.mxu0 %v934
    %v1149 = vpop.f32.mrf.mxu0
    %v1150 = vadd.f32 %v634, %v1149
    %v1151 = vpop.f32.mrf.mxu0
    %1152 = vmatprep.mubr.f32.mxu0 0.0
    %1153 = vmatmul.mubr.f32.gmra.mxu0 %v936
    %v1154 = vpop.f32.mrf.mxu0
    %v1155 = vadd.f32 %v639, %v1154
    %v1156 = vpop.f32.mrf.mxu0
    %1157 = vmatprep.mubr.f32.mxu0 0.0
    %1158 = vmatmul.mubr.f32.gmra.mxu0 %v938
    %v1159 = vpop.f32.mrf.mxu0
    %v1160 = vadd.f32 %v644, %v1159
    %v1161 = vpop.f32.mrf.mxu0
    %1162 = vmatprep.mubr.f32.mxu0 0.0
    %1163 = vmatmul.mubr.f32.gmra.mxu0 %v940
    %v1164 = vpop.f32.mrf.mxu0
    %v1165 = vadd.f32 %v649, %v1164
    %v1166 = vpop.f32.mrf.mxu0
    %1167 = vmatprep.mubr.f32.mxu0 0.0
    %1168 = vmatmul.mubr.f32.gmra.mxu0 %v942
    %v1169 = vpop.f32.mrf.mxu0
    %v1170 = vadd.f32 %v654, %v1169
    %v1171 = vpop.f32.mrf.mxu0
    %1172 = vmatprep.mubr.f32.mxu0 0.0
    %1173 = vmatmul.mubr.f32.gmra.mxu0 %v944
    %v1174 = vpop.f32.mrf.mxu0
    %v1175 = vadd.f32 %v659, %v1174
    %v1176 = vpop.f32.mrf.mxu0
    %1177 = vmatprep.mubr.f32.mxu0 0.0
    %1178 = vmatmul.mubr.f32.gmra.mxu0 %v946
    %v1179 = vpop.f32.mrf.mxu0
    %v1180 = vadd.f32 %v664, %v1179
    %v1181 = vpop.f32.mrf.mxu0
    %1182 = vmatprep.mubr.f32.mxu0 0.0
    %1183 = vmatmul.mubr.f32.gmra.mxu0 %v948
    %v1184 = vpop.f32.mrf.mxu0
    %v1185 = vadd.f32 %v669, %v1184
    %v1186 = vpop.f32.mrf.mxu0
    %1187 = vmatprep.mubr.f32.mxu0 0.0
    %1188 = vmatmul.mubr.f32.gmra.mxu0 %v950
    %v1189 = vpop.f32.mrf.mxu0
    %v1190 = vadd.f32 %v674, %v1189
    %v1191 = vpop.f32.mrf.mxu0
    %1192 = vmatprep.mubr.f32.mxu0 0.0
    %1193 = vmatmul.mubr.f32.gmra.mxu0 %v952
    %v1194 = vpop.f32.mrf.mxu0
    %v1195 = vadd.f32 %v679, %v1194
    %v1196 = vpop.f32.mrf.mxu0
    %1197 = vmatprep.mubr.f32.mxu0 0.0
    %1198 = vmatmul.mubr.f32.gmra.mxu0 %v954
    %v1199 = vpop.f32.mrf.mxu0
    %v1200 = vadd.f32 %v684, %v1199
    %v1201 = vpop.f32.mrf.mxu0
    %1202 = vmatprep.mubr.f32.mxu0 0.0
    %1203 = vmatmul.mubr.f32.gmra.mxu0 %v956
    %v1204 = vpop.f32.mrf.mxu0
    %v1205 = vadd.f32 %v689, %v1204
    %v1206 = vpop.f32.mrf.mxu0
    %1207 = vmatprep.mubr.f32.mxu0 0.0
    %1208 = vmatmul.mubr.f32.gmra.mxu0 %v958
    %v1209 = vpop.f32.mrf.mxu0
    %v1210 = vadd.f32 %v694, %v1209
    %v1211 = vpop.f32.mrf.mxu0
    %1212 = vmatprep.mubr.f32.mxu0 0.0
    %1213 = vmatmul.mubr.f32.gmra.mxu0 %v960
    %v1214 = vpop.f32.mrf.mxu0
    %v1215 = vadd.f32 %v699, %v1214
    %v1216 = vpop.f32.mrf.mxu0
    %1217 = vmatprep.mubr.f32.mxu0 0.0
    %1218 = vmatmul.mubr.f32.gmra.mxu0 %v962
    %v1219 = vpop.f32.mrf.mxu0
    %v1220 = vadd.f32 %v704, %v1219
    %v1221 = vpop.f32.mrf.mxu0
    %1222 = vmatprep.mubr.f32.mxu0 0.0
    %1223 = vmatmul.mubr.f32.gmra.mxu0 %v964
    %v1224 = vpop.f32.mrf.mxu0
    %v1225 = vadd.f32 %v709, %v1224
    %v1226 = vpop.f32.mrf.mxu0
    %1227 = vmatprep.mubr.f32.mxu0 0.0
    %1228 = vmatmul.mubr.f32.gmra.mxu0 %v966
    %v1229 = vpop.f32.mrf.mxu0
    %v1230 = vadd.f32 %v714, %v1229
    %v1231 = vpop.f32.mrf.mxu0
    %1232 = vmatprep.mubr.f32.mxu0 0.0
    %1233 = vmatmul.mubr.f32.gmra.mxu0 %v968
    %v1234 = vpop.f32.mrf.mxu0
    %v1235 = vadd.f32 %v719, %v1234
    %v1236 = vpop.f32.mrf.mxu0
    %1237 = vmatprep.mubr.f32.mxu0 0.0
    %1238 = vmatmul.mubr.f32.gmra.mxu0 %v970
    %v1239 = vpop.f32.mrf.mxu0
    %v1240 = vadd.f32 %v724, %v1239
    %v1241 = vpop.f32.mrf.mxu0
    %1242 = vmatprep.mubr.f32.mxu0 0.0
    %1243 = vmatmul.mubr.f32.gmra.mxu0 %v972
    %v1244 = vpop.f32.mrf.mxu0
    %v1245 = vadd.f32 %v729, %v1244
    %v1246 = vpop.f32.mrf.mxu0
    %1247 = vmatprep.mubr.f32.mxu0 0.0
    %1248 = vmatmul.mubr.f32.gmra.mxu0 %v974
    %v1249 = vpop.f32.mrf.mxu0
    %v1250 = vadd.f32 %v734, %v1249
    %v1251 = vpop.f32.mrf.mxu0
    %1252 = vmatprep.mubr.f32.mxu0 0.0
    %1253 = vmatmul.mubr.f32.gmra.mxu0 %v976
    %v1254 = vpop.f32.mrf.mxu0
    %v1255 = vadd.f32 %v739, %v1254
    %v1256 = vpop.f32.mrf.mxu0
    %1257 = vmatprep.mubr.f32.mxu0 0.0
    %1258 = vmatmul.mubr.f32.gmra.mxu0 %v978
    %v1259 = vpop.f32.mrf.mxu0
    %v1260 = vadd.f32 %v744, %v1259
    %v1261 = vpop.f32.mrf.mxu0
    %1262 = vmatprep.mubr.f32.mxu0 0.0
    %1263 = vmatmul.mubr.f32.gmra.mxu0 %v980
    %v1264 = vpop.f32.mrf.mxu0
    %v1265 = vadd.f32 %v749, %v1264
    %v1266 = vpop.f32.mrf.mxu0
    %1267 = vmatprep.mubr.f32.mxu0 0.0
    %1268 = vmatmul.mubr.f32.gmra.mxu0 %v982
    %v1269 = vpop.f32.mrf.mxu0
    %v1270 = vadd.f32 %v754, %v1269
    %v1271 = vpop.f32.mrf.mxu0
    %1272 = vmatprep.mubr.f32.mxu0 0.0
    %1273 = vmatmul.mubr.f32.gmra.mxu0 %v984
    %v1274 = vpop.f32.mrf.mxu0
    %v1275 = vadd.f32 %v759, %v1274
    %v1276 = vpop.f32.mrf.mxu0
    %1277 = vmatprep.mubr.f32.mxu0 0.0
    %1278 = vmatmul.mubr.f32.gmra.mxu0 %v986
    %v1279 = vpop.f32.mrf.mxu0
    %v1280 = vadd.f32 %v764, %v1279
    %v1281 = vpop.f32.mrf.mxu0
    %1282 = vmatprep.mubr.f32.mxu0 0.0
    %1283 = vmatmul.mubr.f32.gmra.mxu0 %v988
    %v1284 = vpop.f32.mrf.mxu0
    %v1285 = vadd.f32 %v769, %v1284
    %v1286 = vpop.f32.mrf.mxu0
    %1287 = vmatprep.mubr.f32.mxu0 0.0
    %1288 = vmatmul.mubr.f32.gmra.mxu0 %v990
    %v1289 = vpop.f32.mrf.mxu0
    %v1290 = vadd.f32 %v774, %v1289
    %v1291 = vpop.f32.mrf.mxu0
    %1292 = vmatprep.mubr.f32.mxu0 0.0
    %1293 = vmatmul.mubr.f32.gmra.mxu0 %v992
    %v1294 = vpop.f32.mrf.mxu0
    %v1295 = vadd.f32 %v779, %v1294
    %v1296 = vpop.f32.mrf.mxu0
    %1297 = vmatprep.mubr.f32.mxu0 0.0
    %1298 = vmatmul.mubr.f32.gmra.mxu0 %v994
    %v1299 = vpop.f32.mrf.mxu0
    %v1300 = vadd.f32 %v784, %v1299
    %v1301 = vpop.f32.mrf.mxu0
    %1302 = vmatprep.mubr.f32.mxu0 0.0
    %1303 = vmatmul.mubr.f32.gmra.mxu0 %v996
    %v1304 = vpop.f32.mrf.mxu0
    %v1305 = vadd.f32 %v789, %v1304
    %v1306 = vpop.f32.mrf.mxu0
    %1307 = vmatprep.mubr.f32.mxu0 0.0
    %1308 = vmatmul.mubr.f32.gmra.mxu0 %v998
    %v1309 = vpop.f32.mrf.mxu0
    %v1310 = vadd.f32 %v794, %v1309
    %v1311 = vpop.f32.mrf.mxu0
    %1312 = vmatprep.mubr.f32.mxu0 0.0
    %1313 = vmatmul.mubr.f32.gmra.mxu0 %v1000
    %v1314 = vpop.f32.mrf.mxu0
    %v1315 = vadd.f32 %v799, %v1314
    %v1316 = vpop.f32.mrf.mxu0
    %1317 = vmatprep.mubr.f32.mxu0 0.0
    %1318 = vmatmul.mubr.f32.gmra.mxu0 %v1002
    %v1319 = vpop.f32.mrf.mxu0
    %v1320 = vadd.f32 %v804, %v1319
    %v1321 = vpop.f32.mrf.mxu0
    %1322 = vmatprep.mubr.f32.mxu0 0.0
    %1323 = vmatmul.mubr.f32.gmra.mxu0 %v1004
    %v1324 = vpop.f32.mrf.mxu0
    %v1325 = vadd.f32 %v809, %v1324
    %v1326 = vpop.f32.mrf.mxu0
    %1327 = vmatprep.mubr.f32.mxu0 0.0
    %1328 = vmatmul.mubr.f32.gmra.mxu0 %v1006
    %v1329 = vpop.f32.mrf.mxu0
    %v1330 = vadd.f32 %v814, %v1329
    %v1331 = vpop.f32.mrf.mxu0
    %1332 = vmatprep.mubr.f32.mxu0 0.0
    %1333 = vmatmul.mubr.f32.gmra.mxu0 %v1008
    %v1334 = vpop.f32.mrf.mxu0
    %v1335 = vadd.f32 %v819, %v1334
    %v1336 = vpop.f32.mrf.mxu0
    %1337 = vmatprep.mubr.f32.mxu0 0.0
    %1338 = vmatmul.mubr.f32.gmra.mxu0 %v1010
    %v1339 = vpop.f32.mrf.mxu0
    %v1340 = vadd.f32 %v824, %v1339
    %v1341 = vpop.f32.mrf.mxu0
    %1342 = vmatprep.mubr.f32.mxu0 0.0
    %1343 = vmatmul.mubr.f32.gmra.mxu0 %v1012
    %v1344 = vpop.f32.mrf.mxu0
    %v1345 = vadd.f32 %v829, %v1344
    %v1346 = vpop.f32.mrf.mxu0
    %1347 = vmatprep.mubr.f32.mxu0 0.0
    %1348 = vmatmul.mubr.f32.gmra.mxu0 %v1014
    %v1349 = vpop.f32.mrf.mxu0
    %v1350 = vadd.f32 %v834, %v1349
    %v1351 = vpop.f32.mrf.mxu0
    %1352 = vmatprep.mubr.f32.mxu0 0.0
    %1353 = vmatmul.mubr.f32.gmra.mxu0 %v1016
    %v1354 = vpop.f32.mrf.mxu0
    %v1355 = vadd.f32 %v839, %v1354
    %v1356 = vpop.f32.mrf.mxu0
    %1357 = vmatprep.mubr.f32.mxu0 0.0
    %1358 = vmatmul.mubr.f32.gmra.mxu0 %v1018
    %v1359 = vpop.f32.mrf.mxu0
    %v1360 = vadd.f32 %v844, %v1359
    %v1361 = vpop.f32.mrf.mxu0
    %1362 = vmatprep.mubr.f32.mxu0 0.0
    %1363 = vmatmul.mubr.f32.gmra.mxu0 %v1020
    %v1364 = vpop.f32.mrf.mxu0
    %v1365 = vadd.f32 %v849, %v1364
    %v1366 = vpop.f32.mrf.mxu0
    %1367 = vmatprep.mubr.f32.mxu0 0.0
    %1368 = vmatmul.mubr.f32.gmra.mxu0 %v1022
    %v1369 = vpop.f32.mrf.mxu0
    %v1370 = vadd.f32 %v854, %v1369
    %v1371 = vpop.f32.mrf.mxu0
    %1372 = vmatprep.mubr.f32.mxu0 0.0
    %1373 = vmatmul.mubr.f32.gmra.mxu0 %v1024
    %v1374 = vpop.f32.mrf.mxu0
    %v1375 = vadd.f32 %v859, %v1374
    %v1376 = vpop.f32.mrf.mxu0
    %1377 = vmatprep.mubr.f32.mxu0 0.0
    %1378 = vmatmul.mubr.f32.gmra.mxu0 %v1026
    %v1379 = vpop.f32.mrf.mxu0
    %v1380 = vadd.f32 %v864, %v1379
    %v1381 = vpop.f32.mrf.mxu0
    %1382 = vmatprep.mubr.f32.mxu0 0.0
    %1383 = vmatmul.mubr.f32.gmra.mxu0 %v1028
    %v1384 = vpop.f32.mrf.mxu0
    %v1385 = vadd.f32 %v869, %v1384
    %v1386 = vpop.f32.mrf.mxu0
    %1387 = vmatprep.mubr.f32.mxu0 0.0
    %1388 = vmatmul.mubr.f32.gmra.mxu0 %v1030
    %v1389 = vpop.f32.mrf.mxu0
    %v1390 = vadd.f32 %v874, %v1389
    %v1391 = vpop.f32.mrf.mxu0
    %1392 = vmatprep.mubr.f32.mxu0 0.0
    %1393 = vmatmul.mubr.f32.gmra.mxu0 %v1032
    %v1394 = vpop.f32.mrf.mxu0
    %v1395 = vadd.f32 %v879, %v1394
    %v1396 = vpop.f32.mrf.mxu0
    %1397 = vmatprep.mubr.f32.mxu0 0.0
    %1398 = vmatmul.mubr.f32.gmra.mxu0 %v1034
    %v1399 = vpop.f32.mrf.mxu0
    %v1400 = vadd.f32 %v884, %v1399
    %v1401 = vpop.f32.mrf.mxu0
    %1402 = vmatprep.mubr.f32.mxu0 0.0
    %1403 = vmatmul.mubr.f32.gmra.mxu0 %v1036
    %v1404 = vpop.f32.mrf.mxu0
    %v1405 = vadd.f32 %v889, %v1404
    %v1406 = vpop.f32.mrf.mxu0
    %1407 = vmatprep.mubr.f32.mxu0 0.0
    %1408 = vmatmul.mubr.f32.gmra.mxu0 %v1038
    %v1409 = vpop.f32.mrf.mxu0
    %v1410 = vadd.f32 %v894, %v1409
    %v1411 = vpop.f32.mrf.mxu0
    %1412 = vmatprep.mubr.f32.mxu0 0.0
    %1413 = vmatmul.mubr.f32.gmra.mxu0 %v1040
    %v1414 = vpop.f32.mrf.mxu0
    %v1415 = vadd.f32 %v899, %v1414
    %v1416 = vpop.f32.mrf.mxu0
    %1417 = vmatprep.mubr.f32.mxu0 0.0
    %1418 = vmatmul.mubr.f32.gmra.mxu0 %v1042
    %v1419 = vpop.f32.mrf.mxu0
    %v1420 = vadd.f32 %v904, %v1419
    %v1421 = vpop.f32.mrf.mxu0
    %1422 = vmatprep.mubr.f32.mxu0 0.0
    %1423 = vmatmul.mubr.f32.gmra.mxu0 %v1044
    %v1424 = vpop.f32.mrf.mxu0
    %v1425 = vadd.f32 %v909, %v1424
    %v1426 = vpop.f32.mrf.mxu0
    %1427 = vmatprep.mubr.f32.mxu0 0.0
    %1428 = vmatmul.mubr.f32.gmra.mxu0 %v1046
    %v1429 = vpop.f32.mrf.mxu0
    %v1430 = vadd.f32 %v914, %v1429
    %v1431 = vpop.f32.mrf.mxu0
    %1432 = vmatprep.mubr.f32.mxu0 0.0
    %1433 = vmatmul.mubr.f32.gmra.mxu0 %v1048
    %v1434 = vpop.f32.mrf.mxu0
    %v1435 = vadd.f32 %v919, %v1434
    %v1436 = vpop.f32.mrf.mxu0
    %1437 = vdwg.mxu0
    %vm1438 = vcmask 1045504
    %v1439 = vrot.slane %v36, 2
    %v1440 = vrot.slane %v37, 2
    %v1441 = vsel %vm1438, %v1439, %v1440
    %v1442 = vrot.slane %v38, 2
    %v1443 = vsel %vm1438, %v1440, %v1442
    %v1444 = vrot.slane %v39, 2
    %v1445 = vrot.slane %v40, 2
    %v1446 = vsel %vm1438, %v1444, %v1445
    %v1447 = vrot.slane %v41, 2
    %v1448 = vsel %vm1438, %v1445, %v1447
    %v1449 = vrot.slane %v42, 2
    %v1450 = vrot.slane %v43, 2
    %v1451 = vsel %vm1438, %v1449, %v1450
    %v1452 = vrot.slane %v44, 2
    %v1453 = vsel %vm1438, %v1450, %v1452
    %v1454 = vrot.slane %v45, 2
    %v1455 = vrot.slane %v46, 2
    %v1456 = vsel %vm1438, %v1454, %v1455
    %v1457 = vrot.slane %v47, 2
    %v1458 = vsel %vm1438, %v1455, %v1457
    %v1459 = vrot.slane %v48, 2
    %v1460 = vrot.slane %v49, 2
    %v1461 = vsel %vm1438, %v1459, %v1460
    %v1462 = vrot.slane %v50, 2
    %v1463 = vsel %vm1438, %v1460, %v1462
    %v1464 = vrot.slane %v51, 2
    %v1465 = vrot.slane %v52, 2
    %v1466 = vsel %vm1438, %v1464, %v1465
    %v1467 = vrot.slane %v53, 2
    %v1468 = vsel %vm1438, %v1465, %v1467
    %v1469 = vrot.slane %v54, 2
    %v1470 = vrot.slane %v55, 2
    %v1471 = vsel %vm1438, %v1469, %v1470
    %v1472 = vrot.slane %v56, 2
    %v1473 = vsel %vm1438, %v1470, %v1472
    %v1474 = vrot.slane %v57, 2
    %v1475 = vrot.slane %v58, 2
    %v1476 = vsel %vm1438, %v1474, %v1475
    %v1477 = vrot.slane %v59, 2
    %v1478 = vsel %vm1438, %v1475, %v1477
    %v1479 = vrot.slane %v60, 2
    %v1480 = vrot.slane %v61, 2
    %v1481 = vsel %vm1438, %v1479, %v1480
    %v1482 = vrot.slane %v62, 2
    %v1483 = vsel %vm1438, %v1480, %v1482
    %v1484 = vrot.slane %v63, 2
    %v1485 = vrot.slane %v64, 2
    %v1486 = vsel %vm1438, %v1484, %v1485
    %v1487 = vrot.slane %v65, 2
    %v1488 = vsel %vm1438, %v1485, %v1487
    %v1489 = vrot.slane %v66, 2
    %v1490 = vrot.slane %v67, 2
    %v1491 = vsel %vm1438, %v1489, %v1490
    %v1492 = vrot.slane %v68, 2
    %v1493 = vsel %vm1438, %v1490, %v1492
    %v1494 = vrot.slane %v69, 2
    %v1495 = vrot.slane %v70, 2
    %v1496 = vsel %vm1438, %v1494, %v1495
    %v1497 = vrot.slane %v71, 2
    %v1498 = vsel %vm1438, %v1495, %v1497
    %v1499 = vrot.slane %v72, 2
    %v1500 = vrot.slane %v73, 2
    %v1501 = vsel %vm1438, %v1499, %v1500
    %v1502 = vrot.slane %v74, 2
    %v1503 = vsel %vm1438, %v1500, %v1502
    %v1504 = vrot.slane %v75, 2
    %v1505 = vrot.slane %v76, 2
    %v1506 = vsel %vm1438, %v1504, %v1505
    %v1507 = vrot.slane %v77, 2
    %v1508 = vsel %vm1438, %v1505, %v1507
    %v1509 = vrot.slane %v78, 2
    %v1510 = vrot.slane %v79, 2
    %v1511 = vsel %vm1438, %v1509, %v1510
    %v1512 = vrot.slane %v80, 2
    %v1513 = vsel %vm1438, %v1510, %v1512
    %v1514 = vrot.slane %v81, 2
    %v1515 = vrot.slane %v82, 2
    %v1516 = vsel %vm1438, %v1514, %v1515
    %v1517 = vrot.slane %v83, 2
    %v1518 = vsel %vm1438, %v1515, %v1517
    %v1519 = vrot.slane %v90, 2
    %v1520 = vrot.slane %v91, 2
    %v1521 = vsel %vm1438, %v1519, %v1520
    %v1522 = vrot.slane %v92, 2
    %v1523 = vsel %vm1438, %v1520, %v1522
    %v1524 = vrot.slane %v93, 2
    %v1525 = vrot.slane %v94, 2
    %v1526 = vsel %vm1438, %v1524, %v1525
    %v1527 = vrot.slane %v95, 2
    %v1528 = vsel %vm1438, %v1525, %v1527
    %v1529 = vrot.slane %v96, 2
    %v1530 = vrot.slane %v97, 2
    %v1531 = vsel %vm1438, %v1529, %v1530
    %v1532 = vrot.slane %v98, 2
    %v1533 = vsel %vm1438, %v1530, %v1532
    %v1534 = vrot.slane %v99, 2
    %v1535 = vrot.slane %v100, 2
    %v1536 = vsel %vm1438, %v1534, %v1535
    %v1537 = vrot.slane %v101, 2
    %v1538 = vsel %vm1438, %v1535, %v1537
    %v1539 = vrot.slane %v102, 2
    %v1540 = vrot.slane %v103, 2
    %v1541 = vsel %vm1438, %v1539, %v1540
    %v1542 = vrot.slane %v104, 2
    %v1543 = vsel %vm1438, %v1540, %v1542
    %v1544 = vrot.slane %v105, 2
    %v1545 = vrot.slane %v106, 2
    %v1546 = vsel %vm1438, %v1544, %v1545
    %v1547 = vrot.slane %v107, 2
    %v1548 = vsel %vm1438, %v1545, %v1547
    %v1549 = vrot.slane %v108, 2
    %v1550 = vrot.slane %v109, 2
    %v1551 = vsel %vm1438, %v1549, %v1550
    %v1552 = vrot.slane %v110, 2
    %v1553 = vsel %vm1438, %v1550, %v1552
    %v1554 = vrot.slane %v111, 2
    %v1555 = vrot.slane %v112, 2
    %v1556 = vsel %vm1438, %v1554, %v1555
    %v1557 = vrot.slane %v113, 2
    %v1558 = vsel %vm1438, %v1555, %v1557
    %v1559 = vrot.slane %v114, 2
    %v1560 = vrot.slane %v115, 2
    %v1561 = vsel %vm1438, %v1559, %v1560
    %v1562 = vrot.slane %v116, 2
    %v1563 = vsel %vm1438, %v1560, %v1562
    %v1564 = vrot.slane %v117, 2
    %v1565 = vrot.slane %v118, 2
    %v1566 = vsel %vm1438, %v1564, %v1565
    %v1567 = vrot.slane %v119, 2
    %v1568 = vsel %vm1438, %v1565, %v1567
    %v1569 = vrot.slane %v120, 2
    %v1570 = vrot.slane %v121, 2
    %v1571 = vsel %vm1438, %v1569, %v1570
    %v1572 = vrot.slane %v122, 2
    %v1573 = vsel %vm1438, %v1570, %v1572
    %v1574 = vrot.slane %v123, 2
    %v1575 = vrot.slane %v124, 2
    %v1576 = vsel %vm1438, %v1574, %v1575
    %v1577 = vrot.slane %v125, 2
    %v1578 = vsel %vm1438, %v1575, %v1577
    %v1579 = vrot.slane %v126, 2
    %v1580 = vrot.slane %v127, 2
    %v1581 = vsel %vm1438, %v1579, %v1580
    %v1582 = vrot.slane %v128, 2
    %v1583 = vsel %vm1438, %v1580, %v1582
    %v1584 = vrot.slane %v129, 2
    %v1585 = vrot.slane %v130, 2
    %v1586 = vsel %vm1438, %v1584, %v1585
    %v1587 = vrot.slane %v131, 2
    %v1588 = vsel %vm1438, %v1585, %v1587
    %v1589 = vrot.slane %v132, 2
    %v1590 = vrot.slane %v133, 2
    %v1591 = vsel %vm1438, %v1589, %v1590
    %v1592 = vrot.slane %v134, 2
    %v1593 = vsel %vm1438, %v1590, %v1592
    %v1594 = vrot.slane %v135, 2
    %v1595 = vrot.slane %v136, 2
    %v1596 = vsel %vm1438, %v1594, %v1595
    %v1597 = vrot.slane %v137, 2
    %v1598 = vsel %vm1438, %v1595, %v1597
    %s1599 = scalar_lea.vmem %s1, 8
    %v1600 = vld [vmem:[%s1599] sm:$0xf]
    %v1601 = vsel %vm404, %v1441, 0
    %v1603 = vsel %vm404, %v1443, 0
    %v1605 = vsel %vm404, %v1446, 0
    %v1607 = vsel %vm404, %v1448, 0
    %v1609 = vsel %vm404, %v1451, 0
    %v1611 = vsel %vm404, %v1453, 0
    %v1613 = vsel %vm404, %v1456, 0
    %v1615 = vsel %vm404, %v1458, 0
    %v1617 = vsel %vm404, %v1461, 0
    %v1619 = vsel %vm404, %v1463, 0
    %v1621 = vsel %vm404, %v1466, 0
    %v1623 = vsel %vm404, %v1468, 0
    %v1625 = vsel %vm404, %v1471, 0
    %v1627 = vsel %vm404, %v1473, 0
    %v1629 = vsel %vm404, %v1476, 0
    %v1631 = vsel %vm404, %v1478, 0
    %v1633 = vsel %vm404, %v1481, 0
    %v1635 = vsel %vm404, %v1483, 0
    %v1637 = vsel %vm404, %v1486, 0
    %v1639 = vsel %vm404, %v1488, 0
    %v1641 = vsel %vm404, %v1491, 0
    %v1643 = vsel %vm404, %v1493, 0
    %v1645 = vsel %vm404, %v1496, 0
    %v1647 = vsel %vm404, %v1498, 0
    %v1649 = vsel %vm404, %v1501, 0
    %v1651 = vsel %vm404, %v1503, 0
    %v1653 = vsel %vm404, %v1506, 0
    %v1655 = vsel %vm404, %v1508, 0
    %v1657 = vsel %vm404, %v1511, 0
    %v1659 = vsel %vm404, %v1513, 0
    %v1661 = vsel %vm404, %v1516, 0
    %v1663 = vsel %vm404, %v1518, 0
    %v1665 = vsel %vm404, %v1521, 0
    %v1667 = vsel %vm404, %v1523, 0
    %v1669 = vsel %vm404, %v1526, 0
    %v1671 = vsel %vm404, %v1528, 0
    %v1673 = vsel %vm404, %v1531, 0
    %v1675 = vsel %vm404, %v1533, 0
    %v1677 = vsel %vm404, %v1536, 0
    %v1679 = vsel %vm404, %v1538, 0
    %v1681 = vsel %vm404, %v1541, 0
    %v1683 = vsel %vm404, %v1543, 0
    %v1685 = vsel %vm404, %v1546, 0
    %v1687 = vsel %vm404, %v1548, 0
    %v1689 = vsel %vm404, %v1551, 0
    %v1691 = vsel %vm404, %v1553, 0
    %v1693 = vsel %vm404, %v1556, 0
    %v1695 = vsel %vm404, %v1558, 0
    %v1697 = vsel %vm404, %v1561, 0
    %v1699 = vsel %vm404, %v1563, 0
    %v1701 = vsel %vm404, %v1566, 0
    %v1703 = vsel %vm404, %v1568, 0
    %v1705 = vsel %vm404, %v1571, 0
    %v1707 = vsel %vm404, %v1573, 0
    %v1709 = vsel %vm404, %v1576, 0
    %v1711 = vsel %vm404, %v1578, 0
    %v1713 = vsel %vm404, %v1581, 0
    %v1715 = vsel %vm404, %v1583, 0
    %v1717 = vsel %vm404, %v1586, 0
    %v1719 = vsel %vm404, %v1588, 0
    %v1721 = vsel %vm404, %v1591, 0
    %v1723 = vsel %vm404, %v1593, 0
    %v1725 = vsel %vm404, %v1596, 0
    %v1727 = vsel %vm404, %v1598, 0
    %v1730 = vsel %vm533, %v1600, 0
    %1732 = vmatprep.subr.mxu0 0.0
    %1733 = vmatpush1.msra.mxu0 0.0
    %1734 = vmatprep.subr.mxu0 0.0
    %1735 = vmatpush1.msra.mxu0 0.0
    %1736 = vmatprep.subr.mxu0 0.0
    %1737 = vmatpush1.msra.mxu0 0.0
    %1738 = vmatprep.subr.mxu0 0.0
    %1739 = vmatpush1.msra.mxu0 0.0
    %1740 = vmatprep.subr.mxu0 0.0
    %1741 = vmatpush1.msra.mxu0 0.0
    %1742 = vmatprep.subr.mxu0 0.0
    %1743 = vmatpush1.msra.mxu0 0.0
    %1744 = vmatprep.subr.mxu0 0.0
    %1745 = vmatpush1.msra.mxu0 0.0
    %1746 = vmatprep.subr.mxu0 0.0
    %1747 = vmatpush1.msra.mxu0 0.0
    %1748 = vmatprep.subr.mxu0 0.0
    %1749 = vmatpush1.msra.mxu0 0.0
    %1750 = vmatprep.subr.mxu0 0.0
    %1751 = vmatpush1.msra.mxu0 0.0
    %1752 = vmatprep.subr.mxu0 0.0
    %1753 = vmatpush1.msra.mxu0 0.0
    %1754 = vmatprep.subr.mxu0 0.0
    %1755 = vmatpush1.msra.mxu0 0.0
    %1756 = vmatprep.subr.mxu0 0.0
    %1757 = vmatpush1.msra.mxu0 0.0
    %1758 = vmatprep.subr.mxu0 0.0
    %1759 = vmatpush1.msra.mxu0 0.0
    %1760 = vmatprep.subr.mxu0 0.0
    %1761 = vmatpush1.msra.mxu0 0.0
    %1762 = vmatprep.subr.mxu0 0.0
    %1763 = vmatpush1.msra.mxu0 %v1730
    %1764 = vmatprep.subr.mxu0 0.0
    %1765 = vmatpush2.msra.mxu0 0.0
    %1766 = vmatprep.subr.mxu0 0.0
    %1767 = vmatpush2.msra.mxu0 0.0
    %1768 = vmatprep.subr.mxu0 0.0
    %1769 = vmatpush2.msra.mxu0 0.0
    %1770 = vmatprep.subr.mxu0 0.0
    %1771 = vmatpush2.msra.mxu0 0.0
    %1772 = vmatprep.subr.mxu0 0.0
    %1773 = vmatpush2.msra.mxu0 0.0
    %1774 = vmatprep.subr.mxu0 0.0
    %1775 = vmatpush2.msra.mxu0 0.0
    %1776 = vmatprep.subr.mxu0 0.0
    %1777 = vmatpush2.msra.mxu0 0.0
    %1778 = vmatprep.subr.mxu0 0.0
    %1779 = vmatpush2.msra.mxu0 0.0
    %1780 = vmatprep.subr.mxu0 0.0
    %1781 = vmatpush2.msra.mxu0 0.0
    %1782 = vmatprep.subr.mxu0 0.0
    %1783 = vmatpush2.msra.mxu0 0.0
    %1784 = vmatprep.subr.mxu0 0.0
    %1785 = vmatpush2.msra.mxu0 0.0
    %1786 = vmatprep.subr.mxu0 0.0
    %1787 = vmatpush2.msra.mxu0 0.0
    %1788 = vmatprep.subr.mxu0 0.0
    %1789 = vmatpush2.msra.mxu0 0.0
    %1790 = vmatprep.subr.mxu0 0.0
    %1791 = vmatpush2.msra.mxu0 0.0
    %1792 = vmatprep.subr.mxu0 0.0
    %1793 = vmatpush2.msra.mxu0 0.0
    %1794 = vmatprep.subr.mxu0 0.0
    %1795 = vmatpush2.msra.mxu0 0.0
    %1796 = vmatprep.mubr.f32.mxu0 0.0
    %1797 = vmatmul.mubr.f32.gmra.mxu0 %v1601
    %v1798 = vpop.f32.mrf.mxu0
    %v1799 = vadd.f32 0.0, %v1798
    %v1800 = vpop.f32.mrf.mxu0
    %1801 = vmatprep.mubr.f32.mxu0 0.0
    %1802 = vmatmul.mubr.f32.gmra.mxu0 %v1603
    %v1803 = vpop.f32.mrf.mxu0
    %v1804 = vadd.f32 0.0, %v1803
    %v1805 = vpop.f32.mrf.mxu0
    %1806 = vmatprep.mubr.f32.mxu0 0.0
    %1807 = vmatmul.mubr.f32.gmra.mxu0 %v1605
    %v1808 = vpop.f32.mrf.mxu0
    %v1809 = vadd.f32 0.0, %v1808
    %v1810 = vpop.f32.mrf.mxu0
    %1811 = vmatprep.mubr.f32.mxu0 0.0
    %1812 = vmatmul.mubr.f32.gmra.mxu0 %v1607
    %v1813 = vpop.f32.mrf.mxu0
    %v1814 = vadd.f32 0.0, %v1813
    %v1815 = vpop.f32.mrf.mxu0
    %1816 = vmatprep.mubr.f32.mxu0 0.0
    %1817 = vmatmul.mubr.f32.gmra.mxu0 %v1609
    %v1818 = vpop.f32.mrf.mxu0
    %v1819 = vadd.f32 0.0, %v1818
    %v1820 = vpop.f32.mrf.mxu0
    %1821 = vmatprep.mubr.f32.mxu0 0.0
    %1822 = vmatmul.mubr.f32.gmra.mxu0 %v1611
    %v1823 = vpop.f32.mrf.mxu0
    %v1824 = vadd.f32 0.0, %v1823
    %v1825 = vpop.f32.mrf.mxu0
    %1826 = vmatprep.mubr.f32.mxu0 0.0
    %1827 = vmatmul.mubr.f32.gmra.mxu0 %v1613
    %v1828 = vpop.f32.mrf.mxu0
    %v1829 = vadd.f32 0.0, %v1828
    %v1830 = vpop.f32.mrf.mxu0
    %1831 = vmatprep.mubr.f32.mxu0 0.0
    %1832 = vmatmul.mubr.f32.gmra.mxu0 %v1615
    %v1833 = vpop.f32.mrf.mxu0
    %v1834 = vadd.f32 0.0, %v1833
    %v1835 = vpop.f32.mrf.mxu0
    %1836 = vmatprep.mubr.f32.mxu0 0.0
    %1837 = vmatmul.mubr.f32.gmra.mxu0 %v1617
    %v1838 = vpop.f32.mrf.mxu0
    %v1839 = vadd.f32 0.0, %v1838
    %v1840 = vpop.f32.mrf.mxu0
    %1841 = vmatprep.mubr.f32.mxu0 0.0
    %1842 = vmatmul.mubr.f32.gmra.mxu0 %v1619
    %v1843 = vpop.f32.mrf.mxu0
    %v1844 = vadd.f32 0.0, %v1843
    %v1845 = vpop.f32.mrf.mxu0
    %1846 = vmatprep.mubr.f32.mxu0 0.0
    %1847 = vmatmul.mubr.f32.gmra.mxu0 %v1621
    %v1848 = vpop.f32.mrf.mxu0
    %v1849 = vadd.f32 0.0, %v1848
    %v1850 = vpop.f32.mrf.mxu0
    %1851 = vmatprep.mubr.f32.mxu0 0.0
    %1852 = vmatmul.mubr.f32.gmra.mxu0 %v1623
    %v1853 = vpop.f32.mrf.mxu0
    %v1854 = vadd.f32 0.0, %v1853
    %v1855 = vpop.f32.mrf.mxu0
    %1856 = vmatprep.mubr.f32.mxu0 0.0
    %1857 = vmatmul.mubr.f32.gmra.mxu0 %v1625
    %v1858 = vpop.f32.mrf.mxu0
    %v1859 = vadd.f32 0.0, %v1858
    %v1860 = vpop.f32.mrf.mxu0
    %1861 = vmatprep.mubr.f32.mxu0 0.0
    %1862 = vmatmul.mubr.f32.gmra.mxu0 %v1627
    %v1863 = vpop.f32.mrf.mxu0
    %v1864 = vadd.f32 0.0, %v1863
    %v1865 = vpop.f32.mrf.mxu0
    %1866 = vmatprep.mubr.f32.mxu0 0.0
    %1867 = vmatmul.mubr.f32.gmra.mxu0 %v1629
    %v1868 = vpop.f32.mrf.mxu0
    %v1869 = vadd.f32 0.0, %v1868
    %v1870 = vpop.f32.mrf.mxu0
    %1871 = vmatprep.mubr.f32.mxu0 0.0
    %1872 = vmatmul.mubr.f32.gmra.mxu0 %v1631
    %v1873 = vpop.f32.mrf.mxu0
    %v1874 = vadd.f32 0.0, %v1873
    %v1875 = vpop.f32.mrf.mxu0
    %1876 = vmatprep.mubr.f32.mxu0 0.0
    %1877 = vmatmul.mubr.f32.gmra.mxu0 %v1633
    %v1878 = vpop.f32.mrf.mxu0
    %v1879 = vadd.f32 0.0, %v1878
    %v1880 = vpop.f32.mrf.mxu0
    %1881 = vmatprep.mubr.f32.mxu0 0.0
    %1882 = vmatmul.mubr.f32.gmra.mxu0 %v1635
    %v1883 = vpop.f32.mrf.mxu0
    %v1884 = vadd.f32 0.0, %v1883
    %v1885 = vpop.f32.mrf.mxu0
    %1886 = vmatprep.mubr.f32.mxu0 0.0
    %1887 = vmatmul.mubr.f32.gmra.mxu0 %v1637
    %v1888 = vpop.f32.mrf.mxu0
    %v1889 = vadd.f32 0.0, %v1888
    %v1890 = vpop.f32.mrf.mxu0
    %1891 = vmatprep.mubr.f32.mxu0 0.0
    %1892 = vmatmul.mubr.f32.gmra.mxu0 %v1639
    %v1893 = vpop.f32.mrf.mxu0
    %v1894 = vadd.f32 0.0, %v1893
    %v1895 = vpop.f32.mrf.mxu0
    %1896 = vmatprep.mubr.f32.mxu0 0.0
    %1897 = vmatmul.mubr.f32.gmra.mxu0 %v1641
    %v1898 = vpop.f32.mrf.mxu0
    %v1899 = vadd.f32 0.0, %v1898
    %v1900 = vpop.f32.mrf.mxu0
    %1901 = vmatprep.mubr.f32.mxu0 0.0
    %1902 = vmatmul.mubr.f32.gmra.mxu0 %v1643
    %v1903 = vpop.f32.mrf.mxu0
    %v1904 = vadd.f32 0.0, %v1903
    %v1905 = vpop.f32.mrf.mxu0
    %1906 = vmatprep.mubr.f32.mxu0 0.0
    %1907 = vmatmul.mubr.f32.gmra.mxu0 %v1645
    %v1908 = vpop.f32.mrf.mxu0
    %v1909 = vadd.f32 0.0, %v1908
    %v1910 = vpop.f32.mrf.mxu0
    %1911 = vmatprep.mubr.f32.mxu0 0.0
    %1912 = vmatmul.mubr.f32.gmra.mxu0 %v1647
    %v1913 = vpop.f32.mrf.mxu0
    %v1914 = vadd.f32 0.0, %v1913
    %v1915 = vpop.f32.mrf.mxu0
    %1916 = vmatprep.mubr.f32.mxu0 0.0
    %1917 = vmatmul.mubr.f32.gmra.mxu0 %v1649
    %v1918 = vpop.f32.mrf.mxu0
    %v1919 = vadd.f32 0.0, %v1918
    %v1920 = vpop.f32.mrf.mxu0
    %1921 = vmatprep.mubr.f32.mxu0 0.0
    %1922 = vmatmul.mubr.f32.gmra.mxu0 %v1651
    %v1923 = vpop.f32.mrf.mxu0
    %v1924 = vadd.f32 0.0, %v1923
    %v1925 = vpop.f32.mrf.mxu0
    %1926 = vmatprep.mubr.f32.mxu0 0.0
    %1927 = vmatmul.mubr.f32.gmra.mxu0 %v1653
    %v1928 = vpop.f32.mrf.mxu0
    %v1929 = vadd.f32 0.0, %v1928
    %v1930 = vpop.f32.mrf.mxu0
    %1931 = vmatprep.mubr.f32.mxu0 0.0
    %1932 = vmatmul.mubr.f32.gmra.mxu0 %v1655
    %v1933 = vpop.f32.mrf.mxu0
    %v1934 = vadd.f32 0.0, %v1933
    %v1935 = vpop.f32.mrf.mxu0
    %1936 = vmatprep.mubr.f32.mxu0 0.0
    %1937 = vmatmul.mubr.f32.gmra.mxu0 %v1657
    %v1938 = vpop.f32.mrf.mxu0
    %v1939 = vadd.f32 0.0, %v1938
    %v1940 = vpop.f32.mrf.mxu0
    %1941 = vmatprep.mubr.f32.mxu0 0.0
    %1942 = vmatmul.mubr.f32.gmra.mxu0 %v1659
    %v1943 = vpop.f32.mrf.mxu0
    %v1944 = vadd.f32 0.0, %v1943
    %v1945 = vpop.f32.mrf.mxu0
    %1946 = vmatprep.mubr.f32.mxu0 0.0
    %1947 = vmatmul.mubr.f32.gmra.mxu0 %v1661
    %v1948 = vpop.f32.mrf.mxu0
    %v1949 = vadd.f32 0.0, %v1948
    %v1950 = vpop.f32.mrf.mxu0
    %1951 = vmatprep.mubr.f32.mxu0 0.0
    %1952 = vmatmul.mubr.f32.gmra.mxu0 %v1663
    %v1953 = vpop.f32.mrf.mxu0
    %v1954 = vadd.f32 0.0, %v1953
    %v1955 = vpop.f32.mrf.mxu0
    %1956 = vmatprep.mubr.f32.mxu0 0.0
    %1957 = vmatmul.mubr.f32.gmra.mxu0 %v1665
    %v1958 = vpop.f32.mrf.mxu0
    %v1959 = vadd.f32 0.0, %v1958
    %v1960 = vpop.f32.mrf.mxu0
    %1961 = vmatprep.mubr.f32.mxu0 0.0
    %1962 = vmatmul.mubr.f32.gmra.mxu0 %v1667
    %v1963 = vpop.f32.mrf.mxu0
    %v1964 = vadd.f32 0.0, %v1963
    %v1965 = vpop.f32.mrf.mxu0
    %1966 = vmatprep.mubr.f32.mxu0 0.0
    %1967 = vmatmul.mubr.f32.gmra.mxu0 %v1669
    %v1968 = vpop.f32.mrf.mxu0
    %v1969 = vadd.f32 0.0, %v1968
    %v1970 = vpop.f32.mrf.mxu0
    %1971 = vmatprep.mubr.f32.mxu0 0.0
    %1972 = vmatmul.mubr.f32.gmra.mxu0 %v1671
    %v1973 = vpop.f32.mrf.mxu0
    %v1974 = vadd.f32 0.0, %v1973
    %v1975 = vpop.f32.mrf.mxu0
    %1976 = vmatprep.mubr.f32.mxu0 0.0
    %1977 = vmatmul.mubr.f32.gmra.mxu0 %v1673
    %v1978 = vpop.f32.mrf.mxu0
    %v1979 = vadd.f32 0.0, %v1978
    %v1980 = vpop.f32.mrf.mxu0
    %1981 = vmatprep.mubr.f32.mxu0 0.0
    %1982 = vmatmul.mubr.f32.gmra.mxu0 %v1675
    %v1983 = vpop.f32.mrf.mxu0
    %v1984 = vadd.f32 0.0, %v1983
    %v1985 = vpop.f32.mrf.mxu0
    %1986 = vmatprep.mubr.f32.mxu0 0.0
    %1987 = vmatmul.mubr.f32.gmra.mxu0 %v1677
    %v1988 = vpop.f32.mrf.mxu0
    %v1989 = vadd.f32 0.0, %v1988
    %v1990 = vpop.f32.mrf.mxu0
    %1991 = vmatprep.mubr.f32.mxu0 0.0
    %1992 = vmatmul.mubr.f32.gmra.mxu0 %v1679
    %v1993 = vpop.f32.mrf.mxu0
    %v1994 = vadd.f32 0.0, %v1993
    %v1995 = vpop.f32.mrf.mxu0
    %1996 = vmatprep.mubr.f32.mxu0 0.0
    %1997 = vmatmul.mubr.f32.gmra.mxu0 %v1681
    %v1998 = vpop.f32.mrf.mxu0
    %v1999 = vadd.f32 0.0, %v1998
    %v2000 = vpop.f32.mrf.mxu0
    %2001 = vmatprep.mubr.f32.mxu0 0.0
    %2002 = vmatmul.mubr.f32.gmra.mxu0 %v1683
    %v2003 = vpop.f32.mrf.mxu0
    %v2004 = vadd.f32 0.0, %v2003
    %v2005 = vpop.f32.mrf.mxu0
    %2006 = vmatprep.mubr.f32.mxu0 0.0
    %2007 = vmatmul.mubr.f32.gmra.mxu0 %v1685
    %v2008 = vpop.f32.mrf.mxu0
    %v2009 = vadd.f32 0.0, %v2008
    %v2010 = vpop.f32.mrf.mxu0
    %2011 = vmatprep.mubr.f32.mxu0 0.0
    %2012 = vmatmul.mubr.f32.gmra.mxu0 %v1687
    %v2013 = vpop.f32.mrf.mxu0
    %v2014 = vadd.f32 0.0, %v2013
    %v2015 = vpop.f32.mrf.mxu0
    %2016 = vmatprep.mubr.f32.mxu0 0.0
    %2017 = vmatmul.mubr.f32.gmra.mxu0 %v1689
    %v2018 = vpop.f32.mrf.mxu0
    %v2019 = vadd.f32 0.0, %v2018
    %v2020 = vpop.f32.mrf.mxu0
    %2021 = vmatprep.mubr.f32.mxu0 0.0
    %2022 = vmatmul.mubr.f32.gmra.mxu0 %v1691
    %v2023 = vpop.f32.mrf.mxu0
    %v2024 = vadd.f32 0.0, %v2023
    %v2025 = vpop.f32.mrf.mxu0
    %2026 = vmatprep.mubr.f32.mxu0 0.0
    %2027 = vmatmul.mubr.f32.gmra.mxu0 %v1693
    %v2028 = vpop.f32.mrf.mxu0
    %v2029 = vadd.f32 0.0, %v2028
    %v2030 = vpop.f32.mrf.mxu0
    %2031 = vmatprep.mubr.f32.mxu0 0.0
    %2032 = vmatmul.mubr.f32.gmra.mxu0 %v1695
    %v2033 = vpop.f32.mrf.mxu0
    %v2034 = vadd.f32 0.0, %v2033
    %v2035 = vpop.f32.mrf.mxu0
    %2036 = vmatprep.mubr.f32.mxu0 0.0
    %2037 = vmatmul.mubr.f32.gmra.mxu0 %v1697
    %v2038 = vpop.f32.mrf.mxu0
    %v2039 = vadd.f32 0.0, %v2038
    %v2040 = vpop.f32.mrf.mxu0
    %2041 = vmatprep.mubr.f32.mxu0 0.0
    %2042 = vmatmul.mubr.f32.gmra.mxu0 %v1699
    %v2043 = vpop.f32.mrf.mxu0
    %v2044 = vadd.f32 0.0, %v2043
    %v2045 = vpop.f32.mrf.mxu0
    %2046 = vmatprep.mubr.f32.mxu0 0.0
    %2047 = vmatmul.mubr.f32.gmra.mxu0 %v1701
    %v2048 = vpop.f32.mrf.mxu0
    %v2049 = vadd.f32 0.0, %v2048
    %v2050 = vpop.f32.mrf.mxu0
    %2051 = vmatprep.mubr.f32.mxu0 0.0
    %2052 = vmatmul.mubr.f32.gmra.mxu0 %v1703
    %v2053 = vpop.f32.mrf.mxu0
    %v2054 = vadd.f32 0.0, %v2053
    %v2055 = vpop.f32.mrf.mxu0
    %2056 = vmatprep.mubr.f32.mxu0 0.0
    %2057 = vmatmul.mubr.f32.gmra.mxu0 %v1705
    %v2058 = vpop.f32.mrf.mxu0
    %v2059 = vadd.f32 0.0, %v2058
    %v2060 = vpop.f32.mrf.mxu0
    %2061 = vmatprep.mubr.f32.mxu0 0.0
    %2062 = vmatmul.mubr.f32.gmra.mxu0 %v1707
    %v2063 = vpop.f32.mrf.mxu0
    %v2064 = vadd.f32 0.0, %v2063
    %v2065 = vpop.f32.mrf.mxu0
    %2066 = vmatprep.mubr.f32.mxu0 0.0
    %2067 = vmatmul.mubr.f32.gmra.mxu0 %v1709
    %v2068 = vpop.f32.mrf.mxu0
    %v2069 = vadd.f32 0.0, %v2068
    %v2070 = vpop.f32.mrf.mxu0
    %2071 = vmatprep.mubr.f32.mxu0 0.0
    %2072 = vmatmul.mubr.f32.gmra.mxu0 %v1711
    %v2073 = vpop.f32.mrf.mxu0
    %v2074 = vadd.f32 0.0, %v2073
    %v2075 = vpop.f32.mrf.mxu0
    %2076 = vmatprep.mubr.f32.mxu0 0.0
    %2077 = vmatmul.mubr.f32.gmra.mxu0 %v1713
    %v2078 = vpop.f32.mrf.mxu0
    %v2079 = vadd.f32 0.0, %v2078
    %v2080 = vpop.f32.mrf.mxu0
    %2081 = vmatprep.mubr.f32.mxu0 0.0
    %2082 = vmatmul.mubr.f32.gmra.mxu0 %v1715
    %v2083 = vpop.f32.mrf.mxu0
    %v2084 = vadd.f32 0.0, %v2083
    %v2085 = vpop.f32.mrf.mxu0
    %2086 = vmatprep.mubr.f32.mxu0 0.0
    %2087 = vmatmul.mubr.f32.gmra.mxu0 %v1717
    %v2088 = vpop.f32.mrf.mxu0
    %v2089 = vadd.f32 0.0, %v2088
    %v2090 = vpop.f32.mrf.mxu0
    %2091 = vmatprep.mubr.f32.mxu0 0.0
    %2092 = vmatmul.mubr.f32.gmra.mxu0 %v1719
    %v2093 = vpop.f32.mrf.mxu0
    %v2094 = vadd.f32 0.0, %v2093
    %v2095 = vpop.f32.mrf.mxu0
    %2096 = vmatprep.mubr.f32.mxu0 0.0
    %2097 = vmatmul.mubr.f32.gmra.mxu0 %v1721
    %v2098 = vpop.f32.mrf.mxu0
    %v2099 = vadd.f32 0.0, %v2098
    %v2100 = vpop.f32.mrf.mxu0
    %2101 = vmatprep.mubr.f32.mxu0 0.0
    %2102 = vmatmul.mubr.f32.gmra.mxu0 %v1723
    %v2103 = vpop.f32.mrf.mxu0
    %v2104 = vadd.f32 0.0, %v2103
    %v2105 = vpop.f32.mrf.mxu0
    %2106 = vmatprep.mubr.f32.mxu0 0.0
    %2107 = vmatmul.mubr.f32.gmra.mxu0 %v1725
    %v2108 = vpop.f32.mrf.mxu0
    %v2109 = vadd.f32 0.0, %v2108
    %v2110 = vpop.f32.mrf.mxu0
    %2111 = vmatprep.mubr.f32.mxu0 0.0
    %2112 = vmatmul.mubr.f32.gmra.mxu0 %v1727
    %v2113 = vpop.f32.mrf.mxu0
    %v2114 = vadd.f32 0.0, %v2113
    %v2115 = vpop.f32.mrf.mxu0
    %2116 = vdwg.mxu0
    %v2117 = vadd.f32 %v1120, %v1799
    %v2118 = vadd.f32 %v1125, %v1804
    %v2119 = vadd.f32 %v1130, %v1809
    %v2120 = vadd.f32 %v1135, %v1814
    %v2121 = vadd.f32 %v1140, %v1819
    %v2122 = vadd.f32 %v1145, %v1824
    %v2123 = vadd.f32 %v1150, %v1829
    %v2124 = vadd.f32 %v1155, %v1834
    %v2125 = vadd.f32 %v1160, %v1839
    %v2126 = vadd.f32 %v1165, %v1844
    %v2127 = vadd.f32 %v1170, %v1849
    %v2128 = vadd.f32 %v1175, %v1854
    %v2129 = vadd.f32 %v1180, %v1859
    %v2130 = vadd.f32 %v1185, %v1864
    %v2131 = vadd.f32 %v1190, %v1869
    %v2132 = vadd.f32 %v1195, %v1874
    %v2133 = vadd.f32 %v1200, %v1879
    %v2134 = vadd.f32 %v1205, %v1884
    %v2135 = vadd.f32 %v1210, %v1889
    %v2136 = vadd.f32 %v1215, %v1894
    %v2137 = vadd.f32 %v1220, %v1899
    %v2138 = vadd.f32 %v1225, %v1904
    %v2139 = vadd.f32 %v1230, %v1909
    %v2140 = vadd.f32 %v1235, %v1914
    %v2141 = vadd.f32 %v1240, %v1919
    %v2142 = vadd.f32 %v1245, %v1924
    %v2143 = vadd.f32 %v1250, %v1929
    %v2144 = vadd.f32 %v1255, %v1934
    %v2145 = vadd.f32 %v1260, %v1939
    %v2146 = vadd.f32 %v1265, %v1944
    %v2147 = vadd.f32 %v1270, %v1949
    %v2148 = vadd.f32 %v1275, %v1954
    %v2149 = vadd.f32 %v1280, %v1959
    %v2150 = vadd.f32 %v1285, %v1964
    %v2151 = vadd.f32 %v1290, %v1969
    %v2152 = vadd.f32 %v1295, %v1974
    %v2153 = vadd.f32 %v1300, %v1979
    %v2154 = vadd.f32 %v1305, %v1984
    %v2155 = vadd.f32 %v1310, %v1989
    %v2156 = vadd.f32 %v1315, %v1994
    %v2157 = vadd.f32 %v1320, %v1999
    %v2158 = vadd.f32 %v1325, %v2004
    %v2159 = vadd.f32 %v1330, %v2009
    %v2160 = vadd.f32 %v1335, %v2014
    %v2161 = vadd.f32 %v1340, %v2019
    %v2162 = vadd.f32 %v1345, %v2024
    %v2163 = vadd.f32 %v1350, %v2029
    %v2164 = vadd.f32 %v1355, %v2034
    %v2165 = vadd.f32 %v1360, %v2039
    %v2166 = vadd.f32 %v1365, %v2044
    %v2167 = vadd.f32 %v1370, %v2049
    %v2168 = vadd.f32 %v1375, %v2054
    %v2169 = vadd.f32 %v1380, %v2059
    %v2170 = vadd.f32 %v1385, %v2064
    %v2171 = vadd.f32 %v1390, %v2069
    %v2172 = vadd.f32 %v1395, %v2074
    %v2173 = vadd.f32 %v1400, %v2079
    %v2174 = vadd.f32 %v1405, %v2084
    %v2175 = vadd.f32 %v1410, %v2089
    %v2176 = vadd.f32 %v1415, %v2094
    %v2177 = vadd.f32 %v1420, %v2099
    %v2178 = vadd.f32 %v1425, %v2104
    %v2179 = vadd.f32 %v1430, %v2109
    %v2180 = vadd.f32 %v1435, %v2114
    %s2181 = scalar_lea.vmem %s1, 12
    %v2182 = vld [vmem:[%s2181] sm:$0xf]
    %v2184 = vsel %vm404, %v84, 0
    %v2187 = vsel %vm404, %v85, 0
    %v2190 = vsel %vm404, %v138, 0
    %v2193 = vsel %vm404, %v139, 0
    %v2196 = vsel %vm533, %v2182, 0
    %2198 = vmatprep.subr.mxu0 0.0
    %2199 = vmatpush1.msra.mxu0 0.0
    %2200 = vmatprep.subr.mxu0 0.0
    %2201 = vmatpush1.msra.mxu0 0.0
    %2202 = vmatprep.subr.mxu0 0.0
    %2203 = vmatpush1.msra.mxu0 0.0
    %2204 = vmatprep.subr.mxu0 0.0
    %2205 = vmatpush1.msra.mxu0 0.0
    %2206 = vmatprep.subr.mxu0 0.0
    %2207 = vmatpush1.msra.mxu0 0.0
    %2208 = vmatprep.subr.mxu0 0.0
    %2209 = vmatpush1.msra.mxu0 0.0
    %2210 = vmatprep.subr.mxu0 0.0
    %2211 = vmatpush1.msra.mxu0 0.0
    %2212 = vmatprep.subr.mxu0 0.0
    %2213 = vmatpush1.msra.mxu0 0.0
    %2214 = vmatprep.subr.mxu0 0.0
    %2215 = vmatpush1.msra.mxu0 0.0
    %2216 = vmatprep.subr.mxu0 0.0
    %2217 = vmatpush1.msra.mxu0 0.0
    %2218 = vmatprep.subr.mxu0 0.0
    %2219 = vmatpush1.msra.mxu0 0.0
    %2220 = vmatprep.subr.mxu0 0.0
    %2221 = vmatpush1.msra.mxu0 0.0
    %2222 = vmatprep.subr.mxu0 0.0
    %2223 = vmatpush1.msra.mxu0 0.0
    %2224 = vmatprep.subr.mxu0 0.0
    %2225 = vmatpush1.msra.mxu0 0.0
    %2226 = vmatprep.subr.mxu0 0.0
    %2227 = vmatpush1.msra.mxu0 0.0
    %2228 = vmatprep.subr.mxu0 0.0
    %2229 = vmatpush1.msra.mxu0 %v2196
    %2230 = vmatprep.subr.mxu0 0.0
    %2231 = vmatpush2.msra.mxu0 0.0
    %2232 = vmatprep.subr.mxu0 0.0
    %2233 = vmatpush2.msra.mxu0 0.0
    %2234 = vmatprep.subr.mxu0 0.0
    %2235 = vmatpush2.msra.mxu0 0.0
    %2236 = vmatprep.subr.mxu0 0.0
    %2237 = vmatpush2.msra.mxu0 0.0
    %2238 = vmatprep.subr.mxu0 0.0
    %2239 = vmatpush2.msra.mxu0 0.0
    %2240 = vmatprep.subr.mxu0 0.0
    %2241 = vmatpush2.msra.mxu0 0.0
    %2242 = vmatprep.subr.mxu0 0.0
    %2243 = vmatpush2.msra.mxu0 0.0
    %2244 = vmatprep.subr.mxu0 0.0
    %2245 = vmatpush2.msra.mxu0 0.0
    %2246 = vmatprep.subr.mxu0 0.0
    %2247 = vmatpush2.msra.mxu0 0.0
    %2248 = vmatprep.subr.mxu0 0.0
    %2249 = vmatpush2.msra.mxu0 0.0
    %2250 = vmatprep.subr.mxu0 0.0
    %2251 = vmatpush2.msra.mxu0 0.0
    %2252 = vmatprep.subr.mxu0 0.0
    %2253 = vmatpush2.msra.mxu0 0.0
    %2254 = vmatprep.subr.mxu0 0.0
    %2255 = vmatpush2.msra.mxu0 0.0
    %2256 = vmatprep.subr.mxu0 0.0
    %2257 = vmatpush2.msra.mxu0 0.0
    %2258 = vmatprep.subr.mxu0 0.0
    %2259 = vmatpush2.msra.mxu0 0.0
    %2260 = vmatprep.subr.mxu0 0.0
    %2261 = vmatpush2.msra.mxu0 0.0
    %2262 = vmatprep.mubr.f32.mxu0 0.0
    %2263 = vmatmul.mubr.f32.gmra.mxu0 %v926
    %v2264 = vpop.f32.mrf.mxu0
    %v2265 = vadd.f32 0.0, %v2264
    %v2266 = vpop.f32.mrf.mxu0
    %2267 = vmatprep.mubr.f32.mxu0 0.0
    %2268 = vmatmul.mubr.f32.gmra.mxu0 %v928
    %v2269 = vpop.f32.mrf.mxu0
    %v2270 = vadd.f32 0.0, %v2269
    %v2271 = vpop.f32.mrf.mxu0
    %2272 = vmatprep.mubr.f32.mxu0 0.0
    %2273 = vmatmul.mubr.f32.gmra.mxu0 %v930
    %v2274 = vpop.f32.mrf.mxu0
    %v2275 = vadd.f32 0.0, %v2274
    %v2276 = vpop.f32.mrf.mxu0
    %2277 = vmatprep.mubr.f32.mxu0 0.0
    %2278 = vmatmul.mubr.f32.gmra.mxu0 %v932
    %v2279 = vpop.f32.mrf.mxu0
    %v2280 = vadd.f32 0.0, %v2279
    %v2281 = vpop.f32.mrf.mxu0
    %2282 = vmatprep.mubr.f32.mxu0 0.0
    %2283 = vmatmul.mubr.f32.gmra.mxu0 %v934
    %v2284 = vpop.f32.mrf.mxu0
    %v2285 = vadd.f32 0.0, %v2284
    %v2286 = vpop.f32.mrf.mxu0
    %2287 = vmatprep.mubr.f32.mxu0 0.0
    %2288 = vmatmul.mubr.f32.gmra.mxu0 %v936
    %v2289 = vpop.f32.mrf.mxu0
    %v2290 = vadd.f32 0.0, %v2289
    %v2291 = vpop.f32.mrf.mxu0
    %2292 = vmatprep.mubr.f32.mxu0 0.0
    %2293 = vmatmul.mubr.f32.gmra.mxu0 %v938
    %v2294 = vpop.f32.mrf.mxu0
    %v2295 = vadd.f32 0.0, %v2294
    %v2296 = vpop.f32.mrf.mxu0
    %2297 = vmatprep.mubr.f32.mxu0 0.0
    %2298 = vmatmul.mubr.f32.gmra.mxu0 %v940
    %v2299 = vpop.f32.mrf.mxu0
    %v2300 = vadd.f32 0.0, %v2299
    %v2301 = vpop.f32.mrf.mxu0
    %2302 = vmatprep.mubr.f32.mxu0 0.0
    %2303 = vmatmul.mubr.f32.gmra.mxu0 %v942
    %v2304 = vpop.f32.mrf.mxu0
    %v2305 = vadd.f32 0.0, %v2304
    %v2306 = vpop.f32.mrf.mxu0
    %2307 = vmatprep.mubr.f32.mxu0 0.0
    %2308 = vmatmul.mubr.f32.gmra.mxu0 %v944
    %v2309 = vpop.f32.mrf.mxu0
    %v2310 = vadd.f32 0.0, %v2309
    %v2311 = vpop.f32.mrf.mxu0
    %2312 = vmatprep.mubr.f32.mxu0 0.0
    %2313 = vmatmul.mubr.f32.gmra.mxu0 %v946
    %v2314 = vpop.f32.mrf.mxu0
    %v2315 = vadd.f32 0.0, %v2314
    %v2316 = vpop.f32.mrf.mxu0
    %2317 = vmatprep.mubr.f32.mxu0 0.0
    %2318 = vmatmul.mubr.f32.gmra.mxu0 %v948
    %v2319 = vpop.f32.mrf.mxu0
    %v2320 = vadd.f32 0.0, %v2319
    %v2321 = vpop.f32.mrf.mxu0
    %2322 = vmatprep.mubr.f32.mxu0 0.0
    %2323 = vmatmul.mubr.f32.gmra.mxu0 %v950
    %v2324 = vpop.f32.mrf.mxu0
    %v2325 = vadd.f32 0.0, %v2324
    %v2326 = vpop.f32.mrf.mxu0
    %2327 = vmatprep.mubr.f32.mxu0 0.0
    %2328 = vmatmul.mubr.f32.gmra.mxu0 %v952
    %v2329 = vpop.f32.mrf.mxu0
    %v2330 = vadd.f32 0.0, %v2329
    %v2331 = vpop.f32.mrf.mxu0
    %2332 = vmatprep.mubr.f32.mxu0 0.0
    %2333 = vmatmul.mubr.f32.gmra.mxu0 %v954
    %v2334 = vpop.f32.mrf.mxu0
    %v2335 = vadd.f32 0.0, %v2334
    %v2336 = vpop.f32.mrf.mxu0
    %2337 = vmatprep.mubr.f32.mxu0 0.0
    %2338 = vmatmul.mubr.f32.gmra.mxu0 %v956
    %v2339 = vpop.f32.mrf.mxu0
    %v2340 = vadd.f32 0.0, %v2339
    %v2341 = vpop.f32.mrf.mxu0
    %2342 = vmatprep.mubr.f32.mxu0 0.0
    %2343 = vmatmul.mubr.f32.gmra.mxu0 %v958
    %v2344 = vpop.f32.mrf.mxu0
    %v2345 = vadd.f32 0.0, %v2344
    %v2346 = vpop.f32.mrf.mxu0
    %2347 = vmatprep.mubr.f32.mxu0 0.0
    %2348 = vmatmul.mubr.f32.gmra.mxu0 %v960
    %v2349 = vpop.f32.mrf.mxu0
    %v2350 = vadd.f32 0.0, %v2349
    %v2351 = vpop.f32.mrf.mxu0
    %2352 = vmatprep.mubr.f32.mxu0 0.0
    %2353 = vmatmul.mubr.f32.gmra.mxu0 %v962
    %v2354 = vpop.f32.mrf.mxu0
    %v2355 = vadd.f32 0.0, %v2354
    %v2356 = vpop.f32.mrf.mxu0
    %2357 = vmatprep.mubr.f32.mxu0 0.0
    %2358 = vmatmul.mubr.f32.gmra.mxu0 %v964
    %v2359 = vpop.f32.mrf.mxu0
    %v2360 = vadd.f32 0.0, %v2359
    %v2361 = vpop.f32.mrf.mxu0
    %2362 = vmatprep.mubr.f32.mxu0 0.0
    %2363 = vmatmul.mubr.f32.gmra.mxu0 %v966
    %v2364 = vpop.f32.mrf.mxu0
    %v2365 = vadd.f32 0.0, %v2364
    %v2366 = vpop.f32.mrf.mxu0
    %2367 = vmatprep.mubr.f32.mxu0 0.0
    %2368 = vmatmul.mubr.f32.gmra.mxu0 %v968
    %v2369 = vpop.f32.mrf.mxu0
    %v2370 = vadd.f32 0.0, %v2369
    %v2371 = vpop.f32.mrf.mxu0
    %2372 = vmatprep.mubr.f32.mxu0 0.0
    %2373 = vmatmul.mubr.f32.gmra.mxu0 %v970
    %v2374 = vpop.f32.mrf.mxu0
    %v2375 = vadd.f32 0.0, %v2374
    %v2376 = vpop.f32.mrf.mxu0
    %2377 = vmatprep.mubr.f32.mxu0 0.0
    %2378 = vmatmul.mubr.f32.gmra.mxu0 %v972
    %v2379 = vpop.f32.mrf.mxu0
    %v2380 = vadd.f32 0.0, %v2379
    %v2381 = vpop.f32.mrf.mxu0
    %2382 = vmatprep.mubr.f32.mxu0 0.0
    %2383 = vmatmul.mubr.f32.gmra.mxu0 %v974
    %v2384 = vpop.f32.mrf.mxu0
    %v2385 = vadd.f32 0.0, %v2384
    %v2386 = vpop.f32.mrf.mxu0
    %2387 = vmatprep.mubr.f32.mxu0 0.0
    %2388 = vmatmul.mubr.f32.gmra.mxu0 %v976
    %v2389 = vpop.f32.mrf.mxu0
    %v2390 = vadd.f32 0.0, %v2389
    %v2391 = vpop.f32.mrf.mxu0
    %2392 = vmatprep.mubr.f32.mxu0 0.0
    %2393 = vmatmul.mubr.f32.gmra.mxu0 %v978
    %v2394 = vpop.f32.mrf.mxu0
    %v2395 = vadd.f32 0.0, %v2394
    %v2396 = vpop.f32.mrf.mxu0
    %2397 = vmatprep.mubr.f32.mxu0 0.0
    %2398 = vmatmul.mubr.f32.gmra.mxu0 %v980
    %v2399 = vpop.f32.mrf.mxu0
    %v2400 = vadd.f32 0.0, %v2399
    %v2401 = vpop.f32.mrf.mxu0
    %2402 = vmatprep.mubr.f32.mxu0 0.0
    %2403 = vmatmul.mubr.f32.gmra.mxu0 %v982
    %v2404 = vpop.f32.mrf.mxu0
    %v2405 = vadd.f32 0.0, %v2404
    %v2406 = vpop.f32.mrf.mxu0
    %2407 = vmatprep.mubr.f32.mxu0 0.0
    %2408 = vmatmul.mubr.f32.gmra.mxu0 %v984
    %v2409 = vpop.f32.mrf.mxu0
    %v2410 = vadd.f32 0.0, %v2409
    %v2411 = vpop.f32.mrf.mxu0
    %2412 = vmatprep.mubr.f32.mxu0 0.0
    %2413 = vmatmul.mubr.f32.gmra.mxu0 %v2184
    %v2414 = vpop.f32.mrf.mxu0
    %v2415 = vadd.f32 0.0, %v2414
    %v2416 = vpop.f32.mrf.mxu0
    %2417 = vmatprep.mubr.f32.mxu0 0.0
    %2418 = vmatmul.mubr.f32.gmra.mxu0 %v2187
    %v2419 = vpop.f32.mrf.mxu0
    %v2420 = vadd.f32 0.0, %v2419
    %v2421 = vpop.f32.mrf.mxu0
    %2422 = vmatprep.mubr.f32.mxu0 0.0
    %2423 = vmatmul.mubr.f32.gmra.mxu0 %v990
    %v2424 = vpop.f32.mrf.mxu0
    %v2425 = vadd.f32 0.0, %v2424
    %v2426 = vpop.f32.mrf.mxu0
    %2427 = vmatprep.mubr.f32.mxu0 0.0
    %2428 = vmatmul.mubr.f32.gmra.mxu0 %v992
    %v2429 = vpop.f32.mrf.mxu0
    %v2430 = vadd.f32 0.0, %v2429
    %v2431 = vpop.f32.mrf.mxu0
    %2432 = vmatprep.mubr.f32.mxu0 0.0
    %2433 = vmatmul.mubr.f32.gmra.mxu0 %v994
    %v2434 = vpop.f32.mrf.mxu0
    %v2435 = vadd.f32 0.0, %v2434
    %v2436 = vpop.f32.mrf.mxu0
    %2437 = vmatprep.mubr.f32.mxu0 0.0
    %2438 = vmatmul.mubr.f32.gmra.mxu0 %v996
    %v2439 = vpop.f32.mrf.mxu0
    %v2440 = vadd.f32 0.0, %v2439
    %v2441 = vpop.f32.mrf.mxu0
    %2442 = vmatprep.mubr.f32.mxu0 0.0
    %2443 = vmatmul.mubr.f32.gmra.mxu0 %v998
    %v2444 = vpop.f32.mrf.mxu0
    %v2445 = vadd.f32 0.0, %v2444
    %v2446 = vpop.f32.mrf.mxu0
    %2447 = vmatprep.mubr.f32.mxu0 0.0
    %2448 = vmatmul.mubr.f32.gmra.mxu0 %v1000
    %v2449 = vpop.f32.mrf.mxu0
    %v2450 = vadd.f32 0.0, %v2449
    %v2451 = vpop.f32.mrf.mxu0
    %2452 = vmatprep.mubr.f32.mxu0 0.0
    %2453 = vmatmul.mubr.f32.gmra.mxu0 %v1002
    %v2454 = vpop.f32.mrf.mxu0
    %v2455 = vadd.f32 0.0, %v2454
    %v2456 = vpop.f32.mrf.mxu0
    %2457 = vmatprep.mubr.f32.mxu0 0.0
    %2458 = vmatmul.mubr.f32.gmra.mxu0 %v1004
    %v2459 = vpop.f32.mrf.mxu0
    %v2460 = vadd.f32 0.0, %v2459
    %v2461 = vpop.f32.mrf.mxu0
    %2462 = vmatprep.mubr.f32.mxu0 0.0
    %2463 = vmatmul.mubr.f32.gmra.mxu0 %v1006
    %v2464 = vpop.f32.mrf.mxu0
    %v2465 = vadd.f32 0.0, %v2464
    %v2466 = vpop.f32.mrf.mxu0
    %2467 = vmatprep.mubr.f32.mxu0 0.0
    %2468 = vmatmul.mubr.f32.gmra.mxu0 %v1008
    %v2469 = vpop.f32.mrf.mxu0
    %v2470 = vadd.f32 0.0, %v2469
    %v2471 = vpop.f32.mrf.mxu0
    %2472 = vmatprep.mubr.f32.mxu0 0.0
    %2473 = vmatmul.mubr.f32.gmra.mxu0 %v1010
    %v2474 = vpop.f32.mrf.mxu0
    %v2475 = vadd.f32 0.0, %v2474
    %v2476 = vpop.f32.mrf.mxu0
    %2477 = vmatprep.mubr.f32.mxu0 0.0
    %2478 = vmatmul.mubr.f32.gmra.mxu0 %v1012
    %v2479 = vpop.f32.mrf.mxu0
    %v2480 = vadd.f32 0.0, %v2479
    %v2481 = vpop.f32.mrf.mxu0
    %2482 = vmatprep.mubr.f32.mxu0 0.0
    %2483 = vmatmul.mubr.f32.gmra.mxu0 %v1014
    %v2484 = vpop.f32.mrf.mxu0
    %v2485 = vadd.f32 0.0, %v2484
    %v2486 = vpop.f32.mrf.mxu0
    %2487 = vmatprep.mubr.f32.mxu0 0.0
    %2488 = vmatmul.mubr.f32.gmra.mxu0 %v1016
    %v2489 = vpop.f32.mrf.mxu0
    %v2490 = vadd.f32 0.0, %v2489
    %v2491 = vpop.f32.mrf.mxu0
    %2492 = vmatprep.mubr.f32.mxu0 0.0
    %2493 = vmatmul.mubr.f32.gmra.mxu0 %v1018
    %v2494 = vpop.f32.mrf.mxu0
    %v2495 = vadd.f32 0.0, %v2494
    %v2496 = vpop.f32.mrf.mxu0
    %2497 = vmatprep.mubr.f32.mxu0 0.0
    %2498 = vmatmul.mubr.f32.gmra.mxu0 %v1020
    %v2499 = vpop.f32.mrf.mxu0
    %v2500 = vadd.f32 0.0, %v2499
    %v2501 = vpop.f32.mrf.mxu0
    %2502 = vmatprep.mubr.f32.mxu0 0.0
    %2503 = vmatmul.mubr.f32.gmra.mxu0 %v1022
    %v2504 = vpop.f32.mrf.mxu0
    %v2505 = vadd.f32 0.0, %v2504
    %v2506 = vpop.f32.mrf.mxu0
    %2507 = vmatprep.mubr.f32.mxu0 0.0
    %2508 = vmatmul.mubr.f32.gmra.mxu0 %v1024
    %v2509 = vpop.f32.mrf.mxu0
    %v2510 = vadd.f32 0.0, %v2509
    %v2511 = vpop.f32.mrf.mxu0
    %2512 = vmatprep.mubr.f32.mxu0 0.0
    %2513 = vmatmul.mubr.f32.gmra.mxu0 %v1026
    %v2514 = vpop.f32.mrf.mxu0
    %v2515 = vadd.f32 0.0, %v2514
    %v2516 = vpop.f32.mrf.mxu0
    %2517 = vmatprep.mubr.f32.mxu0 0.0
    %2518 = vmatmul.mubr.f32.gmra.mxu0 %v1028
    %v2519 = vpop.f32.mrf.mxu0
    %v2520 = vadd.f32 0.0, %v2519
    %v2521 = vpop.f32.mrf.mxu0
    %2522 = vmatprep.mubr.f32.mxu0 0.0
    %2523 = vmatmul.mubr.f32.gmra.mxu0 %v1030
    %v2524 = vpop.f32.mrf.mxu0
    %v2525 = vadd.f32 0.0, %v2524
    %v2526 = vpop.f32.mrf.mxu0
    %2527 = vmatprep.mubr.f32.mxu0 0.0
    %2528 = vmatmul.mubr.f32.gmra.mxu0 %v1032
    %v2529 = vpop.f32.mrf.mxu0
    %v2530 = vadd.f32 0.0, %v2529
    %v2531 = vpop.f32.mrf.mxu0
    %2532 = vmatprep.mubr.f32.mxu0 0.0
    %2533 = vmatmul.mubr.f32.gmra.mxu0 %v1034
    %v2534 = vpop.f32.mrf.mxu0
    %v2535 = vadd.f32 0.0, %v2534
    %v2536 = vpop.f32.mrf.mxu0
    %2537 = vmatprep.mubr.f32.mxu0 0.0
    %2538 = vmatmul.mubr.f32.gmra.mxu0 %v1036
    %v2539 = vpop.f32.mrf.mxu0
    %v2540 = vadd.f32 0.0, %v2539
    %v2541 = vpop.f32.mrf.mxu0
    %2542 = vmatprep.mubr.f32.mxu0 0.0
    %2543 = vmatmul.mubr.f32.gmra.mxu0 %v1038
    %v2544 = vpop.f32.mrf.mxu0
    %v2545 = vadd.f32 0.0, %v2544
    %v2546 = vpop.f32.mrf.mxu0
    %2547 = vmatprep.mubr.f32.mxu0 0.0
    %2548 = vmatmul.mubr.f32.gmra.mxu0 %v1040
    %v2549 = vpop.f32.mrf.mxu0
    %v2550 = vadd.f32 0.0, %v2549
    %v2551 = vpop.f32.mrf.mxu0
    %2552 = vmatprep.mubr.f32.mxu0 0.0
    %2553 = vmatmul.mubr.f32.gmra.mxu0 %v1042
    %v2554 = vpop.f32.mrf.mxu0
    %v2555 = vadd.f32 0.0, %v2554
    %v2556 = vpop.f32.mrf.mxu0
    %2557 = vmatprep.mubr.f32.mxu0 0.0
    %2558 = vmatmul.mubr.f32.gmra.mxu0 %v1044
    %v2559 = vpop.f32.mrf.mxu0
    %v2560 = vadd.f32 0.0, %v2559
    %v2561 = vpop.f32.mrf.mxu0
    %2562 = vmatprep.mubr.f32.mxu0 0.0
    %2563 = vmatmul.mubr.f32.gmra.mxu0 %v1046
    %v2564 = vpop.f32.mrf.mxu0
    %v2565 = vadd.f32 0.0, %v2564
    %v2566 = vpop.f32.mrf.mxu0
    %2567 = vmatprep.mubr.f32.mxu0 0.0
    %2568 = vmatmul.mubr.f32.gmra.mxu0 %v1048
    %v2569 = vpop.f32.mrf.mxu0
    %v2570 = vadd.f32 0.0, %v2569
    %v2571 = vpop.f32.mrf.mxu0
    %2572 = vmatprep.mubr.f32.mxu0 0.0
    %2573 = vmatmul.mubr.f32.gmra.mxu0 %v2190
    %v2574 = vpop.f32.mrf.mxu0
    %v2575 = vadd.f32 0.0, %v2574
    %v2576 = vpop.f32.mrf.mxu0
    %2577 = vmatprep.mubr.f32.mxu0 0.0
    %2578 = vmatmul.mubr.f32.gmra.mxu0 %v2193
    %v2579 = vpop.f32.mrf.mxu0
    %v2580 = vadd.f32 0.0, %v2579
    %v2581 = vpop.f32.mrf.mxu0
    %2582 = vdwg.mxu0
    %v2583 = vadd.f32 %v2117, %v2265
    %v2584 = vadd.f32 %v2118, %v2270
    %v2585 = vadd.f32 %v2119, %v2275
    %v2586 = vadd.f32 %v2120, %v2280
    %v2587 = vadd.f32 %v2121, %v2285
    %v2588 = vadd.f32 %v2122, %v2290
    %v2589 = vadd.f32 %v2123, %v2295
    %v2590 = vadd.f32 %v2124, %v2300
    %v2591 = vadd.f32 %v2125, %v2305
    %v2592 = vadd.f32 %v2126, %v2310
    %v2593 = vadd.f32 %v2127, %v2315
    %v2594 = vadd.f32 %v2128, %v2320
    %v2595 = vadd.f32 %v2129, %v2325
    %v2596 = vadd.f32 %v2130, %v2330
    %v2597 = vadd.f32 %v2131, %v2335
    %v2598 = vadd.f32 %v2132, %v2340
    %v2599 = vadd.f32 %v2133, %v2345
    %v2600 = vadd.f32 %v2134, %v2350
    %v2601 = vadd.f32 %v2135, %v2355
    %v2602 = vadd.f32 %v2136, %v2360
    %v2603 = vadd.f32 %v2137, %v2365
    %v2604 = vadd.f32 %v2138, %v2370
    %v2605 = vadd.f32 %v2139, %v2375
    %v2606 = vadd.f32 %v2140, %v2380
    %v2607 = vadd.f32 %v2141, %v2385
    %v2608 = vadd.f32 %v2142, %v2390
    %v2609 = vadd.f32 %v2143, %v2395
    %v2610 = vadd.f32 %v2144, %v2400
    %v2611 = vadd.f32 %v2145, %v2405
    %v2612 = vadd.f32 %v2146, %v2410
    %v2613 = vadd.f32 %v2147, %v2415
    %v2614 = vadd.f32 %v2148, %v2420
    %v2615 = vadd.f32 %v2149, %v2425
    %v2616 = vadd.f32 %v2150, %v2430
    %v2617 = vadd.f32 %v2151, %v2435
    %v2618 = vadd.f32 %v2152, %v2440
    %v2619 = vadd.f32 %v2153, %v2445
    %v2620 = vadd.f32 %v2154, %v2450
    %v2621 = vadd.f32 %v2155, %v2455
    %v2622 = vadd.f32 %v2156, %v2460
    %v2623 = vadd.f32 %v2157, %v2465
    %v2624 = vadd.f32 %v2158, %v2470
    %v2625 = vadd.f32 %v2159, %v2475
    %v2626 = vadd.f32 %v2160, %v2480
    %v2627 = vadd.f32 %v2161, %v2485
    %v2628 = vadd.f32 %v2162, %v2490
    %v2629 = vadd.f32 %v2163, %v2495
    %v2630 = vadd.f32 %v2164, %v2500
    %v2631 = vadd.f32 %v2165, %v2505
    %v2632 = vadd.f32 %v2166, %v2510
    %v2633 = vadd.f32 %v2167, %v2515
    %v2634 = vadd.f32 %v2168, %v2520
    %v2635 = vadd.f32 %v2169, %v2525
    %v2636 = vadd.f32 %v2170, %v2530
    %v2637 = vadd.f32 %v2171, %v2535
    %v2638 = vadd.f32 %v2172, %v2540
    %v2639 = vadd.f32 %v2173, %v2545
    %v2640 = vadd.f32 %v2174, %v2550
    %v2641 = vadd.f32 %v2175, %v2555
    %v2642 = vadd.f32 %v2176, %v2560
    %v2643 = vadd.f32 %v2177, %v2565
    %v2644 = vadd.f32 %v2178, %v2570
    %v2645 = vadd.f32 %v2179, %v2575
    %v2646 = vadd.f32 %v2180, %v2580
    %v2649 = vrot.slane %v84, 1
    %v2650 = vrot.slane %v85, 1
    %v2651 = vsel %vm241, %v2649, %v2650
    %v2652 = vrot.slane %v86, 1
    %v2653 = vsel %vm241, %v2650, %v2652
    %v2654 = vrot.slane %v138, 1
    %v2655 = vrot.slane %v139, 1
    %v2656 = vsel %vm241, %v2654, %v2655
    %v2657 = vrot.slane %v140, 1
    %v2658 = vsel %vm241, %v2655, %v2657
    %s2659 = scalar_lea.vmem %s1, 16
    %v2660 = vld [vmem:[%s2659] sm:$0xf]
    %v2661 = vsel %vm404, %v2651, 0
    %v2663 = vsel %vm404, %v2653, 0
    %v2665 = vsel %vm404, %v2656, 0
    %v2667 = vsel %vm404, %v2658, 0
    %v2670 = vsel %vm533, %v2660, 0
    %2672 = vmatprep.subr.mxu0 0.0
    %2673 = vmatpush1.msra.mxu0 0.0
    %2674 = vmatprep.subr.mxu0 0.0
    %2675 = vmatpush1.msra.mxu0 0.0
    %2676 = vmatprep.subr.mxu0 0.0
    %2677 = vmatpush1.msra.mxu0 0.0
    %2678 = vmatprep.subr.mxu0 0.0
    %2679 = vmatpush1.msra.mxu0 0.0
    %2680 = vmatprep.subr.mxu0 0.0
    %2681 = vmatpush1.msra.mxu0 0.0
    %2682 = vmatprep.subr.mxu0 0.0
    %2683 = vmatpush1.msra.mxu0 0.0
    %2684 = vmatprep.subr.mxu0 0.0
    %2685 = vmatpush1.msra.mxu0 0.0
    %2686 = vmatprep.subr.mxu0 0.0
    %2687 = vmatpush1.msra.mxu0 0.0
    %2688 = vmatprep.subr.mxu0 0.0
    %2689 = vmatpush1.msra.mxu0 0.0
    %2690 = vmatprep.subr.mxu0 0.0
    %2691 = vmatpush1.msra.mxu0 0.0
    %2692 = vmatprep.subr.mxu0 0.0
    %2693 = vmatpush1.msra.mxu0 0.0
    %2694 = vmatprep.subr.mxu0 0.0
    %2695 = vmatpush1.msra.mxu0 0.0
    %2696 = vmatprep.subr.mxu0 0.0
    %2697 = vmatpush1.msra.mxu0 0.0
    %2698 = vmatprep.subr.mxu0 0.0
    %2699 = vmatpush1.msra.mxu0 0.0
    %2700 = vmatprep.subr.mxu0 0.0
    %2701 = vmatpush1.msra.mxu0 0.0
    %2702 = vmatprep.subr.mxu0 0.0
    %2703 = vmatpush1.msra.mxu0 %v2670
    %2704 = vmatprep.subr.mxu0 0.0
    %2705 = vmatpush2.msra.mxu0 0.0
    %2706 = vmatprep.subr.mxu0 0.0
    %2707 = vmatpush2.msra.mxu0 0.0
    %2708 = vmatprep.subr.mxu0 0.0
    %2709 = vmatpush2.msra.mxu0 0.0
    %2710 = vmatprep.subr.mxu0 0.0
    %2711 = vmatpush2.msra.mxu0 0.0
    %2712 = vmatprep.subr.mxu0 0.0
    %2713 = vmatpush2.msra.mxu0 0.0
    %2714 = vmatprep.subr.mxu0 0.0
    %2715 = vmatpush2.msra.mxu0 0.0
    %2716 = vmatprep.subr.mxu0 0.0
    %2717 = vmatpush2.msra.mxu0 0.0
    %2718 = vmatprep.subr.mxu0 0.0
    %2719 = vmatpush2.msra.mxu0 0.0
    %2720 = vmatprep.subr.mxu0 0.0
    %2721 = vmatpush2.msra.mxu0 0.0
    %2722 = vmatprep.subr.mxu0 0.0
    %2723 = vmatpush2.msra.mxu0 0.0
    %2724 = vmatprep.subr.mxu0 0.0
    %2725 = vmatpush2.msra.mxu0 0.0
    %2726 = vmatprep.subr.mxu0 0.0
    %2727 = vmatpush2.msra.mxu0 0.0
    %2728 = vmatprep.subr.mxu0 0.0
    %2729 = vmatpush2.msra.mxu0 0.0
    %2730 = vmatprep.subr.mxu0 0.0
    %2731 = vmatpush2.msra.mxu0 0.0
    %2732 = vmatprep.subr.mxu0 0.0
    %2733 = vmatpush2.msra.mxu0 0.0
    %2734 = vmatprep.subr.mxu0 0.0
    %2735 = vmatpush2.msra.mxu0 0.0
    %2736 = vmatprep.mubr.f32.mxu0 0.0
    %2737 = vmatmul.mubr.f32.gmra.mxu0 %v409
    %v2738 = vpop.f32.mrf.mxu0
    %v2739 = vadd.f32 0.0, %v2738
    %v2740 = vpop.f32.mrf.mxu0
    %2741 = vmatprep.mubr.f32.mxu0 0.0
    %2742 = vmatmul.mubr.f32.gmra.mxu0 %v411
    %v2743 = vpop.f32.mrf.mxu0
    %v2744 = vadd.f32 0.0, %v2743
    %v2745 = vpop.f32.mrf.mxu0
    %2746 = vmatprep.mubr.f32.mxu0 0.0
    %2747 = vmatmul.mubr.f32.gmra.mxu0 %v413
    %v2748 = vpop.f32.mrf.mxu0
    %v2749 = vadd.f32 0.0, %v2748
    %v2750 = vpop.f32.mrf.mxu0
    %2751 = vmatprep.mubr.f32.mxu0 0.0
    %2752 = vmatmul.mubr.f32.gmra.mxu0 %v415
    %v2753 = vpop.f32.mrf.mxu0
    %v2754 = vadd.f32 0.0, %v2753
    %v2755 = vpop.f32.mrf.mxu0
    %2756 = vmatprep.mubr.f32.mxu0 0.0
    %2757 = vmatmul.mubr.f32.gmra.mxu0 %v417
    %v2758 = vpop.f32.mrf.mxu0
    %v2759 = vadd.f32 0.0, %v2758
    %v2760 = vpop.f32.mrf.mxu0
    %2761 = vmatprep.mubr.f32.mxu0 0.0
    %2762 = vmatmul.mubr.f32.gmra.mxu0 %v419
    %v2763 = vpop.f32.mrf.mxu0
    %v2764 = vadd.f32 0.0, %v2763
    %v2765 = vpop.f32.mrf.mxu0
    %2766 = vmatprep.mubr.f32.mxu0 0.0
    %2767 = vmatmul.mubr.f32.gmra.mxu0 %v421
    %v2768 = vpop.f32.mrf.mxu0
    %v2769 = vadd.f32 0.0, %v2768
    %v2770 = vpop.f32.mrf.mxu0
    %2771 = vmatprep.mubr.f32.mxu0 0.0
    %2772 = vmatmul.mubr.f32.gmra.mxu0 %v423
    %v2773 = vpop.f32.mrf.mxu0
    %v2774 = vadd.f32 0.0, %v2773
    %v2775 = vpop.f32.mrf.mxu0
    %2776 = vmatprep.mubr.f32.mxu0 0.0
    %2777 = vmatmul.mubr.f32.gmra.mxu0 %v425
    %v2778 = vpop.f32.mrf.mxu0
    %v2779 = vadd.f32 0.0, %v2778
    %v2780 = vpop.f32.mrf.mxu0
    %2781 = vmatprep.mubr.f32.mxu0 0.0
    %2782 = vmatmul.mubr.f32.gmra.mxu0 %v427
    %v2783 = vpop.f32.mrf.mxu0
    %v2784 = vadd.f32 0.0, %v2783
    %v2785 = vpop.f32.mrf.mxu0
    %2786 = vmatprep.mubr.f32.mxu0 0.0
    %2787 = vmatmul.mubr.f32.gmra.mxu0 %v429
    %v2788 = vpop.f32.mrf.mxu0
    %v2789 = vadd.f32 0.0, %v2788
    %v2790 = vpop.f32.mrf.mxu0
    %2791 = vmatprep.mubr.f32.mxu0 0.0
    %2792 = vmatmul.mubr.f32.gmra.mxu0 %v431
    %v2793 = vpop.f32.mrf.mxu0
    %v2794 = vadd.f32 0.0, %v2793
    %v2795 = vpop.f32.mrf.mxu0
    %2796 = vmatprep.mubr.f32.mxu0 0.0
    %2797 = vmatmul.mubr.f32.gmra.mxu0 %v433
    %v2798 = vpop.f32.mrf.mxu0
    %v2799 = vadd.f32 0.0, %v2798
    %v2800 = vpop.f32.mrf.mxu0
    %2801 = vmatprep.mubr.f32.mxu0 0.0
    %2802 = vmatmul.mubr.f32.gmra.mxu0 %v435
    %v2803 = vpop.f32.mrf.mxu0
    %v2804 = vadd.f32 0.0, %v2803
    %v2805 = vpop.f32.mrf.mxu0
    %2806 = vmatprep.mubr.f32.mxu0 0.0
    %2807 = vmatmul.mubr.f32.gmra.mxu0 %v437
    %v2808 = vpop.f32.mrf.mxu0
    %v2809 = vadd.f32 0.0, %v2808
    %v2810 = vpop.f32.mrf.mxu0
    %2811 = vmatprep.mubr.f32.mxu0 0.0
    %2812 = vmatmul.mubr.f32.gmra.mxu0 %v439
    %v2813 = vpop.f32.mrf.mxu0
    %v2814 = vadd.f32 0.0, %v2813
    %v2815 = vpop.f32.mrf.mxu0
    %2816 = vmatprep.mubr.f32.mxu0 0.0
    %2817 = vmatmul.mubr.f32.gmra.mxu0 %v441
    %v2818 = vpop.f32.mrf.mxu0
    %v2819 = vadd.f32 0.0, %v2818
    %v2820 = vpop.f32.mrf.mxu0
    %2821 = vmatprep.mubr.f32.mxu0 0.0
    %2822 = vmatmul.mubr.f32.gmra.mxu0 %v443
    %v2823 = vpop.f32.mrf.mxu0
    %v2824 = vadd.f32 0.0, %v2823
    %v2825 = vpop.f32.mrf.mxu0
    %2826 = vmatprep.mubr.f32.mxu0 0.0
    %2827 = vmatmul.mubr.f32.gmra.mxu0 %v445
    %v2828 = vpop.f32.mrf.mxu0
    %v2829 = vadd.f32 0.0, %v2828
    %v2830 = vpop.f32.mrf.mxu0
    %2831 = vmatprep.mubr.f32.mxu0 0.0
    %2832 = vmatmul.mubr.f32.gmra.mxu0 %v447
    %v2833 = vpop.f32.mrf.mxu0
    %v2834 = vadd.f32 0.0, %v2833
    %v2835 = vpop.f32.mrf.mxu0
    %2836 = vmatprep.mubr.f32.mxu0 0.0
    %2837 = vmatmul.mubr.f32.gmra.mxu0 %v449
    %v2838 = vpop.f32.mrf.mxu0
    %v2839 = vadd.f32 0.0, %v2838
    %v2840 = vpop.f32.mrf.mxu0
    %2841 = vmatprep.mubr.f32.mxu0 0.0
    %2842 = vmatmul.mubr.f32.gmra.mxu0 %v451
    %v2843 = vpop.f32.mrf.mxu0
    %v2844 = vadd.f32 0.0, %v2843
    %v2845 = vpop.f32.mrf.mxu0
    %2846 = vmatprep.mubr.f32.mxu0 0.0
    %2847 = vmatmul.mubr.f32.gmra.mxu0 %v453
    %v2848 = vpop.f32.mrf.mxu0
    %v2849 = vadd.f32 0.0, %v2848
    %v2850 = vpop.f32.mrf.mxu0
    %2851 = vmatprep.mubr.f32.mxu0 0.0
    %2852 = vmatmul.mubr.f32.gmra.mxu0 %v455
    %v2853 = vpop.f32.mrf.mxu0
    %v2854 = vadd.f32 0.0, %v2853
    %v2855 = vpop.f32.mrf.mxu0
    %2856 = vmatprep.mubr.f32.mxu0 0.0
    %2857 = vmatmul.mubr.f32.gmra.mxu0 %v457
    %v2858 = vpop.f32.mrf.mxu0
    %v2859 = vadd.f32 0.0, %v2858
    %v2860 = vpop.f32.mrf.mxu0
    %2861 = vmatprep.mubr.f32.mxu0 0.0
    %2862 = vmatmul.mubr.f32.gmra.mxu0 %v459
    %v2863 = vpop.f32.mrf.mxu0
    %v2864 = vadd.f32 0.0, %v2863
    %v2865 = vpop.f32.mrf.mxu0
    %2866 = vmatprep.mubr.f32.mxu0 0.0
    %2867 = vmatmul.mubr.f32.gmra.mxu0 %v461
    %v2868 = vpop.f32.mrf.mxu0
    %v2869 = vadd.f32 0.0, %v2868
    %v2870 = vpop.f32.mrf.mxu0
    %2871 = vmatprep.mubr.f32.mxu0 0.0
    %2872 = vmatmul.mubr.f32.gmra.mxu0 %v463
    %v2873 = vpop.f32.mrf.mxu0
    %v2874 = vadd.f32 0.0, %v2873
    %v2875 = vpop.f32.mrf.mxu0
    %2876 = vmatprep.mubr.f32.mxu0 0.0
    %2877 = vmatmul.mubr.f32.gmra.mxu0 %v465
    %v2878 = vpop.f32.mrf.mxu0
    %v2879 = vadd.f32 0.0, %v2878
    %v2880 = vpop.f32.mrf.mxu0
    %2881 = vmatprep.mubr.f32.mxu0 0.0
    %2882 = vmatmul.mubr.f32.gmra.mxu0 %v467
    %v2883 = vpop.f32.mrf.mxu0
    %v2884 = vadd.f32 0.0, %v2883
    %v2885 = vpop.f32.mrf.mxu0
    %2886 = vmatprep.mubr.f32.mxu0 0.0
    %2887 = vmatmul.mubr.f32.gmra.mxu0 %v2661
    %v2888 = vpop.f32.mrf.mxu0
    %v2889 = vadd.f32 0.0, %v2888
    %v2890 = vpop.f32.mrf.mxu0
    %2891 = vmatprep.mubr.f32.mxu0 0.0
    %2892 = vmatmul.mubr.f32.gmra.mxu0 %v2663
    %v2893 = vpop.f32.mrf.mxu0
    %v2894 = vadd.f32 0.0, %v2893
    %v2895 = vpop.f32.mrf.mxu0
    %2896 = vmatprep.mubr.f32.mxu0 0.0
    %2897 = vmatmul.mubr.f32.gmra.mxu0 %v473
    %v2898 = vpop.f32.mrf.mxu0
    %v2899 = vadd.f32 0.0, %v2898
    %v2900 = vpop.f32.mrf.mxu0
    %2901 = vmatprep.mubr.f32.mxu0 0.0
    %2902 = vmatmul.mubr.f32.gmra.mxu0 %v475
    %v2903 = vpop.f32.mrf.mxu0
    %v2904 = vadd.f32 0.0, %v2903
    %v2905 = vpop.f32.mrf.mxu0
    %2906 = vmatprep.mubr.f32.mxu0 0.0
    %2907 = vmatmul.mubr.f32.gmra.mxu0 %v477
    %v2908 = vpop.f32.mrf.mxu0
    %v2909 = vadd.f32 0.0, %v2908
    %v2910 = vpop.f32.mrf.mxu0
    %2911 = vmatprep.mubr.f32.mxu0 0.0
    %2912 = vmatmul.mubr.f32.gmra.mxu0 %v479
    %v2913 = vpop.f32.mrf.mxu0
    %v2914 = vadd.f32 0.0, %v2913
    %v2915 = vpop.f32.mrf.mxu0
    %2916 = vmatprep.mubr.f32.mxu0 0.0
    %2917 = vmatmul.mubr.f32.gmra.mxu0 %v481
    %v2918 = vpop.f32.mrf.mxu0
    %v2919 = vadd.f32 0.0, %v2918
    %v2920 = vpop.f32.mrf.mxu0
    %2921 = vmatprep.mubr.f32.mxu0 0.0
    %2922 = vmatmul.mubr.f32.gmra.mxu0 %v483
    %v2923 = vpop.f32.mrf.mxu0
    %v2924 = vadd.f32 0.0, %v2923
    %v2925 = vpop.f32.mrf.mxu0
    %2926 = vmatprep.mubr.f32.mxu0 0.0
    %2927 = vmatmul.mubr.f32.gmra.mxu0 %v485
    %v2928 = vpop.f32.mrf.mxu0
    %v2929 = vadd.f32 0.0, %v2928
    %v2930 = vpop.f32.mrf.mxu0
    %2931 = vmatprep.mubr.f32.mxu0 0.0
    %2932 = vmatmul.mubr.f32.gmra.mxu0 %v487
    %v2933 = vpop.f32.mrf.mxu0
    %v2934 = vadd.f32 0.0, %v2933
    %v2935 = vpop.f32.mrf.mxu0
    %2936 = vmatprep.mubr.f32.mxu0 0.0
    %2937 = vmatmul.mubr.f32.gmra.mxu0 %v489
    %v2938 = vpop.f32.mrf.mxu0
    %v2939 = vadd.f32 0.0, %v2938
    %v2940 = vpop.f32.mrf.mxu0
    %2941 = vmatprep.mubr.f32.mxu0 0.0
    %2942 = vmatmul.mubr.f32.gmra.mxu0 %v491
    %v2943 = vpop.f32.mrf.mxu0
    %v2944 = vadd.f32 0.0, %v2943
    %v2945 = vpop.f32.mrf.mxu0
    %2946 = vmatprep.mubr.f32.mxu0 0.0
    %2947 = vmatmul.mubr.f32.gmra.mxu0 %v493
    %v2948 = vpop.f32.mrf.mxu0
    %v2949 = vadd.f32 0.0, %v2948
    %v2950 = vpop.f32.mrf.mxu0
    %2951 = vmatprep.mubr.f32.mxu0 0.0
    %2952 = vmatmul.mubr.f32.gmra.mxu0 %v495
    %v2953 = vpop.f32.mrf.mxu0
    %v2954 = vadd.f32 0.0, %v2953
    %v2955 = vpop.f32.mrf.mxu0
    %2956 = vmatprep.mubr.f32.mxu0 0.0
    %2957 = vmatmul.mubr.f32.gmra.mxu0 %v497
    %v2958 = vpop.f32.mrf.mxu0
    %v2959 = vadd.f32 0.0, %v2958
    %v2960 = vpop.f32.mrf.mxu0
    %2961 = vmatprep.mubr.f32.mxu0 0.0
    %2962 = vmatmul.mubr.f32.gmra.mxu0 %v499
    %v2963 = vpop.f32.mrf.mxu0
    %v2964 = vadd.f32 0.0, %v2963
    %v2965 = vpop.f32.mrf.mxu0
    %2966 = vmatprep.mubr.f32.mxu0 0.0
    %2967 = vmatmul.mubr.f32.gmra.mxu0 %v501
    %v2968 = vpop.f32.mrf.mxu0
    %v2969 = vadd.f32 0.0, %v2968
    %v2970 = vpop.f32.mrf.mxu0
    %2971 = vmatprep.mubr.f32.mxu0 0.0
    %2972 = vmatmul.mubr.f32.gmra.mxu0 %v503
    %v2973 = vpop.f32.mrf.mxu0
    %v2974 = vadd.f32 0.0, %v2973
    %v2975 = vpop.f32.mrf.mxu0
    %2976 = vmatprep.mubr.f32.mxu0 0.0
    %2977 = vmatmul.mubr.f32.gmra.mxu0 %v505
    %v2978 = vpop.f32.mrf.mxu0
    %v2979 = vadd.f32 0.0, %v2978
    %v2980 = vpop.f32.mrf.mxu0
    %2981 = vmatprep.mubr.f32.mxu0 0.0
    %2982 = vmatmul.mubr.f32.gmra.mxu0 %v507
    %v2983 = vpop.f32.mrf.mxu0
    %v2984 = vadd.f32 0.0, %v2983
    %v2985 = vpop.f32.mrf.mxu0
    %2986 = vmatprep.mubr.f32.mxu0 0.0
    %2987 = vmatmul.mubr.f32.gmra.mxu0 %v509
    %v2988 = vpop.f32.mrf.mxu0
    %v2989 = vadd.f32 0.0, %v2988
    %v2990 = vpop.f32.mrf.mxu0
    %2991 = vmatprep.mubr.f32.mxu0 0.0
    %2992 = vmatmul.mubr.f32.gmra.mxu0 %v511
    %v2993 = vpop.f32.mrf.mxu0
    %v2994 = vadd.f32 0.0, %v2993
    %v2995 = vpop.f32.mrf.mxu0
    %2996 = vmatprep.mubr.f32.mxu0 0.0
    %2997 = vmatmul.mubr.f32.gmra.mxu0 %v513
    %v2998 = vpop.f32.mrf.mxu0
    %v2999 = vadd.f32 0.0, %v2998
    %v3000 = vpop.f32.mrf.mxu0
    %3001 = vmatprep.mubr.f32.mxu0 0.0
    %3002 = vmatmul.mubr.f32.gmra.mxu0 %v515
    %v3003 = vpop.f32.mrf.mxu0
    %v3004 = vadd.f32 0.0, %v3003
    %v3005 = vpop.f32.mrf.mxu0
    %3006 = vmatprep.mubr.f32.mxu0 0.0
    %3007 = vmatmul.mubr.f32.gmra.mxu0 %v517
    %v3008 = vpop.f32.mrf.mxu0
    %v3009 = vadd.f32 0.0, %v3008
    %v3010 = vpop.f32.mrf.mxu0
    %3011 = vmatprep.mubr.f32.mxu0 0.0
    %3012 = vmatmul.mubr.f32.gmra.mxu0 %v519
    %v3013 = vpop.f32.mrf.mxu0
    %v3014 = vadd.f32 0.0, %v3013
    %v3015 = vpop.f32.mrf.mxu0
    %3016 = vmatprep.mubr.f32.mxu0 0.0
    %3017 = vmatmul.mubr.f32.gmra.mxu0 %v521
    %v3018 = vpop.f32.mrf.mxu0
    %v3019 = vadd.f32 0.0, %v3018
    %v3020 = vpop.f32.mrf.mxu0
    %3021 = vmatprep.mubr.f32.mxu0 0.0
    %3022 = vmatmul.mubr.f32.gmra.mxu0 %v523
    %v3023 = vpop.f32.mrf.mxu0
    %v3024 = vadd.f32 0.0, %v3023
    %v3025 = vpop.f32.mrf.mxu0
    %3026 = vmatprep.mubr.f32.mxu0 0.0
    %3027 = vmatmul.mubr.f32.gmra.mxu0 %v525
    %v3028 = vpop.f32.mrf.mxu0
    %v3029 = vadd.f32 0.0, %v3028
    %v3030 = vpop.f32.mrf.mxu0
    %3031 = vmatprep.mubr.f32.mxu0 0.0
    %3032 = vmatmul.mubr.f32.gmra.mxu0 %v527
    %v3033 = vpop.f32.mrf.mxu0
    %v3034 = vadd.f32 0.0, %v3033
    %v3035 = vpop.f32.mrf.mxu0
    %3036 = vmatprep.mubr.f32.mxu0 0.0
    %3037 = vmatmul.mubr.f32.gmra.mxu0 %v529
    %v3038 = vpop.f32.mrf.mxu0
    %v3039 = vadd.f32 0.0, %v3038
    %v3040 = vpop.f32.mrf.mxu0
    %3041 = vmatprep.mubr.f32.mxu0 0.0
    %3042 = vmatmul.mubr.f32.gmra.mxu0 %v531
    %v3043 = vpop.f32.mrf.mxu0
    %v3044 = vadd.f32 0.0, %v3043
    %v3045 = vpop.f32.mrf.mxu0
    %3046 = vmatprep.mubr.f32.mxu0 0.0
    %3047 = vmatmul.mubr.f32.gmra.mxu0 %v2665
    %v3048 = vpop.f32.mrf.mxu0
    %v3049 = vadd.f32 0.0, %v3048
    %v3050 = vpop.f32.mrf.mxu0
    %3051 = vmatprep.mubr.f32.mxu0 0.0
    %3052 = vmatmul.mubr.f32.gmra.mxu0 %v2667
    %v3053 = vpop.f32.mrf.mxu0
    %v3054 = vadd.f32 0.0, %v3053
    %v3055 = vpop.f32.mrf.mxu0
    %3056 = vdwg.mxu0
    %v3057 = vadd.f32 %v2583, %v2739
    %v3058 = vadd.f32 %v2584, %v2744
    %v3059 = vadd.f32 %v2585, %v2749
    %v3060 = vadd.f32 %v2586, %v2754
    %v3061 = vadd.f32 %v2587, %v2759
    %v3062 = vadd.f32 %v2588, %v2764
    %v3063 = vadd.f32 %v2589, %v2769
    %v3064 = vadd.f32 %v2590, %v2774
    %v3065 = vadd.f32 %v2591, %v2779
    %v3066 = vadd.f32 %v2592, %v2784
    %v3067 = vadd.f32 %v2593, %v2789
    %v3068 = vadd.f32 %v2594, %v2794
    %v3069 = vadd.f32 %v2595, %v2799
    %v3070 = vadd.f32 %v2596, %v2804
    %v3071 = vadd.f32 %v2597, %v2809
    %v3072 = vadd.f32 %v2598, %v2814
    %v3073 = vadd.f32 %v2599, %v2819
    %v3074 = vadd.f32 %v2600, %v2824
    %v3075 = vadd.f32 %v2601, %v2829
    %v3076 = vadd.f32 %v2602, %v2834
    %v3077 = vadd.f32 %v2603, %v2839
    %v3078 = vadd.f32 %v2604, %v2844
    %v3079 = vadd.f32 %v2605, %v2849
    %v3080 = vadd.f32 %v2606, %v2854
    %v3081 = vadd.f32 %v2607, %v2859
    %v3082 = vadd.f32 %v2608, %v2864
    %v3083 = vadd.f32 %v2609, %v2869
    %v3084 = vadd.f32 %v2610, %v2874
    %v3085 = vadd.f32 %v2611, %v2879
    %v3086 = vadd.f32 %v2612, %v2884
    %v3087 = vadd.f32 %v2613, %v2889
    %v3088 = vadd.f32 %v2614, %v2894
    %v3089 = vadd.f32 %v2615, %v2899
    %v3090 = vadd.f32 %v2616, %v2904
    %v3091 = vadd.f32 %v2617, %v2909
    %v3092 = vadd.f32 %v2618, %v2914
    %v3093 = vadd.f32 %v2619, %v2919
    %v3094 = vadd.f32 %v2620, %v2924
    %v3095 = vadd.f32 %v2621, %v2929
    %v3096 = vadd.f32 %v2622, %v2934
    %v3097 = vadd.f32 %v2623, %v2939
    %v3098 = vadd.f32 %v2624, %v2944
    %v3099 = vadd.f32 %v2625, %v2949
    %v3100 = vadd.f32 %v2626, %v2954
    %v3101 = vadd.f32 %v2627, %v2959
    %v3102 = vadd.f32 %v2628, %v2964
    %v3103 = vadd.f32 %v2629, %v2969
    %v3104 = vadd.f32 %v2630, %v2974
    %v3105 = vadd.f32 %v2631, %v2979
    %v3106 = vadd.f32 %v2632, %v2984
    %v3107 = vadd.f32 %v2633, %v2989
    %v3108 = vadd.f32 %v2634, %v2994
    %v3109 = vadd.f32 %v2635, %v2999
    %v3110 = vadd.f32 %v2636, %v3004
    %v3111 = vadd.f32 %v2637, %v3009
    %v3112 = vadd.f32 %v2638, %v3014
    %v3113 = vadd.f32 %v2639, %v3019
    %v3114 = vadd.f32 %v2640, %v3024
    %v3115 = vadd.f32 %v2641, %v3029
    %v3116 = vadd.f32 %v2642, %v3034
    %v3117 = vadd.f32 %v2643, %v3039
    %v3118 = vadd.f32 %v2644, %v3044
    %v3119 = vadd.f32 %v2645, %v3049
    %v3120 = vadd.f32 %v2646, %v3054
    %v3121 = vrot.slane %v84, 2
    %v3122 = vrot.slane %v85, 2
    %v3123 = vsel %vm1438, %v3121, %v3122
    %v3124 = vrot.slane %v86, 2
    %v3125 = vsel %vm1438, %v3122, %v3124
    %v3126 = vrot.slane %v138, 2
    %v3127 = vrot.slane %v139, 2
    %v3128 = vsel %vm1438, %v3126, %v3127
    %v3129 = vrot.slane %v140, 2
    %v3130 = vsel %vm1438, %v3127, %v3129
    %s3131 = scalar_lea.vmem %s1, 20
    %v3132 = vld [vmem:[%s3131] sm:$0xf]
    %v3133 = vsel %vm404, %v3123, 0
    %v3135 = vsel %vm404, %v3125, 0
    %v3137 = vsel %vm404, %v3128, 0
    %v3139 = vsel %vm404, %v3130, 0
    %v3142 = vsel %vm533, %v3132, 0
    %3144 = vmatprep.subr.mxu0 0.0
    %3145 = vmatpush1.msra.mxu0 0.0
    %3146 = vmatprep.subr.mxu0 0.0
    %3147 = vmatpush1.msra.mxu0 0.0
    %3148 = vmatprep.subr.mxu0 0.0
    %3149 = vmatpush1.msra.mxu0 0.0
    %3150 = vmatprep.subr.mxu0 0.0
    %3151 = vmatpush1.msra.mxu0 0.0
    %3152 = vmatprep.subr.mxu0 0.0
    %3153 = vmatpush1.msra.mxu0 0.0
    %3154 = vmatprep.subr.mxu0 0.0
    %3155 = vmatpush1.msra.mxu0 0.0
    %3156 = vmatprep.subr.mxu0 0.0
    %3157 = vmatpush1.msra.mxu0 0.0
    %3158 = vmatprep.subr.mxu0 0.0
    %3159 = vmatpush1.msra.mxu0 0.0
    %3160 = vmatprep.subr.mxu0 0.0
    %3161 = vmatpush1.msra.mxu0 0.0
    %3162 = vmatprep.subr.mxu0 0.0
    %3163 = vmatpush1.msra.mxu0 0.0
    %3164 = vmatprep.subr.mxu0 0.0
    %3165 = vmatpush1.msra.mxu0 0.0
    %3166 = vmatprep.subr.mxu0 0.0
    %3167 = vmatpush1.msra.mxu0 0.0
    %3168 = vmatprep.subr.mxu0 0.0
    %3169 = vmatpush1.msra.mxu0 0.0
    %3170 = vmatprep.subr.mxu0 0.0
    %3171 = vmatpush1.msra.mxu0 0.0
    %3172 = vmatprep.subr.mxu0 0.0
    %3173 = vmatpush1.msra.mxu0 0.0
    %3174 = vmatprep.subr.mxu0 0.0
    %3175 = vmatpush1.msra.mxu0 %v3142
    %3176 = vmatprep.subr.mxu0 0.0
    %3177 = vmatpush2.msra.mxu0 0.0
    %3178 = vmatprep.subr.mxu0 0.0
    %3179 = vmatpush2.msra.mxu0 0.0
    %3180 = vmatprep.subr.mxu0 0.0
    %3181 = vmatpush2.msra.mxu0 0.0
    %3182 = vmatprep.subr.mxu0 0.0
    %3183 = vmatpush2.msra.mxu0 0.0
    %3184 = vmatprep.subr.mxu0 0.0
    %3185 = vmatpush2.msra.mxu0 0.0
    %3186 = vmatprep.subr.mxu0 0.0
    %3187 = vmatpush2.msra.mxu0 0.0
    %3188 = vmatprep.subr.mxu0 0.0
    %3189 = vmatpush2.msra.mxu0 0.0
    %3190 = vmatprep.subr.mxu0 0.0
    %3191 = vmatpush2.msra.mxu0 0.0
    %3192 = vmatprep.subr.mxu0 0.0
    %3193 = vmatpush2.msra.mxu0 0.0
    %3194 = vmatprep.subr.mxu0 0.0
    %3195 = vmatpush2.msra.mxu0 0.0
    %3196 = vmatprep.subr.mxu0 0.0
    %3197 = vmatpush2.msra.mxu0 0.0
    %3198 = vmatprep.subr.mxu0 0.0
    %3199 = vmatpush2.msra.mxu0 0.0
    %3200 = vmatprep.subr.mxu0 0.0
    %3201 = vmatpush2.msra.mxu0 0.0
    %3202 = vmatprep.subr.mxu0 0.0
    %3203 = vmatpush2.msra.mxu0 0.0
    %3204 = vmatprep.subr.mxu0 0.0
    %3205 = vmatpush2.msra.mxu0 0.0
    %3206 = vmatprep.subr.mxu0 0.0
    %3207 = vmatpush2.msra.mxu0 0.0
    %3208 = vmatprep.mubr.f32.mxu0 0.0
    %3209 = vmatmul.mubr.f32.gmra.mxu0 %v1605
    %v3210 = vpop.f32.mrf.mxu0
    %v3211 = vadd.f32 0.0, %v3210
    %v3212 = vpop.f32.mrf.mxu0
    %3213 = vmatprep.mubr.f32.mxu0 0.0
    %3214 = vmatmul.mubr.f32.gmra.mxu0 %v1607
    %v3215 = vpop.f32.mrf.mxu0
    %v3216 = vadd.f32 0.0, %v3215
    %v3217 = vpop.f32.mrf.mxu0
    %3218 = vmatprep.mubr.f32.mxu0 0.0
    %3219 = vmatmul.mubr.f32.gmra.mxu0 %v1609
    %v3220 = vpop.f32.mrf.mxu0
    %v3221 = vadd.f32 0.0, %v3220
    %v3222 = vpop.f32.mrf.mxu0
    %3223 = vmatprep.mubr.f32.mxu0 0.0
    %3224 = vmatmul.mubr.f32.gmra.mxu0 %v1611
    %v3225 = vpop.f32.mrf.mxu0
    %v3226 = vadd.f32 0.0, %v3225
    %v3227 = vpop.f32.mrf.mxu0
    %3228 = vmatprep.mubr.f32.mxu0 0.0
    %3229 = vmatmul.mubr.f32.gmra.mxu0 %v1613
    %v3230 = vpop.f32.mrf.mxu0
    %v3231 = vadd.f32 0.0, %v3230
    %v3232 = vpop.f32.mrf.mxu0
    %3233 = vmatprep.mubr.f32.mxu0 0.0
    %3234 = vmatmul.mubr.f32.gmra.mxu0 %v1615
    %v3235 = vpop.f32.mrf.mxu0
    %v3236 = vadd.f32 0.0, %v3235
    %v3237 = vpop.f32.mrf.mxu0
    %3238 = vmatprep.mubr.f32.mxu0 0.0
    %3239 = vmatmul.mubr.f32.gmra.mxu0 %v1617
    %v3240 = vpop.f32.mrf.mxu0
    %v3241 = vadd.f32 0.0, %v3240
    %v3242 = vpop.f32.mrf.mxu0
    %3243 = vmatprep.mubr.f32.mxu0 0.0
    %3244 = vmatmul.mubr.f32.gmra.mxu0 %v1619
    %v3245 = vpop.f32.mrf.mxu0
    %v3246 = vadd.f32 0.0, %v3245
    %v3247 = vpop.f32.mrf.mxu0
    %3248 = vmatprep.mubr.f32.mxu0 0.0
    %3249 = vmatmul.mubr.f32.gmra.mxu0 %v1621
    %v3250 = vpop.f32.mrf.mxu0
    %v3251 = vadd.f32 0.0, %v3250
    %v3252 = vpop.f32.mrf.mxu0
    %3253 = vmatprep.mubr.f32.mxu0 0.0
    %3254 = vmatmul.mubr.f32.gmra.mxu0 %v1623
    %v3255 = vpop.f32.mrf.mxu0
    %v3256 = vadd.f32 0.0, %v3255
    %v3257 = vpop.f32.mrf.mxu0
    %3258 = vmatprep.mubr.f32.mxu0 0.0
    %3259 = vmatmul.mubr.f32.gmra.mxu0 %v1625
    %v3260 = vpop.f32.mrf.mxu0
    %v3261 = vadd.f32 0.0, %v3260
    %v3262 = vpop.f32.mrf.mxu0
    %3263 = vmatprep.mubr.f32.mxu0 0.0
    %3264 = vmatmul.mubr.f32.gmra.mxu0 %v1627
    %v3265 = vpop.f32.mrf.mxu0
    %v3266 = vadd.f32 0.0, %v3265
    %v3267 = vpop.f32.mrf.mxu0
    %3268 = vmatprep.mubr.f32.mxu0 0.0
    %3269 = vmatmul.mubr.f32.gmra.mxu0 %v1629
    %v3270 = vpop.f32.mrf.mxu0
    %v3271 = vadd.f32 0.0, %v3270
    %v3272 = vpop.f32.mrf.mxu0
    %3273 = vmatprep.mubr.f32.mxu0 0.0
    %3274 = vmatmul.mubr.f32.gmra.mxu0 %v1631
    %v3275 = vpop.f32.mrf.mxu0
    %v3276 = vadd.f32 0.0, %v3275
    %v3277 = vpop.f32.mrf.mxu0
    %3278 = vmatprep.mubr.f32.mxu0 0.0
    %3279 = vmatmul.mubr.f32.gmra.mxu0 %v1633
    %v3280 = vpop.f32.mrf.mxu0
    %v3281 = vadd.f32 0.0, %v3280
    %v3282 = vpop.f32.mrf.mxu0
    %3283 = vmatprep.mubr.f32.mxu0 0.0
    %3284 = vmatmul.mubr.f32.gmra.mxu0 %v1635
    %v3285 = vpop.f32.mrf.mxu0
    %v3286 = vadd.f32 0.0, %v3285
    %v3287 = vpop.f32.mrf.mxu0
    %3288 = vmatprep.mubr.f32.mxu0 0.0
    %3289 = vmatmul.mubr.f32.gmra.mxu0 %v1637
    %v3290 = vpop.f32.mrf.mxu0
    %v3291 = vadd.f32 0.0, %v3290
    %v3292 = vpop.f32.mrf.mxu0
    %3293 = vmatprep.mubr.f32.mxu0 0.0
    %3294 = vmatmul.mubr.f32.gmra.mxu0 %v1639
    %v3295 = vpop.f32.mrf.mxu0
    %v3296 = vadd.f32 0.0, %v3295
    %v3297 = vpop.f32.mrf.mxu0
    %3298 = vmatprep.mubr.f32.mxu0 0.0
    %3299 = vmatmul.mubr.f32.gmra.mxu0 %v1641
    %v3300 = vpop.f32.mrf.mxu0
    %v3301 = vadd.f32 0.0, %v3300
    %v3302 = vpop.f32.mrf.mxu0
    %3303 = vmatprep.mubr.f32.mxu0 0.0
    %3304 = vmatmul.mubr.f32.gmra.mxu0 %v1643
    %v3305 = vpop.f32.mrf.mxu0
    %v3306 = vadd.f32 0.0, %v3305
    %v3307 = vpop.f32.mrf.mxu0
    %3308 = vmatprep.mubr.f32.mxu0 0.0
    %3309 = vmatmul.mubr.f32.gmra.mxu0 %v1645
    %v3310 = vpop.f32.mrf.mxu0
    %v3311 = vadd.f32 0.0, %v3310
    %v3312 = vpop.f32.mrf.mxu0
    %3313 = vmatprep.mubr.f32.mxu0 0.0
    %3314 = vmatmul.mubr.f32.gmra.mxu0 %v1647
    %v3315 = vpop.f32.mrf.mxu0
    %v3316 = vadd.f32 0.0, %v3315
    %v3317 = vpop.f32.mrf.mxu0
    %3318 = vmatprep.mubr.f32.mxu0 0.0
    %3319 = vmatmul.mubr.f32.gmra.mxu0 %v1649
    %v3320 = vpop.f32.mrf.mxu0
    %v3321 = vadd.f32 0.0, %v3320
    %v3322 = vpop.f32.mrf.mxu0
    %3323 = vmatprep.mubr.f32.mxu0 0.0
    %3324 = vmatmul.mubr.f32.gmra.mxu0 %v1651
    %v3325 = vpop.f32.mrf.mxu0
    %v3326 = vadd.f32 0.0, %v3325
    %v3327 = vpop.f32.mrf.mxu0
    %3328 = vmatprep.mubr.f32.mxu0 0.0
    %3329 = vmatmul.mubr.f32.gmra.mxu0 %v1653
    %v3330 = vpop.f32.mrf.mxu0
    %v3331 = vadd.f32 0.0, %v3330
    %v3332 = vpop.f32.mrf.mxu0
    %3333 = vmatprep.mubr.f32.mxu0 0.0
    %3334 = vmatmul.mubr.f32.gmra.mxu0 %v1655
    %v3335 = vpop.f32.mrf.mxu0
    %v3336 = vadd.f32 0.0, %v3335
    %v3337 = vpop.f32.mrf.mxu0
    %3338 = vmatprep.mubr.f32.mxu0 0.0
    %3339 = vmatmul.mubr.f32.gmra.mxu0 %v1657
    %v3340 = vpop.f32.mrf.mxu0
    %v3341 = vadd.f32 0.0, %v3340
    %v3342 = vpop.f32.mrf.mxu0
    %3343 = vmatprep.mubr.f32.mxu0 0.0
    %3344 = vmatmul.mubr.f32.gmra.mxu0 %v1659
    %v3345 = vpop.f32.mrf.mxu0
    %v3346 = vadd.f32 0.0, %v3345
    %v3347 = vpop.f32.mrf.mxu0
    %3348 = vmatprep.mubr.f32.mxu0 0.0
    %3349 = vmatmul.mubr.f32.gmra.mxu0 %v1661
    %v3350 = vpop.f32.mrf.mxu0
    %v3351 = vadd.f32 0.0, %v3350
    %v3352 = vpop.f32.mrf.mxu0
    %3353 = vmatprep.mubr.f32.mxu0 0.0
    %3354 = vmatmul.mubr.f32.gmra.mxu0 %v1663
    %v3355 = vpop.f32.mrf.mxu0
    %v3356 = vadd.f32 0.0, %v3355
    %v3357 = vpop.f32.mrf.mxu0
    %3358 = vmatprep.mubr.f32.mxu0 0.0
    %3359 = vmatmul.mubr.f32.gmra.mxu0 %v3133
    %v3360 = vpop.f32.mrf.mxu0
    %v3361 = vadd.f32 0.0, %v3360
    %v3362 = vpop.f32.mrf.mxu0
    %3363 = vmatprep.mubr.f32.mxu0 0.0
    %3364 = vmatmul.mubr.f32.gmra.mxu0 %v3135
    %v3365 = vpop.f32.mrf.mxu0
    %v3366 = vadd.f32 0.0, %v3365
    %v3367 = vpop.f32.mrf.mxu0
    %3368 = vmatprep.mubr.f32.mxu0 0.0
    %3369 = vmatmul.mubr.f32.gmra.mxu0 %v1669
    %v3370 = vpop.f32.mrf.mxu0
    %v3371 = vadd.f32 0.0, %v3370
    %v3372 = vpop.f32.mrf.mxu0
    %3373 = vmatprep.mubr.f32.mxu0 0.0
    %3374 = vmatmul.mubr.f32.gmra.mxu0 %v1671
    %v3375 = vpop.f32.mrf.mxu0
    %v3376 = vadd.f32 0.0, %v3375
    %v3377 = vpop.f32.mrf.mxu0
    %3378 = vmatprep.mubr.f32.mxu0 0.0
    %3379 = vmatmul.mubr.f32.gmra.mxu0 %v1673
    %v3380 = vpop.f32.mrf.mxu0
    %v3381 = vadd.f32 0.0, %v3380
    %v3382 = vpop.f32.mrf.mxu0
    %3383 = vmatprep.mubr.f32.mxu0 0.0
    %3384 = vmatmul.mubr.f32.gmra.mxu0 %v1675
    %v3385 = vpop.f32.mrf.mxu0
    %v3386 = vadd.f32 0.0, %v3385
    %v3387 = vpop.f32.mrf.mxu0
    %3388 = vmatprep.mubr.f32.mxu0 0.0
    %3389 = vmatmul.mubr.f32.gmra.mxu0 %v1677
    %v3390 = vpop.f32.mrf.mxu0
    %v3391 = vadd.f32 0.0, %v3390
    %v3392 = vpop.f32.mrf.mxu0
    %3393 = vmatprep.mubr.f32.mxu0 0.0
    %3394 = vmatmul.mubr.f32.gmra.mxu0 %v1679
    %v3395 = vpop.f32.mrf.mxu0
    %v3396 = vadd.f32 0.0, %v3395
    %v3397 = vpop.f32.mrf.mxu0
    %3398 = vmatprep.mubr.f32.mxu0 0.0
    %3399 = vmatmul.mubr.f32.gmra.mxu0 %v1681
    %v3400 = vpop.f32.mrf.mxu0
    %v3401 = vadd.f32 0.0, %v3400
    %v3402 = vpop.f32.mrf.mxu0
    %3403 = vmatprep.mubr.f32.mxu0 0.0
    %3404 = vmatmul.mubr.f32.gmra.mxu0 %v1683
    %v3405 = vpop.f32.mrf.mxu0
    %v3406 = vadd.f32 0.0, %v3405
    %v3407 = vpop.f32.mrf.mxu0
    %3408 = vmatprep.mubr.f32.mxu0 0.0
    %3409 = vmatmul.mubr.f32.gmra.mxu0 %v1685
    %v3410 = vpop.f32.mrf.mxu0
    %v3411 = vadd.f32 0.0, %v3410
    %v3412 = vpop.f32.mrf.mxu0
    %3413 = vmatprep.mubr.f32.mxu0 0.0
    %3414 = vmatmul.mubr.f32.gmra.mxu0 %v1687
    %v3415 = vpop.f32.mrf.mxu0
    %v3416 = vadd.f32 0.0, %v3415
    %v3417 = vpop.f32.mrf.mxu0
    %3418 = vmatprep.mubr.f32.mxu0 0.0
    %3419 = vmatmul.mubr.f32.gmra.mxu0 %v1689
    %v3420 = vpop.f32.mrf.mxu0
    %v3421 = vadd.f32 0.0, %v3420
    %v3422 = vpop.f32.mrf.mxu0
    %3423 = vmatprep.mubr.f32.mxu0 0.0
    %3424 = vmatmul.mubr.f32.gmra.mxu0 %v1691
    %v3425 = vpop.f32.mrf.mxu0
    %v3426 = vadd.f32 0.0, %v3425
    %v3427 = vpop.f32.mrf.mxu0
    %3428 = vmatprep.mubr.f32.mxu0 0.0
    %3429 = vmatmul.mubr.f32.gmra.mxu0 %v1693
    %v3430 = vpop.f32.mrf.mxu0
    %v3431 = vadd.f32 0.0, %v3430
    %v3432 = vpop.f32.mrf.mxu0
    %3433 = vmatprep.mubr.f32.mxu0 0.0
    %3434 = vmatmul.mubr.f32.gmra.mxu0 %v1695
    %v3435 = vpop.f32.mrf.mxu0
    %v3436 = vadd.f32 0.0, %v3435
    %v3437 = vpop.f32.mrf.mxu0
    %3438 = vmatprep.mubr.f32.mxu0 0.0
    %3439 = vmatmul.mubr.f32.gmra.mxu0 %v1697
    %v3440 = vpop.f32.mrf.mxu0
    %v3441 = vadd.f32 0.0, %v3440
    %v3442 = vpop.f32.mrf.mxu0
    %3443 = vmatprep.mubr.f32.mxu0 0.0
    %3444 = vmatmul.mubr.f32.gmra.mxu0 %v1699
    %v3445 = vpop.f32.mrf.mxu0
    %v3446 = vadd.f32 0.0, %v3445
    %v3447 = vpop.f32.mrf.mxu0
    %3448 = vmatprep.mubr.f32.mxu0 0.0
    %3449 = vmatmul.mubr.f32.gmra.mxu0 %v1701
    %v3450 = vpop.f32.mrf.mxu0
    %v3451 = vadd.f32 0.0, %v3450
    %v3452 = vpop.f32.mrf.mxu0
    %3453 = vmatprep.mubr.f32.mxu0 0.0
    %3454 = vmatmul.mubr.f32.gmra.mxu0 %v1703
    %v3455 = vpop.f32.mrf.mxu0
    %v3456 = vadd.f32 0.0, %v3455
    %v3457 = vpop.f32.mrf.mxu0
    %3458 = vmatprep.mubr.f32.mxu0 0.0
    %3459 = vmatmul.mubr.f32.gmra.mxu0 %v1705
    %v3460 = vpop.f32.mrf.mxu0
    %v3461 = vadd.f32 0.0, %v3460
    %v3462 = vpop.f32.mrf.mxu0
    %3463 = vmatprep.mubr.f32.mxu0 0.0
    %3464 = vmatmul.mubr.f32.gmra.mxu0 %v1707
    %v3465 = vpop.f32.mrf.mxu0
    %v3466 = vadd.f32 0.0, %v3465
    %v3467 = vpop.f32.mrf.mxu0
    %3468 = vmatprep.mubr.f32.mxu0 0.0
    %3469 = vmatmul.mubr.f32.gmra.mxu0 %v1709
    %v3470 = vpop.f32.mrf.mxu0
    %v3471 = vadd.f32 0.0, %v3470
    %v3472 = vpop.f32.mrf.mxu0
    %3473 = vmatprep.mubr.f32.mxu0 0.0
    %3474 = vmatmul.mubr.f32.gmra.mxu0 %v1711
    %v3475 = vpop.f32.mrf.mxu0
    %v3476 = vadd.f32 0.0, %v3475
    %v3477 = vpop.f32.mrf.mxu0
    %3478 = vmatprep.mubr.f32.mxu0 0.0
    %3479 = vmatmul.mubr.f32.gmra.mxu0 %v1713
    %v3480 = vpop.f32.mrf.mxu0
    %v3481 = vadd.f32 0.0, %v3480
    %v3482 = vpop.f32.mrf.mxu0
    %3483 = vmatprep.mubr.f32.mxu0 0.0
    %3484 = vmatmul.mubr.f32.gmra.mxu0 %v1715
    %v3485 = vpop.f32.mrf.mxu0
    %v3486 = vadd.f32 0.0, %v3485
    %v3487 = vpop.f32.mrf.mxu0
    %3488 = vmatprep.mubr.f32.mxu0 0.0
    %3489 = vmatmul.mubr.f32.gmra.mxu0 %v1717
    %v3490 = vpop.f32.mrf.mxu0
    %v3491 = vadd.f32 0.0, %v3490
    %v3492 = vpop.f32.mrf.mxu0
    %3493 = vmatprep.mubr.f32.mxu0 0.0
    %3494 = vmatmul.mubr.f32.gmra.mxu0 %v1719
    %v3495 = vpop.f32.mrf.mxu0
    %v3496 = vadd.f32 0.0, %v3495
    %v3497 = vpop.f32.mrf.mxu0
    %3498 = vmatprep.mubr.f32.mxu0 0.0
    %3499 = vmatmul.mubr.f32.gmra.mxu0 %v1721
    %v3500 = vpop.f32.mrf.mxu0
    %v3501 = vadd.f32 0.0, %v3500
    %v3502 = vpop.f32.mrf.mxu0
    %3503 = vmatprep.mubr.f32.mxu0 0.0
    %3504 = vmatmul.mubr.f32.gmra.mxu0 %v1723
    %v3505 = vpop.f32.mrf.mxu0
    %v3506 = vadd.f32 0.0, %v3505
    %v3507 = vpop.f32.mrf.mxu0
    %3508 = vmatprep.mubr.f32.mxu0 0.0
    %3509 = vmatmul.mubr.f32.gmra.mxu0 %v1725
    %v3510 = vpop.f32.mrf.mxu0
    %v3511 = vadd.f32 0.0, %v3510
    %v3512 = vpop.f32.mrf.mxu0
    %3513 = vmatprep.mubr.f32.mxu0 0.0
    %3514 = vmatmul.mubr.f32.gmra.mxu0 %v1727
    %v3515 = vpop.f32.mrf.mxu0
    %v3516 = vadd.f32 0.0, %v3515
    %v3517 = vpop.f32.mrf.mxu0
    %3518 = vmatprep.mubr.f32.mxu0 0.0
    %3519 = vmatmul.mubr.f32.gmra.mxu0 %v3137
    %v3520 = vpop.f32.mrf.mxu0
    %v3521 = vadd.f32 0.0, %v3520
    %v3522 = vpop.f32.mrf.mxu0
    %3523 = vmatprep.mubr.f32.mxu0 0.0
    %3524 = vmatmul.mubr.f32.gmra.mxu0 %v3139
    %v3525 = vpop.f32.mrf.mxu0
    %v3526 = vadd.f32 0.0, %v3525
    %v3527 = vpop.f32.mrf.mxu0
    %3528 = vdwg.mxu0
    %v3529 = vadd.f32 %v3057, %v3211
    %v3530 = vadd.f32 %v3058, %v3216
    %v3531 = vadd.f32 %v3059, %v3221
    %v3532 = vadd.f32 %v3060, %v3226
    %v3533 = vadd.f32 %v3061, %v3231
    %v3534 = vadd.f32 %v3062, %v3236
    %v3535 = vadd.f32 %v3063, %v3241
    %v3536 = vadd.f32 %v3064, %v3246
    %v3537 = vadd.f32 %v3065, %v3251
    %v3538 = vadd.f32 %v3066, %v3256
    %v3539 = vadd.f32 %v3067, %v3261
    %v3540 = vadd.f32 %v3068, %v3266
    %v3541 = vadd.f32 %v3069, %v3271
    %v3542 = vadd.f32 %v3070, %v3276
    %v3543 = vadd.f32 %v3071, %v3281
    %v3544 = vadd.f32 %v3072, %v3286
    %v3545 = vadd.f32 %v3073, %v3291
    %v3546 = vadd.f32 %v3074, %v3296
    %v3547 = vadd.f32 %v3075, %v3301
    %v3548 = vadd.f32 %v3076, %v3306
    %v3549 = vadd.f32 %v3077, %v3311
    %v3550 = vadd.f32 %v3078, %v3316
    %v3551 = vadd.f32 %v3079, %v3321
    %v3552 = vadd.f32 %v3080, %v3326
    %v3553 = vadd.f32 %v3081, %v3331
    %v3554 = vadd.f32 %v3082, %v3336
    %v3555 = vadd.f32 %v3083, %v3341
    %v3556 = vadd.f32 %v3084, %v3346
    %v3557 = vadd.f32 %v3085, %v3351
    %v3558 = vadd.f32 %v3086, %v3356
    %v3559 = vadd.f32 %v3087, %v3361
    %v3560 = vadd.f32 %v3088, %v3366
    %v3561 = vadd.f32 %v3089, %v3371
    %v3562 = vadd.f32 %v3090, %v3376
    %v3563 = vadd.f32 %v3091, %v3381
    %v3564 = vadd.f32 %v3092, %v3386
    %v3565 = vadd.f32 %v3093, %v3391
    %v3566 = vadd.f32 %v3094, %v3396
    %v3567 = vadd.f32 %v3095, %v3401
    %v3568 = vadd.f32 %v3096, %v3406
    %v3569 = vadd.f32 %v3097, %v3411
    %v3570 = vadd.f32 %v3098, %v3416
    %v3571 = vadd.f32 %v3099, %v3421
    %v3572 = vadd.f32 %v3100, %v3426
    %v3573 = vadd.f32 %v3101, %v3431
    %v3574 = vadd.f32 %v3102, %v3436
    %v3575 = vadd.f32 %v3103, %v3441
    %v3576 = vadd.f32 %v3104, %v3446
    %v3577 = vadd.f32 %v3105, %v3451
    %v3578 = vadd.f32 %v3106, %v3456
    %v3579 = vadd.f32 %v3107, %v3461
    %v3580 = vadd.f32 %v3108, %v3466
    %v3581 = vadd.f32 %v3109, %v3471
    %v3582 = vadd.f32 %v3110, %v3476
    %v3583 = vadd.f32 %v3111, %v3481
    %v3584 = vadd.f32 %v3112, %v3486
    %v3585 = vadd.f32 %v3113, %v3491
    %v3586 = vadd.f32 %v3114, %v3496
    %v3587 = vadd.f32 %v3115, %v3501
    %v3588 = vadd.f32 %v3116, %v3506
    %v3589 = vadd.f32 %v3117, %v3511
    %v3590 = vadd.f32 %v3118, %v3516
    %v3591 = vadd.f32 %v3119, %v3521
    %v3592 = vadd.f32 %v3120, %v3526
    %s3593 = scalar_lea.vmem %s1, 24
    %v3594 = vld [vmem:[%s3593] sm:$0xf]
    %v3596 = vsel %vm404, %v87, 0
    %v3599 = vsel %vm404, %v88, 0
    %v3602 = vsel %vm404, %v141, 0
    %v3605 = vsel %vm404, %v142, 0
    %v3608 = vsel %vm533, %v3594, 0
    %3610 = vmatprep.subr.mxu0 0.0
    %3611 = vmatpush1.msra.mxu0 0.0
    %3612 = vmatprep.subr.mxu0 0.0
    %3613 = vmatpush1.msra.mxu0 0.0
    %3614 = vmatprep.subr.mxu0 0.0
    %3615 = vmatpush1.msra.mxu0 0.0
    %3616 = vmatprep.subr.mxu0 0.0
    %3617 = vmatpush1.msra.mxu0 0.0
    %3618 = vmatprep.subr.mxu0 0.0
    %3619 = vmatpush1.msra.mxu0 0.0
    %3620 = vmatprep.subr.mxu0 0.0
    %3621 = vmatpush1.msra.mxu0 0.0
    %3622 = vmatprep.subr.mxu0 0.0
    %3623 = vmatpush1.msra.mxu0 0.0
    %3624 = vmatprep.subr.mxu0 0.0
    %3625 = vmatpush1.msra.mxu0 0.0
    %3626 = vmatprep.subr.mxu0 0.0
    %3627 = vmatpush1.msra.mxu0 0.0
    %3628 = vmatprep.subr.mxu0 0.0
    %3629 = vmatpush1.msra.mxu0 0.0
    %3630 = vmatprep.subr.mxu0 0.0
    %3631 = vmatpush1.msra.mxu0 0.0
    %3632 = vmatprep.subr.mxu0 0.0
    %3633 = vmatpush1.msra.mxu0 0.0
    %3634 = vmatprep.subr.mxu0 0.0
    %3635 = vmatpush1.msra.mxu0 0.0
    %3636 = vmatprep.subr.mxu0 0.0
    %3637 = vmatpush1.msra.mxu0 0.0
    %3638 = vmatprep.subr.mxu0 0.0
    %3639 = vmatpush1.msra.mxu0 0.0
    %3640 = vmatprep.subr.mxu0 0.0
    %3641 = vmatpush1.msra.mxu0 %v3608
    %3642 = vmatprep.subr.mxu0 0.0
    %3643 = vmatpush2.msra.mxu0 0.0
    %3644 = vmatprep.subr.mxu0 0.0
    %3645 = vmatpush2.msra.mxu0 0.0
    %3646 = vmatprep.subr.mxu0 0.0
    %3647 = vmatpush2.msra.mxu0 0.0
    %3648 = vmatprep.subr.mxu0 0.0
    %3649 = vmatpush2.msra.mxu0 0.0
    %3650 = vmatprep.subr.mxu0 0.0
    %3651 = vmatpush2.msra.mxu0 0.0
    %3652 = vmatprep.subr.mxu0 0.0
    %3653 = vmatpush2.msra.mxu0 0.0
    %3654 = vmatprep.subr.mxu0 0.0
    %3655 = vmatpush2.msra.mxu0 0.0
    %3656 = vmatprep.subr.mxu0 0.0
    %3657 = vmatpush2.msra.mxu0 0.0
    %3658 = vmatprep.subr.mxu0 0.0
    %3659 = vmatpush2.msra.mxu0 0.0
    %3660 = vmatprep.subr.mxu0 0.0
    %3661 = vmatpush2.msra.mxu0 0.0
    %3662 = vmatprep.subr.mxu0 0.0
    %3663 = vmatpush2.msra.mxu0 0.0
    %3664 = vmatprep.subr.mxu0 0.0
    %3665 = vmatpush2.msra.mxu0 0.0
    %3666 = vmatprep.subr.mxu0 0.0
    %3667 = vmatpush2.msra.mxu0 0.0
    %3668 = vmatprep.subr.mxu0 0.0
    %3669 = vmatpush2.msra.mxu0 0.0
    %3670 = vmatprep.subr.mxu0 0.0
    %3671 = vmatpush2.msra.mxu0 0.0
    %3672 = vmatprep.subr.mxu0 0.0
    %3673 = vmatpush2.msra.mxu0 0.0
    %3674 = vmatprep.mubr.f32.mxu0 0.0
    %3675 = vmatmul.mubr.f32.gmra.mxu0 %v930
    %v3676 = vpop.f32.mrf.mxu0
    %v3677 = vadd.f32 0.0, %v3676
    %v3678 = vpop.f32.mrf.mxu0
    %3679 = vmatprep.mubr.f32.mxu0 0.0
    %3680 = vmatmul.mubr.f32.gmra.mxu0 %v932
    %v3681 = vpop.f32.mrf.mxu0
    %v3682 = vadd.f32 0.0, %v3681
    %v3683 = vpop.f32.mrf.mxu0
    %3684 = vmatprep.mubr.f32.mxu0 0.0
    %3685 = vmatmul.mubr.f32.gmra.mxu0 %v934
    %v3686 = vpop.f32.mrf.mxu0
    %v3687 = vadd.f32 0.0, %v3686
    %v3688 = vpop.f32.mrf.mxu0
    %3689 = vmatprep.mubr.f32.mxu0 0.0
    %3690 = vmatmul.mubr.f32.gmra.mxu0 %v936
    %v3691 = vpop.f32.mrf.mxu0
    %v3692 = vadd.f32 0.0, %v3691
    %v3693 = vpop.f32.mrf.mxu0
    %3694 = vmatprep.mubr.f32.mxu0 0.0
    %3695 = vmatmul.mubr.f32.gmra.mxu0 %v938
    %v3696 = vpop.f32.mrf.mxu0
    %v3697 = vadd.f32 0.0, %v3696
    %v3698 = vpop.f32.mrf.mxu0
    %3699 = vmatprep.mubr.f32.mxu0 0.0
    %3700 = vmatmul.mubr.f32.gmra.mxu0 %v940
    %v3701 = vpop.f32.mrf.mxu0
    %v3702 = vadd.f32 0.0, %v3701
    %v3703 = vpop.f32.mrf.mxu0
    %3704 = vmatprep.mubr.f32.mxu0 0.0
    %3705 = vmatmul.mubr.f32.gmra.mxu0 %v942
    %v3706 = vpop.f32.mrf.mxu0
    %v3707 = vadd.f32 0.0, %v3706
    %v3708 = vpop.f32.mrf.mxu0
    %3709 = vmatprep.mubr.f32.mxu0 0.0
    %3710 = vmatmul.mubr.f32.gmra.mxu0 %v944
    %v3711 = vpop.f32.mrf.mxu0
    %v3712 = vadd.f32 0.0, %v3711
    %v3713 = vpop.f32.mrf.mxu0
    %3714 = vmatprep.mubr.f32.mxu0 0.0
    %3715 = vmatmul.mubr.f32.gmra.mxu0 %v946
    %v3716 = vpop.f32.mrf.mxu0
    %v3717 = vadd.f32 0.0, %v3716
    %v3718 = vpop.f32.mrf.mxu0
    %3719 = vmatprep.mubr.f32.mxu0 0.0
    %3720 = vmatmul.mubr.f32.gmra.mxu0 %v948
    %v3721 = vpop.f32.mrf.mxu0
    %v3722 = vadd.f32 0.0, %v3721
    %v3723 = vpop.f32.mrf.mxu0
    %3724 = vmatprep.mubr.f32.mxu0 0.0
    %3725 = vmatmul.mubr.f32.gmra.mxu0 %v950
    %v3726 = vpop.f32.mrf.mxu0
    %v3727 = vadd.f32 0.0, %v3726
    %v3728 = vpop.f32.mrf.mxu0
    %3729 = vmatprep.mubr.f32.mxu0 0.0
    %3730 = vmatmul.mubr.f32.gmra.mxu0 %v952
    %v3731 = vpop.f32.mrf.mxu0
    %v3732 = vadd.f32 0.0, %v3731
    %v3733 = vpop.f32.mrf.mxu0
    %3734 = vmatprep.mubr.f32.mxu0 0.0
    %3735 = vmatmul.mubr.f32.gmra.mxu0 %v954
    %v3736 = vpop.f32.mrf.mxu0
    %v3737 = vadd.f32 0.0, %v3736
    %v3738 = vpop.f32.mrf.mxu0
    %3739 = vmatprep.mubr.f32.mxu0 0.0
    %3740 = vmatmul.mubr.f32.gmra.mxu0 %v956
    %v3741 = vpop.f32.mrf.mxu0
    %v3742 = vadd.f32 0.0, %v3741
    %v3743 = vpop.f32.mrf.mxu0
    %3744 = vmatprep.mubr.f32.mxu0 0.0
    %3745 = vmatmul.mubr.f32.gmra.mxu0 %v958
    %v3746 = vpop.f32.mrf.mxu0
    %v3747 = vadd.f32 0.0, %v3746
    %v3748 = vpop.f32.mrf.mxu0
    %3749 = vmatprep.mubr.f32.mxu0 0.0
    %3750 = vmatmul.mubr.f32.gmra.mxu0 %v960
    %v3751 = vpop.f32.mrf.mxu0
    %v3752 = vadd.f32 0.0, %v3751
    %v3753 = vpop.f32.mrf.mxu0
    %3754 = vmatprep.mubr.f32.mxu0 0.0
    %3755 = vmatmul.mubr.f32.gmra.mxu0 %v962
    %v3756 = vpop.f32.mrf.mxu0
    %v3757 = vadd.f32 0.0, %v3756
    %v3758 = vpop.f32.mrf.mxu0
    %3759 = vmatprep.mubr.f32.mxu0 0.0
    %3760 = vmatmul.mubr.f32.gmra.mxu0 %v964
    %v3761 = vpop.f32.mrf.mxu0
    %v3762 = vadd.f32 0.0, %v3761
    %v3763 = vpop.f32.mrf.mxu0
    %3764 = vmatprep.mubr.f32.mxu0 0.0
    %3765 = vmatmul.mubr.f32.gmra.mxu0 %v966
    %v3766 = vpop.f32.mrf.mxu0
    %v3767 = vadd.f32 0.0, %v3766
    %v3768 = vpop.f32.mrf.mxu0
    %3769 = vmatprep.mubr.f32.mxu0 0.0
    %3770 = vmatmul.mubr.f32.gmra.mxu0 %v968
    %v3771 = vpop.f32.mrf.mxu0
    %v3772 = vadd.f32 0.0, %v3771
    %v3773 = vpop.f32.mrf.mxu0
    %3774 = vmatprep.mubr.f32.mxu0 0.0
    %3775 = vmatmul.mubr.f32.gmra.mxu0 %v970
    %v3776 = vpop.f32.mrf.mxu0
    %v3777 = vadd.f32 0.0, %v3776
    %v3778 = vpop.f32.mrf.mxu0
    %3779 = vmatprep.mubr.f32.mxu0 0.0
    %3780 = vmatmul.mubr.f32.gmra.mxu0 %v972
    %v3781 = vpop.f32.mrf.mxu0
    %v3782 = vadd.f32 0.0, %v3781
    %v3783 = vpop.f32.mrf.mxu0
    %3784 = vmatprep.mubr.f32.mxu0 0.0
    %3785 = vmatmul.mubr.f32.gmra.mxu0 %v974
    %v3786 = vpop.f32.mrf.mxu0
    %v3787 = vadd.f32 0.0, %v3786
    %v3788 = vpop.f32.mrf.mxu0
    %3789 = vmatprep.mubr.f32.mxu0 0.0
    %3790 = vmatmul.mubr.f32.gmra.mxu0 %v976
    %v3791 = vpop.f32.mrf.mxu0
    %v3792 = vadd.f32 0.0, %v3791
    %v3793 = vpop.f32.mrf.mxu0
    %3794 = vmatprep.mubr.f32.mxu0 0.0
    %3795 = vmatmul.mubr.f32.gmra.mxu0 %v978
    %v3796 = vpop.f32.mrf.mxu0
    %v3797 = vadd.f32 0.0, %v3796
    %v3798 = vpop.f32.mrf.mxu0
    %3799 = vmatprep.mubr.f32.mxu0 0.0
    %3800 = vmatmul.mubr.f32.gmra.mxu0 %v980
    %v3801 = vpop.f32.mrf.mxu0
    %v3802 = vadd.f32 0.0, %v3801
    %v3803 = vpop.f32.mrf.mxu0
    %3804 = vmatprep.mubr.f32.mxu0 0.0
    %3805 = vmatmul.mubr.f32.gmra.mxu0 %v982
    %v3806 = vpop.f32.mrf.mxu0
    %v3807 = vadd.f32 0.0, %v3806
    %v3808 = vpop.f32.mrf.mxu0
    %3809 = vmatprep.mubr.f32.mxu0 0.0
    %3810 = vmatmul.mubr.f32.gmra.mxu0 %v984
    %v3811 = vpop.f32.mrf.mxu0
    %v3812 = vadd.f32 0.0, %v3811
    %v3813 = vpop.f32.mrf.mxu0
    %3814 = vmatprep.mubr.f32.mxu0 0.0
    %3815 = vmatmul.mubr.f32.gmra.mxu0 %v2184
    %v3816 = vpop.f32.mrf.mxu0
    %v3817 = vadd.f32 0.0, %v3816
    %v3818 = vpop.f32.mrf.mxu0
    %3819 = vmatprep.mubr.f32.mxu0 0.0
    %3820 = vmatmul.mubr.f32.gmra.mxu0 %v2187
    %v3821 = vpop.f32.mrf.mxu0
    %v3822 = vadd.f32 0.0, %v3821
    %v3823 = vpop.f32.mrf.mxu0
    %3824 = vmatprep.mubr.f32.mxu0 0.0
    %3825 = vmatmul.mubr.f32.gmra.mxu0 %v3596
    %v3826 = vpop.f32.mrf.mxu0
    %v3827 = vadd.f32 0.0, %v3826
    %v3828 = vpop.f32.mrf.mxu0
    %3829 = vmatprep.mubr.f32.mxu0 0.0
    %3830 = vmatmul.mubr.f32.gmra.mxu0 %v3599
    %v3831 = vpop.f32.mrf.mxu0
    %v3832 = vadd.f32 0.0, %v3831
    %v3833 = vpop.f32.mrf.mxu0
    %3834 = vmatprep.mubr.f32.mxu0 0.0
    %3835 = vmatmul.mubr.f32.gmra.mxu0 %v994
    %v3836 = vpop.f32.mrf.mxu0
    %v3837 = vadd.f32 0.0, %v3836
    %v3838 = vpop.f32.mrf.mxu0
    %3839 = vmatprep.mubr.f32.mxu0 0.0
    %3840 = vmatmul.mubr.f32.gmra.mxu0 %v996
    %v3841 = vpop.f32.mrf.mxu0
    %v3842 = vadd.f32 0.0, %v3841
    %v3843 = vpop.f32.mrf.mxu0
    %3844 = vmatprep.mubr.f32.mxu0 0.0
    %3845 = vmatmul.mubr.f32.gmra.mxu0 %v998
    %v3846 = vpop.f32.mrf.mxu0
    %v3847 = vadd.f32 0.0, %v3846
    %v3848 = vpop.f32.mrf.mxu0
    %3849 = vmatprep.mubr.f32.mxu0 0.0
    %3850 = vmatmul.mubr.f32.gmra.mxu0 %v1000
    %v3851 = vpop.f32.mrf.mxu0
    %v3852 = vadd.f32 0.0, %v3851
    %v3853 = vpop.f32.mrf.mxu0
    %3854 = vmatprep.mubr.f32.mxu0 0.0
    %3855 = vmatmul.mubr.f32.gmra.mxu0 %v1002
    %v3856 = vpop.f32.mrf.mxu0
    %v3857 = vadd.f32 0.0, %v3856
    %v3858 = vpop.f32.mrf.mxu0
    %3859 = vmatprep.mubr.f32.mxu0 0.0
    %3860 = vmatmul.mubr.f32.gmra.mxu0 %v1004
    %v3861 = vpop.f32.mrf.mxu0
    %v3862 = vadd.f32 0.0, %v3861
    %v3863 = vpop.f32.mrf.mxu0
    %3864 = vmatprep.mubr.f32.mxu0 0.0
    %3865 = vmatmul.mubr.f32.gmra.mxu0 %v1006
    %v3866 = vpop.f32.mrf.mxu0
    %v3867 = vadd.f32 0.0, %v3866
    %v3868 = vpop.f32.mrf.mxu0
    %3869 = vmatprep.mubr.f32.mxu0 0.0
    %3870 = vmatmul.mubr.f32.gmra.mxu0 %v1008
    %v3871 = vpop.f32.mrf.mxu0
    %v3872 = vadd.f32 0.0, %v3871
    %v3873 = vpop.f32.mrf.mxu0
    %3874 = vmatprep.mubr.f32.mxu0 0.0
    %3875 = vmatmul.mubr.f32.gmra.mxu0 %v1010
    %v3876 = vpop.f32.mrf.mxu0
    %v3877 = vadd.f32 0.0, %v3876
    %v3878 = vpop.f32.mrf.mxu0
    %3879 = vmatprep.mubr.f32.mxu0 0.0
    %3880 = vmatmul.mubr.f32.gmra.mxu0 %v1012
    %v3881 = vpop.f32.mrf.mxu0
    %v3882 = vadd.f32 0.0, %v3881
    %v3883 = vpop.f32.mrf.mxu0
    %3884 = vmatprep.mubr.f32.mxu0 0.0
    %3885 = vmatmul.mubr.f32.gmra.mxu0 %v1014
    %v3886 = vpop.f32.mrf.mxu0
    %v3887 = vadd.f32 0.0, %v3886
    %v3888 = vpop.f32.mrf.mxu0
    %3889 = vmatprep.mubr.f32.mxu0 0.0
    %3890 = vmatmul.mubr.f32.gmra.mxu0 %v1016
    %v3891 = vpop.f32.mrf.mxu0
    %v3892 = vadd.f32 0.0, %v3891
    %v3893 = vpop.f32.mrf.mxu0
    %3894 = vmatprep.mubr.f32.mxu0 0.0
    %3895 = vmatmul.mubr.f32.gmra.mxu0 %v1018
    %v3896 = vpop.f32.mrf.mxu0
    %v3897 = vadd.f32 0.0, %v3896
    %v3898 = vpop.f32.mrf.mxu0
    %3899 = vmatprep.mubr.f32.mxu0 0.0
    %3900 = vmatmul.mubr.f32.gmra.mxu0 %v1020
    %v3901 = vpop.f32.mrf.mxu0
    %v3902 = vadd.f32 0.0, %v3901
    %v3903 = vpop.f32.mrf.mxu0
    %3904 = vmatprep.mubr.f32.mxu0 0.0
    %3905 = vmatmul.mubr.f32.gmra.mxu0 %v1022
    %v3906 = vpop.f32.mrf.mxu0
    %v3907 = vadd.f32 0.0, %v3906
    %v3908 = vpop.f32.mrf.mxu0
    %3909 = vmatprep.mubr.f32.mxu0 0.0
    %3910 = vmatmul.mubr.f32.gmra.mxu0 %v1024
    %v3911 = vpop.f32.mrf.mxu0
    %v3912 = vadd.f32 0.0, %v3911
    %v3913 = vpop.f32.mrf.mxu0
    %3914 = vmatprep.mubr.f32.mxu0 0.0
    %3915 = vmatmul.mubr.f32.gmra.mxu0 %v1026
    %v3916 = vpop.f32.mrf.mxu0
    %v3917 = vadd.f32 0.0, %v3916
    %v3918 = vpop.f32.mrf.mxu0
    %3919 = vmatprep.mubr.f32.mxu0 0.0
    %3920 = vmatmul.mubr.f32.gmra.mxu0 %v1028
    %v3921 = vpop.f32.mrf.mxu0
    %v3922 = vadd.f32 0.0, %v3921
    %v3923 = vpop.f32.mrf.mxu0
    %3924 = vmatprep.mubr.f32.mxu0 0.0
    %3925 = vmatmul.mubr.f32.gmra.mxu0 %v1030
    %v3926 = vpop.f32.mrf.mxu0
    %v3927 = vadd.f32 0.0, %v3926
    %v3928 = vpop.f32.mrf.mxu0
    %3929 = vmatprep.mubr.f32.mxu0 0.0
    %3930 = vmatmul.mubr.f32.gmra.mxu0 %v1032
    %v3931 = vpop.f32.mrf.mxu0
    %v3932 = vadd.f32 0.0, %v3931
    %v3933 = vpop.f32.mrf.mxu0
    %3934 = vmatprep.mubr.f32.mxu0 0.0
    %3935 = vmatmul.mubr.f32.gmra.mxu0 %v1034
    %v3936 = vpop.f32.mrf.mxu0
    %v3937 = vadd.f32 0.0, %v3936
    %v3938 = vpop.f32.mrf.mxu0
    %3939 = vmatprep.mubr.f32.mxu0 0.0
    %3940 = vmatmul.mubr.f32.gmra.mxu0 %v1036
    %v3941 = vpop.f32.mrf.mxu0
    %v3942 = vadd.f32 0.0, %v3941
    %v3943 = vpop.f32.mrf.mxu0
    %3944 = vmatprep.mubr.f32.mxu0 0.0
    %3945 = vmatmul.mubr.f32.gmra.mxu0 %v1038
    %v3946 = vpop.f32.mrf.mxu0
    %v3947 = vadd.f32 0.0, %v3946
    %v3948 = vpop.f32.mrf.mxu0
    %3949 = vmatprep.mubr.f32.mxu0 0.0
    %3950 = vmatmul.mubr.f32.gmra.mxu0 %v1040
    %v3951 = vpop.f32.mrf.mxu0
    %v3952 = vadd.f32 0.0, %v3951
    %v3953 = vpop.f32.mrf.mxu0
    %3954 = vmatprep.mubr.f32.mxu0 0.0
    %3955 = vmatmul.mubr.f32.gmra.mxu0 %v1042
    %v3956 = vpop.f32.mrf.mxu0
    %v3957 = vadd.f32 0.0, %v3956
    %v3958 = vpop.f32.mrf.mxu0
    %3959 = vmatprep.mubr.f32.mxu0 0.0
    %3960 = vmatmul.mubr.f32.gmra.mxu0 %v1044
    %v3961 = vpop.f32.mrf.mxu0
    %v3962 = vadd.f32 0.0, %v3961
    %v3963 = vpop.f32.mrf.mxu0
    %3964 = vmatprep.mubr.f32.mxu0 0.0
    %3965 = vmatmul.mubr.f32.gmra.mxu0 %v1046
    %v3966 = vpop.f32.mrf.mxu0
    %v3967 = vadd.f32 0.0, %v3966
    %v3968 = vpop.f32.mrf.mxu0
    %3969 = vmatprep.mubr.f32.mxu0 0.0
    %3970 = vmatmul.mubr.f32.gmra.mxu0 %v1048
    %v3971 = vpop.f32.mrf.mxu0
    %v3972 = vadd.f32 0.0, %v3971
    %v3973 = vpop.f32.mrf.mxu0
    %3974 = vmatprep.mubr.f32.mxu0 0.0
    %3975 = vmatmul.mubr.f32.gmra.mxu0 %v2190
    %v3976 = vpop.f32.mrf.mxu0
    %v3977 = vadd.f32 0.0, %v3976
    %v3978 = vpop.f32.mrf.mxu0
    %3979 = vmatprep.mubr.f32.mxu0 0.0
    %3980 = vmatmul.mubr.f32.gmra.mxu0 %v2193
    %v3981 = vpop.f32.mrf.mxu0
    %v3982 = vadd.f32 0.0, %v3981
    %v3983 = vpop.f32.mrf.mxu0
    %3984 = vmatprep.mubr.f32.mxu0 0.0
    %3985 = vmatmul.mubr.f32.gmra.mxu0 %v3602
    %v3986 = vpop.f32.mrf.mxu0
    %v3987 = vadd.f32 0.0, %v3986
    %v3988 = vpop.f32.mrf.mxu0
    %3989 = vmatprep.mubr.f32.mxu0 0.0
    %3990 = vmatmul.mubr.f32.gmra.mxu0 %v3605
    %v3991 = vpop.f32.mrf.mxu0
    %v3992 = vadd.f32 0.0, %v3991
    %v3993 = vpop.f32.mrf.mxu0
    %3994 = vdwg.mxu0
    %v3995 = vadd.f32 %v3529, %v3677
    %v3996 = vadd.f32 %v3530, %v3682
    %v3997 = vadd.f32 %v3531, %v3687
    %v3998 = vadd.f32 %v3532, %v3692
    %v3999 = vadd.f32 %v3533, %v3697
    %v4000 = vadd.f32 %v3534, %v3702
    %v4001 = vadd.f32 %v3535, %v3707
    %v4002 = vadd.f32 %v3536, %v3712
    %v4003 = vadd.f32 %v3537, %v3717
    %v4004 = vadd.f32 %v3538, %v3722
    %v4005 = vadd.f32 %v3539, %v3727
    %v4006 = vadd.f32 %v3540, %v3732
    %v4007 = vadd.f32 %v3541, %v3737
    %v4008 = vadd.f32 %v3542, %v3742
    %v4009 = vadd.f32 %v3543, %v3747
    %v4010 = vadd.f32 %v3544, %v3752
    %v4011 = vadd.f32 %v3545, %v3757
    %v4012 = vadd.f32 %v3546, %v3762
    %v4013 = vadd.f32 %v3547, %v3767
    %v4014 = vadd.f32 %v3548, %v3772
    %v4015 = vadd.f32 %v3549, %v3777
    %v4016 = vadd.f32 %v3550, %v3782
    %v4017 = vadd.f32 %v3551, %v3787
    %v4018 = vadd.f32 %v3552, %v3792
    %v4019 = vadd.f32 %v3553, %v3797
    %v4020 = vadd.f32 %v3554, %v3802
    %v4021 = vadd.f32 %v3555, %v3807
    %v4022 = vadd.f32 %v3556, %v3812
    %v4023 = vadd.f32 %v3557, %v3817
    %v4024 = vadd.f32 %v3558, %v3822
    %v4025 = vadd.f32 %v3559, %v3827
    %v4026 = vadd.f32 %v3560, %v3832
    %v4027 = vadd.f32 %v3561, %v3837
    %v4028 = vadd.f32 %v3562, %v3842
    %v4029 = vadd.f32 %v3563, %v3847
    %v4030 = vadd.f32 %v3564, %v3852
    %v4031 = vadd.f32 %v3565, %v3857
    %v4032 = vadd.f32 %v3566, %v3862
    %v4033 = vadd.f32 %v3567, %v3867
    %v4034 = vadd.f32 %v3568, %v3872
    %v4035 = vadd.f32 %v3569, %v3877
    %v4036 = vadd.f32 %v3570, %v3882
    %v4037 = vadd.f32 %v3571, %v3887
    %v4038 = vadd.f32 %v3572, %v3892
    %v4039 = vadd.f32 %v3573, %v3897
    %v4040 = vadd.f32 %v3574, %v3902
    %v4041 = vadd.f32 %v3575, %v3907
    %v4042 = vadd.f32 %v3576, %v3912
    %v4043 = vadd.f32 %v3577, %v3917
    %v4044 = vadd.f32 %v3578, %v3922
    %v4045 = vadd.f32 %v3579, %v3927
    %v4046 = vadd.f32 %v3580, %v3932
    %v4047 = vadd.f32 %v3581, %v3937
    %v4048 = vadd.f32 %v3582, %v3942
    %v4049 = vadd.f32 %v3583, %v3947
    %v4050 = vadd.f32 %v3584, %v3952
    %v4051 = vadd.f32 %v3585, %v3957
    %v4052 = vadd.f32 %v3586, %v3962
    %v4053 = vadd.f32 %v3587, %v3967
    %v4054 = vadd.f32 %v3588, %v3972
    %v4055 = vadd.f32 %v3589, %v3977
    %v4056 = vadd.f32 %v3590, %v3982
    %v4057 = vadd.f32 %v3591, %v3987
    %v4058 = vadd.f32 %v3592, %v3992
    %v4061 = vrot.slane %v87, 1
    %v4062 = vrot.slane %v88, 1
    %v4063 = vsel %vm241, %v4061, %v4062
    %v4064 = vrot.slane %v89, 1
    %v4065 = vsel %vm241, %v4062, %v4064
    %v4066 = vrot.slane %v141, 1
    %v4067 = vrot.slane %v142, 1
    %v4068 = vsel %vm241, %v4066, %v4067
    %v4069 = vrot.slane %v143, 1
    %v4070 = vsel %vm241, %v4067, %v4069
    %s4071 = scalar_lea.vmem %s1, 28
    %v4072 = vld [vmem:[%s4071] sm:$0xf]
    %v4073 = vsel %vm404, %v4063, 0
    %v4075 = vsel %vm404, %v4065, 0
    %v4077 = vsel %vm404, %v4068, 0
    %v4079 = vsel %vm404, %v4070, 0
    %v4082 = vsel %vm533, %v4072, 0
    %4084 = vmatprep.subr.mxu0 0.0
    %4085 = vmatpush1.msra.mxu0 0.0
    %4086 = vmatprep.subr.mxu0 0.0
    %4087 = vmatpush1.msra.mxu0 0.0
    %4088 = vmatprep.subr.mxu0 0.0
    %4089 = vmatpush1.msra.mxu0 0.0
    %4090 = vmatprep.subr.mxu0 0.0
    %4091 = vmatpush1.msra.mxu0 0.0
    %4092 = vmatprep.subr.mxu0 0.0
    %4093 = vmatpush1.msra.mxu0 0.0
    %4094 = vmatprep.subr.mxu0 0.0
    %4095 = vmatpush1.msra.mxu0 0.0
    %4096 = vmatprep.subr.mxu0 0.0
    %4097 = vmatpush1.msra.mxu0 0.0
    %4098 = vmatprep.subr.mxu0 0.0
    %4099 = vmatpush1.msra.mxu0 0.0
    %4100 = vmatprep.subr.mxu0 0.0
    %4101 = vmatpush1.msra.mxu0 0.0
    %4102 = vmatprep.subr.mxu0 0.0
    %4103 = vmatpush1.msra.mxu0 0.0
    %4104 = vmatprep.subr.mxu0 0.0
    %4105 = vmatpush1.msra.mxu0 0.0
    %4106 = vmatprep.subr.mxu0 0.0
    %4107 = vmatpush1.msra.mxu0 0.0
    %4108 = vmatprep.subr.mxu0 0.0
    %4109 = vmatpush1.msra.mxu0 0.0
    %4110 = vmatprep.subr.mxu0 0.0
    %4111 = vmatpush1.msra.mxu0 0.0
    %4112 = vmatprep.subr.mxu0 0.0
    %4113 = vmatpush1.msra.mxu0 0.0
    %4114 = vmatprep.subr.mxu0 0.0
    %4115 = vmatpush1.msra.mxu0 %v4082
    %4116 = vmatprep.subr.mxu0 0.0
    %4117 = vmatpush2.msra.mxu0 0.0
    %4118 = vmatprep.subr.mxu0 0.0
    %4119 = vmatpush2.msra.mxu0 0.0
    %4120 = vmatprep.subr.mxu0 0.0
    %4121 = vmatpush2.msra.mxu0 0.0
    %4122 = vmatprep.subr.mxu0 0.0
    %4123 = vmatpush2.msra.mxu0 0.0
    %4124 = vmatprep.subr.mxu0 0.0
    %4125 = vmatpush2.msra.mxu0 0.0
    %4126 = vmatprep.subr.mxu0 0.0
    %4127 = vmatpush2.msra.mxu0 0.0
    %4128 = vmatprep.subr.mxu0 0.0
    %4129 = vmatpush2.msra.mxu0 0.0
    %4130 = vmatprep.subr.mxu0 0.0
    %4131 = vmatpush2.msra.mxu0 0.0
    %4132 = vmatprep.subr.mxu0 0.0
    %4133 = vmatpush2.msra.mxu0 0.0
    %4134 = vmatprep.subr.mxu0 0.0
    %4135 = vmatpush2.msra.mxu0 0.0
    %4136 = vmatprep.subr.mxu0 0.0
    %4137 = vmatpush2.msra.mxu0 0.0
    %4138 = vmatprep.subr.mxu0 0.0
    %4139 = vmatpush2.msra.mxu0 0.0
    %4140 = vmatprep.subr.mxu0 0.0
    %4141 = vmatpush2.msra.mxu0 0.0
    %4142 = vmatprep.subr.mxu0 0.0
    %4143 = vmatpush2.msra.mxu0 0.0
    %4144 = vmatprep.subr.mxu0 0.0
    %4145 = vmatpush2.msra.mxu0 0.0
    %4146 = vmatprep.subr.mxu0 0.0
    %4147 = vmatpush2.msra.mxu0 0.0
    %4148 = vmatprep.mubr.f32.mxu0 0.0
    %4149 = vmatmul.mubr.f32.gmra.mxu0 %v413
    %v4150 = vpop.f32.mrf.mxu0
    %v4151 = vadd.f32 0.0, %v4150
    %v4152 = vpop.f32.mrf.mxu0
    %4153 = vmatprep.mubr.f32.mxu0 0.0
    %4154 = vmatmul.mubr.f32.gmra.mxu0 %v415
    %v4155 = vpop.f32.mrf.mxu0
    %v4156 = vadd.f32 0.0, %v4155
    %v4157 = vpop.f32.mrf.mxu0
    %4158 = vmatprep.mubr.f32.mxu0 0.0
    %4159 = vmatmul.mubr.f32.gmra.mxu0 %v417
    %v4160 = vpop.f32.mrf.mxu0
    %v4161 = vadd.f32 0.0, %v4160
    %v4162 = vpop.f32.mrf.mxu0
    %4163 = vmatprep.mubr.f32.mxu0 0.0
    %4164 = vmatmul.mubr.f32.gmra.mxu0 %v419
    %v4165 = vpop.f32.mrf.mxu0
    %v4166 = vadd.f32 0.0, %v4165
    %v4167 = vpop.f32.mrf.mxu0
    %4168 = vmatprep.mubr.f32.mxu0 0.0
    %4169 = vmatmul.mubr.f32.gmra.mxu0 %v421
    %v4170 = vpop.f32.mrf.mxu0
    %v4171 = vadd.f32 0.0, %v4170
    %v4172 = vpop.f32.mrf.mxu0
    %4173 = vmatprep.mubr.f32.mxu0 0.0
    %4174 = vmatmul.mubr.f32.gmra.mxu0 %v423
    %v4175 = vpop.f32.mrf.mxu0
    %v4176 = vadd.f32 0.0, %v4175
    %v4177 = vpop.f32.mrf.mxu0
    %4178 = vmatprep.mubr.f32.mxu0 0.0
    %4179 = vmatmul.mubr.f32.gmra.mxu0 %v425
    %v4180 = vpop.f32.mrf.mxu0
    %v4181 = vadd.f32 0.0, %v4180
    %v4182 = vpop.f32.mrf.mxu0
    %4183 = vmatprep.mubr.f32.mxu0 0.0
    %4184 = vmatmul.mubr.f32.gmra.mxu0 %v427
    %v4185 = vpop.f32.mrf.mxu0
    %v4186 = vadd.f32 0.0, %v4185
    %v4187 = vpop.f32.mrf.mxu0
    %4188 = vmatprep.mubr.f32.mxu0 0.0
    %4189 = vmatmul.mubr.f32.gmra.mxu0 %v429
    %v4190 = vpop.f32.mrf.mxu0
    %v4191 = vadd.f32 0.0, %v4190
    %v4192 = vpop.f32.mrf.mxu0
    %4193 = vmatprep.mubr.f32.mxu0 0.0
    %4194 = vmatmul.mubr.f32.gmra.mxu0 %v431
    %v4195 = vpop.f32.mrf.mxu0
    %v4196 = vadd.f32 0.0, %v4195
    %v4197 = vpop.f32.mrf.mxu0
    %4198 = vmatprep.mubr.f32.mxu0 0.0
    %4199 = vmatmul.mubr.f32.gmra.mxu0 %v433
    %v4200 = vpop.f32.mrf.mxu0
    %v4201 = vadd.f32 0.0, %v4200
    %v4202 = vpop.f32.mrf.mxu0
    %4203 = vmatprep.mubr.f32.mxu0 0.0
    %4204 = vmatmul.mubr.f32.gmra.mxu0 %v435
    %v4205 = vpop.f32.mrf.mxu0
    %v4206 = vadd.f32 0.0, %v4205
    %v4207 = vpop.f32.mrf.mxu0
    %4208 = vmatprep.mubr.f32.mxu0 0.0
    %4209 = vmatmul.mubr.f32.gmra.mxu0 %v437
    %v4210 = vpop.f32.mrf.mxu0
    %v4211 = vadd.f32 0.0, %v4210
    %v4212 = vpop.f32.mrf.mxu0
    %4213 = vmatprep.mubr.f32.mxu0 0.0
    %4214 = vmatmul.mubr.f32.gmra.mxu0 %v439
    %v4215 = vpop.f32.mrf.mxu0
    %v4216 = vadd.f32 0.0, %v4215
    %v4217 = vpop.f32.mrf.mxu0
    %4218 = vmatprep.mubr.f32.mxu0 0.0
    %4219 = vmatmul.mubr.f32.gmra.mxu0 %v441
    %v4220 = vpop.f32.mrf.mxu0
    %v4221 = vadd.f32 0.0, %v4220
    %v4222 = vpop.f32.mrf.mxu0
    %4223 = vmatprep.mubr.f32.mxu0 0.0
    %4224 = vmatmul.mubr.f32.gmra.mxu0 %v443
    %v4225 = vpop.f32.mrf.mxu0
    %v4226 = vadd.f32 0.0, %v4225
    %v4227 = vpop.f32.mrf.mxu0
    %4228 = vmatprep.mubr.f32.mxu0 0.0
    %4229 = vmatmul.mubr.f32.gmra.mxu0 %v445
    %v4230 = vpop.f32.mrf.mxu0
    %v4231 = vadd.f32 0.0, %v4230
    %v4232 = vpop.f32.mrf.mxu0
    %4233 = vmatprep.mubr.f32.mxu0 0.0
    %4234 = vmatmul.mubr.f32.gmra.mxu0 %v447
    %v4235 = vpop.f32.mrf.mxu0
    %v4236 = vadd.f32 0.0, %v4235
    %v4237 = vpop.f32.mrf.mxu0
    %4238 = vmatprep.mubr.f32.mxu0 0.0
    %4239 = vmatmul.mubr.f32.gmra.mxu0 %v449
    %v4240 = vpop.f32.mrf.mxu0
    %v4241 = vadd.f32 0.0, %v4240
    %v4242 = vpop.f32.mrf.mxu0
    %4243 = vmatprep.mubr.f32.mxu0 0.0
    %4244 = vmatmul.mubr.f32.gmra.mxu0 %v451
    %v4245 = vpop.f32.mrf.mxu0
    %v4246 = vadd.f32 0.0, %v4245
    %v4247 = vpop.f32.mrf.mxu0
    %4248 = vmatprep.mubr.f32.mxu0 0.0
    %4249 = vmatmul.mubr.f32.gmra.mxu0 %v453
    %v4250 = vpop.f32.mrf.mxu0
    %v4251 = vadd.f32 0.0, %v4250
    %v4252 = vpop.f32.mrf.mxu0
    %4253 = vmatprep.mubr.f32.mxu0 0.0
    %4254 = vmatmul.mubr.f32.gmra.mxu0 %v455
    %v4255 = vpop.f32.mrf.mxu0
    %v4256 = vadd.f32 0.0, %v4255
    %v4257 = vpop.f32.mrf.mxu0
    %4258 = vmatprep.mubr.f32.mxu0 0.0
    %4259 = vmatmul.mubr.f32.gmra.mxu0 %v457
    %v4260 = vpop.f32.mrf.mxu0
    %v4261 = vadd.f32 0.0, %v4260
    %v4262 = vpop.f32.mrf.mxu0
    %4263 = vmatprep.mubr.f32.mxu0 0.0
    %4264 = vmatmul.mubr.f32.gmra.mxu0 %v459
    %v4265 = vpop.f32.mrf.mxu0
    %v4266 = vadd.f32 0.0, %v4265
    %v4267 = vpop.f32.mrf.mxu0
    %4268 = vmatprep.mubr.f32.mxu0 0.0
    %4269 = vmatmul.mubr.f32.gmra.mxu0 %v461
    %v4270 = vpop.f32.mrf.mxu0
    %v4271 = vadd.f32 0.0, %v4270
    %v4272 = vpop.f32.mrf.mxu0
    %4273 = vmatprep.mubr.f32.mxu0 0.0
    %4274 = vmatmul.mubr.f32.gmra.mxu0 %v463
    %v4275 = vpop.f32.mrf.mxu0
    %v4276 = vadd.f32 0.0, %v4275
    %v4277 = vpop.f32.mrf.mxu0
    %4278 = vmatprep.mubr.f32.mxu0 0.0
    %4279 = vmatmul.mubr.f32.gmra.mxu0 %v465
    %v4280 = vpop.f32.mrf.mxu0
    %v4281 = vadd.f32 0.0, %v4280
    %v4282 = vpop.f32.mrf.mxu0
    %4283 = vmatprep.mubr.f32.mxu0 0.0
    %4284 = vmatmul.mubr.f32.gmra.mxu0 %v467
    %v4285 = vpop.f32.mrf.mxu0
    %v4286 = vadd.f32 0.0, %v4285
    %v4287 = vpop.f32.mrf.mxu0
    %4288 = vmatprep.mubr.f32.mxu0 0.0
    %4289 = vmatmul.mubr.f32.gmra.mxu0 %v2661
    %v4290 = vpop.f32.mrf.mxu0
    %v4291 = vadd.f32 0.0, %v4290
    %v4292 = vpop.f32.mrf.mxu0
    %4293 = vmatprep.mubr.f32.mxu0 0.0
    %4294 = vmatmul.mubr.f32.gmra.mxu0 %v2663
    %v4295 = vpop.f32.mrf.mxu0
    %v4296 = vadd.f32 0.0, %v4295
    %v4297 = vpop.f32.mrf.mxu0
    %4298 = vmatprep.mubr.f32.mxu0 0.0
    %4299 = vmatmul.mubr.f32.gmra.mxu0 %v4073
    %v4300 = vpop.f32.mrf.mxu0
    %v4301 = vadd.f32 0.0, %v4300
    %v4302 = vpop.f32.mrf.mxu0
    %4303 = vmatprep.mubr.f32.mxu0 0.0
    %4304 = vmatmul.mubr.f32.gmra.mxu0 %v4075
    %v4305 = vpop.f32.mrf.mxu0
    %v4306 = vadd.f32 0.0, %v4305
    %v4307 = vpop.f32.mrf.mxu0
    %4308 = vmatprep.mubr.f32.mxu0 0.0
    %4309 = vmatmul.mubr.f32.gmra.mxu0 %v477
    %v4310 = vpop.f32.mrf.mxu0
    %v4311 = vadd.f32 0.0, %v4310
    %v4312 = vpop.f32.mrf.mxu0
    %4313 = vmatprep.mubr.f32.mxu0 0.0
    %4314 = vmatmul.mubr.f32.gmra.mxu0 %v479
    %v4315 = vpop.f32.mrf.mxu0
    %v4316 = vadd.f32 0.0, %v4315
    %v4317 = vpop.f32.mrf.mxu0
    %4318 = vmatprep.mubr.f32.mxu0 0.0
    %4319 = vmatmul.mubr.f32.gmra.mxu0 %v481
    %v4320 = vpop.f32.mrf.mxu0
    %v4321 = vadd.f32 0.0, %v4320
    %v4322 = vpop.f32.mrf.mxu0
    %4323 = vmatprep.mubr.f32.mxu0 0.0
    %4324 = vmatmul.mubr.f32.gmra.mxu0 %v483
    %v4325 = vpop.f32.mrf.mxu0
    %v4326 = vadd.f32 0.0, %v4325
    %v4327 = vpop.f32.mrf.mxu0
    %4328 = vmatprep.mubr.f32.mxu0 0.0
    %4329 = vmatmul.mubr.f32.gmra.mxu0 %v485
    %v4330 = vpop.f32.mrf.mxu0
    %v4331 = vadd.f32 0.0, %v4330
    %v4332 = vpop.f32.mrf.mxu0
    %4333 = vmatprep.mubr.f32.mxu0 0.0
    %4334 = vmatmul.mubr.f32.gmra.mxu0 %v487
    %v4335 = vpop.f32.mrf.mxu0
    %v4336 = vadd.f32 0.0, %v4335
    %v4337 = vpop.f32.mrf.mxu0
    %4338 = vmatprep.mubr.f32.mxu0 0.0
    %4339 = vmatmul.mubr.f32.gmra.mxu0 %v489
    %v4340 = vpop.f32.mrf.mxu0
    %v4341 = vadd.f32 0.0, %v4340
    %v4342 = vpop.f32.mrf.mxu0
    %4343 = vmatprep.mubr.f32.mxu0 0.0
    %4344 = vmatmul.mubr.f32.gmra.mxu0 %v491
    %v4345 = vpop.f32.mrf.mxu0
    %v4346 = vadd.f32 0.0, %v4345
    %v4347 = vpop.f32.mrf.mxu0
    %4348 = vmatprep.mubr.f32.mxu0 0.0
    %4349 = vmatmul.mubr.f32.gmra.mxu0 %v493
    %v4350 = vpop.f32.mrf.mxu0
    %v4351 = vadd.f32 0.0, %v4350
    %v4352 = vpop.f32.mrf.mxu0
    %4353 = vmatprep.mubr.f32.mxu0 0.0
    %4354 = vmatmul.mubr.f32.gmra.mxu0 %v495
    %v4355 = vpop.f32.mrf.mxu0
    %v4356 = vadd.f32 0.0, %v4355
    %v4357 = vpop.f32.mrf.mxu0
    %4358 = vmatprep.mubr.f32.mxu0 0.0
    %4359 = vmatmul.mubr.f32.gmra.mxu0 %v497
    %v4360 = vpop.f32.mrf.mxu0
    %v4361 = vadd.f32 0.0, %v4360
    %v4362 = vpop.f32.mrf.mxu0
    %4363 = vmatprep.mubr.f32.mxu0 0.0
    %4364 = vmatmul.mubr.f32.gmra.mxu0 %v499
    %v4365 = vpop.f32.mrf.mxu0
    %v4366 = vadd.f32 0.0, %v4365
    %v4367 = vpop.f32.mrf.mxu0
    %4368 = vmatprep.mubr.f32.mxu0 0.0
    %4369 = vmatmul.mubr.f32.gmra.mxu0 %v501
    %v4370 = vpop.f32.mrf.mxu0
    %v4371 = vadd.f32 0.0, %v4370
    %v4372 = vpop.f32.mrf.mxu0
    %4373 = vmatprep.mubr.f32.mxu0 0.0
    %4374 = vmatmul.mubr.f32.gmra.mxu0 %v503
    %v4375 = vpop.f32.mrf.mxu0
    %v4376 = vadd.f32 0.0, %v4375
    %v4377 = vpop.f32.mrf.mxu0
    %4378 = vmatprep.mubr.f32.mxu0 0.0
    %4379 = vmatmul.mubr.f32.gmra.mxu0 %v505
    %v4380 = vpop.f32.mrf.mxu0
    %v4381 = vadd.f32 0.0, %v4380
    %v4382 = vpop.f32.mrf.mxu0
    %4383 = vmatprep.mubr.f32.mxu0 0.0
    %4384 = vmatmul.mubr.f32.gmra.mxu0 %v507
    %v4385 = vpop.f32.mrf.mxu0
    %v4386 = vadd.f32 0.0, %v4385
    %v4387 = vpop.f32.mrf.mxu0
    %4388 = vmatprep.mubr.f32.mxu0 0.0
    %4389 = vmatmul.mubr.f32.gmra.mxu0 %v509
    %v4390 = vpop.f32.mrf.mxu0
    %v4391 = vadd.f32 0.0, %v4390
    %v4392 = vpop.f32.mrf.mxu0
    %4393 = vmatprep.mubr.f32.mxu0 0.0
    %4394 = vmatmul.mubr.f32.gmra.mxu0 %v511
    %v4395 = vpop.f32.mrf.mxu0
    %v4396 = vadd.f32 0.0, %v4395
    %v4397 = vpop.f32.mrf.mxu0
    %4398 = vmatprep.mubr.f32.mxu0 0.0
    %4399 = vmatmul.mubr.f32.gmra.mxu0 %v513
    %v4400 = vpop.f32.mrf.mxu0
    %v4401 = vadd.f32 0.0, %v4400
    %v4402 = vpop.f32.mrf.mxu0
    %4403 = vmatprep.mubr.f32.mxu0 0.0
    %4404 = vmatmul.mubr.f32.gmra.mxu0 %v515
    %v4405 = vpop.f32.mrf.mxu0
    %v4406 = vadd.f32 0.0, %v4405
    %v4407 = vpop.f32.mrf.mxu0
    %4408 = vmatprep.mubr.f32.mxu0 0.0
    %4409 = vmatmul.mubr.f32.gmra.mxu0 %v517
    %v4410 = vpop.f32.mrf.mxu0
    %v4411 = vadd.f32 0.0, %v4410
    %v4412 = vpop.f32.mrf.mxu0
    %4413 = vmatprep.mubr.f32.mxu0 0.0
    %4414 = vmatmul.mubr.f32.gmra.mxu0 %v519
    %v4415 = vpop.f32.mrf.mxu0
    %v4416 = vadd.f32 0.0, %v4415
    %v4417 = vpop.f32.mrf.mxu0
    %4418 = vmatprep.mubr.f32.mxu0 0.0
    %4419 = vmatmul.mubr.f32.gmra.mxu0 %v521
    %v4420 = vpop.f32.mrf.mxu0
    %v4421 = vadd.f32 0.0, %v4420
    %v4422 = vpop.f32.mrf.mxu0
    %4423 = vmatprep.mubr.f32.mxu0 0.0
    %4424 = vmatmul.mubr.f32.gmra.mxu0 %v523
    %v4425 = vpop.f32.mrf.mxu0
    %v4426 = vadd.f32 0.0, %v4425
    %v4427 = vpop.f32.mrf.mxu0
    %4428 = vmatprep.mubr.f32.mxu0 0.0
    %4429 = vmatmul.mubr.f32.gmra.mxu0 %v525
    %v4430 = vpop.f32.mrf.mxu0
    %v4431 = vadd.f32 0.0, %v4430
    %v4432 = vpop.f32.mrf.mxu0
    %4433 = vmatprep.mubr.f32.mxu0 0.0
    %4434 = vmatmul.mubr.f32.gmra.mxu0 %v527
    %v4435 = vpop.f32.mrf.mxu0
    %v4436 = vadd.f32 0.0, %v4435
    %v4437 = vpop.f32.mrf.mxu0
    %4438 = vmatprep.mubr.f32.mxu0 0.0
    %4439 = vmatmul.mubr.f32.gmra.mxu0 %v529
    %v4440 = vpop.f32.mrf.mxu0
    %v4441 = vadd.f32 0.0, %v4440
    %v4442 = vpop.f32.mrf.mxu0
    %4443 = vmatprep.mubr.f32.mxu0 0.0
    %4444 = vmatmul.mubr.f32.gmra.mxu0 %v531
    %v4445 = vpop.f32.mrf.mxu0
    %v4446 = vadd.f32 0.0, %v4445
    %v4447 = vpop.f32.mrf.mxu0
    %4448 = vmatprep.mubr.f32.mxu0 0.0
    %4449 = vmatmul.mubr.f32.gmra.mxu0 %v2665
    %v4450 = vpop.f32.mrf.mxu0
    %v4451 = vadd.f32 0.0, %v4450
    %v4452 = vpop.f32.mrf.mxu0
    %4453 = vmatprep.mubr.f32.mxu0 0.0
    %4454 = vmatmul.mubr.f32.gmra.mxu0 %v2667
    %v4455 = vpop.f32.mrf.mxu0
    %v4456 = vadd.f32 0.0, %v4455
    %v4457 = vpop.f32.mrf.mxu0
    %4458 = vmatprep.mubr.f32.mxu0 0.0
    %4459 = vmatmul.mubr.f32.gmra.mxu0 %v4077
    %v4460 = vpop.f32.mrf.mxu0
    %v4461 = vadd.f32 0.0, %v4460
    %v4462 = vpop.f32.mrf.mxu0
    %4463 = vmatprep.mubr.f32.mxu0 0.0
    %4464 = vmatmul.mubr.f32.gmra.mxu0 %v4079
    %v4465 = vpop.f32.mrf.mxu0
    %v4466 = vadd.f32 0.0, %v4465
    %v4467 = vpop.f32.mrf.mxu0
    %4468 = vdwg.mxu0
    %v4469 = vadd.f32 %v3995, %v4151
    %v4470 = vadd.f32 %v3996, %v4156
    %v4471 = vadd.f32 %v3997, %v4161
    %v4472 = vadd.f32 %v3998, %v4166
    %v4473 = vadd.f32 %v3999, %v4171
    %v4474 = vadd.f32 %v4000, %v4176
    %v4475 = vadd.f32 %v4001, %v4181
    %v4476 = vadd.f32 %v4002, %v4186
    %v4477 = vadd.f32 %v4003, %v4191
    %v4478 = vadd.f32 %v4004, %v4196
    %v4479 = vadd.f32 %v4005, %v4201
    %v4480 = vadd.f32 %v4006, %v4206
    %v4481 = vadd.f32 %v4007, %v4211
    %v4482 = vadd.f32 %v4008, %v4216
    %v4483 = vadd.f32 %v4009, %v4221
    %v4484 = vadd.f32 %v4010, %v4226
    %v4485 = vadd.f32 %v4011, %v4231
    %v4486 = vadd.f32 %v4012, %v4236
    %v4487 = vadd.f32 %v4013, %v4241
    %v4488 = vadd.f32 %v4014, %v4246
    %v4489 = vadd.f32 %v4015, %v4251
    %v4490 = vadd.f32 %v4016, %v4256
    %v4491 = vadd.f32 %v4017, %v4261
    %v4492 = vadd.f32 %v4018, %v4266
    %v4493 = vadd.f32 %v4019, %v4271
    %v4494 = vadd.f32 %v4020, %v4276
    %v4495 = vadd.f32 %v4021, %v4281
    %v4496 = vadd.f32 %v4022, %v4286
    %v4497 = vadd.f32 %v4023, %v4291
    %v4498 = vadd.f32 %v4024, %v4296
    %v4499 = vadd.f32 %v4025, %v4301
    %v4500 = vadd.f32 %v4026, %v4306
    %v4501 = vadd.f32 %v4027, %v4311
    %v4502 = vadd.f32 %v4028, %v4316
    %v4503 = vadd.f32 %v4029, %v4321
    %v4504 = vadd.f32 %v4030, %v4326
    %v4505 = vadd.f32 %v4031, %v4331
    %v4506 = vadd.f32 %v4032, %v4336
    %v4507 = vadd.f32 %v4033, %v4341
    %v4508 = vadd.f32 %v4034, %v4346
    %v4509 = vadd.f32 %v4035, %v4351
    %v4510 = vadd.f32 %v4036, %v4356
    %v4511 = vadd.f32 %v4037, %v4361
    %v4512 = vadd.f32 %v4038, %v4366
    %v4513 = vadd.f32 %v4039, %v4371
    %v4514 = vadd.f32 %v4040, %v4376
    %v4515 = vadd.f32 %v4041, %v4381
    %v4516 = vadd.f32 %v4042, %v4386
    %v4517 = vadd.f32 %v4043, %v4391
    %v4518 = vadd.f32 %v4044, %v4396
    %v4519 = vadd.f32 %v4045, %v4401
    %v4520 = vadd.f32 %v4046, %v4406
    %v4521 = vadd.f32 %v4047, %v4411
    %v4522 = vadd.f32 %v4048, %v4416
    %v4523 = vadd.f32 %v4049, %v4421
    %v4524 = vadd.f32 %v4050, %v4426
    %v4525 = vadd.f32 %v4051, %v4431
    %v4526 = vadd.f32 %v4052, %v4436
    %v4527 = vadd.f32 %v4053, %v4441
    %v4528 = vadd.f32 %v4054, %v4446
    %v4529 = vadd.f32 %v4055, %v4451
    %v4530 = vadd.f32 %v4056, %v4456
    %v4531 = vadd.f32 %v4057, %v4461
    %v4532 = vadd.f32 %v4058, %v4466
    %v4533 = vrot.slane %v87, 2
    %v4534 = vrot.slane %v88, 2
    %v4535 = vsel %vm1438, %v4533, %v4534
    %v4536 = vrot.slane %v89, 2
    %v4537 = vsel %vm1438, %v4534, %v4536
    %v4538 = vrot.slane %v141, 2
    %v4539 = vrot.slane %v142, 2
    %v4540 = vsel %vm1438, %v4538, %v4539
    %v4541 = vrot.slane %v143, 2
    %v4542 = vsel %vm1438, %v4539, %v4541
    %s4543 = scalar_lea.vmem %s1, 32
    %v4544 = vld [vmem:[%s4543] sm:$0xf]
    %v4545 = vsel %vm404, %v4535, 0
    %v4547 = vsel %vm404, %v4537, 0
    %v4549 = vsel %vm404, %v4540, 0
    %v4551 = vsel %vm404, %v4542, 0
    %v4554 = vsel %vm533, %v4544, 0
    %4556 = vmatprep.subr.mxu0 0.0
    %4557 = vmatpush1.msra.mxu0 0.0
    %4558 = vmatprep.subr.mxu0 0.0
    %4559 = vmatpush1.msra.mxu0 0.0
    %4560 = vmatprep.subr.mxu0 0.0
    %4561 = vmatpush1.msra.mxu0 0.0
    %4562 = vmatprep.subr.mxu0 0.0
    %4563 = vmatpush1.msra.mxu0 0.0
    %4564 = vmatprep.subr.mxu0 0.0
    %4565 = vmatpush1.msra.mxu0 0.0
    %4566 = vmatprep.subr.mxu0 0.0
    %4567 = vmatpush1.msra.mxu0 0.0
    %4568 = vmatprep.subr.mxu0 0.0
    %4569 = vmatpush1.msra.mxu0 0.0
    %4570 = vmatprep.subr.mxu0 0.0
    %4571 = vmatpush1.msra.mxu0 0.0
    %4572 = vmatprep.subr.mxu0 0.0
    %4573 = vmatpush1.msra.mxu0 0.0
    %4574 = vmatprep.subr.mxu0 0.0
    %4575 = vmatpush1.msra.mxu0 0.0
    %4576 = vmatprep.subr.mxu0 0.0
    %4577 = vmatpush1.msra.mxu0 0.0
    %4578 = vmatprep.subr.mxu0 0.0
    %4579 = vmatpush1.msra.mxu0 0.0
    %4580 = vmatprep.subr.mxu0 0.0
    %4581 = vmatpush1.msra.mxu0 0.0
    %4582 = vmatprep.subr.mxu0 0.0
    %4583 = vmatpush1.msra.mxu0 0.0
    %4584 = vmatprep.subr.mxu0 0.0
    %4585 = vmatpush1.msra.mxu0 0.0
    %4586 = vmatprep.subr.mxu0 0.0
    %4587 = vmatpush1.msra.mxu0 %v4554
    %4588 = vmatprep.subr.mxu0 0.0
    %4589 = vmatpush2.msra.mxu0 0.0
    %4590 = vmatprep.subr.mxu0 0.0
    %4591 = vmatpush2.msra.mxu0 0.0
    %4592 = vmatprep.subr.mxu0 0.0
    %4593 = vmatpush2.msra.mxu0 0.0
    %4594 = vmatprep.subr.mxu0 0.0
    %4595 = vmatpush2.msra.mxu0 0.0
    %4596 = vmatprep.subr.mxu0 0.0
    %4597 = vmatpush2.msra.mxu0 0.0
    %4598 = vmatprep.subr.mxu0 0.0
    %4599 = vmatpush2.msra.mxu0 0.0
    %4600 = vmatprep.subr.mxu0 0.0
    %4601 = vmatpush2.msra.mxu0 0.0
    %4602 = vmatprep.subr.mxu0 0.0
    %4603 = vmatpush2.msra.mxu0 0.0
    %4604 = vmatprep.subr.mxu0 0.0
    %4605 = vmatpush2.msra.mxu0 0.0
    %4606 = vmatprep.subr.mxu0 0.0
    %4607 = vmatpush2.msra.mxu0 0.0
    %4608 = vmatprep.subr.mxu0 0.0
    %4609 = vmatpush2.msra.mxu0 0.0
    %4610 = vmatprep.subr.mxu0 0.0
    %4611 = vmatpush2.msra.mxu0 0.0
    %4612 = vmatprep.subr.mxu0 0.0
    %4613 = vmatpush2.msra.mxu0 0.0
    %4614 = vmatprep.subr.mxu0 0.0
    %4615 = vmatpush2.msra.mxu0 0.0
    %4616 = vmatprep.subr.mxu0 0.0
    %4617 = vmatpush2.msra.mxu0 0.0
    %4618 = vmatprep.subr.mxu0 0.0
    %4619 = vmatpush2.msra.mxu0 0.0
    %4620 = vmatprep.mubr.f32.mxu0 0.0
    %4621 = vmatmul.mubr.f32.gmra.mxu0 %v1609
    %v4622 = vpop.f32.mrf.mxu0
    %v4623 = vadd.f32 0.0, %v4622
    %v4624 = vpop.f32.mrf.mxu0
    %4625 = vmatprep.mubr.f32.mxu0 0.0
    %4626 = vmatmul.mubr.f32.gmra.mxu0 %v1611
    %v4627 = vpop.f32.mrf.mxu0
    %v4628 = vadd.f32 0.0, %v4627
    %v4629 = vpop.f32.mrf.mxu0
    %4630 = vmatprep.mubr.f32.mxu0 0.0
    %4631 = vmatmul.mubr.f32.gmra.mxu0 %v1613
    %v4632 = vpop.f32.mrf.mxu0
    %v4633 = vadd.f32 0.0, %v4632
    %v4634 = vpop.f32.mrf.mxu0
    %4635 = vmatprep.mubr.f32.mxu0 0.0
    %4636 = vmatmul.mubr.f32.gmra.mxu0 %v1615
    %v4637 = vpop.f32.mrf.mxu0
    %v4638 = vadd.f32 0.0, %v4637
    %v4639 = vpop.f32.mrf.mxu0
    %4640 = vmatprep.mubr.f32.mxu0 0.0
    %4641 = vmatmul.mubr.f32.gmra.mxu0 %v1617
    %v4642 = vpop.f32.mrf.mxu0
    %v4643 = vadd.f32 0.0, %v4642
    %v4644 = vpop.f32.mrf.mxu0
    %4645 = vmatprep.mubr.f32.mxu0 0.0
    %4646 = vmatmul.mubr.f32.gmra.mxu0 %v1619
    %v4647 = vpop.f32.mrf.mxu0
    %v4648 = vadd.f32 0.0, %v4647
    %v4649 = vpop.f32.mrf.mxu0
    %4650 = vmatprep.mubr.f32.mxu0 0.0
    %4651 = vmatmul.mubr.f32.gmra.mxu0 %v1621
    %v4652 = vpop.f32.mrf.mxu0
    %v4653 = vadd.f32 0.0, %v4652
    %v4654 = vpop.f32.mrf.mxu0
    %4655 = vmatprep.mubr.f32.mxu0 0.0
    %4656 = vmatmul.mubr.f32.gmra.mxu0 %v1623
    %v4657 = vpop.f32.mrf.mxu0
    %v4658 = vadd.f32 0.0, %v4657
    %v4659 = vpop.f32.mrf.mxu0
    %4660 = vmatprep.mubr.f32.mxu0 0.0
    %4661 = vmatmul.mubr.f32.gmra.mxu0 %v1625
    %v4662 = vpop.f32.mrf.mxu0
    %v4663 = vadd.f32 0.0, %v4662
    %v4664 = vpop.f32.mrf.mxu0
    %4665 = vmatprep.mubr.f32.mxu0 0.0
    %4666 = vmatmul.mubr.f32.gmra.mxu0 %v1627
    %v4667 = vpop.f32.mrf.mxu0
    %v4668 = vadd.f32 0.0, %v4667
    %v4669 = vpop.f32.mrf.mxu0
    %4670 = vmatprep.mubr.f32.mxu0 0.0
    %4671 = vmatmul.mubr.f32.gmra.mxu0 %v1629
    %v4672 = vpop.f32.mrf.mxu0
    %v4673 = vadd.f32 0.0, %v4672
    %v4674 = vpop.f32.mrf.mxu0
    %4675 = vmatprep.mubr.f32.mxu0 0.0
    %4676 = vmatmul.mubr.f32.gmra.mxu0 %v1631
    %v4677 = vpop.f32.mrf.mxu0
    %v4678 = vadd.f32 0.0, %v4677
    %v4679 = vpop.f32.mrf.mxu0
    %4680 = vmatprep.mubr.f32.mxu0 0.0
    %4681 = vmatmul.mubr.f32.gmra.mxu0 %v1633
    %v4682 = vpop.f32.mrf.mxu0
    %v4683 = vadd.f32 0.0, %v4682
    %v4684 = vpop.f32.mrf.mxu0
    %4685 = vmatprep.mubr.f32.mxu0 0.0
    %4686 = vmatmul.mubr.f32.gmra.mxu0 %v1635
    %v4687 = vpop.f32.mrf.mxu0
    %v4688 = vadd.f32 0.0, %v4687
    %v4689 = vpop.f32.mrf.mxu0
    %4690 = vmatprep.mubr.f32.mxu0 0.0
    %4691 = vmatmul.mubr.f32.gmra.mxu0 %v1637
    %v4692 = vpop.f32.mrf.mxu0
    %v4693 = vadd.f32 0.0, %v4692
    %v4694 = vpop.f32.mrf.mxu0
    %4695 = vmatprep.mubr.f32.mxu0 0.0
    %4696 = vmatmul.mubr.f32.gmra.mxu0 %v1639
    %v4697 = vpop.f32.mrf.mxu0
    %v4698 = vadd.f32 0.0, %v4697
    %v4699 = vpop.f32.mrf.mxu0
    %4700 = vmatprep.mubr.f32.mxu0 0.0
    %4701 = vmatmul.mubr.f32.gmra.mxu0 %v1641
    %v4702 = vpop.f32.mrf.mxu0
    %v4703 = vadd.f32 0.0, %v4702
    %v4704 = vpop.f32.mrf.mxu0
    %4705 = vmatprep.mubr.f32.mxu0 0.0
    %4706 = vmatmul.mubr.f32.gmra.mxu0 %v1643
    %v4707 = vpop.f32.mrf.mxu0
    %v4708 = vadd.f32 0.0, %v4707
    %v4709 = vpop.f32.mrf.mxu0
    %4710 = vmatprep.mubr.f32.mxu0 0.0
    %4711 = vmatmul.mubr.f32.gmra.mxu0 %v1645
    %v4712 = vpop.f32.mrf.mxu0
    %v4713 = vadd.f32 0.0, %v4712
    %v4714 = vpop.f32.mrf.mxu0
    %4715 = vmatprep.mubr.f32.mxu0 0.0
    %4716 = vmatmul.mubr.f32.gmra.mxu0 %v1647
    %v4717 = vpop.f32.mrf.mxu0
    %v4718 = vadd.f32 0.0, %v4717
    %v4719 = vpop.f32.mrf.mxu0
    %4720 = vmatprep.mubr.f32.mxu0 0.0
    %4721 = vmatmul.mubr.f32.gmra.mxu0 %v1649
    %v4722 = vpop.f32.mrf.mxu0
    %v4723 = vadd.f32 0.0, %v4722
    %v4724 = vpop.f32.mrf.mxu0
    %4725 = vmatprep.mubr.f32.mxu0 0.0
    %4726 = vmatmul.mubr.f32.gmra.mxu0 %v1651
    %v4727 = vpop.f32.mrf.mxu0
    %v4728 = vadd.f32 0.0, %v4727
    %v4729 = vpop.f32.mrf.mxu0
    %4730 = vmatprep.mubr.f32.mxu0 0.0
    %4731 = vmatmul.mubr.f32.gmra.mxu0 %v1653
    %v4732 = vpop.f32.mrf.mxu0
    %v4733 = vadd.f32 0.0, %v4732
    %v4734 = vpop.f32.mrf.mxu0
    %4735 = vmatprep.mubr.f32.mxu0 0.0
    %4736 = vmatmul.mubr.f32.gmra.mxu0 %v1655
    %v4737 = vpop.f32.mrf.mxu0
    %v4738 = vadd.f32 0.0, %v4737
    %v4739 = vpop.f32.mrf.mxu0
    %4740 = vmatprep.mubr.f32.mxu0 0.0
    %4741 = vmatmul.mubr.f32.gmra.mxu0 %v1657
    %v4742 = vpop.f32.mrf.mxu0
    %v4743 = vadd.f32 0.0, %v4742
    %v4744 = vpop.f32.mrf.mxu0
    %4745 = vmatprep.mubr.f32.mxu0 0.0
    %4746 = vmatmul.mubr.f32.gmra.mxu0 %v1659
    %v4747 = vpop.f32.mrf.mxu0
    %v4748 = vadd.f32 0.0, %v4747
    %v4749 = vpop.f32.mrf.mxu0
    %4750 = vmatprep.mubr.f32.mxu0 0.0
    %4751 = vmatmul.mubr.f32.gmra.mxu0 %v1661
    %v4752 = vpop.f32.mrf.mxu0
    %v4753 = vadd.f32 0.0, %v4752
    %v4754 = vpop.f32.mrf.mxu0
    %4755 = vmatprep.mubr.f32.mxu0 0.0
    %4756 = vmatmul.mubr.f32.gmra.mxu0 %v1663
    %v4757 = vpop.f32.mrf.mxu0
    %v4758 = vadd.f32 0.0, %v4757
    %v4759 = vpop.f32.mrf.mxu0
    %4760 = vmatprep.mubr.f32.mxu0 0.0
    %4761 = vmatmul.mubr.f32.gmra.mxu0 %v3133
    %v4762 = vpop.f32.mrf.mxu0
    %v4763 = vadd.f32 0.0, %v4762
    %v4764 = vpop.f32.mrf.mxu0
    %4765 = vmatprep.mubr.f32.mxu0 0.0
    %4766 = vmatmul.mubr.f32.gmra.mxu0 %v3135
    %v4767 = vpop.f32.mrf.mxu0
    %v4768 = vadd.f32 0.0, %v4767
    %v4769 = vpop.f32.mrf.mxu0
    %4770 = vmatprep.mubr.f32.mxu0 0.0
    %4771 = vmatmul.mubr.f32.gmra.mxu0 %v4545
    %v4772 = vpop.f32.mrf.mxu0
    %v4773 = vadd.f32 0.0, %v4772
    %v4774 = vpop.f32.mrf.mxu0
    %4775 = vmatprep.mubr.f32.mxu0 0.0
    %4776 = vmatmul.mubr.f32.gmra.mxu0 %v4547
    %v4777 = vpop.f32.mrf.mxu0
    %v4778 = vadd.f32 0.0, %v4777
    %v4779 = vpop.f32.mrf.mxu0
    %4780 = vmatprep.mubr.f32.mxu0 0.0
    %4781 = vmatmul.mubr.f32.gmra.mxu0 %v1673
    %v4782 = vpop.f32.mrf.mxu0
    %v4783 = vadd.f32 0.0, %v4782
    %v4784 = vpop.f32.mrf.mxu0
    %4785 = vmatprep.mubr.f32.mxu0 0.0
    %4786 = vmatmul.mubr.f32.gmra.mxu0 %v1675
    %v4787 = vpop.f32.mrf.mxu0
    %v4788 = vadd.f32 0.0, %v4787
    %v4789 = vpop.f32.mrf.mxu0
    %4790 = vmatprep.mubr.f32.mxu0 0.0
    %4791 = vmatmul.mubr.f32.gmra.mxu0 %v1677
    %v4792 = vpop.f32.mrf.mxu0
    %v4793 = vadd.f32 0.0, %v4792
    %v4794 = vpop.f32.mrf.mxu0
    %4795 = vmatprep.mubr.f32.mxu0 0.0
    %4796 = vmatmul.mubr.f32.gmra.mxu0 %v1679
    %v4797 = vpop.f32.mrf.mxu0
    %v4798 = vadd.f32 0.0, %v4797
    %v4799 = vpop.f32.mrf.mxu0
    %4800 = vmatprep.mubr.f32.mxu0 0.0
    %4801 = vmatmul.mubr.f32.gmra.mxu0 %v1681
    %v4802 = vpop.f32.mrf.mxu0
    %v4803 = vadd.f32 0.0, %v4802
    %v4804 = vpop.f32.mrf.mxu0
    %4805 = vmatprep.mubr.f32.mxu0 0.0
    %4806 = vmatmul.mubr.f32.gmra.mxu0 %v1683
    %v4807 = vpop.f32.mrf.mxu0
    %v4808 = vadd.f32 0.0, %v4807
    %v4809 = vpop.f32.mrf.mxu0
    %4810 = vmatprep.mubr.f32.mxu0 0.0
    %4811 = vmatmul.mubr.f32.gmra.mxu0 %v1685
    %v4812 = vpop.f32.mrf.mxu0
    %v4813 = vadd.f32 0.0, %v4812
    %v4814 = vpop.f32.mrf.mxu0
    %4815 = vmatprep.mubr.f32.mxu0 0.0
    %4816 = vmatmul.mubr.f32.gmra.mxu0 %v1687
    %v4817 = vpop.f32.mrf.mxu0
    %v4818 = vadd.f32 0.0, %v4817
    %v4819 = vpop.f32.mrf.mxu0
    %4820 = vmatprep.mubr.f32.mxu0 0.0
    %4821 = vmatmul.mubr.f32.gmra.mxu0 %v1689
    %v4822 = vpop.f32.mrf.mxu0
    %v4823 = vadd.f32 0.0, %v4822
    %v4824 = vpop.f32.mrf.mxu0
    %4825 = vmatprep.mubr.f32.mxu0 0.0
    %4826 = vmatmul.mubr.f32.gmra.mxu0 %v1691
    %v4827 = vpop.f32.mrf.mxu0
    %v4828 = vadd.f32 0.0, %v4827
    %v4829 = vpop.f32.mrf.mxu0
    %4830 = vmatprep.mubr.f32.mxu0 0.0
    %4831 = vmatmul.mubr.f32.gmra.mxu0 %v1693
    %v4832 = vpop.f32.mrf.mxu0
    %v4833 = vadd.f32 0.0, %v4832
    %v4834 = vpop.f32.mrf.mxu0
    %4835 = vmatprep.mubr.f32.mxu0 0.0
    %4836 = vmatmul.mubr.f32.gmra.mxu0 %v1695
    %v4837 = vpop.f32.mrf.mxu0
    %v4838 = vadd.f32 0.0, %v4837
    %v4839 = vpop.f32.mrf.mxu0
    %4840 = vmatprep.mubr.f32.mxu0 0.0
    %4841 = vmatmul.mubr.f32.gmra.mxu0 %v1697
    %v4842 = vpop.f32.mrf.mxu0
    %v4843 = vadd.f32 0.0, %v4842
    %v4844 = vpop.f32.mrf.mxu0
    %4845 = vmatprep.mubr.f32.mxu0 0.0
    %4846 = vmatmul.mubr.f32.gmra.mxu0 %v1699
    %v4847 = vpop.f32.mrf.mxu0
    %v4848 = vadd.f32 0.0, %v4847
    %v4849 = vpop.f32.mrf.mxu0
    %4850 = vmatprep.mubr.f32.mxu0 0.0
    %4851 = vmatmul.mubr.f32.gmra.mxu0 %v1701
    %v4852 = vpop.f32.mrf.mxu0
    %v4853 = vadd.f32 0.0, %v4852
    %v4854 = vpop.f32.mrf.mxu0
    %4855 = vmatprep.mubr.f32.mxu0 0.0
    %4856 = vmatmul.mubr.f32.gmra.mxu0 %v1703
    %v4857 = vpop.f32.mrf.mxu0
    %v4858 = vadd.f32 0.0, %v4857
    %v4859 = vpop.f32.mrf.mxu0
    %4860 = vmatprep.mubr.f32.mxu0 0.0
    %4861 = vmatmul.mubr.f32.gmra.mxu0 %v1705
    %v4862 = vpop.f32.mrf.mxu0
    %v4863 = vadd.f32 0.0, %v4862
    %v4864 = vpop.f32.mrf.mxu0
    %4865 = vmatprep.mubr.f32.mxu0 0.0
    %4866 = vmatmul.mubr.f32.gmra.mxu0 %v1707
    %v4867 = vpop.f32.mrf.mxu0
    %v4868 = vadd.f32 0.0, %v4867
    %v4869 = vpop.f32.mrf.mxu0
    %4870 = vmatprep.mubr.f32.mxu0 0.0
    %4871 = vmatmul.mubr.f32.gmra.mxu0 %v1709
    %v4872 = vpop.f32.mrf.mxu0
    %v4873 = vadd.f32 0.0, %v4872
    %v4874 = vpop.f32.mrf.mxu0
    %4875 = vmatprep.mubr.f32.mxu0 0.0
    %4876 = vmatmul.mubr.f32.gmra.mxu0 %v1711
    %v4877 = vpop.f32.mrf.mxu0
    %v4878 = vadd.f32 0.0, %v4877
    %v4879 = vpop.f32.mrf.mxu0
    %4880 = vmatprep.mubr.f32.mxu0 0.0
    %4881 = vmatmul.mubr.f32.gmra.mxu0 %v1713
    %v4882 = vpop.f32.mrf.mxu0
    %v4883 = vadd.f32 0.0, %v4882
    %v4884 = vpop.f32.mrf.mxu0
    %4885 = vmatprep.mubr.f32.mxu0 0.0
    %4886 = vmatmul.mubr.f32.gmra.mxu0 %v1715
    %v4887 = vpop.f32.mrf.mxu0
    %v4888 = vadd.f32 0.0, %v4887
    %v4889 = vpop.f32.mrf.mxu0
    %4890 = vmatprep.mubr.f32.mxu0 0.0
    %4891 = vmatmul.mubr.f32.gmra.mxu0 %v1717
    %v4892 = vpop.f32.mrf.mxu0
    %v4893 = vadd.f32 0.0, %v4892
    %v4894 = vpop.f32.mrf.mxu0
    %4895 = vmatprep.mubr.f32.mxu0 0.0
    %4896 = vmatmul.mubr.f32.gmra.mxu0 %v1719
    %v4897 = vpop.f32.mrf.mxu0
    %v4898 = vadd.f32 0.0, %v4897
    %v4899 = vpop.f32.mrf.mxu0
    %4900 = vmatprep.mubr.f32.mxu0 0.0
    %4901 = vmatmul.mubr.f32.gmra.mxu0 %v1721
    %v4902 = vpop.f32.mrf.mxu0
    %v4903 = vadd.f32 0.0, %v4902
    %v4904 = vpop.f32.mrf.mxu0
    %4905 = vmatprep.mubr.f32.mxu0 0.0
    %4906 = vmatmul.mubr.f32.gmra.mxu0 %v1723
    %v4907 = vpop.f32.mrf.mxu0
    %v4908 = vadd.f32 0.0, %v4907
    %v4909 = vpop.f32.mrf.mxu0
    %4910 = vmatprep.mubr.f32.mxu0 0.0
    %4911 = vmatmul.mubr.f32.gmra.mxu0 %v1725
    %v4912 = vpop.f32.mrf.mxu0
    %v4913 = vadd.f32 0.0, %v4912
    %v4914 = vpop.f32.mrf.mxu0
    %4915 = vmatprep.mubr.f32.mxu0 0.0
    %4916 = vmatmul.mubr.f32.gmra.mxu0 %v1727
    %v4917 = vpop.f32.mrf.mxu0
    %v4918 = vadd.f32 0.0, %v4917
    %v4919 = vpop.f32.mrf.mxu0
    %4920 = vmatprep.mubr.f32.mxu0 0.0
    %4921 = vmatmul.mubr.f32.gmra.mxu0 %v3137
    %v4922 = vpop.f32.mrf.mxu0
    %v4923 = vadd.f32 0.0, %v4922
    %v4924 = vpop.f32.mrf.mxu0
    %4925 = vmatprep.mubr.f32.mxu0 0.0
    %4926 = vmatmul.mubr.f32.gmra.mxu0 %v3139
    %v4927 = vpop.f32.mrf.mxu0
    %v4928 = vadd.f32 0.0, %v4927
    %v4929 = vpop.f32.mrf.mxu0
    %4930 = vmatprep.mubr.f32.mxu0 0.0
    %4931 = vmatmul.mubr.f32.gmra.mxu0 %v4549
    %v4932 = vpop.f32.mrf.mxu0
    %v4933 = vadd.f32 0.0, %v4932
    %v4934 = vpop.f32.mrf.mxu0
    %4935 = vmatprep.mubr.f32.mxu0 0.0
    %4936 = vmatmul.mubr.f32.gmra.mxu0 %v4551
    %v4937 = vpop.f32.mrf.mxu0
    %v4938 = vadd.f32 0.0, %v4937
    %v4939 = vpop.f32.mrf.mxu0
    %4940 = vdwg.mxu0
    %v4941 = vadd.f32 %v4469, %v4623
    %v4942 = vadd.f32 %v4470, %v4628
    %v4943 = vadd.f32 %v4471, %v4633
    %v4944 = vadd.f32 %v4472, %v4638
    %v4945 = vadd.f32 %v4473, %v4643
    %v4946 = vadd.f32 %v4474, %v4648
    %v4947 = vadd.f32 %v4475, %v4653
    %v4948 = vadd.f32 %v4476, %v4658
    %v4949 = vadd.f32 %v4477, %v4663
    %v4950 = vadd.f32 %v4478, %v4668
    %v4951 = vadd.f32 %v4479, %v4673
    %v4952 = vadd.f32 %v4480, %v4678
    %v4953 = vadd.f32 %v4481, %v4683
    %v4954 = vadd.f32 %v4482, %v4688
    %v4955 = vadd.f32 %v4483, %v4693
    %v4956 = vadd.f32 %v4484, %v4698
    %v4957 = vadd.f32 %v4485, %v4703
    %v4958 = vadd.f32 %v4486, %v4708
    %v4959 = vadd.f32 %v4487, %v4713
    %v4960 = vadd.f32 %v4488, %v4718
    %v4961 = vadd.f32 %v4489, %v4723
    %v4962 = vadd.f32 %v4490, %v4728
    %v4963 = vadd.f32 %v4491, %v4733
    %v4964 = vadd.f32 %v4492, %v4738
    %v4965 = vadd.f32 %v4493, %v4743
    %v4966 = vadd.f32 %v4494, %v4748
    %v4967 = vadd.f32 %v4495, %v4753
    %v4968 = vadd.f32 %v4496, %v4758
    %v4969 = vadd.f32 %v4497, %v4763
    %v4970 = vadd.f32 %v4498, %v4768
    %v4971 = vadd.f32 %v4499, %v4773
    %v4972 = vadd.f32 %v4500, %v4778
    %v4973 = vadd.f32 %v4501, %v4783
    %v4974 = vadd.f32 %v4502, %v4788
    %v4975 = vadd.f32 %v4503, %v4793
    %v4976 = vadd.f32 %v4504, %v4798
    %v4977 = vadd.f32 %v4505, %v4803
    %v4978 = vadd.f32 %v4506, %v4808
    %v4979 = vadd.f32 %v4507, %v4813
    %v4980 = vadd.f32 %v4508, %v4818
    %v4981 = vadd.f32 %v4509, %v4823
    %v4982 = vadd.f32 %v4510, %v4828
    %v4983 = vadd.f32 %v4511, %v4833
    %v4984 = vadd.f32 %v4512, %v4838
    %v4985 = vadd.f32 %v4513, %v4843
    %v4986 = vadd.f32 %v4514, %v4848
    %v4987 = vadd.f32 %v4515, %v4853
    %v4988 = vadd.f32 %v4516, %v4858
    %v4989 = vadd.f32 %v4517, %v4863
    %v4990 = vadd.f32 %v4518, %v4868
    %v4991 = vadd.f32 %v4519, %v4873
    %v4992 = vadd.f32 %v4520, %v4878
    %v4993 = vadd.f32 %v4521, %v4883
    %v4994 = vadd.f32 %v4522, %v4888
    %v4995 = vadd.f32 %v4523, %v4893
    %v4996 = vadd.f32 %v4524, %v4898
    %v4997 = vadd.f32 %v4525, %v4903
    %v4998 = vadd.f32 %v4526, %v4908
    %v4999 = vadd.f32 %v4527, %v4913
    %v5000 = vadd.f32 %v4528, %v4918
    %v5001 = vadd.f32 %v4529, %v4923
    %v5002 = vadd.f32 %v4530, %v4928
    %v5003 = vadd.f32 %v4531, %v4933
    %v5004 = vadd.f32 %v4532, %v4938
    %v5005 = vld [vmem:[%s2] sm:$0x1]
    %v5007 = vlaneseq
    %v5008 = vshrl.u32 %v5007, 7
    %v5009 = vsub.s32 0, %v5008
    %v5010 = vrot.slane %v5005, %v5009
    %v5012 = vmul.f32 %v4941, %v5010
    %v5013 = vmul.f32 %v4942, %v5010
    %v5014 = vmul.f32 %v4943, %v5010
    %v5015 = vmul.f32 %v4944, %v5010
    %v5016 = vmul.f32 %v4945, %v5010
    %v5017 = vmul.f32 %v4946, %v5010
    %v5018 = vmul.f32 %v4947, %v5010
    %v5019 = vmul.f32 %v4948, %v5010
    %v5020 = vmul.f32 %v4949, %v5010
    %v5021 = vmul.f32 %v4950, %v5010
    %v5022 = vmul.f32 %v4951, %v5010
    %v5023 = vmul.f32 %v4952, %v5010
    %v5024 = vmul.f32 %v4953, %v5010
    %v5025 = vmul.f32 %v4954, %v5010
    %v5026 = vmul.f32 %v4955, %v5010
    %v5027 = vmul.f32 %v4956, %v5010
    %v5028 = vmul.f32 %v4957, %v5010
    %v5029 = vmul.f32 %v4958, %v5010
    %v5030 = vmul.f32 %v4959, %v5010
    %v5031 = vmul.f32 %v4960, %v5010
    %v5032 = vmul.f32 %v4961, %v5010
    %v5033 = vmul.f32 %v4962, %v5010
    %v5034 = vmul.f32 %v4963, %v5010
    %v5035 = vmul.f32 %v4964, %v5010
    %v5036 = vmul.f32 %v4965, %v5010
    %v5037 = vmul.f32 %v4966, %v5010
    %v5038 = vmul.f32 %v4967, %v5010
    %v5039 = vmul.f32 %v4968, %v5010
    %v5040 = vmul.f32 %v4969, %v5010
    %v5041 = vmul.f32 %v4970, %v5010
    %v5042 = vmul.f32 %v4971, %v5010
    %v5043 = vmul.f32 %v4972, %v5010
    %v5044 = vmul.f32 %v4973, %v5010
    %v5045 = vmul.f32 %v4974, %v5010
    %v5046 = vmul.f32 %v4975, %v5010
    %v5047 = vmul.f32 %v4976, %v5010
    %v5048 = vmul.f32 %v4977, %v5010
    %v5049 = vmul.f32 %v4978, %v5010
    %v5050 = vmul.f32 %v4979, %v5010
    %v5051 = vmul.f32 %v4980, %v5010
    %v5052 = vmul.f32 %v4981, %v5010
    %v5053 = vmul.f32 %v4982, %v5010
    %v5054 = vmul.f32 %v4983, %v5010
    %v5055 = vmul.f32 %v4984, %v5010
    %v5056 = vmul.f32 %v4985, %v5010
    %v5057 = vmul.f32 %v4986, %v5010
    %v5058 = vmul.f32 %v4987, %v5010
    %v5059 = vmul.f32 %v4988, %v5010
    %v5060 = vmul.f32 %v4989, %v5010
    %v5061 = vmul.f32 %v4990, %v5010
    %v5062 = vmul.f32 %v4991, %v5010
    %v5063 = vmul.f32 %v4992, %v5010
    %v5064 = vmul.f32 %v4993, %v5010
    %v5065 = vmul.f32 %v4994, %v5010
    %v5066 = vmul.f32 %v4995, %v5010
    %v5067 = vmul.f32 %v4996, %v5010
    %v5068 = vmul.f32 %v4997, %v5010
    %v5069 = vmul.f32 %v4998, %v5010
    %v5070 = vmul.f32 %v4999, %v5010
    %v5071 = vmul.f32 %v5000, %v5010
    %v5072 = vmul.f32 %v5001, %v5010
    %v5073 = vmul.f32 %v5002, %v5010
    %v5074 = vmul.f32 %v5003, %v5010
    %v5075 = vmul.f32 %v5004, %v5010
    %v5076 = vld [vmem:[%s3] sm:$0x1]
    %v5078 = vlaneseq
    %v5079 = vshrl.u32 %v5078, 7
    %v5080 = vsub.s32 0, %v5079
    %v5081 = vrot.slane %v5076, %v5080
    %v5083 = vadd.f32 %v5012, %v5081
    %v5084 = vadd.f32 %v5013, %v5081
    %v5085 = vadd.f32 %v5014, %v5081
    %v5086 = vadd.f32 %v5015, %v5081
    %v5087 = vadd.f32 %v5016, %v5081
    %v5088 = vadd.f32 %v5017, %v5081
    %v5089 = vadd.f32 %v5018, %v5081
    %v5090 = vadd.f32 %v5019, %v5081
    %v5091 = vadd.f32 %v5020, %v5081
    %v5092 = vadd.f32 %v5021, %v5081
    %v5093 = vadd.f32 %v5022, %v5081
    %v5094 = vadd.f32 %v5023, %v5081
    %v5095 = vadd.f32 %v5024, %v5081
    %v5096 = vadd.f32 %v5025, %v5081
    %v5097 = vadd.f32 %v5026, %v5081
    %v5098 = vadd.f32 %v5027, %v5081
    %v5099 = vadd.f32 %v5028, %v5081
    %v5100 = vadd.f32 %v5029, %v5081
    %v5101 = vadd.f32 %v5030, %v5081
    %v5102 = vadd.f32 %v5031, %v5081
    %v5103 = vadd.f32 %v5032, %v5081
    %v5104 = vadd.f32 %v5033, %v5081
    %v5105 = vadd.f32 %v5034, %v5081
    %v5106 = vadd.f32 %v5035, %v5081
    %v5107 = vadd.f32 %v5036, %v5081
    %v5108 = vadd.f32 %v5037, %v5081
    %v5109 = vadd.f32 %v5038, %v5081
    %v5110 = vadd.f32 %v5039, %v5081
    %v5111 = vadd.f32 %v5040, %v5081
    %v5112 = vadd.f32 %v5041, %v5081
    %v5113 = vadd.f32 %v5042, %v5081
    %v5114 = vadd.f32 %v5043, %v5081
    %v5115 = vadd.f32 %v5044, %v5081
    %v5116 = vadd.f32 %v5045, %v5081
    %v5117 = vadd.f32 %v5046, %v5081
    %v5118 = vadd.f32 %v5047, %v5081
    %v5119 = vadd.f32 %v5048, %v5081
    %v5120 = vadd.f32 %v5049, %v5081
    %v5121 = vadd.f32 %v5050, %v5081
    %v5122 = vadd.f32 %v5051, %v5081
    %v5123 = vadd.f32 %v5052, %v5081
    %v5124 = vadd.f32 %v5053, %v5081
    %v5125 = vadd.f32 %v5054, %v5081
    %v5126 = vadd.f32 %v5055, %v5081
    %v5127 = vadd.f32 %v5056, %v5081
    %v5128 = vadd.f32 %v5057, %v5081
    %v5129 = vadd.f32 %v5058, %v5081
    %v5130 = vadd.f32 %v5059, %v5081
    %v5131 = vadd.f32 %v5060, %v5081
    %v5132 = vadd.f32 %v5061, %v5081
    %v5133 = vadd.f32 %v5062, %v5081
    %v5134 = vadd.f32 %v5063, %v5081
    %v5135 = vadd.f32 %v5064, %v5081
    %v5136 = vadd.f32 %v5065, %v5081
    %v5137 = vadd.f32 %v5066, %v5081
    %v5138 = vadd.f32 %v5067, %v5081
    %v5139 = vadd.f32 %v5068, %v5081
    %v5140 = vadd.f32 %v5069, %v5081
    %v5141 = vadd.f32 %v5070, %v5081
    %v5142 = vadd.f32 %v5071, %v5081
    %v5143 = vadd.f32 %v5072, %v5081
    %v5144 = vadd.f32 %v5073, %v5081
    %v5145 = vadd.f32 %v5074, %v5081
    %v5146 = vadd.f32 %v5075, %v5081
    %v5147 = vmax.f32 %v5083, 0.0
    %v5148 = vmax.f32 %v5084, 0.0
    %v5149 = vmax.f32 %v5085, 0.0
    %v5150 = vmax.f32 %v5086, 0.0
    %v5151 = vmax.f32 %v5087, 0.0
    %v5152 = vmax.f32 %v5088, 0.0
    %v5153 = vmax.f32 %v5089, 0.0
    %v5154 = vmax.f32 %v5090, 0.0
    %v5155 = vmax.f32 %v5091, 0.0
    %v5156 = vmax.f32 %v5092, 0.0
    %v5157 = vmax.f32 %v5093, 0.0
    %v5158 = vmax.f32 %v5094, 0.0
    %v5159 = vmax.f32 %v5095, 0.0
    %v5160 = vmax.f32 %v5096, 0.0
    %v5161 = vmax.f32 %v5097, 0.0
    %v5162 = vmax.f32 %v5098, 0.0
    %v5163 = vmax.f32 %v5099, 0.0
    %v5164 = vmax.f32 %v5100, 0.0
    %v5165 = vmax.f32 %v5101, 0.0
    %v5166 = vmax.f32 %v5102, 0.0
    %v5167 = vmax.f32 %v5103, 0.0
    %v5168 = vmax.f32 %v5104, 0.0
    %v5169 = vmax.f32 %v5105, 0.0
    %v5170 = vmax.f32 %v5106, 0.0
    %v5171 = vmax.f32 %v5107, 0.0
    %v5172 = vmax.f32 %v5108, 0.0
    %v5173 = vmax.f32 %v5109, 0.0
    %v5174 = vmax.f32 %v5110, 0.0
    %v5175 = vmax.f32 %v5111, 0.0
    %v5176 = vmax.f32 %v5112, 0.0
    %v5177 = vmax.f32 %v5113, 0.0
    %v5178 = vmax.f32 %v5114, 0.0
    %v5179 = vmax.f32 %v5115, 0.0
    %v5180 = vmax.f32 %v5116, 0.0
    %v5181 = vmax.f32 %v5117, 0.0
    %v5182 = vmax.f32 %v5118, 0.0
    %v5183 = vmax.f32 %v5119, 0.0
    %v5184 = vmax.f32 %v5120, 0.0
    %v5185 = vmax.f32 %v5121, 0.0
    %v5186 = vmax.f32 %v5122, 0.0
    %v5187 = vmax.f32 %v5123, 0.0
    %v5188 = vmax.f32 %v5124, 0.0
    %v5189 = vmax.f32 %v5125, 0.0
    %v5190 = vmax.f32 %v5126, 0.0
    %v5191 = vmax.f32 %v5127, 0.0
    %v5192 = vmax.f32 %v5128, 0.0
    %v5193 = vmax.f32 %v5129, 0.0
    %v5194 = vmax.f32 %v5130, 0.0
    %v5195 = vmax.f32 %v5131, 0.0
    %v5196 = vmax.f32 %v5132, 0.0
    %v5197 = vmax.f32 %v5133, 0.0
    %v5198 = vmax.f32 %v5134, 0.0
    %v5199 = vmax.f32 %v5135, 0.0
    %v5200 = vmax.f32 %v5136, 0.0
    %v5201 = vmax.f32 %v5137, 0.0
    %v5202 = vmax.f32 %v5138, 0.0
    %v5203 = vmax.f32 %v5139, 0.0
    %v5204 = vmax.f32 %v5140, 0.0
    %v5205 = vmax.f32 %v5141, 0.0
    %v5206 = vmax.f32 %v5142, 0.0
    %v5207 = vmax.f32 %v5143, 0.0
    %v5208 = vmax.f32 %v5144, 0.0
    %v5209 = vmax.f32 %v5145, 0.0
    %v5210 = vmax.f32 %v5146, 0.0
    %v5211 = vmax.f32 %v5147, %v5149
    %v5212 = vmax.f32 %v5148, %v5150
    %v5213 = vmax.f32 %v5151, %v5153
    %v5214 = vmax.f32 %v5152, %v5154
    %v5215 = vmax.f32 %v5155, %v5157
    %v5216 = vmax.f32 %v5156, %v5158
    %v5217 = vmax.f32 %v5159, %v5161
    %v5218 = vmax.f32 %v5160, %v5162
    %v5219 = vmax.f32 %v5163, %v5165
    %v5220 = vmax.f32 %v5164, %v5166
    %v5221 = vmax.f32 %v5167, %v5169
    %v5222 = vmax.f32 %v5168, %v5170
    %v5223 = vmax.f32 %v5171, %v5173
    %v5224 = vmax.f32 %v5172, %v5174
    %v5225 = vmax.f32 %v5175, %v5177
    %v5226 = vmax.f32 %v5176, %v5178
    %v5227 = vmax.f32 %v5179, %v5181
    %v5228 = vmax.f32 %v5180, %v5182
    %v5229 = vmax.f32 %v5183, %v5185
    %v5230 = vmax.f32 %v5184, %v5186
    %v5231 = vmax.f32 %v5187, %v5189
    %v5232 = vmax.f32 %v5188, %v5190
    %v5233 = vmax.f32 %v5191, %v5193
    %v5234 = vmax.f32 %v5192, %v5194
    %v5235 = vmax.f32 %v5195, %v5197
    %v5236 = vmax.f32 %v5196, %v5198
    %v5237 = vmax.f32 %v5199, %v5201
    %v5238 = vmax.f32 %v5200, %v5202
    %v5239 = vmax.f32 %v5203, %v5205
    %v5240 = vmax.f32 %v5204, %v5206
    %v5241 = vmax.f32 %v5207, %v5209
    %v5242 = vmax.f32 %v5208, %v5210
    %v5243 = vlaneseq
    %v5244 = vshrl.u32 %v5243, 7
    %v5245 = vadd.s32 %v5244, 8
    %v5246 = vlaneseq
    %v5247 = vand.u32 %v5246, 127
    %v5248 = vadd.s32 %v5247, 128
    %vm5249 = vcmp.ge.s32.totalorder %v5244, 1
    %vm5250 = vcmp.ge.s32.totalorder %v5245, 1
    %vm5251 = vmand 0, %vm5249
    %vm5252 = vmand 0, %vm5250
    %vm5253 = vmand 1, %vm5249
    %vm5254 = vmand 1, %vm5250
    %vm5255 = vcmp.le.s32.totalorder %v5244, 8
    %vm5256 = vcmp.le.s32.totalorder %v5245, 8
    %vm5257 = vmand %vm5251, %vm5255
    %vm5258 = vmand %vm5252, %vm5256
    %vm5259 = vmand %vm5253, %vm5255
    %vm5260 = vmand %vm5254, %vm5256
    %v5261 = vsub.s32 %v5244, 1
    %v5262 = vsub.s32 %v5245, 1
    %v5263 = vmul.u32 %v5261, 2
    %v5264 = vmul.u32 %v5262, 2
    %v5265 = vadd.s32 %v5263, 4294967280
    %v5266 = vadd.s32 %v5264, 4294967280
    %v5267 = vadd.s32 %v5263, 16
    %v5268 = vadd.s32 %v5264, 16
    %v5269 = vadd.s32 %v5263, 32
    %v5270 = vadd.s32 %v5264, 32
    %v5271 = vadd.s32 %v5263, 48
    %v5272 = vadd.s32 %v5264, 48
    %v5273 = vadd.s32 %v5263, 64
    %v5274 = vadd.s32 %v5264, 64
    %v5275 = vadd.s32 %v5263, 80
    %v5276 = vadd.s32 %v5264, 80
    %v5277 = vadd.s32 %v5263, 96
    %v5278 = vadd.s32 %v5264, 96
    %v5279 = vadd.s32 %v5263, 112
    %v5280 = vadd.s32 %v5264, 112
    %v5281 = vadd.s32 %v5263, 128
    %v5282 = vadd.s32 %v5264, 128
    %v5283 = vadd.s32 %v5263, 144
    %v5284 = vadd.s32 %v5264, 144
    %v5285 = vadd.s32 %v5263, 160
    %v5286 = vadd.s32 %v5264, 160
    %v5287 = vadd.s32 %v5263, 176
    %v5288 = vadd.s32 %v5264, 176
    %v5289 = vadd.s32 %v5263, 192
    %v5290 = vadd.s32 %v5264, 192
    %v5291 = vadd.s32 %v5263, 208
    %v5292 = vadd.s32 %v5264, 208
    %v5293 = vadd.s32 %v5263, 224
    %v5294 = vadd.s32 %v5264, 224
    %v5295 = vadd.s32 %v5263, 240
    %v5296 = vadd.s32 %v5264, 240
    %v5297 = vadd.s32 %v5263, 256
    %v5298 = vadd.s32 %v5264, 256
    %v5299 = vsub.s32 %v5247, %v5265
    %v5300 = vsub.s32 %v5248, %v5265
    %v5301 = vsub.s32 %v5247, %v5266
    %v5302 = vsub.s32 %v5248, %v5266
    %v5303 = vsub.s32 %v5247, %v5263
    %v5304 = vsub.s32 %v5248, %v5263
    %v5305 = vsub.s32 %v5247, %v5264
    %v5306 = vsub.s32 %v5248, %v5264
    %v5307 = vsub.s32 %v5247, %v5267
    %v5308 = vsub.s32 %v5248, %v5267
    %v5309 = vsub.s32 %v5247, %v5268
    %v5310 = vsub.s32 %v5248, %v5268
    %v5311 = vsub.s32 %v5247, %v5269
    %v5312 = vsub.s32 %v5248, %v5269
    %v5313 = vsub.s32 %v5247, %v5270
    %v5314 = vsub.s32 %v5248, %v5270
    %v5315 = vsub.s32 %v5247, %v5271
    %v5316 = vsub.s32 %v5248, %v5271
    %v5317 = vsub.s32 %v5247, %v5272
    %v5318 = vsub.s32 %v5248, %v5272
    %v5319 = vsub.s32 %v5247, %v5273
    %v5320 = vsub.s32 %v5248, %v5273
    %v5321 = vsub.s32 %v5247, %v5274
    %v5322 = vsub.s32 %v5248, %v5274
    %v5323 = vsub.s32 %v5247, %v5275
    %v5324 = vsub.s32 %v5248, %v5275
    %v5325 = vsub.s32 %v5247, %v5276
    %v5326 = vsub.s32 %v5248, %v5276
    %v5327 = vsub.s32 %v5247, %v5277
    %v5328 = vsub.s32 %v5248, %v5277
    %v5329 = vsub.s32 %v5247, %v5278
    %v5330 = vsub.s32 %v5248, %v5278
    %v5331 = vsub.s32 %v5247, %v5279
    %v5332 = vsub.s32 %v5248, %v5279
    %v5333 = vsub.s32 %v5247, %v5280
    %v5334 = vsub.s32 %v5248, %v5280
    %v5335 = vsub.s32 %v5247, %v5281
    %v5336 = vsub.s32 %v5248, %v5281
    %v5337 = vsub.s32 %v5247, %v5282
    %v5338 = vsub.s32 %v5248, %v5282
    %v5339 = vsub.s32 %v5247, %v5283
    %v5340 = vsub.s32 %v5248, %v5283
    %v5341 = vsub.s32 %v5247, %v5284
    %v5342 = vsub.s32 %v5248, %v5284
    %v5343 = vsub.s32 %v5247, %v5285
    %v5344 = vsub.s32 %v5248, %v5285
    %v5345 = vsub.s32 %v5247, %v5286
    %v5346 = vsub.s32 %v5248, %v5286
    %v5347 = vsub.s32 %v5247, %v5287
    %v5348 = vsub.s32 %v5248, %v5287
    %v5349 = vsub.s32 %v5247, %v5288
    %v5350 = vsub.s32 %v5248, %v5288
    %v5351 = vsub.s32 %v5247, %v5289
    %v5352 = vsub.s32 %v5248, %v5289
    %v5353 = vsub.s32 %v5247, %v5290
    %v5354 = vsub.s32 %v5248, %v5290
    %v5355 = vsub.s32 %v5247, %v5291
    %v5356 = vsub.s32 %v5248, %v5291
    %v5357 = vsub.s32 %v5247, %v5292
    %v5358 = vsub.s32 %v5248, %v5292
    %v5359 = vsub.s32 %v5247, %v5293
    %v5360 = vsub.s32 %v5248, %v5293
    %v5361 = vsub.s32 %v5247, %v5294
    %v5362 = vsub.s32 %v5248, %v5294
    %v5363 = vsub.s32 %v5247, %v5295
    %v5364 = vsub.s32 %v5248, %v5295
    %v5365 = vsub.s32 %v5247, %v5296
    %v5366 = vsub.s32 %v5248, %v5296
    %v5367 = vsub.s32 %v5247, %v5297
    %v5368 = vsub.s32 %v5248, %v5297
    %v5369 = vsub.s32 %v5247, %v5298
    %v5370 = vsub.s32 %v5248, %v5298
    %vm5371 = vcmp.eq.s32.totalorder %v5299, 0
    %vm5372 = vcmp.eq.s32.totalorder %v5300, 0
    %vm5373 = vcmp.eq.s32.totalorder %v5301, 0
    %vm5374 = vcmp.eq.s32.totalorder %v5302, 0
    %vm5375 = vcmp.eq.s32.totalorder %v5303, 0
    %vm5376 = vcmp.eq.s32.totalorder %v5304, 0
    %vm5377 = vcmp.eq.s32.totalorder %v5305, 0
    %vm5378 = vcmp.eq.s32.totalorder %v5306, 0
    %vm5379 = vcmp.eq.s32.totalorder %v5307, 0
    %vm5380 = vcmp.eq.s32.totalorder %v5308, 0
    %vm5381 = vcmp.eq.s32.totalorder %v5309, 0
    %vm5382 = vcmp.eq.s32.totalorder %v5310, 0
    %vm5383 = vcmp.eq.s32.totalorder %v5311, 0
    %vm5384 = vcmp.eq.s32.totalorder %v5312, 0
    %vm5385 = vcmp.eq.s32.totalorder %v5313, 0
    %vm5386 = vcmp.eq.s32.totalorder %v5314, 0
    %vm5387 = vcmp.eq.s32.totalorder %v5315, 0
    %vm5388 = vcmp.eq.s32.totalorder %v5316, 0
    %vm5389 = vcmp.eq.s32.totalorder %v5317, 0
    %vm5390 = vcmp.eq.s32.totalorder %v5318, 0
    %vm5391 = vcmp.eq.s32.totalorder %v5319, 0
    %vm5392 = vcmp.eq.s32.totalorder %v5320, 0
    %vm5393 = vcmp.eq.s32.totalorder %v5321, 0
    %vm5394 = vcmp.eq.s32.totalorder %v5322, 0
    %vm5395 = vcmp.eq.s32.totalorder %v5323, 0
    %vm5396 = vcmp.eq.s32.totalorder %v5324, 0
    %vm5397 = vcmp.eq.s32.totalorder %v5325, 0
    %vm5398 = vcmp.eq.s32.totalorder %v5326, 0
    %vm5399 = vcmp.eq.s32.totalorder %v5327, 0
    %vm5400 = vcmp.eq.s32.totalorder %v5328, 0
    %vm5401 = vcmp.eq.s32.totalorder %v5329, 0
    %vm5402 = vcmp.eq.s32.totalorder %v5330, 0
    %vm5403 = vcmp.eq.s32.totalorder %v5331, 0
    %vm5404 = vcmp.eq.s32.totalorder %v5332, 0
    %vm5405 = vcmp.eq.s32.totalorder %v5333, 0
    %vm5406 = vcmp.eq.s32.totalorder %v5334, 0
    %vm5407 = vcmp.eq.s32.totalorder %v5335, 0
    %vm5408 = vcmp.eq.s32.totalorder %v5336, 0
    %vm5409 = vcmp.eq.s32.totalorder %v5337, 0
    %vm5410 = vcmp.eq.s32.totalorder %v5338, 0
    %vm5411 = vcmp.eq.s32.totalorder %v5339, 0
    %vm5412 = vcmp.eq.s32.totalorder %v5340, 0
    %vm5413 = vcmp.eq.s32.totalorder %v5341, 0
    %vm5414 = vcmp.eq.s32.totalorder %v5342, 0
    %vm5415 = vcmp.eq.s32.totalorder %v5343, 0
    %vm5416 = vcmp.eq.s32.totalorder %v5344, 0
    %vm5417 = vcmp.eq.s32.totalorder %v5345, 0
    %vm5418 = vcmp.eq.s32.totalorder %v5346, 0
    %vm5419 = vcmp.eq.s32.totalorder %v5347, 0
    %vm5420 = vcmp.eq.s32.totalorder %v5348, 0
    %vm5421 = vcmp.eq.s32.totalorder %v5349, 0
    %vm5422 = vcmp.eq.s32.totalorder %v5350, 0
    %vm5423 = vcmp.eq.s32.totalorder %v5351, 0
    %vm5424 = vcmp.eq.s32.totalorder %v5352, 0
    %vm5425 = vcmp.eq.s32.totalorder %v5353, 0
    %vm5426 = vcmp.eq.s32.totalorder %v5354, 0
    %vm5427 = vcmp.eq.s32.totalorder %v5355, 0
    %vm5428 = vcmp.eq.s32.totalorder %v5356, 0
    %vm5429 = vcmp.eq.s32.totalorder %v5357, 0
    %vm5430 = vcmp.eq.s32.totalorder %v5358, 0
    %vm5431 = vcmp.eq.s32.totalorder %v5359, 0
    %vm5432 = vcmp.eq.s32.totalorder %v5360, 0
    %vm5433 = vcmp.eq.s32.totalorder %v5361, 0
    %vm5434 = vcmp.eq.s32.totalorder %v5362, 0
    %vm5435 = vcmp.eq.s32.totalorder %v5363, 0
    %vm5436 = vcmp.eq.s32.totalorder %v5364, 0
    %vm5437 = vcmp.eq.s32.totalorder %v5365, 0
    %vm5438 = vcmp.eq.s32.totalorder %v5366, 0
    %vm5439 = vcmp.eq.s32.totalorder %v5367, 0
    %vm5440 = vcmp.eq.s32.totalorder %v5368, 0
    %vm5441 = vcmp.eq.s32.totalorder %v5369, 0
    %vm5442 = vcmp.eq.s32.totalorder %v5370, 0
    %vm5443 = vmand %vm5257, %vm5371
    %vm5444 = vmand %vm5257, %vm5372
    %vm5445 = vmand %vm5258, %vm5373
    %vm5446 = vmand %vm5258, %vm5374
    %vm5447 = vmand %vm5259, %vm5375
    %vm5448 = vmand %vm5259, %vm5376
    %vm5449 = vmand %vm5260, %vm5377
    %vm5450 = vmand %vm5260, %vm5378
    %vm5451 = vmand %vm5259, %vm5379
    %vm5452 = vmand %vm5259, %vm5380
    %vm5453 = vmand %vm5260, %vm5381
    %vm5454 = vmand %vm5260, %vm5382
    %vm5455 = vmand %vm5259, %vm5383
    %vm5456 = vmand %vm5259, %vm5384
    %vm5457 = vmand %vm5260, %vm5385
    %vm5458 = vmand %vm5260, %vm5386
    %vm5459 = vmand %vm5259, %vm5387
    %vm5460 = vmand %vm5259, %vm5388
    %vm5461 = vmand %vm5260, %vm5389
    %vm5462 = vmand %vm5260, %vm5390
    %vm5463 = vmand %vm5259, %vm5391
    %vm5464 = vmand %vm5259, %vm5392
    %vm5465 = vmand %vm5260, %vm5393
    %vm5466 = vmand %vm5260, %vm5394
    %vm5467 = vmand %vm5259, %vm5395
    %vm5468 = vmand %vm5259, %vm5396
    %vm5469 = vmand %vm5260, %vm5397
    %vm5470 = vmand %vm5260, %vm5398
    %vm5471 = vmand %vm5259, %vm5399
    %vm5472 = vmand %vm5259, %vm5400
    %vm5473 = vmand %vm5260, %vm5401
    %vm5474 = vmand %vm5260, %vm5402
    %vm5475 = vmand %vm5259, %vm5403
    %vm5476 = vmand %vm5259, %vm5404
    %vm5477 = vmand %vm5260, %vm5405
    %vm5478 = vmand %vm5260, %vm5406
    %vm5479 = vmand %vm5257, %vm5407
    %vm5480 = vmand %vm5257, %vm5408
    %vm5481 = vmand %vm5258, %vm5409
    %vm5482 = vmand %vm5258, %vm5410
    %vm5483 = vmand %vm5257, %vm5403
    %vm5484 = vmand %vm5257, %vm5404
    %vm5485 = vmand %vm5258, %vm5405
    %vm5486 = vmand %vm5258, %vm5406
    %vm5487 = vmand %vm5259, %vm5407
    %vm5488 = vmand %vm5259, %vm5408
    %vm5489 = vmand %vm5260, %vm5409
    %vm5490 = vmand %vm5260, %vm5410
    %vm5491 = vmand %vm5259, %vm5411
    %vm5492 = vmand %vm5259, %vm5412
    %vm5493 = vmand %vm5260, %vm5413
    %vm5494 = vmand %vm5260, %vm5414
    %vm5495 = vmand %vm5259, %vm5415
    %vm5496 = vmand %vm5259, %vm5416
    %vm5497 = vmand %vm5260, %vm5417
    %vm5498 = vmand %vm5260, %vm5418
    %vm5499 = vmand %vm5259, %vm5419
    %vm5500 = vmand %vm5259, %vm5420
    %vm5501 = vmand %vm5260, %vm5421
    %vm5502 = vmand %vm5260, %vm5422
    %vm5503 = vmand %vm5259, %vm5423
    %vm5504 = vmand %vm5259, %vm5424
    %vm5505 = vmand %vm5260, %vm5425
    %vm5506 = vmand %vm5260, %vm5426
    %vm5507 = vmand %vm5259, %vm5427
    %vm5508 = vmand %vm5259, %vm5428
    %vm5509 = vmand %vm5260, %vm5429
    %vm5510 = vmand %vm5260, %vm5430
    %vm5511 = vmand %vm5259, %vm5431
    %vm5512 = vmand %vm5259, %vm5432
    %vm5513 = vmand %vm5260, %vm5433
    %vm5514 = vmand %vm5260, %vm5434
    %vm5515 = vmand %vm5259, %vm5435
    %vm5516 = vmand %vm5259, %vm5436
    %vm5517 = vmand %vm5260, %vm5437
    %vm5518 = vmand %vm5260, %vm5438
    %vm5519 = vmand %vm5257, %vm5439
    %vm5520 = vmand %vm5257, %vm5440
    %vm5521 = vmand %vm5258, %vm5441
    %vm5522 = vmand %vm5258, %vm5442
    %v5523 = vsel %vm5443, 1.0, 0.0
    %v5524 = vsel %vm5444, 1.0, 0.0
    %v5525 = vsel %vm5445, 1.0, 0.0
    %v5526 = vsel %vm5446, 1.0, 0.0
    %v5527 = vsel %vm5447, 1.0, 0.0
    %v5528 = vsel %vm5448, 1.0, 0.0
    %v5529 = vsel %vm5449, 1.0, 0.0
    %v5530 = vsel %vm5450, 1.0, 0.0
    %v5531 = vsel %vm5451, 1.0, 0.0
    %v5532 = vsel %vm5452, 1.0, 0.0
    %v5533 = vsel %vm5453, 1.0, 0.0
    %v5534 = vsel %vm5454, 1.0, 0.0
    %v5535 = vsel %vm5455, 1.0, 0.0
    %v5536 = vsel %vm5456, 1.0, 0.0
    %v5537 = vsel %vm5457, 1.0, 0.0
    %v5538 = vsel %vm5458, 1.0, 0.0
    %v5539 = vsel %vm5459, 1.0, 0.0
    %v5540 = vsel %vm5460, 1.0, 0.0
    %v5541 = vsel %vm5461, 1.0, 0.0
    %v5542 = vsel %vm5462, 1.0, 0.0
    %v5543 = vsel %vm5463, 1.0, 0.0
    %v5544 = vsel %vm5464, 1.0, 0.0
    %v5545 = vsel %vm5465, 1.0, 0.0
    %v5546 = vsel %vm5466, 1.0, 0.0
    %v5547 = vsel %vm5467, 1.0, 0.0
    %v5548 = vsel %vm5468, 1.0, 0.0
    %v5549 = vsel %vm5469, 1.0, 0.0
    %v5550 = vsel %vm5470, 1.0, 0.0
    %v5551 = vsel %vm5471, 1.0, 0.0
    %v5552 = vsel %vm5472, 1.0, 0.0
    %v5553 = vsel %vm5473, 1.0, 0.0
    %v5554 = vsel %vm5474, 1.0, 0.0
    %v5555 = vsel %vm5475, 1.0, 0.0
    %v5556 = vsel %vm5476, 1.0, 0.0
    %v5557 = vsel %vm5477, 1.0, 0.0
    %v5558 = vsel %vm5478, 1.0, 0.0
    %v5559 = vsel %vm5479, 1.0, 0.0
    %v5560 = vsel %vm5480, 1.0, 0.0
    %v5561 = vsel %vm5481, 1.0, 0.0
    %v5562 = vsel %vm5482, 1.0, 0.0
    %v5563 = vsel %vm5483, 1.0, 0.0
    %v5564 = vsel %vm5484, 1.0, 0.0
    %v5565 = vsel %vm5485, 1.0, 0.0
    %v5566 = vsel %vm5486, 1.0, 0.0
    %v5567 = vsel %vm5487, 1.0, 0.0
    %v5568 = vsel %vm5488, 1.0, 0.0
    %v5569 = vsel %vm5489, 1.0, 0.0
    %v5570 = vsel %vm5490, 1.0, 0.0
    %v5571 = vsel %vm5491, 1.0, 0.0
    %v5572 = vsel %vm5492, 1.0, 0.0
    %v5573 = vsel %vm5493, 1.0, 0.0
    %v5574 = vsel %vm5494, 1.0, 0.0
    %v5575 = vsel %vm5495, 1.0, 0.0
    %v5576 = vsel %vm5496, 1.0, 0.0
    %v5577 = vsel %vm5497, 1.0, 0.0
    %v5578 = vsel %vm5498, 1.0, 0.0
    %v5579 = vsel %vm5499, 1.0, 0.0
    %v5580 = vsel %vm5500, 1.0, 0.0
    %v5581 = vsel %vm5501, 1.0, 0.0
    %v5582 = vsel %vm5502, 1.0, 0.0
    %v5583 = vsel %vm5503, 1.0, 0.0
    %v5584 = vsel %vm5504, 1.0, 0.0
    %v5585 = vsel %vm5505, 1.0, 0.0
    %v5586 = vsel %vm5506, 1.0, 0.0
    %v5587 = vsel %vm5507, 1.0, 0.0
    %v5588 = vsel %vm5508, 1.0, 0.0
    %v5589 = vsel %vm5509, 1.0, 0.0
    %v5590 = vsel %vm5510, 1.0, 0.0
    %v5591 = vsel %vm5511, 1.0, 0.0
    %v5592 = vsel %vm5512, 1.0, 0.0
    %v5593 = vsel %vm5513, 1.0, 0.0
    %v5594 = vsel %vm5514, 1.0, 0.0
    %v5595 = vsel %vm5515, 1.0, 0.0
    %v5596 = vsel %vm5516, 1.0, 0.0
    %v5597 = vsel %vm5517, 1.0, 0.0
    %v5598 = vsel %vm5518, 1.0, 0.0
    %v5599 = vsel %vm5519, 1.0, 0.0
    %v5600 = vsel %vm5520, 1.0, 0.0
    %v5601 = vsel %vm5521, 1.0, 0.0
    %v5602 = vsel %vm5522, 1.0, 0.0
    %vm5603 = vcmp.eq.s32.totalorder %v5299, 1
    %vm5604 = vcmp.eq.s32.totalorder %v5300, 1
    %vm5605 = vcmp.eq.s32.totalorder %v5301, 1
    %vm5606 = vcmp.eq.s32.totalorder %v5302, 1
    %vm5607 = vcmp.eq.s32.totalorder %v5303, 1
    %vm5608 = vcmp.eq.s32.totalorder %v5304, 1
    %vm5609 = vcmp.eq.s32.totalorder %v5305, 1
    %vm5610 = vcmp.eq.s32.totalorder %v5306, 1
    %vm5611 = vcmp.eq.s32.totalorder %v5307, 1
    %vm5612 = vcmp.eq.s32.totalorder %v5308, 1
    %vm5613 = vcmp.eq.s32.totalorder %v5309, 1
    %vm5614 = vcmp.eq.s32.totalorder %v5310, 1
    %vm5615 = vcmp.eq.s32.totalorder %v5311, 1
    %vm5616 = vcmp.eq.s32.totalorder %v5312, 1
    %vm5617 = vcmp.eq.s32.totalorder %v5313, 1
    %vm5618 = vcmp.eq.s32.totalorder %v5314, 1
    %vm5619 = vcmp.eq.s32.totalorder %v5315, 1
    %vm5620 = vcmp.eq.s32.totalorder %v5316, 1
    %vm5621 = vcmp.eq.s32.totalorder %v5317, 1
    %vm5622 = vcmp.eq.s32.totalorder %v5318, 1
    %vm5623 = vcmp.eq.s32.totalorder %v5319, 1
    %vm5624 = vcmp.eq.s32.totalorder %v5320, 1
    %vm5625 = vcmp.eq.s32.totalorder %v5321, 1
    %vm5626 = vcmp.eq.s32.totalorder %v5322, 1
    %vm5627 = vcmp.eq.s32.totalorder %v5323, 1
    %vm5628 = vcmp.eq.s32.totalorder %v5324, 1
    %vm5629 = vcmp.eq.s32.totalorder %v5325, 1
    %vm5630 = vcmp.eq.s32.totalorder %v5326, 1
    %vm5631 = vcmp.eq.s32.totalorder %v5327, 1
    %vm5632 = vcmp.eq.s32.totalorder %v5328, 1
    %vm5633 = vcmp.eq.s32.totalorder %v5329, 1
    %vm5634 = vcmp.eq.s32.totalorder %v5330, 1
    %vm5635 = vcmp.eq.s32.totalorder %v5331, 1
    %vm5636 = vcmp.eq.s32.totalorder %v5332, 1
    %vm5637 = vcmp.eq.s32.totalorder %v5333, 1
    %vm5638 = vcmp.eq.s32.totalorder %v5334, 1
    %vm5639 = vcmp.eq.s32.totalorder %v5335, 1
    %vm5640 = vcmp.eq.s32.totalorder %v5336, 1
    %vm5641 = vcmp.eq.s32.totalorder %v5337, 1
    %vm5642 = vcmp.eq.s32.totalorder %v5338, 1
    %vm5643 = vcmp.eq.s32.totalorder %v5339, 1
    %vm5644 = vcmp.eq.s32.totalorder %v5340, 1
    %vm5645 = vcmp.eq.s32.totalorder %v5341, 1
    %vm5646 = vcmp.eq.s32.totalorder %v5342, 1
    %vm5647 = vcmp.eq.s32.totalorder %v5343, 1
    %vm5648 = vcmp.eq.s32.totalorder %v5344, 1
    %vm5649 = vcmp.eq.s32.totalorder %v5345, 1
    %vm5650 = vcmp.eq.s32.totalorder %v5346, 1
    %vm5651 = vcmp.eq.s32.totalorder %v5347, 1
    %vm5652 = vcmp.eq.s32.totalorder %v5348, 1
    %vm5653 = vcmp.eq.s32.totalorder %v5349, 1
    %vm5654 = vcmp.eq.s32.totalorder %v5350, 1
    %vm5655 = vcmp.eq.s32.totalorder %v5351, 1
    %vm5656 = vcmp.eq.s32.totalorder %v5352, 1
    %vm5657 = vcmp.eq.s32.totalorder %v5353, 1
    %vm5658 = vcmp.eq.s32.totalorder %v5354, 1
    %vm5659 = vcmp.eq.s32.totalorder %v5355, 1
    %vm5660 = vcmp.eq.s32.totalorder %v5356, 1
    %vm5661 = vcmp.eq.s32.totalorder %v5357, 1
    %vm5662 = vcmp.eq.s32.totalorder %v5358, 1
    %vm5663 = vcmp.eq.s32.totalorder %v5359, 1
    %vm5664 = vcmp.eq.s32.totalorder %v5360, 1
    %vm5665 = vcmp.eq.s32.totalorder %v5361, 1
    %vm5666 = vcmp.eq.s32.totalorder %v5362, 1
    %vm5667 = vcmp.eq.s32.totalorder %v5363, 1
    %vm5668 = vcmp.eq.s32.totalorder %v5364, 1
    %vm5669 = vcmp.eq.s32.totalorder %v5365, 1
    %vm5670 = vcmp.eq.s32.totalorder %v5366, 1
    %vm5671 = vcmp.eq.s32.totalorder %v5367, 1
    %vm5672 = vcmp.eq.s32.totalorder %v5368, 1
    %vm5673 = vcmp.eq.s32.totalorder %v5369, 1
    %vm5674 = vcmp.eq.s32.totalorder %v5370, 1
    %vm5675 = vmand %vm5257, %vm5603
    %vm5676 = vmand %vm5257, %vm5604
    %vm5677 = vmand %vm5258, %vm5605
    %vm5678 = vmand %vm5258, %vm5606
    %vm5679 = vmand %vm5259, %vm5607
    %vm5680 = vmand %vm5259, %vm5608
    %vm5681 = vmand %vm5260, %vm5609
    %vm5682 = vmand %vm5260, %vm5610
    %vm5683 = vmand %vm5259, %vm5611
    %vm5684 = vmand %vm5259, %vm5612
    %vm5685 = vmand %vm5260, %vm5613
    %vm5686 = vmand %vm5260, %vm5614
    %vm5687 = vmand %vm5259, %vm5615
    %vm5688 = vmand %vm5259, %vm5616
    %vm5689 = vmand %vm5260, %vm5617
    %vm5690 = vmand %vm5260, %vm5618
    %vm5691 = vmand %vm5259, %vm5619
    %vm5692 = vmand %vm5259, %vm5620
    %vm5693 = vmand %vm5260, %vm5621
    %vm5694 = vmand %vm5260, %vm5622
    %vm5695 = vmand %vm5259, %vm5623
    %vm5696 = vmand %vm5259, %vm5624
    %vm5697 = vmand %vm5260, %vm5625
    %vm5698 = vmand %vm5260, %vm5626
    %vm5699 = vmand %vm5259, %vm5627
    %vm5700 = vmand %vm5259, %vm5628
    %vm5701 = vmand %vm5260, %vm5629
    %vm5702 = vmand %vm5260, %vm5630
    %vm5703 = vmand %vm5259, %vm5631
    %vm5704 = vmand %vm5259, %vm5632
    %vm5705 = vmand %vm5260, %vm5633
    %vm5706 = vmand %vm5260, %vm5634
    %vm5707 = vmand %vm5259, %vm5635
    %vm5708 = vmand %vm5259, %vm5636
    %vm5709 = vmand %vm5260, %vm5637
    %vm5710 = vmand %vm5260, %vm5638
    %vm5711 = vmand %vm5257, %vm5639
    %vm5712 = vmand %vm5257, %vm5640
    %vm5713 = vmand %vm5258, %vm5641
    %vm5714 = vmand %vm5258, %vm5642
    %vm5715 = vmand %vm5257, %vm5635
    %vm5716 = vmand %vm5257, %vm5636
    %vm5717 = vmand %vm5258, %vm5637
    %vm5718 = vmand %vm5258, %vm5638
    %vm5719 = vmand %vm5259, %vm5639
    %vm5720 = vmand %vm5259, %vm5640
    %vm5721 = vmand %vm5260, %vm5641
    %vm5722 = vmand %vm5260, %vm5642
    %vm5723 = vmand %vm5259, %vm5643
    %vm5724 = vmand %vm5259, %vm5644
    %vm5725 = vmand %vm5260, %vm5645
    %vm5726 = vmand %vm5260, %vm5646
    %vm5727 = vmand %vm5259, %vm5647
    %vm5728 = vmand %vm5259, %vm5648
    %vm5729 = vmand %vm5260, %vm5649
    %vm5730 = vmand %vm5260, %vm5650
    %vm5731 = vmand %vm5259, %vm5651
    %vm5732 = vmand %vm5259, %vm5652
    %vm5733 = vmand %vm5260, %vm5653
    %vm5734 = vmand %vm5260, %vm5654
    %vm5735 = vmand %vm5259, %vm5655
    %vm5736 = vmand %vm5259, %vm5656
    %vm5737 = vmand %vm5260, %vm5657
    %vm5738 = vmand %vm5260, %vm5658
    %vm5739 = vmand %vm5259, %vm5659
    %vm5740 = vmand %vm5259, %vm5660
    %vm5741 = vmand %vm5260, %vm5661
    %vm5742 = vmand %vm5260, %vm5662
    %vm5743 = vmand %vm5259, %vm5663
    %vm5744 = vmand %vm5259, %vm5664
    %vm5745 = vmand %vm5260, %vm5665
    %vm5746 = vmand %vm5260, %vm5666
    %vm5747 = vmand %vm5259, %vm5667
    %vm5748 = vmand %vm5259, %vm5668
    %vm5749 = vmand %vm5260, %vm5669
    %vm5750 = vmand %vm5260, %vm5670
    %vm5751 = vmand %vm5257, %vm5671
    %vm5752 = vmand %vm5257, %vm5672
    %vm5753 = vmand %vm5258, %vm5673
    %vm5754 = vmand %vm5258, %vm5674
    %v5755 = vsel %vm5675, 1.0, 0.0
    %v5756 = vsel %vm5676, 1.0, 0.0
    %v5757 = vsel %vm5677, 1.0, 0.0
    %v5758 = vsel %vm5678, 1.0, 0.0
    %v5759 = vsel %vm5679, 1.0, 0.0
    %v5760 = vsel %vm5680, 1.0, 0.0
    %v5761 = vsel %vm5681, 1.0, 0.0
    %v5762 = vsel %vm5682, 1.0, 0.0
    %v5763 = vsel %vm5683, 1.0, 0.0
    %v5764 = vsel %vm5684, 1.0, 0.0
    %v5765 = vsel %vm5685, 1.0, 0.0
    %v5766 = vsel %vm5686, 1.0, 0.0
    %v5767 = vsel %vm5687, 1.0, 0.0
    %v5768 = vsel %vm5688, 1.0, 0.0
    %v5769 = vsel %vm5689, 1.0, 0.0
    %v5770 = vsel %vm5690, 1.0, 0.0
    %v5771 = vsel %vm5691, 1.0, 0.0
    %v5772 = vsel %vm5692, 1.0, 0.0
    %v5773 = vsel %vm5693, 1.0, 0.0
    %v5774 = vsel %vm5694, 1.0, 0.0
    %v5775 = vsel %vm5695, 1.0, 0.0
    %v5776 = vsel %vm5696, 1.0, 0.0
    %v5777 = vsel %vm5697, 1.0, 0.0
    %v5778 = vsel %vm5698, 1.0, 0.0
    %v5779 = vsel %vm5699, 1.0, 0.0
    %v5780 = vsel %vm5700, 1.0, 0.0
    %v5781 = vsel %vm5701, 1.0, 0.0
    %v5782 = vsel %vm5702, 1.0, 0.0
    %v5783 = vsel %vm5703, 1.0, 0.0
    %v5784 = vsel %vm5704, 1.0, 0.0
    %v5785 = vsel %vm5705, 1.0, 0.0
    %v5786 = vsel %vm5706, 1.0, 0.0
    %v5787 = vsel %vm5707, 1.0, 0.0
    %v5788 = vsel %vm5708, 1.0, 0.0
    %v5789 = vsel %vm5709, 1.0, 0.0
    %v5790 = vsel %vm5710, 1.0, 0.0
    %v5791 = vsel %vm5711, 1.0, 0.0
    %v5792 = vsel %vm5712, 1.0, 0.0
    %v5793 = vsel %vm5713, 1.0, 0.0
    %v5794 = vsel %vm5714, 1.0, 0.0
    %v5795 = vsel %vm5715, 1.0, 0.0
    %v5796 = vsel %vm5716, 1.0, 0.0
    %v5797 = vsel %vm5717, 1.0, 0.0
    %v5798 = vsel %vm5718, 1.0, 0.0
    %v5799 = vsel %vm5719, 1.0, 0.0
    %v5800 = vsel %vm5720, 1.0, 0.0
    %v5801 = vsel %vm5721, 1.0, 0.0
    %v5802 = vsel %vm5722, 1.0, 0.0
    %v5803 = vsel %vm5723, 1.0, 0.0
    %v5804 = vsel %vm5724, 1.0, 0.0
    %v5805 = vsel %vm5725, 1.0, 0.0
    %v5806 = vsel %vm5726, 1.0, 0.0
    %v5807 = vsel %vm5727, 1.0, 0.0
    %v5808 = vsel %vm5728, 1.0, 0.0
    %v5809 = vsel %vm5729, 1.0, 0.0
    %v5810 = vsel %vm5730, 1.0, 0.0
    %v5811 = vsel %vm5731, 1.0, 0.0
    %v5812 = vsel %vm5732, 1.0, 0.0
    %v5813 = vsel %vm5733, 1.0, 0.0
    %v5814 = vsel %vm5734, 1.0, 0.0
    %v5815 = vsel %vm5735, 1.0, 0.0
    %v5816 = vsel %vm5736, 1.0, 0.0
    %v5817 = vsel %vm5737, 1.0, 0.0
    %v5818 = vsel %vm5738, 1.0, 0.0
    %v5819 = vsel %vm5739, 1.0, 0.0
    %v5820 = vsel %vm5740, 1.0, 0.0
    %v5821 = vsel %vm5741, 1.0, 0.0
    %v5822 = vsel %vm5742, 1.0, 0.0
    %v5823 = vsel %vm5743, 1.0, 0.0
    %v5824 = vsel %vm5744, 1.0, 0.0
    %v5825 = vsel %vm5745, 1.0, 0.0
    %v5826 = vsel %vm5746, 1.0, 0.0
    %v5827 = vsel %vm5747, 1.0, 0.0
    %v5828 = vsel %vm5748, 1.0, 0.0
    %v5829 = vsel %vm5749, 1.0, 0.0
    %v5830 = vsel %vm5750, 1.0, 0.0
    %v5831 = vsel %vm5751, 1.0, 0.0
    %v5832 = vsel %vm5752, 1.0, 0.0
    %v5833 = vsel %vm5753, 1.0, 0.0
    %v5834 = vsel %vm5754, 1.0, 0.0
    %5835 = vmatprep.subr.mxu0 0.0
    %5836 = vmatpush1.msra.mxu0 %v5226
    %5837 = vmatprep.subr.mxu0 0.0
    %5838 = vmatpush1.msra.mxu0 %v5225
    %5839 = vmatprep.subr.mxu0 0.0
    %5840 = vmatpush1.msra.mxu0 %v5224
    %5841 = vmatprep.subr.mxu0 0.0
    %5842 = vmatpush1.msra.mxu0 %v5223
    %5843 = vmatprep.subr.mxu0 0.0
    %5844 = vmatpush1.msra.mxu0 %v5222
    %5845 = vmatprep.subr.mxu0 0.0
    %5846 = vmatpush1.msra.mxu0 %v5221
    %5847 = vmatprep.subr.mxu0 0.0
    %5848 = vmatpush1.msra.mxu0 %v5220
    %5849 = vmatprep.subr.mxu0 0.0
    %5850 = vmatpush1.msra.mxu0 %v5219
    %5851 = vmatprep.subr.mxu0 0.0
    %5852 = vmatpush1.msra.mxu0 %v5218
    %5853 = vmatprep.subr.mxu0 0.0
    %5854 = vmatpush1.msra.mxu0 %v5217
    %5855 = vmatprep.subr.mxu0 0.0
    %5856 = vmatpush1.msra.mxu0 %v5216
    %5857 = vmatprep.subr.mxu0 0.0
    %5858 = vmatpush1.msra.mxu0 %v5215
    %5859 = vmatprep.subr.mxu0 0.0
    %5860 = vmatpush1.msra.mxu0 %v5214
    %5861 = vmatprep.subr.mxu0 0.0
    %5862 = vmatpush1.msra.mxu0 %v5213
    %5863 = vmatprep.subr.mxu0 0.0
    %5864 = vmatpush1.msra.mxu0 %v5212
    %5865 = vmatprep.subr.mxu0 0.0
    %5866 = vmatpush1.msra.mxu0 %v5211
    %5867 = vmatprep.subr.mxu0 0.0
    %5868 = vmatpush2.msra.mxu0 %v5242
    %5869 = vmatprep.subr.mxu0 0.0
    %5870 = vmatpush2.msra.mxu0 %v5241
    %5871 = vmatprep.subr.mxu0 0.0
    %5872 = vmatpush2.msra.mxu0 %v5240
    %5873 = vmatprep.subr.mxu0 0.0
    %5874 = vmatpush2.msra.mxu0 %v5239
    %5875 = vmatprep.subr.mxu0 0.0
    %5876 = vmatpush2.msra.mxu0 %v5238
    %5877 = vmatprep.subr.mxu0 0.0
    %5878 = vmatpush2.msra.mxu0 %v5237
    %5879 = vmatprep.subr.mxu0 0.0
    %5880 = vmatpush2.msra.mxu0 %v5236
    %5881 = vmatprep.subr.mxu0 0.0
    %5882 = vmatpush2.msra.mxu0 %v5235
    %5883 = vmatprep.subr.mxu0 0.0
    %5884 = vmatpush2.msra.mxu0 %v5234
    %5885 = vmatprep.subr.mxu0 0.0
    %5886 = vmatpush2.msra.mxu0 %v5233
    %5887 = vmatprep.subr.mxu0 0.0
    %5888 = vmatpush2.msra.mxu0 %v5232
    %5889 = vmatprep.subr.mxu0 0.0
    %5890 = vmatpush2.msra.mxu0 %v5231
    %5891 = vmatprep.subr.mxu0 0.0
    %5892 = vmatpush2.msra.mxu0 %v5230
    %5893 = vmatprep.subr.mxu0 0.0
    %5894 = vmatpush2.msra.mxu0 %v5229
    %5895 = vmatprep.subr.mxu0 0.0
    %5896 = vmatpush2.msra.mxu0 %v5228
    %5897 = vmatprep.subr.mxu0 0.0
    %5898 = vmatpush2.msra.mxu0 %v5227
    %5899 = vmatprep.mubr.f32.mxu0 %v5524
    %5900 = vmatmul.mubr.f32.gmra.mxu0 %v5523
    %v5901 = vpop.f32.mrf.mxu0
    %v5902 = vadd.f32 0.0, %v5901
    %v5903 = vpop.f32.mrf.mxu0
    %5904 = vmatprep.mubr.f32.mxu0 %v5526
    %5905 = vmatmul.mubr.f32.gmra.mxu0 %v5525
    %v5906 = vpop.f32.mrf.mxu0
    %v5907 = vadd.f32 0.0, %v5906
    %v5908 = vpop.f32.mrf.mxu0
    %5909 = vmatprep.mubr.f32.mxu0 %v5528
    %5910 = vmatmul.mubr.f32.gmra.mxu0 %v5527
    %v5911 = vpop.f32.mrf.mxu0
    %v5912 = vadd.f32 0.0, %v5911
    %v5913 = vpop.f32.mrf.mxu0
    %5914 = vmatprep.mubr.f32.mxu0 %v5530
    %5915 = vmatmul.mubr.f32.gmra.mxu0 %v5529
    %v5916 = vpop.f32.mrf.mxu0
    %v5917 = vadd.f32 0.0, %v5916
    %v5918 = vpop.f32.mrf.mxu0
    %5919 = vmatprep.mubr.f32.mxu0 %v5532
    %5920 = vmatmul.mubr.f32.gmra.mxu0 %v5531
    %v5921 = vpop.f32.mrf.mxu0
    %v5922 = vadd.f32 0.0, %v5921
    %v5923 = vpop.f32.mrf.mxu0
    %5924 = vmatprep.mubr.f32.mxu0 %v5534
    %5925 = vmatmul.mubr.f32.gmra.mxu0 %v5533
    %v5926 = vpop.f32.mrf.mxu0
    %v5927 = vadd.f32 0.0, %v5926
    %v5928 = vpop.f32.mrf.mxu0
    %5929 = vmatprep.mubr.f32.mxu0 %v5536
    %5930 = vmatmul.mubr.f32.gmra.mxu0 %v5535
    %v5931 = vpop.f32.mrf.mxu0
    %v5932 = vadd.f32 0.0, %v5931
    %v5933 = vpop.f32.mrf.mxu0
    %5934 = vmatprep.mubr.f32.mxu0 %v5538
    %5935 = vmatmul.mubr.f32.gmra.mxu0 %v5537
    %v5936 = vpop.f32.mrf.mxu0
    %v5937 = vadd.f32 0.0, %v5936
    %v5938 = vpop.f32.mrf.mxu0
    %5939 = vmatprep.mubr.f32.mxu0 %v5540
    %5940 = vmatmul.mubr.f32.gmra.mxu0 %v5539
    %v5941 = vpop.f32.mrf.mxu0
    %v5942 = vadd.f32 0.0, %v5941
    %v5943 = vpop.f32.mrf.mxu0
    %5944 = vmatprep.mubr.f32.mxu0 %v5542
    %5945 = vmatmul.mubr.f32.gmra.mxu0 %v5541
    %v5946 = vpop.f32.mrf.mxu0
    %v5947 = vadd.f32 0.0, %v5946
    %v5948 = vpop.f32.mrf.mxu0
    %5949 = vmatprep.mubr.f32.mxu0 %v5544
    %5950 = vmatmul.mubr.f32.gmra.mxu0 %v5543
    %v5951 = vpop.f32.mrf.mxu0
    %v5952 = vadd.f32 0.0, %v5951
    %v5953 = vpop.f32.mrf.mxu0
    %5954 = vmatprep.mubr.f32.mxu0 %v5546
    %5955 = vmatmul.mubr.f32.gmra.mxu0 %v5545
    %v5956 = vpop.f32.mrf.mxu0
    %v5957 = vadd.f32 0.0, %v5956
    %v5958 = vpop.f32.mrf.mxu0
    %5959 = vmatprep.mubr.f32.mxu0 %v5548
    %5960 = vmatmul.mubr.f32.gmra.mxu0 %v5547
    %v5961 = vpop.f32.mrf.mxu0
    %v5962 = vadd.f32 0.0, %v5961
    %v5963 = vpop.f32.mrf.mxu0
    %5964 = vmatprep.mubr.f32.mxu0 %v5550
    %5965 = vmatmul.mubr.f32.gmra.mxu0 %v5549
    %v5966 = vpop.f32.mrf.mxu0
    %v5967 = vadd.f32 0.0, %v5966
    %v5968 = vpop.f32.mrf.mxu0
    %5969 = vmatprep.mubr.f32.mxu0 %v5552
    %5970 = vmatmul.mubr.f32.gmra.mxu0 %v5551
    %v5971 = vpop.f32.mrf.mxu0
    %v5972 = vadd.f32 0.0, %v5971
    %v5973 = vpop.f32.mrf.mxu0
    %5974 = vmatprep.mubr.f32.mxu0 %v5554
    %5975 = vmatmul.mubr.f32.gmra.mxu0 %v5553
    %v5976 = vpop.f32.mrf.mxu0
    %v5977 = vadd.f32 0.0, %v5976
    %v5978 = vpop.f32.mrf.mxu0
    %5979 = vmatprep.mubr.f32.mxu0 %v5556
    %5980 = vmatmul.mubr.f32.gmra.mxu0 %v5555
    %v5981 = vpop.f32.mrf.mxu0
    %v5982 = vadd.f32 0.0, %v5981
    %v5983 = vpop.f32.mrf.mxu0
    %5984 = vmatprep.mubr.f32.mxu0 %v5558
    %5985 = vmatmul.mubr.f32.gmra.mxu0 %v5557
    %v5986 = vpop.f32.mrf.mxu0
    %v5987 = vadd.f32 0.0, %v5986
    %v5988 = vpop.f32.mrf.mxu0
    %5989 = vmatprep.mubr.f32.mxu0 %v5560
    %5990 = vmatmul.mubr.f32.gmra.mxu0 %v5559
    %v5991 = vpop.f32.mrf.mxu0
    %v5992 = vadd.f32 0.0, %v5991
    %v5993 = vpop.f32.mrf.mxu0
    %5994 = vmatprep.mubr.f32.mxu0 %v5562
    %5995 = vmatmul.mubr.f32.gmra.mxu0 %v5561
    %v5996 = vpop.f32.mrf.mxu0
    %v5997 = vadd.f32 0.0, %v5996
    %v5998 = vpop.f32.mrf.mxu0
    %5999 = vmatprep.mubr.f32.mxu0 %v5564
    %6000 = vmatmul.mubr.f32.gmra.mxu0 %v5563
    %v6001 = vpop.f32.mrf.mxu0
    %v6002 = vadd.f32 0.0, %v6001
    %v6003 = vpop.f32.mrf.mxu0
    %6004 = vmatprep.mubr.f32.mxu0 %v5566
    %6005 = vmatmul.mubr.f32.gmra.mxu0 %v5565
    %v6006 = vpop.f32.mrf.mxu0
    %v6007 = vadd.f32 0.0, %v6006
    %v6008 = vpop.f32.mrf.mxu0
    %6009 = vmatprep.mubr.f32.mxu0 %v5568
    %6010 = vmatmul.mubr.f32.gmra.mxu0 %v5567
    %v6011 = vpop.f32.mrf.mxu0
    %v6012 = vadd.f32 0.0, %v6011
    %v6013 = vpop.f32.mrf.mxu0
    %6014 = vmatprep.mubr.f32.mxu0 %v5570
    %6015 = vmatmul.mubr.f32.gmra.mxu0 %v5569
    %v6016 = vpop.f32.mrf.mxu0
    %v6017 = vadd.f32 0.0, %v6016
    %v6018 = vpop.f32.mrf.mxu0
    %6019 = vmatprep.mubr.f32.mxu0 %v5572
    %6020 = vmatmul.mubr.f32.gmra.mxu0 %v5571
    %v6021 = vpop.f32.mrf.mxu0
    %v6022 = vadd.f32 0.0, %v6021
    %v6023 = vpop.f32.mrf.mxu0
    %6024 = vmatprep.mubr.f32.mxu0 %v5574
    %6025 = vmatmul.mubr.f32.gmra.mxu0 %v5573
    %v6026 = vpop.f32.mrf.mxu0
    %v6027 = vadd.f32 0.0, %v6026
    %v6028 = vpop.f32.mrf.mxu0
    %6029 = vmatprep.mubr.f32.mxu0 %v5576
    %6030 = vmatmul.mubr.f32.gmra.mxu0 %v5575
    %v6031 = vpop.f32.mrf.mxu0
    %v6032 = vadd.f32 0.0, %v6031
    %v6033 = vpop.f32.mrf.mxu0
    %6034 = vmatprep.mubr.f32.mxu0 %v5578
    %6035 = vmatmul.mubr.f32.gmra.mxu0 %v5577
    %v6036 = vpop.f32.mrf.mxu0
    %v6037 = vadd.f32 0.0, %v6036
    %v6038 = vpop.f32.mrf.mxu0
    %6039 = vmatprep.mubr.f32.mxu0 %v5580
    %6040 = vmatmul.mubr.f32.gmra.mxu0 %v5579
    %v6041 = vpop.f32.mrf.mxu0
    %v6042 = vadd.f32 0.0, %v6041
    %v6043 = vpop.f32.mrf.mxu0
    %6044 = vmatprep.mubr.f32.mxu0 %v5582
    %6045 = vmatmul.mubr.f32.gmra.mxu0 %v5581
    %v6046 = vpop.f32.mrf.mxu0
    %v6047 = vadd.f32 0.0, %v6046
    %v6048 = vpop.f32.mrf.mxu0
    %6049 = vmatprep.mubr.f32.mxu0 %v5584
    %6050 = vmatmul.mubr.f32.gmra.mxu0 %v5583
    %v6051 = vpop.f32.mrf.mxu0
    %v6052 = vadd.f32 0.0, %v6051
    %v6053 = vpop.f32.mrf.mxu0
    %6054 = vmatprep.mubr.f32.mxu0 %v5586
    %6055 = vmatmul.mubr.f32.gmra.mxu0 %v5585
    %v6056 = vpop.f32.mrf.mxu0
    %v6057 = vadd.f32 0.0, %v6056
    %v6058 = vpop.f32.mrf.mxu0
    %6059 = vmatprep.mubr.f32.mxu0 %v5588
    %6060 = vmatmul.mubr.f32.gmra.mxu0 %v5587
    %v6061 = vpop.f32.mrf.mxu0
    %v6062 = vadd.f32 0.0, %v6061
    %v6063 = vpop.f32.mrf.mxu0
    %6064 = vmatprep.mubr.f32.mxu0 %v5590
    %6065 = vmatmul.mubr.f32.gmra.mxu0 %v5589
    %v6066 = vpop.f32.mrf.mxu0
    %v6067 = vadd.f32 0.0, %v6066
    %v6068 = vpop.f32.mrf.mxu0
    %6069 = vmatprep.mubr.f32.mxu0 %v5592
    %6070 = vmatmul.mubr.f32.gmra.mxu0 %v5591
    %v6071 = vpop.f32.mrf.mxu0
    %v6072 = vadd.f32 0.0, %v6071
    %v6073 = vpop.f32.mrf.mxu0
    %6074 = vmatprep.mubr.f32.mxu0 %v5594
    %6075 = vmatmul.mubr.f32.gmra.mxu0 %v5593
    %v6076 = vpop.f32.mrf.mxu0
    %v6077 = vadd.f32 0.0, %v6076
    %v6078 = vpop.f32.mrf.mxu0
    %6079 = vmatprep.mubr.f32.mxu0 %v5596
    %6080 = vmatmul.mubr.f32.gmra.mxu0 %v5595
    %v6081 = vpop.f32.mrf.mxu0
    %v6082 = vadd.f32 0.0, %v6081
    %v6083 = vpop.f32.mrf.mxu0
    %6084 = vmatprep.mubr.f32.mxu0 %v5598
    %6085 = vmatmul.mubr.f32.gmra.mxu0 %v5597
    %v6086 = vpop.f32.mrf.mxu0
    %v6087 = vadd.f32 0.0, %v6086
    %v6088 = vpop.f32.mrf.mxu0
    %6089 = vmatprep.mubr.f32.mxu0 %v5600
    %6090 = vmatmul.mubr.f32.gmra.mxu0 %v5599
    %v6091 = vpop.f32.mrf.mxu0
    %v6092 = vadd.f32 0.0, %v6091
    %v6093 = vpop.f32.mrf.mxu0
    %6094 = vmatprep.mubr.f32.mxu0 %v5602
    %6095 = vmatmul.mubr.f32.gmra.mxu0 %v5601
    %v6096 = vpop.f32.mrf.mxu0
    %v6097 = vadd.f32 0.0, %v6096
    %v6098 = vpop.f32.mrf.mxu0
    %6099 = vdwg.mxu0
    %6100 = vmatprep.subr.mxu0 0.0
    %6101 = vmatpush1.msra.mxu0 %v5226
    %6102 = vmatprep.subr.mxu0 0.0
    %6103 = vmatpush1.msra.mxu0 %v5225
    %6104 = vmatprep.subr.mxu0 0.0
    %6105 = vmatpush1.msra.mxu0 %v5224
    %6106 = vmatprep.subr.mxu0 0.0
    %6107 = vmatpush1.msra.mxu0 %v5223
    %6108 = vmatprep.subr.mxu0 0.0
    %6109 = vmatpush1.msra.mxu0 %v5222
    %6110 = vmatprep.subr.mxu0 0.0
    %6111 = vmatpush1.msra.mxu0 %v5221
    %6112 = vmatprep.subr.mxu0 0.0
    %6113 = vmatpush1.msra.mxu0 %v5220
    %6114 = vmatprep.subr.mxu0 0.0
    %6115 = vmatpush1.msra.mxu0 %v5219
    %6116 = vmatprep.subr.mxu0 0.0
    %6117 = vmatpush1.msra.mxu0 %v5218
    %6118 = vmatprep.subr.mxu0 0.0
    %6119 = vmatpush1.msra.mxu0 %v5217
    %6120 = vmatprep.subr.mxu0 0.0
    %6121 = vmatpush1.msra.mxu0 %v5216
    %6122 = vmatprep.subr.mxu0 0.0
    %6123 = vmatpush1.msra.mxu0 %v5215
    %6124 = vmatprep.subr.mxu0 0.0
    %6125 = vmatpush1.msra.mxu0 %v5214
    %6126 = vmatprep.subr.mxu0 0.0
    %6127 = vmatpush1.msra.mxu0 %v5213
    %6128 = vmatprep.subr.mxu0 0.0
    %6129 = vmatpush1.msra.mxu0 %v5212
    %6130 = vmatprep.subr.mxu0 0.0
    %6131 = vmatpush1.msra.mxu0 %v5211
    %6132 = vmatprep.subr.mxu0 0.0
    %6133 = vmatpush2.msra.mxu0 %v5242
    %6134 = vmatprep.subr.mxu0 0.0
    %6135 = vmatpush2.msra.mxu0 %v5241
    %6136 = vmatprep.subr.mxu0 0.0
    %6137 = vmatpush2.msra.mxu0 %v5240
    %6138 = vmatprep.subr.mxu0 0.0
    %6139 = vmatpush2.msra.mxu0 %v5239
    %6140 = vmatprep.subr.mxu0 0.0
    %6141 = vmatpush2.msra.mxu0 %v5238
    %6142 = vmatprep.subr.mxu0 0.0
    %6143 = vmatpush2.msra.mxu0 %v5237
    %6144 = vmatprep.subr.mxu0 0.0
    %6145 = vmatpush2.msra.mxu0 %v5236
    %6146 = vmatprep.subr.mxu0 0.0
    %6147 = vmatpush2.msra.mxu0 %v5235
    %6148 = vmatprep.subr.mxu0 0.0
    %6149 = vmatpush2.msra.mxu0 %v5234
    %6150 = vmatprep.subr.mxu0 0.0
    %6151 = vmatpush2.msra.mxu0 %v5233
    %6152 = vmatprep.subr.mxu0 0.0
    %6153 = vmatpush2.msra.mxu0 %v5232
    %6154 = vmatprep.subr.mxu0 0.0
    %6155 = vmatpush2.msra.mxu0 %v5231
    %6156 = vmatprep.subr.mxu0 0.0
    %6157 = vmatpush2.msra.mxu0 %v5230
    %6158 = vmatprep.subr.mxu0 0.0
    %6159 = vmatpush2.msra.mxu0 %v5229
    %6160 = vmatprep.subr.mxu0 0.0
    %6161 = vmatpush2.msra.mxu0 %v5228
    %6162 = vmatprep.subr.mxu0 0.0
    %6163 = vmatpush2.msra.mxu0 %v5227
    %6164 = vmatprep.mubr.f32.mxu0 %v5756
    %6165 = vmatmul.mubr.f32.gmra.mxu0 %v5755
    %v6166 = vpop.f32.mrf.mxu0
    %v6167 = vadd.f32 0.0, %v6166
    %v6168 = vpop.f32.mrf.mxu0
    %6169 = vmatprep.mubr.f32.mxu0 %v5758
    %6170 = vmatmul.mubr.f32.gmra.mxu0 %v5757
    %v6171 = vpop.f32.mrf.mxu0
    %v6172 = vadd.f32 0.0, %v6171
    %v6173 = vpop.f32.mrf.mxu0
    %6174 = vmatprep.mubr.f32.mxu0 %v5760
    %6175 = vmatmul.mubr.f32.gmra.mxu0 %v5759
    %v6176 = vpop.f32.mrf.mxu0
    %v6177 = vadd.f32 0.0, %v6176
    %v6178 = vpop.f32.mrf.mxu0
    %6179 = vmatprep.mubr.f32.mxu0 %v5762
    %6180 = vmatmul.mubr.f32.gmra.mxu0 %v5761
    %v6181 = vpop.f32.mrf.mxu0
    %v6182 = vadd.f32 0.0, %v6181
    %v6183 = vpop.f32.mrf.mxu0
    %6184 = vmatprep.mubr.f32.mxu0 %v5764
    %6185 = vmatmul.mubr.f32.gmra.mxu0 %v5763
    %v6186 = vpop.f32.mrf.mxu0
    %v6187 = vadd.f32 0.0, %v6186
    %v6188 = vpop.f32.mrf.mxu0
    %6189 = vmatprep.mubr.f32.mxu0 %v5766
    %6190 = vmatmul.mubr.f32.gmra.mxu0 %v5765
    %v6191 = vpop.f32.mrf.mxu0
    %v6192 = vadd.f32 0.0, %v6191
    %v6193 = vpop.f32.mrf.mxu0
    %6194 = vmatprep.mubr.f32.mxu0 %v5768
    %6195 = vmatmul.mubr.f32.gmra.mxu0 %v5767
    %v6196 = vpop.f32.mrf.mxu0
    %v6197 = vadd.f32 0.0, %v6196
    %v6198 = vpop.f32.mrf.mxu0
    %6199 = vmatprep.mubr.f32.mxu0 %v5770
    %6200 = vmatmul.mubr.f32.gmra.mxu0 %v5769
    %v6201 = vpop.f32.mrf.mxu0
    %v6202 = vadd.f32 0.0, %v6201
    %v6203 = vpop.f32.mrf.mxu0
    %6204 = vmatprep.mubr.f32.mxu0 %v5772
    %6205 = vmatmul.mubr.f32.gmra.mxu0 %v5771
    %v6206 = vpop.f32.mrf.mxu0
    %v6207 = vadd.f32 0.0, %v6206
    %v6208 = vpop.f32.mrf.mxu0
    %6209 = vmatprep.mubr.f32.mxu0 %v5774
    %6210 = vmatmul.mubr.f32.gmra.mxu0 %v5773
    %v6211 = vpop.f32.mrf.mxu0
    %v6212 = vadd.f32 0.0, %v6211
    %v6213 = vpop.f32.mrf.mxu0
    %6214 = vmatprep.mubr.f32.mxu0 %v5776
    %6215 = vmatmul.mubr.f32.gmra.mxu0 %v5775
    %v6216 = vpop.f32.mrf.mxu0
    %v6217 = vadd.f32 0.0, %v6216
    %v6218 = vpop.f32.mrf.mxu0
    %6219 = vmatprep.mubr.f32.mxu0 %v5778
    %6220 = vmatmul.mubr.f32.gmra.mxu0 %v5777
    %v6221 = vpop.f32.mrf.mxu0
    %v6222 = vadd.f32 0.0, %v6221
    %v6223 = vpop.f32.mrf.mxu0
    %6224 = vmatprep.mubr.f32.mxu0 %v5780
    %6225 = vmatmul.mubr.f32.gmra.mxu0 %v5779
    %v6226 = vpop.f32.mrf.mxu0
    %v6227 = vadd.f32 0.0, %v6226
    %v6228 = vpop.f32.mrf.mxu0
    %6229 = vmatprep.mubr.f32.mxu0 %v5782
    %6230 = vmatmul.mubr.f32.gmra.mxu0 %v5781
    %v6231 = vpop.f32.mrf.mxu0
    %v6232 = vadd.f32 0.0, %v6231
    %v6233 = vpop.f32.mrf.mxu0
    %6234 = vmatprep.mubr.f32.mxu0 %v5784
    %6235 = vmatmul.mubr.f32.gmra.mxu0 %v5783
    %v6236 = vpop.f32.mrf.mxu0
    %v6237 = vadd.f32 0.0, %v6236
    %v6238 = vpop.f32.mrf.mxu0
    %6239 = vmatprep.mubr.f32.mxu0 %v5786
    %6240 = vmatmul.mubr.f32.gmra.mxu0 %v5785
    %v6241 = vpop.f32.mrf.mxu0
    %v6242 = vadd.f32 0.0, %v6241
    %v6243 = vpop.f32.mrf.mxu0
    %6244 = vmatprep.mubr.f32.mxu0 %v5788
    %6245 = vmatmul.mubr.f32.gmra.mxu0 %v5787
    %v6246 = vpop.f32.mrf.mxu0
    %v6247 = vadd.f32 0.0, %v6246
    %v6248 = vpop.f32.mrf.mxu0
    %6249 = vmatprep.mubr.f32.mxu0 %v5790
    %6250 = vmatmul.mubr.f32.gmra.mxu0 %v5789
    %v6251 = vpop.f32.mrf.mxu0
    %v6252 = vadd.f32 0.0, %v6251
    %v6253 = vpop.f32.mrf.mxu0
    %6254 = vmatprep.mubr.f32.mxu0 %v5792
    %6255 = vmatmul.mubr.f32.gmra.mxu0 %v5791
    %v6256 = vpop.f32.mrf.mxu0
    %v6257 = vadd.f32 0.0, %v6256
    %v6258 = vpop.f32.mrf.mxu0
    %6259 = vmatprep.mubr.f32.mxu0 %v5794
    %6260 = vmatmul.mubr.f32.gmra.mxu0 %v5793
    %v6261 = vpop.f32.mrf.mxu0
    %v6262 = vadd.f32 0.0, %v6261
    %v6263 = vpop.f32.mrf.mxu0
    %6264 = vmatprep.mubr.f32.mxu0 %v5796
    %6265 = vmatmul.mubr.f32.gmra.mxu0 %v5795
    %v6266 = vpop.f32.mrf.mxu0
    %v6267 = vadd.f32 0.0, %v6266
    %v6268 = vpop.f32.mrf.mxu0
    %6269 = vmatprep.mubr.f32.mxu0 %v5798
    %6270 = vmatmul.mubr.f32.gmra.mxu0 %v5797
    %v6271 = vpop.f32.mrf.mxu0
    %v6272 = vadd.f32 0.0, %v6271
    %v6273 = vpop.f32.mrf.mxu0
    %6274 = vmatprep.mubr.f32.mxu0 %v5800
    %6275 = vmatmul.mubr.f32.gmra.mxu0 %v5799
    %v6276 = vpop.f32.mrf.mxu0
    %v6277 = vadd.f32 0.0, %v6276
    %v6278 = vpop.f32.mrf.mxu0
    %6279 = vmatprep.mubr.f32.mxu0 %v5802
    %6280 = vmatmul.mubr.f32.gmra.mxu0 %v5801
    %v6281 = vpop.f32.mrf.mxu0
    %v6282 = vadd.f32 0.0, %v6281
    %v6283 = vpop.f32.mrf.mxu0
    %6284 = vmatprep.mubr.f32.mxu0 %v5804
    %6285 = vmatmul.mubr.f32.gmra.mxu0 %v5803
    %v6286 = vpop.f32.mrf.mxu0
    %v6287 = vadd.f32 0.0, %v6286
    %v6288 = vpop.f32.mrf.mxu0
    %6289 = vmatprep.mubr.f32.mxu0 %v5806
    %6290 = vmatmul.mubr.f32.gmra.mxu0 %v5805
    %v6291 = vpop.f32.mrf.mxu0
    %v6292 = vadd.f32 0.0, %v6291
    %v6293 = vpop.f32.mrf.mxu0
    %6294 = vmatprep.mubr.f32.mxu0 %v5808
    %6295 = vmatmul.mubr.f32.gmra.mxu0 %v5807
    %v6296 = vpop.f32.mrf.mxu0
    %v6297 = vadd.f32 0.0, %v6296
    %v6298 = vpop.f32.mrf.mxu0
    %6299 = vmatprep.mubr.f32.mxu0 %v5810
    %6300 = vmatmul.mubr.f32.gmra.mxu0 %v5809
    %v6301 = vpop.f32.mrf.mxu0
    %v6302 = vadd.f32 0.0, %v6301
    %v6303 = vpop.f32.mrf.mxu0
    %6304 = vmatprep.mubr.f32.mxu0 %v5812
    %6305 = vmatmul.mubr.f32.gmra.mxu0 %v5811
    %v6306 = vpop.f32.mrf.mxu0
    %v6307 = vadd.f32 0.0, %v6306
    %v6308 = vpop.f32.mrf.mxu0
    %6309 = vmatprep.mubr.f32.mxu0 %v5814
    %6310 = vmatmul.mubr.f32.gmra.mxu0 %v5813
    %v6311 = vpop.f32.mrf.mxu0
    %v6312 = vadd.f32 0.0, %v6311
    %v6313 = vpop.f32.mrf.mxu0
    %6314 = vmatprep.mubr.f32.mxu0 %v5816
    %6315 = vmatmul.mubr.f32.gmra.mxu0 %v5815
    %v6316 = vpop.f32.mrf.mxu0
    %v6317 = vadd.f32 0.0, %v6316
    %v6318 = vpop.f32.mrf.mxu0
    %6319 = vmatprep.mubr.f32.mxu0 %v5818
    %6320 = vmatmul.mubr.f32.gmra.mxu0 %v5817
    %v6321 = vpop.f32.mrf.mxu0
    %v6322 = vadd.f32 0.0, %v6321
    %v6323 = vpop.f32.mrf.mxu0
    %6324 = vmatprep.mubr.f32.mxu0 %v5820
    %6325 = vmatmul.mubr.f32.gmra.mxu0 %v5819
    %v6326 = vpop.f32.mrf.mxu0
    %v6327 = vadd.f32 0.0, %v6326
    %v6328 = vpop.f32.mrf.mxu0
    %6329 = vmatprep.mubr.f32.mxu0 %v5822
    %6330 = vmatmul.mubr.f32.gmra.mxu0 %v5821
    %v6331 = vpop.f32.mrf.mxu0
    %v6332 = vadd.f32 0.0, %v6331
    %v6333 = vpop.f32.mrf.mxu0
    %6334 = vmatprep.mubr.f32.mxu0 %v5824
    %6335 = vmatmul.mubr.f32.gmra.mxu0 %v5823
    %v6336 = vpop.f32.mrf.mxu0
    %v6337 = vadd.f32 0.0, %v6336
    %v6338 = vpop.f32.mrf.mxu0
    %6339 = vmatprep.mubr.f32.mxu0 %v5826
    %6340 = vmatmul.mubr.f32.gmra.mxu0 %v5825
    %v6341 = vpop.f32.mrf.mxu0
    %v6342 = vadd.f32 0.0, %v6341
    %v6343 = vpop.f32.mrf.mxu0
    %6344 = vmatprep.mubr.f32.mxu0 %v5828
    %6345 = vmatmul.mubr.f32.gmra.mxu0 %v5827
    %v6346 = vpop.f32.mrf.mxu0
    %v6347 = vadd.f32 0.0, %v6346
    %v6348 = vpop.f32.mrf.mxu0
    %6349 = vmatprep.mubr.f32.mxu0 %v5830
    %6350 = vmatmul.mubr.f32.gmra.mxu0 %v5829
    %v6351 = vpop.f32.mrf.mxu0
    %v6352 = vadd.f32 0.0, %v6351
    %v6353 = vpop.f32.mrf.mxu0
    %6354 = vmatprep.mubr.f32.mxu0 %v5832
    %6355 = vmatmul.mubr.f32.gmra.mxu0 %v5831
    %v6356 = vpop.f32.mrf.mxu0
    %v6357 = vadd.f32 0.0, %v6356
    %v6358 = vpop.f32.mrf.mxu0
    %6359 = vmatprep.mubr.f32.mxu0 %v5834
    %6360 = vmatmul.mubr.f32.gmra.mxu0 %v5833
    %v6361 = vpop.f32.mrf.mxu0
    %v6362 = vadd.f32 0.0, %v6361
    %v6363 = vpop.f32.mrf.mxu0
    %6364 = vdwg.mxu0
    %v6365 = vmax.f32 %v5902, %v6167
    %v6366 = vmax.f32 %v5907, %v6172
    %v6367 = vmax.f32 %v5912, %v6177
    %v6368 = vmax.f32 %v5917, %v6182
    %v6369 = vmax.f32 %v5922, %v6187
    %v6370 = vmax.f32 %v5927, %v6192
    %v6371 = vmax.f32 %v5932, %v6197
    %v6372 = vmax.f32 %v5937, %v6202
    %v6373 = vmax.f32 %v5942, %v6207
    %v6374 = vmax.f32 %v5947, %v6212
    %v6375 = vmax.f32 %v5952, %v6217
    %v6376 = vmax.f32 %v5957, %v6222
    %v6377 = vmax.f32 %v5962, %v6227
    %v6378 = vmax.f32 %v5967, %v6232
    %v6379 = vmax.f32 %v5972, %v6237
    %v6380 = vmax.f32 %v5977, %v6242
    %v6381 = vmax.f32 %v5982, %v6247
    %v6382 = vmax.f32 %v5987, %v6252
    %v6383 = vmax.f32 %v5992, %v6257
    %v6384 = vmax.f32 %v5997, %v6262
    %v6385 = vmax.f32 %v6002, %v6267
    %v6386 = vmax.f32 %v6007, %v6272
    %v6387 = vmax.f32 %v6012, %v6277
    %v6388 = vmax.f32 %v6017, %v6282
    %v6389 = vmax.f32 %v6022, %v6287
    %v6390 = vmax.f32 %v6027, %v6292
    %v6391 = vmax.f32 %v6032, %v6297
    %v6392 = vmax.f32 %v6037, %v6302
    %v6393 = vmax.f32 %v6042, %v6307
    %v6394 = vmax.f32 %v6047, %v6312
    %v6395 = vmax.f32 %v6052, %v6317
    %v6396 = vmax.f32 %v6057, %v6322
    %v6397 = vmax.f32 %v6062, %v6327
    %v6398 = vmax.f32 %v6067, %v6332
    %v6399 = vmax.f32 %v6072, %v6337
    %v6400 = vmax.f32 %v6077, %v6342
    %v6401 = vmax.f32 %v6082, %v6347
    %v6402 = vmax.f32 %v6087, %v6352
    %v6403 = vmax.f32 %v6092, %v6357
    %v6404 = vmax.f32 %v6097, %v6362
    %v6405 = vld [vmem:[%s5] sm:$0x1]
    %v6407 = vlaneseq
    %v6408 = vshrl.u32 %v6407, 7
    %v6409 = vsub.s32 0, %v6408
    %v6410 = vrot.slane %v6405, %v6409
    %v6412 = vld [vmem:[%s4] sm:$0xff]
    %vm6413 = vcmask 64512
    %v6415 = vsel %vm6413, %v6365, 0
    %v6418 = vsel %vm6413, %v6367, 0
    %v6421 = vsel %vm6413, %v6369, 0
    %v6424 = vsel %vm6413, %v6371, 0
    %v6427 = vsel %vm6413, %v6373, 0
    %v6430 = vsel %vm6413, %v6375, 0
    %v6433 = vsel %vm6413, %v6377, 0
    %v6436 = vsel %vm6413, %v6379, 0
    %v6439 = vsel %vm6413, %v6385, 0
    %v6442 = vsel %vm6413, %v6387, 0
    %v6445 = vsel %vm6413, %v6389, 0
    %v6448 = vsel %vm6413, %v6391, 0
    %v6451 = vsel %vm6413, %v6393, 0
    %v6454 = vsel %vm6413, %v6395, 0
    %v6457 = vsel %vm6413, %v6397, 0
    %v6460 = vsel %vm6413, %v6399, 0
    %6462 = vmatprep.subr.mxu0 0.0
    %6463 = vmatpush1.msra.mxu0 0.0
    %6464 = vmatprep.subr.mxu0 0.0
    %6465 = vmatpush1.msra.mxu0 0.0
    %6466 = vmatprep.subr.mxu0 0.0
    %6467 = vmatpush1.msra.mxu0 0.0
    %6468 = vmatprep.subr.mxu0 0.0
    %6469 = vmatpush1.msra.mxu0 0.0
    %6470 = vmatprep.subr.mxu0 0.0
    %6471 = vmatpush1.msra.mxu0 0.0
    %6472 = vmatprep.subr.mxu0 0.0
    %6473 = vmatpush1.msra.mxu0 0.0
    %6474 = vmatprep.subr.mxu0 0.0
    %6475 = vmatpush1.msra.mxu0 0.0
    %6476 = vmatprep.subr.mxu0 0.0
    %6477 = vmatpush1.msra.mxu0 0.0
    %6478 = vmatprep.subr.mxu0 0.0
    %6479 = vmatpush1.msra.mxu0 0.0
    %6480 = vmatprep.subr.mxu0 0.0
    %6481 = vmatpush1.msra.mxu0 0.0
    %6482 = vmatprep.subr.mxu0 0.0
    %6483 = vmatpush1.msra.mxu0 0.0
    %6484 = vmatprep.subr.mxu0 0.0
    %6485 = vmatpush1.msra.mxu0 0.0
    %6486 = vmatprep.subr.mxu0 0.0
    %6487 = vmatpush1.msra.mxu0 0.0
    %6488 = vmatprep.subr.mxu0 0.0
    %6489 = vmatpush1.msra.mxu0 0.0
    %6490 = vmatprep.subr.mxu0 0.0
    %6491 = vmatpush1.msra.mxu0 0.0
    %6492 = vmatprep.subr.mxu0 0.0
    %6493 = vmatpush1.msra.mxu0 %v6412
    %6494 = vmatprep.subr.mxu0 0.0
    %6495 = vmatpush2.msra.mxu0 0.0
    %6496 = vmatprep.subr.mxu0 0.0
    %6497 = vmatpush2.msra.mxu0 0.0
    %6498 = vmatprep.subr.mxu0 0.0
    %6499 = vmatpush2.msra.mxu0 0.0
    %6500 = vmatprep.subr.mxu0 0.0
    %6501 = vmatpush2.msra.mxu0 0.0
    %6502 = vmatprep.subr.mxu0 0.0
    %6503 = vmatpush2.msra.mxu0 0.0
    %6504 = vmatprep.subr.mxu0 0.0
    %6505 = vmatpush2.msra.mxu0 0.0
    %6506 = vmatprep.subr.mxu0 0.0
    %6507 = vmatpush2.msra.mxu0 0.0
    %6508 = vmatprep.subr.mxu0 0.0
    %6509 = vmatpush2.msra.mxu0 0.0
    %6510 = vmatprep.subr.mxu0 0.0
    %6511 = vmatpush2.msra.mxu0 0.0
    %6512 = vmatprep.subr.mxu0 0.0
    %6513 = vmatpush2.msra.mxu0 0.0
    %6514 = vmatprep.subr.mxu0 0.0
    %6515 = vmatpush2.msra.mxu0 0.0
    %6516 = vmatprep.subr.mxu0 0.0
    %6517 = vmatpush2.msra.mxu0 0.0
    %6518 = vmatprep.subr.mxu0 0.0
    %6519 = vmatpush2.msra.mxu0 0.0
    %6520 = vmatprep.subr.mxu0 0.0
    %6521 = vmatpush2.msra.mxu0 0.0
    %6522 = vmatprep.subr.mxu0 0.0
    %6523 = vmatpush2.msra.mxu0 0.0
    %6524 = vmatprep.subr.mxu0 0.0
    %6525 = vmatpush2.msra.mxu0 0.0
    %6526 = vmatprep.mubr.f32.mxu0 0.0
    %6527 = vmatmul.mubr.f32.gmra.mxu0 %v6415
    %v6528 = vpop.f32.mrf.mxu0
    %v6529 = vadd.f32 0.0, %v6528
    %v6530 = vpop.f32.mrf.mxu0
    %6531 = vmatprep.mubr.f32.mxu0 0.0
    %6532 = vmatmul.mubr.f32.gmra.mxu0 %v6418
    %v6533 = vpop.f32.mrf.mxu0
    %v6534 = vadd.f32 0.0, %v6533
    %v6535 = vpop.f32.mrf.mxu0
    %6536 = vmatprep.mubr.f32.mxu0 0.0
    %6537 = vmatmul.mubr.f32.gmra.mxu0 %v6421
    %v6538 = vpop.f32.mrf.mxu0
    %v6539 = vadd.f32 0.0, %v6538
    %v6540 = vpop.f32.mrf.mxu0
    %6541 = vmatprep.mubr.f32.mxu0 0.0
    %6542 = vmatmul.mubr.f32.gmra.mxu0 %v6424
    %v6543 = vpop.f32.mrf.mxu0
    %v6544 = vadd.f32 0.0, %v6543
    %v6545 = vpop.f32.mrf.mxu0
    %6546 = vmatprep.mubr.f32.mxu0 0.0
    %6547 = vmatmul.mubr.f32.gmra.mxu0 %v6427
    %v6548 = vpop.f32.mrf.mxu0
    %v6549 = vadd.f32 0.0, %v6548
    %v6550 = vpop.f32.mrf.mxu0
    %6551 = vmatprep.mubr.f32.mxu0 0.0
    %6552 = vmatmul.mubr.f32.gmra.mxu0 %v6430
    %v6553 = vpop.f32.mrf.mxu0
    %v6554 = vadd.f32 0.0, %v6553
    %v6555 = vpop.f32.mrf.mxu0
    %6556 = vmatprep.mubr.f32.mxu0 0.0
    %6557 = vmatmul.mubr.f32.gmra.mxu0 %v6433
    %v6558 = vpop.f32.mrf.mxu0
    %v6559 = vadd.f32 0.0, %v6558
    %v6560 = vpop.f32.mrf.mxu0
    %6561 = vmatprep.mubr.f32.mxu0 0.0
    %6562 = vmatmul.mubr.f32.gmra.mxu0 %v6436
    %v6563 = vpop.f32.mrf.mxu0
    %v6564 = vadd.f32 0.0, %v6563
    %v6565 = vpop.f32.mrf.mxu0
    %6566 = vmatprep.mubr.f32.mxu0 0.0
    %6567 = vmatmul.mubr.f32.gmra.mxu0 %v6439
    %v6568 = vpop.f32.mrf.mxu0
    %v6569 = vadd.f32 0.0, %v6568
    %v6570 = vpop.f32.mrf.mxu0
    %6571 = vmatprep.mubr.f32.mxu0 0.0
    %6572 = vmatmul.mubr.f32.gmra.mxu0 %v6442
    %v6573 = vpop.f32.mrf.mxu0
    %v6574 = vadd.f32 0.0, %v6573
    %v6575 = vpop.f32.mrf.mxu0
    %6576 = vmatprep.mubr.f32.mxu0 0.0
    %6577 = vmatmul.mubr.f32.gmra.mxu0 %v6445
    %v6578 = vpop.f32.mrf.mxu0
    %v6579 = vadd.f32 0.0, %v6578
    %v6580 = vpop.f32.mrf.mxu0
    %6581 = vmatprep.mubr.f32.mxu0 0.0
    %6582 = vmatmul.mubr.f32.gmra.mxu0 %v6448
    %v6583 = vpop.f32.mrf.mxu0
    %v6584 = vadd.f32 0.0, %v6583
    %v6585 = vpop.f32.mrf.mxu0
    %6586 = vmatprep.mubr.f32.mxu0 0.0
    %6587 = vmatmul.mubr.f32.gmra.mxu0 %v6451
    %v6588 = vpop.f32.mrf.mxu0
    %v6589 = vadd.f32 0.0, %v6588
    %v6590 = vpop.f32.mrf.mxu0
    %6591 = vmatprep.mubr.f32.mxu0 0.0
    %6592 = vmatmul.mubr.f32.gmra.mxu0 %v6454
    %v6593 = vpop.f32.mrf.mxu0
    %v6594 = vadd.f32 0.0, %v6593
    %v6595 = vpop.f32.mrf.mxu0
    %6596 = vmatprep.mubr.f32.mxu0 0.0
    %6597 = vmatmul.mubr.f32.gmra.mxu0 %v6457
    %v6598 = vpop.f32.mrf.mxu0
    %v6599 = vadd.f32 0.0, %v6598
    %v6600 = vpop.f32.mrf.mxu0
    %6601 = vmatprep.mubr.f32.mxu0 0.0
    %6602 = vmatmul.mubr.f32.gmra.mxu0 %v6460
    %v6603 = vpop.f32.mrf.mxu0
    %v6604 = vadd.f32 0.0, %v6603
    %v6605 = vpop.f32.mrf.mxu0
    %6606 = vdwg.mxu0
    %v6607 = vadd.f32 %v6410, %v6529
    %v6608 = vadd.f32 %v6410, %v6534
    %v6609 = vadd.f32 %v6410, %v6539
    %v6610 = vadd.f32 %v6410, %v6544
    %v6611 = vadd.f32 %v6410, %v6549
    %v6612 = vadd.f32 %v6410, %v6554
    %v6613 = vadd.f32 %v6410, %v6559
    %v6614 = vadd.f32 %v6410, %v6564
    %v6615 = vadd.f32 %v6410, %v6569
    %v6616 = vadd.f32 %v6410, %v6574
    %v6617 = vadd.f32 %v6410, %v6579
    %v6618 = vadd.f32 %v6410, %v6584
    %v6619 = vadd.f32 %v6410, %v6589
    %v6620 = vadd.f32 %v6410, %v6594
    %v6621 = vadd.f32 %v6410, %v6599
    %v6622 = vadd.f32 %v6410, %v6604
    %v6639 = vrot.slane %v6365, 1
    %v6640 = vrot.slane %v6366, 1
    %v6641 = vsel %vm241, %v6639, %v6640
    %v6642 = vrot.slane %v6367, 1
    %v6643 = vrot.slane %v6368, 1
    %v6644 = vsel %vm241, %v6642, %v6643
    %v6645 = vrot.slane %v6369, 1
    %v6646 = vrot.slane %v6370, 1
    %v6647 = vsel %vm241, %v6645, %v6646
    %v6648 = vrot.slane %v6371, 1
    %v6649 = vrot.slane %v6372, 1
    %v6650 = vsel %vm241, %v6648, %v6649
    %v6651 = vrot.slane %v6373, 1
    %v6652 = vrot.slane %v6374, 1
    %v6653 = vsel %vm241, %v6651, %v6652
    %v6654 = vrot.slane %v6375, 1
    %v6655 = vrot.slane %v6376, 1
    %v6656 = vsel %vm241, %v6654, %v6655
    %v6657 = vrot.slane %v6377, 1
    %v6658 = vrot.slane %v6378, 1
    %v6659 = vsel %vm241, %v6657, %v6658
    %v6660 = vrot.slane %v6379, 1
    %v6661 = vrot.slane %v6380, 1
    %v6662 = vsel %vm241, %v6660, %v6661
    %v6663 = vrot.slane %v6385, 1
    %v6664 = vrot.slane %v6386, 1
    %v6665 = vsel %vm241, %v6663, %v6664
    %v6666 = vrot.slane %v6387, 1
    %v6667 = vrot.slane %v6388, 1
    %v6668 = vsel %vm241, %v6666, %v6667
    %v6669 = vrot.slane %v6389, 1
    %v6670 = vrot.slane %v6390, 1
    %v6671 = vsel %vm241, %v6669, %v6670
    %v6672 = vrot.slane %v6391, 1
    %v6673 = vrot.slane %v6392, 1
    %v6674 = vsel %vm241, %v6672, %v6673
    %v6675 = vrot.slane %v6393, 1
    %v6676 = vrot.slane %v6394, 1
    %v6677 = vsel %vm241, %v6675, %v6676
    %v6678 = vrot.slane %v6395, 1
    %v6679 = vrot.slane %v6396, 1
    %v6680 = vsel %vm241, %v6678, %v6679
    %v6681 = vrot.slane %v6397, 1
    %v6682 = vrot.slane %v6398, 1
    %v6683 = vsel %vm241, %v6681, %v6682
    %v6684 = vrot.slane %v6399, 1
    %v6685 = vrot.slane %v6400, 1
    %v6686 = vsel %vm241, %v6684, %v6685
    %s6687 = scalar_lea.vmem %s4, 8
    %v6688 = vld [vmem:[%s6687] sm:$0xff]
    %v6689 = vsel %vm6413, %v6641, 0
    %v6691 = vsel %vm6413, %v6644, 0
    %v6693 = vsel %vm6413, %v6647, 0
    %v6695 = vsel %vm6413, %v6650, 0
    %v6697 = vsel %vm6413, %v6653, 0
    %v6699 = vsel %vm6413, %v6656, 0
    %v6701 = vsel %vm6413, %v6659, 0
    %v6703 = vsel %vm6413, %v6662, 0
    %v6705 = vsel %vm6413, %v6665, 0
    %v6707 = vsel %vm6413, %v6668, 0
    %v6709 = vsel %vm6413, %v6671, 0
    %v6711 = vsel %vm6413, %v6674, 0
    %v6713 = vsel %vm6413, %v6677, 0
    %v6715 = vsel %vm6413, %v6680, 0
    %v6717 = vsel %vm6413, %v6683, 0
    %v6719 = vsel %vm6413, %v6686, 0
    %6721 = vmatprep.subr.mxu0 0.0
    %6722 = vmatpush1.msra.mxu0 0.0
    %6723 = vmatprep.subr.mxu0 0.0
    %6724 = vmatpush1.msra.mxu0 0.0
    %6725 = vmatprep.subr.mxu0 0.0
    %6726 = vmatpush1.msra.mxu0 0.0
    %6727 = vmatprep.subr.mxu0 0.0
    %6728 = vmatpush1.msra.mxu0 0.0
    %6729 = vmatprep.subr.mxu0 0.0
    %6730 = vmatpush1.msra.mxu0 0.0
    %6731 = vmatprep.subr.mxu0 0.0
    %6732 = vmatpush1.msra.mxu0 0.0
    %6733 = vmatprep.subr.mxu0 0.0
    %6734 = vmatpush1.msra.mxu0 0.0
    %6735 = vmatprep.subr.mxu0 0.0
    %6736 = vmatpush1.msra.mxu0 0.0
    %6737 = vmatprep.subr.mxu0 0.0
    %6738 = vmatpush1.msra.mxu0 0.0
    %6739 = vmatprep.subr.mxu0 0.0
    %6740 = vmatpush1.msra.mxu0 0.0
    %6741 = vmatprep.subr.mxu0 0.0
    %6742 = vmatpush1.msra.mxu0 0.0
    %6743 = vmatprep.subr.mxu0 0.0
    %6744 = vmatpush1.msra.mxu0 0.0
    %6745 = vmatprep.subr.mxu0 0.0
    %6746 = vmatpush1.msra.mxu0 0.0
    %6747 = vmatprep.subr.mxu0 0.0
    %6748 = vmatpush1.msra.mxu0 0.0
    %6749 = vmatprep.subr.mxu0 0.0
    %6750 = vmatpush1.msra.mxu0 0.0
    %6751 = vmatprep.subr.mxu0 0.0
    %6752 = vmatpush1.msra.mxu0 %v6688
    %6753 = vmatprep.subr.mxu0 0.0
    %6754 = vmatpush2.msra.mxu0 0.0
    %6755 = vmatprep.subr.mxu0 0.0
    %6756 = vmatpush2.msra.mxu0 0.0
    %6757 = vmatprep.subr.mxu0 0.0
    %6758 = vmatpush2.msra.mxu0 0.0
    %6759 = vmatprep.subr.mxu0 0.0
    %6760 = vmatpush2.msra.mxu0 0.0
    %6761 = vmatprep.subr.mxu0 0.0
    %6762 = vmatpush2.msra.mxu0 0.0
    %6763 = vmatprep.subr.mxu0 0.0
    %6764 = vmatpush2.msra.mxu0 0.0
    %6765 = vmatprep.subr.mxu0 0.0
    %6766 = vmatpush2.msra.mxu0 0.0
    %6767 = vmatprep.subr.mxu0 0.0
    %6768 = vmatpush2.msra.mxu0 0.0
    %6769 = vmatprep.subr.mxu0 0.0
    %6770 = vmatpush2.msra.mxu0 0.0
    %6771 = vmatprep.subr.mxu0 0.0
    %6772 = vmatpush2.msra.mxu0 0.0
    %6773 = vmatprep.subr.mxu0 0.0
    %6774 = vmatpush2.msra.mxu0 0.0
    %6775 = vmatprep.subr.mxu0 0.0
    %6776 = vmatpush2.msra.mxu0 0.0
    %6777 = vmatprep.subr.mxu0 0.0
    %6778 = vmatpush2.msra.mxu0 0.0
    %6779 = vmatprep.subr.mxu0 0.0
    %6780 = vmatpush2.msra.mxu0 0.0
    %6781 = vmatprep.subr.mxu0 0.0
    %6782 = vmatpush2.msra.mxu0 0.0
    %6783 = vmatprep.subr.mxu0 0.0
    %6784 = vmatpush2.msra.mxu0 0.0
    %6785 = vmatprep.mubr.f32.mxu0 0.0
    %6786 = vmatmul.mubr.f32.gmra.mxu0 %v6689
    %v6787 = vpop.f32.mrf.mxu0
    %v6788 = vadd.f32 0.0, %v6787
    %v6789 = vpop.f32.mrf.mxu0
    %6790 = vmatprep.mubr.f32.mxu0 0.0
    %6791 = vmatmul.mubr.f32.gmra.mxu0 %v6691
    %v6792 = vpop.f32.mrf.mxu0
    %v6793 = vadd.f32 0.0, %v6792
    %v6794 = vpop.f32.mrf.mxu0
    %6795 = vmatprep.mubr.f32.mxu0 0.0
    %6796 = vmatmul.mubr.f32.gmra.mxu0 %v6693
    %v6797 = vpop.f32.mrf.mxu0
    %v6798 = vadd.f32 0.0, %v6797
    %v6799 = vpop.f32.mrf.mxu0
    %6800 = vmatprep.mubr.f32.mxu0 0.0
    %6801 = vmatmul.mubr.f32.gmra.mxu0 %v6695
    %v6802 = vpop.f32.mrf.mxu0
    %v6803 = vadd.f32 0.0, %v6802
    %v6804 = vpop.f32.mrf.mxu0
    %6805 = vmatprep.mubr.f32.mxu0 0.0
    %6806 = vmatmul.mubr.f32.gmra.mxu0 %v6697
    %v6807 = vpop.f32.mrf.mxu0
    %v6808 = vadd.f32 0.0, %v6807
    %v6809 = vpop.f32.mrf.mxu0
    %6810 = vmatprep.mubr.f32.mxu0 0.0
    %6811 = vmatmul.mubr.f32.gmra.mxu0 %v6699
    %v6812 = vpop.f32.mrf.mxu0
    %v6813 = vadd.f32 0.0, %v6812
    %v6814 = vpop.f32.mrf.mxu0
    %6815 = vmatprep.mubr.f32.mxu0 0.0
    %6816 = vmatmul.mubr.f32.gmra.mxu0 %v6701
    %v6817 = vpop.f32.mrf.mxu0
    %v6818 = vadd.f32 0.0, %v6817
    %v6819 = vpop.f32.mrf.mxu0
    %6820 = vmatprep.mubr.f32.mxu0 0.0
    %6821 = vmatmul.mubr.f32.gmra.mxu0 %v6703
    %v6822 = vpop.f32.mrf.mxu0
    %v6823 = vadd.f32 0.0, %v6822
    %v6824 = vpop.f32.mrf.mxu0
    %6825 = vmatprep.mubr.f32.mxu0 0.0
    %6826 = vmatmul.mubr.f32.gmra.mxu0 %v6705
    %v6827 = vpop.f32.mrf.mxu0
    %v6828 = vadd.f32 0.0, %v6827
    %v6829 = vpop.f32.mrf.mxu0
    %6830 = vmatprep.mubr.f32.mxu0 0.0
    %6831 = vmatmul.mubr.f32.gmra.mxu0 %v6707
    %v6832 = vpop.f32.mrf.mxu0
    %v6833 = vadd.f32 0.0, %v6832
    %v6834 = vpop.f32.mrf.mxu0
    %6835 = vmatprep.mubr.f32.mxu0 0.0
    %6836 = vmatmul.mubr.f32.gmra.mxu0 %v6709
    %v6837 = vpop.f32.mrf.mxu0
    %v6838 = vadd.f32 0.0, %v6837
    %v6839 = vpop.f32.mrf.mxu0
    %6840 = vmatprep.mubr.f32.mxu0 0.0
    %6841 = vmatmul.mubr.f32.gmra.mxu0 %v6711
    %v6842 = vpop.f32.mrf.mxu0
    %v6843 = vadd.f32 0.0, %v6842
    %v6844 = vpop.f32.mrf.mxu0
    %6845 = vmatprep.mubr.f32.mxu0 0.0
    %6846 = vmatmul.mubr.f32.gmra.mxu0 %v6713
    %v6847 = vpop.f32.mrf.mxu0
    %v6848 = vadd.f32 0.0, %v6847
    %v6849 = vpop.f32.mrf.mxu0
    %6850 = vmatprep.mubr.f32.mxu0 0.0
    %6851 = vmatmul.mubr.f32.gmra.mxu0 %v6715
    %v6852 = vpop.f32.mrf.mxu0
    %v6853 = vadd.f32 0.0, %v6852
    %v6854 = vpop.f32.mrf.mxu0
    %6855 = vmatprep.mubr.f32.mxu0 0.0
    %6856 = vmatmul.mubr.f32.gmra.mxu0 %v6717
    %v6857 = vpop.f32.mrf.mxu0
    %v6858 = vadd.f32 0.0, %v6857
    %v6859 = vpop.f32.mrf.mxu0
    %6860 = vmatprep.mubr.f32.mxu0 0.0
    %6861 = vmatmul.mubr.f32.gmra.mxu0 %v6719
    %v6862 = vpop.f32.mrf.mxu0
    %v6863 = vadd.f32 0.0, %v6862
    %v6864 = vpop.f32.mrf.mxu0
    %6865 = vdwg.mxu0
    %v6866 = vadd.f32 %v6607, %v6788
    %v6867 = vadd.f32 %v6608, %v6793
    %v6868 = vadd.f32 %v6609, %v6798
    %v6869 = vadd.f32 %v6610, %v6803
    %v6870 = vadd.f32 %v6611, %v6808
    %v6871 = vadd.f32 %v6612, %v6813
    %v6872 = vadd.f32 %v6613, %v6818
    %v6873 = vadd.f32 %v6614, %v6823
    %v6874 = vadd.f32 %v6615, %v6828
    %v6875 = vadd.f32 %v6616, %v6833
    %v6876 = vadd.f32 %v6617, %v6838
    %v6877 = vadd.f32 %v6618, %v6843
    %v6878 = vadd.f32 %v6619, %v6848
    %v6879 = vadd.f32 %v6620, %v6853
    %v6880 = vadd.f32 %v6621, %v6858
    %v6881 = vadd.f32 %v6622, %v6863
    %v6882 = vrot.slane %v6365, 2
    %v6883 = vrot.slane %v6366, 2
    %v6884 = vsel %vm1438, %v6882, %v6883
    %v6885 = vrot.slane %v6367, 2
    %v6886 = vrot.slane %v6368, 2
    %v6887 = vsel %vm1438, %v6885, %v6886
    %v6888 = vrot.slane %v6369, 2
    %v6889 = vrot.slane %v6370, 2
    %v6890 = vsel %vm1438, %v6888, %v6889
    %v6891 = vrot.slane %v6371, 2
    %v6892 = vrot.slane %v6372, 2
    %v6893 = vsel %vm1438, %v6891, %v6892
    %v6894 = vrot.slane %v6373, 2
    %v6895 = vrot.slane %v6374, 2
    %v6896 = vsel %vm1438, %v6894, %v6895
    %v6897 = vrot.slane %v6375, 2
    %v6898 = vrot.slane %v6376, 2
    %v6899 = vsel %vm1438, %v6897, %v6898
    %v6900 = vrot.slane %v6377, 2
    %v6901 = vrot.slane %v6378, 2
    %v6902 = vsel %vm1438, %v6900, %v6901
    %v6903 = vrot.slane %v6379, 2
    %v6904 = vrot.slane %v6380, 2
    %v6905 = vsel %vm1438, %v6903, %v6904
    %v6906 = vrot.slane %v6385, 2
    %v6907 = vrot.slane %v6386, 2
    %v6908 = vsel %vm1438, %v6906, %v6907
    %v6909 = vrot.slane %v6387, 2
    %v6910 = vrot.slane %v6388, 2
    %v6911 = vsel %vm1438, %v6909, %v6910
    %v6912 = vrot.slane %v6389, 2
    %v6913 = vrot.slane %v6390, 2
    %v6914 = vsel %vm1438, %v6912, %v6913
    %v6915 = vrot.slane %v6391, 2
    %v6916 = vrot.slane %v6392, 2
    %v6917 = vsel %vm1438, %v6915, %v6916
    %v6918 = vrot.slane %v6393, 2
    %v6919 = vrot.slane %v6394, 2
    %v6920 = vsel %vm1438, %v6918, %v6919
    %v6921 = vrot.slane %v6395, 2
    %v6922 = vrot.slane %v6396, 2
    %v6923 = vsel %vm1438, %v6921, %v6922
    %v6924 = vrot.slane %v6397, 2
    %v6925 = vrot.slane %v6398, 2
    %v6926 = vsel %vm1438, %v6924, %v6925
    %v6927 = vrot.slane %v6399, 2
    %v6928 = vrot.slane %v6400, 2
    %v6929 = vsel %vm1438, %v6927, %v6928
    %s6930 = scalar_lea.vmem %s4, 16
    %v6931 = vld [vmem:[%s6930] sm:$0xff]
    %v6932 = vsel %vm6413, %v6884, 0
    %v6934 = vsel %vm6413, %v6887, 0
    %v6936 = vsel %vm6413, %v6890, 0
    %v6938 = vsel %vm6413, %v6893, 0
    %v6940 = vsel %vm6413, %v6896, 0
    %v6942 = vsel %vm6413, %v6899, 0
    %v6944 = vsel %vm6413, %v6902, 0
    %v6946 = vsel %vm6413, %v6905, 0
    %v6948 = vsel %vm6413, %v6908, 0
    %v6950 = vsel %vm6413, %v6911, 0
    %v6952 = vsel %vm6413, %v6914, 0
    %v6954 = vsel %vm6413, %v6917, 0
    %v6956 = vsel %vm6413, %v6920, 0
    %v6958 = vsel %vm6413, %v6923, 0
    %v6960 = vsel %vm6413, %v6926, 0
    %v6962 = vsel %vm6413, %v6929, 0
    %6964 = vmatprep.subr.mxu0 0.0
    %6965 = vmatpush1.msra.mxu0 0.0
    %6966 = vmatprep.subr.mxu0 0.0
    %6967 = vmatpush1.msra.mxu0 0.0
    %6968 = vmatprep.subr.mxu0 0.0
    %6969 = vmatpush1.msra.mxu0 0.0
    %6970 = vmatprep.subr.mxu0 0.0
    %6971 = vmatpush1.msra.mxu0 0.0
    %6972 = vmatprep.subr.mxu0 0.0
    %6973 = vmatpush1.msra.mxu0 0.0
    %6974 = vmatprep.subr.mxu0 0.0
    %6975 = vmatpush1.msra.mxu0 0.0
    %6976 = vmatprep.subr.mxu0 0.0
    %6977 = vmatpush1.msra.mxu0 0.0
    %6978 = vmatprep.subr.mxu0 0.0
    %6979 = vmatpush1.msra.mxu0 0.0
    %6980 = vmatprep.subr.mxu0 0.0
    %6981 = vmatpush1.msra.mxu0 0.0
    %6982 = vmatprep.subr.mxu0 0.0
    %6983 = vmatpush1.msra.mxu0 0.0
    %6984 = vmatprep.subr.mxu0 0.0
    %6985 = vmatpush1.msra.mxu0 0.0
    %6986 = vmatprep.subr.mxu0 0.0
    %6987 = vmatpush1.msra.mxu0 0.0
    %6988 = vmatprep.subr.mxu0 0.0
    %6989 = vmatpush1.msra.mxu0 0.0
    %6990 = vmatprep.subr.mxu0 0.0
    %6991 = vmatpush1.msra.mxu0 0.0
    %6992 = vmatprep.subr.mxu0 0.0
    %6993 = vmatpush1.msra.mxu0 0.0
    %6994 = vmatprep.subr.mxu0 0.0
    %6995 = vmatpush1.msra.mxu0 %v6931
    %6996 = vmatprep.subr.mxu0 0.0
    %6997 = vmatpush2.msra.mxu0 0.0
    %6998 = vmatprep.subr.mxu0 0.0
    %6999 = vmatpush2.msra.mxu0 0.0
    %7000 = vmatprep.subr.mxu0 0.0
    %7001 = vmatpush2.msra.mxu0 0.0
    %7002 = vmatprep.subr.mxu0 0.0
    %7003 = vmatpush2.msra.mxu0 0.0
    %7004 = vmatprep.subr.mxu0 0.0
    %7005 = vmatpush2.msra.mxu0 0.0
    %7006 = vmatprep.subr.mxu0 0.0
    %7007 = vmatpush2.msra.mxu0 0.0
    %7008 = vmatprep.subr.mxu0 0.0
    %7009 = vmatpush2.msra.mxu0 0.0
    %7010 = vmatprep.subr.mxu0 0.0
    %7011 = vmatpush2.msra.mxu0 0.0
    %7012 = vmatprep.subr.mxu0 0.0
    %7013 = vmatpush2.msra.mxu0 0.0
    %7014 = vmatprep.subr.mxu0 0.0
    %7015 = vmatpush2.msra.mxu0 0.0
    %7016 = vmatprep.subr.mxu0 0.0
    %7017 = vmatpush2.msra.mxu0 0.0
    %7018 = vmatprep.subr.mxu0 0.0
    %7019 = vmatpush2.msra.mxu0 0.0
    %7020 = vmatprep.subr.mxu0 0.0
    %7021 = vmatpush2.msra.mxu0 0.0
    %7022 = vmatprep.subr.mxu0 0.0
    %7023 = vmatpush2.msra.mxu0 0.0
    %7024 = vmatprep.subr.mxu0 0.0
    %7025 = vmatpush2.msra.mxu0 0.0
    %7026 = vmatprep.subr.mxu0 0.0
    %7027 = vmatpush2.msra.mxu0 0.0
    %7028 = vmatprep.mubr.f32.mxu0 0.0
    %7029 = vmatmul.mubr.f32.gmra.mxu0 %v6932
    %v7030 = vpop.f32.mrf.mxu0
    %v7031 = vadd.f32 0.0, %v7030
    %v7032 = vpop.f32.mrf.mxu0
    %7033 = vmatprep.mubr.f32.mxu0 0.0
    %7034 = vmatmul.mubr.f32.gmra.mxu0 %v6934
    %v7035 = vpop.f32.mrf.mxu0
    %v7036 = vadd.f32 0.0, %v7035
    %v7037 = vpop.f32.mrf.mxu0
    %7038 = vmatprep.mubr.f32.mxu0 0.0
    %7039 = vmatmul.mubr.f32.gmra.mxu0 %v6936
    %v7040 = vpop.f32.mrf.mxu0
    %v7041 = vadd.f32 0.0, %v7040
    %v7042 = vpop.f32.mrf.mxu0
    %7043 = vmatprep.mubr.f32.mxu0 0.0
    %7044 = vmatmul.mubr.f32.gmra.mxu0 %v6938
    %v7045 = vpop.f32.mrf.mxu0
    %v7046 = vadd.f32 0.0, %v7045
    %v7047 = vpop.f32.mrf.mxu0
    %7048 = vmatprep.mubr.f32.mxu0 0.0
    %7049 = vmatmul.mubr.f32.gmra.mxu0 %v6940
    %v7050 = vpop.f32.mrf.mxu0
    %v7051 = vadd.f32 0.0, %v7050
    %v7052 = vpop.f32.mrf.mxu0
    %7053 = vmatprep.mubr.f32.mxu0 0.0
    %7054 = vmatmul.mubr.f32.gmra.mxu0 %v6942
    %v7055 = vpop.f32.mrf.mxu0
    %v7056 = vadd.f32 0.0, %v7055
    %v7057 = vpop.f32.mrf.mxu0
    %7058 = vmatprep.mubr.f32.mxu0 0.0
    %7059 = vmatmul.mubr.f32.gmra.mxu0 %v6944
    %v7060 = vpop.f32.mrf.mxu0
    %v7061 = vadd.f32 0.0, %v7060
    %v7062 = vpop.f32.mrf.mxu0
    %7063 = vmatprep.mubr.f32.mxu0 0.0
    %7064 = vmatmul.mubr.f32.gmra.mxu0 %v6946
    %v7065 = vpop.f32.mrf.mxu0
    %v7066 = vadd.f32 0.0, %v7065
    %v7067 = vpop.f32.mrf.mxu0
    %7068 = vmatprep.mubr.f32.mxu0 0.0
    %7069 = vmatmul.mubr.f32.gmra.mxu0 %v6948
    %v7070 = vpop.f32.mrf.mxu0
    %v7071 = vadd.f32 0.0, %v7070
    %v7072 = vpop.f32.mrf.mxu0
    %7073 = vmatprep.mubr.f32.mxu0 0.0
    %7074 = vmatmul.mubr.f32.gmra.mxu0 %v6950
    %v7075 = vpop.f32.mrf.mxu0
    %v7076 = vadd.f32 0.0, %v7075
    %v7077 = vpop.f32.mrf.mxu0
    %7078 = vmatprep.mubr.f32.mxu0 0.0
    %7079 = vmatmul.mubr.f32.gmra.mxu0 %v6952
    %v7080 = vpop.f32.mrf.mxu0
    %v7081 = vadd.f32 0.0, %v7080
    %v7082 = vpop.f32.mrf.mxu0
    %7083 = vmatprep.mubr.f32.mxu0 0.0
    %7084 = vmatmul.mubr.f32.gmra.mxu0 %v6954
    %v7085 = vpop.f32.mrf.mxu0
    %v7086 = vadd.f32 0.0, %v7085
    %v7087 = vpop.f32.mrf.mxu0
    %7088 = vmatprep.mubr.f32.mxu0 0.0
    %7089 = vmatmul.mubr.f32.gmra.mxu0 %v6956
    %v7090 = vpop.f32.mrf.mxu0
    %v7091 = vadd.f32 0.0, %v7090
    %v7092 = vpop.f32.mrf.mxu0
    %7093 = vmatprep.mubr.f32.mxu0 0.0
    %7094 = vmatmul.mubr.f32.gmra.mxu0 %v6958
    %v7095 = vpop.f32.mrf.mxu0
    %v7096 = vadd.f32 0.0, %v7095
    %v7097 = vpop.f32.mrf.mxu0
    %7098 = vmatprep.mubr.f32.mxu0 0.0
    %7099 = vmatmul.mubr.f32.gmra.mxu0 %v6960
    %v7100 = vpop.f32.mrf.mxu0
    %v7101 = vadd.f32 0.0, %v7100
    %v7102 = vpop.f32.mrf.mxu0
    %7103 = vmatprep.mubr.f32.mxu0 0.0
    %7104 = vmatmul.mubr.f32.gmra.mxu0 %v6962
    %v7105 = vpop.f32.mrf.mxu0
    %v7106 = vadd.f32 0.0, %v7105
    %v7107 = vpop.f32.mrf.mxu0
    %7108 = vdwg.mxu0
    %v7109 = vadd.f32 %v6866, %v7031
    %v7110 = vadd.f32 %v6867, %v7036
    %v7111 = vadd.f32 %v6868, %v7041
    %v7112 = vadd.f32 %v6869, %v7046
    %v7113 = vadd.f32 %v6870, %v7051
    %v7114 = vadd.f32 %v6871, %v7056
    %v7115 = vadd.f32 %v6872, %v7061
    %v7116 = vadd.f32 %v6873, %v7066
    %v7117 = vadd.f32 %v6874, %v7071
    %v7118 = vadd.f32 %v6875, %v7076
    %v7119 = vadd.f32 %v6876, %v7081
    %v7120 = vadd.f32 %v6877, %v7086
    %v7121 = vadd.f32 %v6878, %v7091
    %v7122 = vadd.f32 %v6879, %v7096
    %v7123 = vadd.f32 %v6880, %v7101
    %v7124 = vadd.f32 %v6881, %v7106
    %s7125 = scalar_lea.vmem %s4, 24
    %v7126 = vld [vmem:[%s7125] sm:$0xff]
    %v7128 = vsel %vm6413, %v6381, 0
    %v7131 = vsel %vm6413, %v6401, 0
    %7133 = vmatprep.subr.mxu0 0.0
    %7134 = vmatpush1.msra.mxu0 0.0
    %7135 = vmatprep.subr.mxu0 0.0
    %7136 = vmatpush1.msra.mxu0 0.0
    %7137 = vmatprep.subr.mxu0 0.0
    %7138 = vmatpush1.msra.mxu0 0.0
    %7139 = vmatprep.subr.mxu0 0.0
    %7140 = vmatpush1.msra.mxu0 0.0
    %7141 = vmatprep.subr.mxu0 0.0
    %7142 = vmatpush1.msra.mxu0 0.0
    %7143 = vmatprep.subr.mxu0 0.0
    %7144 = vmatpush1.msra.mxu0 0.0
    %7145 = vmatprep.subr.mxu0 0.0
    %7146 = vmatpush1.msra.mxu0 0.0
    %7147 = vmatprep.subr.mxu0 0.0
    %7148 = vmatpush1.msra.mxu0 0.0
    %7149 = vmatprep.subr.mxu0 0.0
    %7150 = vmatpush1.msra.mxu0 0.0
    %7151 = vmatprep.subr.mxu0 0.0
    %7152 = vmatpush1.msra.mxu0 0.0
    %7153 = vmatprep.subr.mxu0 0.0
    %7154 = vmatpush1.msra.mxu0 0.0
    %7155 = vmatprep.subr.mxu0 0.0
    %7156 = vmatpush1.msra.mxu0 0.0
    %7157 = vmatprep.subr.mxu0 0.0
    %7158 = vmatpush1.msra.mxu0 0.0
    %7159 = vmatprep.subr.mxu0 0.0
    %7160 = vmatpush1.msra.mxu0 0.0
    %7161 = vmatprep.subr.mxu0 0.0
    %7162 = vmatpush1.msra.mxu0 0.0
    %7163 = vmatprep.subr.mxu0 0.0
    %7164 = vmatpush1.msra.mxu0 %v7126
    %7165 = vmatprep.subr.mxu0 0.0
    %7166 = vmatpush2.msra.mxu0 0.0
    %7167 = vmatprep.subr.mxu0 0.0
    %7168 = vmatpush2.msra.mxu0 0.0
    %7169 = vmatprep.subr.mxu0 0.0
    %7170 = vmatpush2.msra.mxu0 0.0
    %7171 = vmatprep.subr.mxu0 0.0
    %7172 = vmatpush2.msra.mxu0 0.0
    %7173 = vmatprep.subr.mxu0 0.0
    %7174 = vmatpush2.msra.mxu0 0.0
    %7175 = vmatprep.subr.mxu0 0.0
    %7176 = vmatpush2.msra.mxu0 0.0
    %7177 = vmatprep.subr.mxu0 0.0
    %7178 = vmatpush2.msra.mxu0 0.0
    %7179 = vmatprep.subr.mxu0 0.0
    %7180 = vmatpush2.msra.mxu0 0.0
    %7181 = vmatprep.subr.mxu0 0.0
    %7182 = vmatpush2.msra.mxu0 0.0
    %7183 = vmatprep.subr.mxu0 0.0
    %7184 = vmatpush2.msra.mxu0 0.0
    %7185 = vmatprep.subr.mxu0 0.0
    %7186 = vmatpush2.msra.mxu0 0.0
    %7187 = vmatprep.subr.mxu0 0.0
    %7188 = vmatpush2.msra.mxu0 0.0
    %7189 = vmatprep.subr.mxu0 0.0
    %7190 = vmatpush2.msra.mxu0 0.0
    %7191 = vmatprep.subr.mxu0 0.0
    %7192 = vmatpush2.msra.mxu0 0.0
    %7193 = vmatprep.subr.mxu0 0.0
    %7194 = vmatpush2.msra.mxu0 0.0
    %7195 = vmatprep.subr.mxu0 0.0
    %7196 = vmatpush2.msra.mxu0 0.0
    %7197 = vmatprep.mubr.f32.mxu0 0.0
    %7198 = vmatmul.mubr.f32.gmra.mxu0 %v6418
    %v7199 = vpop.f32.mrf.mxu0
    %v7200 = vadd.f32 0.0, %v7199
    %v7201 = vpop.f32.mrf.mxu0
    %7202 = vmatprep.mubr.f32.mxu0 0.0
    %7203 = vmatmul.mubr.f32.gmra.mxu0 %v6421
    %v7204 = vpop.f32.mrf.mxu0
    %v7205 = vadd.f32 0.0, %v7204
    %v7206 = vpop.f32.mrf.mxu0
    %7207 = vmatprep.mubr.f32.mxu0 0.0
    %7208 = vmatmul.mubr.f32.gmra.mxu0 %v6424
    %v7209 = vpop.f32.mrf.mxu0
    %v7210 = vadd.f32 0.0, %v7209
    %v7211 = vpop.f32.mrf.mxu0
    %7212 = vmatprep.mubr.f32.mxu0 0.0
    %7213 = vmatmul.mubr.f32.gmra.mxu0 %v6427
    %v7214 = vpop.f32.mrf.mxu0
    %v7215 = vadd.f32 0.0, %v7214
    %v7216 = vpop.f32.mrf.mxu0
    %7217 = vmatprep.mubr.f32.mxu0 0.0
    %7218 = vmatmul.mubr.f32.gmra.mxu0 %v6430
    %v7219 = vpop.f32.mrf.mxu0
    %v7220 = vadd.f32 0.0, %v7219
    %v7221 = vpop.f32.mrf.mxu0
    %7222 = vmatprep.mubr.f32.mxu0 0.0
    %7223 = vmatmul.mubr.f32.gmra.mxu0 %v6433
    %v7224 = vpop.f32.mrf.mxu0
    %v7225 = vadd.f32 0.0, %v7224
    %v7226 = vpop.f32.mrf.mxu0
    %7227 = vmatprep.mubr.f32.mxu0 0.0
    %7228 = vmatmul.mubr.f32.gmra.mxu0 %v6436
    %v7229 = vpop.f32.mrf.mxu0
    %v7230 = vadd.f32 0.0, %v7229
    %v7231 = vpop.f32.mrf.mxu0
    %7232 = vmatprep.mubr.f32.mxu0 0.0
    %7233 = vmatmul.mubr.f32.gmra.mxu0 %v7128
    %v7234 = vpop.f32.mrf.mxu0
    %v7235 = vadd.f32 0.0, %v7234
    %v7236 = vpop.f32.mrf.mxu0
    %7237 = vmatprep.mubr.f32.mxu0 0.0
    %7238 = vmatmul.mubr.f32.gmra.mxu0 %v6442
    %v7239 = vpop.f32.mrf.mxu0
    %v7240 = vadd.f32 0.0, %v7239
    %v7241 = vpop.f32.mrf.mxu0
    %7242 = vmatprep.mubr.f32.mxu0 0.0
    %7243 = vmatmul.mubr.f32.gmra.mxu0 %v6445
    %v7244 = vpop.f32.mrf.mxu0
    %v7245 = vadd.f32 0.0, %v7244
    %v7246 = vpop.f32.mrf.mxu0
    %7247 = vmatprep.mubr.f32.mxu0 0.0
    %7248 = vmatmul.mubr.f32.gmra.mxu0 %v6448
    %v7249 = vpop.f32.mrf.mxu0
    %v7250 = vadd.f32 0.0, %v7249
    %v7251 = vpop.f32.mrf.mxu0
    %7252 = vmatprep.mubr.f32.mxu0 0.0
    %7253 = vmatmul.mubr.f32.gmra.mxu0 %v6451
    %v7254 = vpop.f32.mrf.mxu0
    %v7255 = vadd.f32 0.0, %v7254
    %v7256 = vpop.f32.mrf.mxu0
    %7257 = vmatprep.mubr.f32.mxu0 0.0
    %7258 = vmatmul.mubr.f32.gmra.mxu0 %v6454
    %v7259 = vpop.f32.mrf.mxu0
    %v7260 = vadd.f32 0.0, %v7259
    %v7261 = vpop.f32.mrf.mxu0
    %7262 = vmatprep.mubr.f32.mxu0 0.0
    %7263 = vmatmul.mubr.f32.gmra.mxu0 %v6457
    %v7264 = vpop.f32.mrf.mxu0
    %v7265 = vadd.f32 0.0, %v7264
    %v7266 = vpop.f32.mrf.mxu0
    %7267 = vmatprep.mubr.f32.mxu0 0.0
    %7268 = vmatmul.mubr.f32.gmra.mxu0 %v6460
    %v7269 = vpop.f32.mrf.mxu0
    %v7270 = vadd.f32 0.0, %v7269
    %v7271 = vpop.f32.mrf.mxu0
    %7272 = vmatprep.mubr.f32.mxu0 0.0
    %7273 = vmatmul.mubr.f32.gmra.mxu0 %v7131
    %v7274 = vpop.f32.mrf.mxu0
    %v7275 = vadd.f32 0.0, %v7274
    %v7276 = vpop.f32.mrf.mxu0
    %7277 = vdwg.mxu0
    %v7278 = vadd.f32 %v7109, %v7200
    %v7279 = vadd.f32 %v7110, %v7205
    %v7280 = vadd.f32 %v7111, %v7210
    %v7281 = vadd.f32 %v7112, %v7215
    %v7282 = vadd.f32 %v7113, %v7220
    %v7283 = vadd.f32 %v7114, %v7225
    %v7284 = vadd.f32 %v7115, %v7230
    %v7285 = vadd.f32 %v7116, %v7235
    %v7286 = vadd.f32 %v7117, %v7240
    %v7287 = vadd.f32 %v7118, %v7245
    %v7288 = vadd.f32 %v7119, %v7250
    %v7289 = vadd.f32 %v7120, %v7255
    %v7290 = vadd.f32 %v7121, %v7260
    %v7291 = vadd.f32 %v7122, %v7265
    %v7292 = vadd.f32 %v7123, %v7270
    %v7293 = vadd.f32 %v7124, %v7275
    %v7296 = vrot.slane %v6381, 1
    %v7297 = vrot.slane %v6382, 1
    %v7298 = vsel %vm241, %v7296, %v7297
    %v7299 = vrot.slane %v6401, 1
    %v7300 = vrot.slane %v6402, 1
    %v7301 = vsel %vm241, %v7299, %v7300
    %s7302 = scalar_lea.vmem %s4, 32
    %v7303 = vld [vmem:[%s7302] sm:$0xff]
    %v7304 = vsel %vm6413, %v7298, 0
    %v7306 = vsel %vm6413, %v7301, 0
    %7308 = vmatprep.subr.mxu0 0.0
    %7309 = vmatpush1.msra.mxu0 0.0
    %7310 = vmatprep.subr.mxu0 0.0
    %7311 = vmatpush1.msra.mxu0 0.0
    %7312 = vmatprep.subr.mxu0 0.0
    %7313 = vmatpush1.msra.mxu0 0.0
    %7314 = vmatprep.subr.mxu0 0.0
    %7315 = vmatpush1.msra.mxu0 0.0
    %7316 = vmatprep.subr.mxu0 0.0
    %7317 = vmatpush1.msra.mxu0 0.0
    %7318 = vmatprep.subr.mxu0 0.0
    %7319 = vmatpush1.msra.mxu0 0.0
    %7320 = vmatprep.subr.mxu0 0.0
    %7321 = vmatpush1.msra.mxu0 0.0
    %7322 = vmatprep.subr.mxu0 0.0
    %7323 = vmatpush1.msra.mxu0 0.0
    %7324 = vmatprep.subr.mxu0 0.0
    %7325 = vmatpush1.msra.mxu0 0.0
    %7326 = vmatprep.subr.mxu0 0.0
    %7327 = vmatpush1.msra.mxu0 0.0
    %7328 = vmatprep.subr.mxu0 0.0
    %7329 = vmatpush1.msra.mxu0 0.0
    %7330 = vmatprep.subr.mxu0 0.0
    %7331 = vmatpush1.msra.mxu0 0.0
    %7332 = vmatprep.subr.mxu0 0.0
    %7333 = vmatpush1.msra.mxu0 0.0
    %7334 = vmatprep.subr.mxu0 0.0
    %7335 = vmatpush1.msra.mxu0 0.0
    %7336 = vmatprep.subr.mxu0 0.0
    %7337 = vmatpush1.msra.mxu0 0.0
    %7338 = vmatprep.subr.mxu0 0.0
    %7339 = vmatpush1.msra.mxu0 %v7303
    %7340 = vmatprep.subr.mxu0 0.0
    %7341 = vmatpush2.msra.mxu0 0.0
    %7342 = vmatprep.subr.mxu0 0.0
    %7343 = vmatpush2.msra.mxu0 0.0
    %7344 = vmatprep.subr.mxu0 0.0
    %7345 = vmatpush2.msra.mxu0 0.0
    %7346 = vmatprep.subr.mxu0 0.0
    %7347 = vmatpush2.msra.mxu0 0.0
    %7348 = vmatprep.subr.mxu0 0.0
    %7349 = vmatpush2.msra.mxu0 0.0
    %7350 = vmatprep.subr.mxu0 0.0
    %7351 = vmatpush2.msra.mxu0 0.0
    %7352 = vmatprep.subr.mxu0 0.0
    %7353 = vmatpush2.msra.mxu0 0.0
    %7354 = vmatprep.subr.mxu0 0.0
    %7355 = vmatpush2.msra.mxu0 0.0
    %7356 = vmatprep.subr.mxu0 0.0
    %7357 = vmatpush2.msra.mxu0 0.0
    %7358 = vmatprep.subr.mxu0 0.0
    %7359 = vmatpush2.msra.mxu0 0.0
    %7360 = vmatprep.subr.mxu0 0.0
    %7361 = vmatpush2.msra.mxu0 0.0
    %7362 = vmatprep.subr.mxu0 0.0
    %7363 = vmatpush2.msra.mxu0 0.0
    %7364 = vmatprep.subr.mxu0 0.0
    %7365 = vmatpush2.msra.mxu0 0.0
    %7366 = vmatprep.subr.mxu0 0.0
    %7367 = vmatpush2.msra.mxu0 0.0
    %7368 = vmatprep.subr.mxu0 0.0
    %7369 = vmatpush2.msra.mxu0 0.0
    %7370 = vmatprep.subr.mxu0 0.0
    %7371 = vmatpush2.msra.mxu0 0.0
    %7372 = vmatprep.mubr.f32.mxu0 0.0
    %7373 = vmatmul.mubr.f32.gmra.mxu0 %v6691
    %v7374 = vpop.f32.mrf.mxu0
    %v7375 = vadd.f32 0.0, %v7374
    %v7376 = vpop.f32.mrf.mxu0
    %7377 = vmatprep.mubr.f32.mxu0 0.0
    %7378 = vmatmul.mubr.f32.gmra.mxu0 %v6693
    %v7379 = vpop.f32.mrf.mxu0
    %v7380 = vadd.f32 0.0, %v7379
    %v7381 = vpop.f32.mrf.mxu0
    %7382 = vmatprep.mubr.f32.mxu0 0.0
    %7383 = vmatmul.mubr.f32.gmra.mxu0 %v6695
    %v7384 = vpop.f32.mrf.mxu0
    %v7385 = vadd.f32 0.0, %v7384
    %v7386 = vpop.f32.mrf.mxu0
    %7387 = vmatprep.mubr.f32.mxu0 0.0
    %7388 = vmatmul.mubr.f32.gmra.mxu0 %v6697
    %v7389 = vpop.f32.mrf.mxu0
    %v7390 = vadd.f32 0.0, %v7389
    %v7391 = vpop.f32.mrf.mxu0
    %7392 = vmatprep.mubr.f32.mxu0 0.0
    %7393 = vmatmul.mubr.f32.gmra.mxu0 %v6699
    %v7394 = vpop.f32.mrf.mxu0
    %v7395 = vadd.f32 0.0, %v7394
    %v7396 = vpop.f32.mrf.mxu0
    %7397 = vmatprep.mubr.f32.mxu0 0.0
    %7398 = vmatmul.mubr.f32.gmra.mxu0 %v6701
    %v7399 = vpop.f32.mrf.mxu0
    %v7400 = vadd.f32 0.0, %v7399
    %v7401 = vpop.f32.mrf.mxu0
    %7402 = vmatprep.mubr.f32.mxu0 0.0
    %7403 = vmatmul.mubr.f32.gmra.mxu0 %v6703
    %v7404 = vpop.f32.mrf.mxu0
    %v7405 = vadd.f32 0.0, %v7404
    %v7406 = vpop.f32.mrf.mxu0
    %7407 = vmatprep.mubr.f32.mxu0 0.0
    %7408 = vmatmul.mubr.f32.gmra.mxu0 %v7304
    %v7409 = vpop.f32.mrf.mxu0
    %v7410 = vadd.f32 0.0, %v7409
    %v7411 = vpop.f32.mrf.mxu0
    %7412 = vmatprep.mubr.f32.mxu0 0.0
    %7413 = vmatmul.mubr.f32.gmra.mxu0 %v6707
    %v7414 = vpop.f32.mrf.mxu0
    %v7415 = vadd.f32 0.0, %v7414
    %v7416 = vpop.f32.mrf.mxu0
    %7417 = vmatprep.mubr.f32.mxu0 0.0
    %7418 = vmatmul.mubr.f32.gmra.mxu0 %v6709
    %v7419 = vpop.f32.mrf.mxu0
    %v7420 = vadd.f32 0.0, %v7419
    %v7421 = vpop.f32.mrf.mxu0
    %7422 = vmatprep.mubr.f32.mxu0 0.0
    %7423 = vmatmul.mubr.f32.gmra.mxu0 %v6711
    %v7424 = vpop.f32.mrf.mxu0
    %v7425 = vadd.f32 0.0, %v7424
    %v7426 = vpop.f32.mrf.mxu0
    %7427 = vmatprep.mubr.f32.mxu0 0.0
    %7428 = vmatmul.mubr.f32.gmra.mxu0 %v6713
    %v7429 = vpop.f32.mrf.mxu0
    %v7430 = vadd.f32 0.0, %v7429
    %v7431 = vpop.f32.mrf.mxu0
    %7432 = vmatprep.mubr.f32.mxu0 0.0
    %7433 = vmatmul.mubr.f32.gmra.mxu0 %v6715
    %v7434 = vpop.f32.mrf.mxu0
    %v7435 = vadd.f32 0.0, %v7434
    %v7436 = vpop.f32.mrf.mxu0
    %7437 = vmatprep.mubr.f32.mxu0 0.0
    %7438 = vmatmul.mubr.f32.gmra.mxu0 %v6717
    %v7439 = vpop.f32.mrf.mxu0
    %v7440 = vadd.f32 0.0, %v7439
    %v7441 = vpop.f32.mrf.mxu0
    %7442 = vmatprep.mubr.f32.mxu0 0.0
    %7443 = vmatmul.mubr.f32.gmra.mxu0 %v6719
    %v7444 = vpop.f32.mrf.mxu0
    %v7445 = vadd.f32 0.0, %v7444
    %v7446 = vpop.f32.mrf.mxu0
    %7447 = vmatprep.mubr.f32.mxu0 0.0
    %7448 = vmatmul.mubr.f32.gmra.mxu0 %v7306
    %v7449 = vpop.f32.mrf.mxu0
    %v7450 = vadd.f32 0.0, %v7449
    %v7451 = vpop.f32.mrf.mxu0
    %7452 = vdwg.mxu0
    %v7453 = vadd.f32 %v7278, %v7375
    %v7454 = vadd.f32 %v7279, %v7380
    %v7455 = vadd.f32 %v7280, %v7385
    %v7456 = vadd.f32 %v7281, %v7390
    %v7457 = vadd.f32 %v7282, %v7395
    %v7458 = vadd.f32 %v7283, %v7400
    %v7459 = vadd.f32 %v7284, %v7405
    %v7460 = vadd.f32 %v7285, %v7410
    %v7461 = vadd.f32 %v7286, %v7415
    %v7462 = vadd.f32 %v7287, %v7420
    %v7463 = vadd.f32 %v7288, %v7425
    %v7464 = vadd.f32 %v7289, %v7430
    %v7465 = vadd.f32 %v7290, %v7435
    %v7466 = vadd.f32 %v7291, %v7440
    %v7467 = vadd.f32 %v7292, %v7445
    %v7468 = vadd.f32 %v7293, %v7450
    %v7469 = vrot.slane %v6381, 2
    %v7470 = vrot.slane %v6382, 2
    %v7471 = vsel %vm1438, %v7469, %v7470
    %v7472 = vrot.slane %v6401, 2
    %v7473 = vrot.slane %v6402, 2
    %v7474 = vsel %vm1438, %v7472, %v7473
    %s7475 = scalar_lea.vmem %s4, 40
    %v7476 = vld [vmem:[%s7475] sm:$0xff]
    %v7477 = vsel %vm6413, %v7471, 0
    %v7479 = vsel %vm6413, %v7474, 0
    %7481 = vmatprep.subr.mxu0 0.0
    %7482 = vmatpush1.msra.mxu0 0.0
    %7483 = vmatprep.subr.mxu0 0.0
    %7484 = vmatpush1.msra.mxu0 0.0
    %7485 = vmatprep.subr.mxu0 0.0
    %7486 = vmatpush1.msra.mxu0 0.0
    %7487 = vmatprep.subr.mxu0 0.0
    %7488 = vmatpush1.msra.mxu0 0.0
    %7489 = vmatprep.subr.mxu0 0.0
    %7490 = vmatpush1.msra.mxu0 0.0
    %7491 = vmatprep.subr.mxu0 0.0
    %7492 = vmatpush1.msra.mxu0 0.0
    %7493 = vmatprep.subr.mxu0 0.0
    %7494 = vmatpush1.msra.mxu0 0.0
    %7495 = vmatprep.subr.mxu0 0.0
    %7496 = vmatpush1.msra.mxu0 0.0
    %7497 = vmatprep.subr.mxu0 0.0
    %7498 = vmatpush1.msra.mxu0 0.0
    %7499 = vmatprep.subr.mxu0 0.0
    %7500 = vmatpush1.msra.mxu0 0.0
    %7501 = vmatprep.subr.mxu0 0.0
    %7502 = vmatpush1.msra.mxu0 0.0
    %7503 = vmatprep.subr.mxu0 0.0
    %7504 = vmatpush1.msra.mxu0 0.0
    %7505 = vmatprep.subr.mxu0 0.0
    %7506 = vmatpush1.msra.mxu0 0.0
    %7507 = vmatprep.subr.mxu0 0.0
    %7508 = vmatpush1.msra.mxu0 0.0
    %7509 = vmatprep.subr.mxu0 0.0
    %7510 = vmatpush1.msra.mxu0 0.0
    %7511 = vmatprep.subr.mxu0 0.0
    %7512 = vmatpush1.msra.mxu0 %v7476
    %7513 = vmatprep.subr.mxu0 0.0
    %7514 = vmatpush2.msra.mxu0 0.0
    %7515 = vmatprep.subr.mxu0 0.0
    %7516 = vmatpush2.msra.mxu0 0.0
    %7517 = vmatprep.subr.mxu0 0.0
    %7518 = vmatpush2.msra.mxu0 0.0
    %7519 = vmatprep.subr.mxu0 0.0
    %7520 = vmatpush2.msra.mxu0 0.0
    %7521 = vmatprep.subr.mxu0 0.0
    %7522 = vmatpush2.msra.mxu0 0.0
    %7523 = vmatprep.subr.mxu0 0.0
    %7524 = vmatpush2.msra.mxu0 0.0
    %7525 = vmatprep.subr.mxu0 0.0
    %7526 = vmatpush2.msra.mxu0 0.0
    %7527 = vmatprep.subr.mxu0 0.0
    %7528 = vmatpush2.msra.mxu0 0.0
    %7529 = vmatprep.subr.mxu0 0.0
    %7530 = vmatpush2.msra.mxu0 0.0
    %7531 = vmatprep.subr.mxu0 0.0
    %7532 = vmatpush2.msra.mxu0 0.0
    %7533 = vmatprep.subr.mxu0 0.0
    %7534 = vmatpush2.msra.mxu0 0.0
    %7535 = vmatprep.subr.mxu0 0.0
    %7536 = vmatpush2.msra.mxu0 0.0
    %7537 = vmatprep.subr.mxu0 0.0
    %7538 = vmatpush2.msra.mxu0 0.0
    %7539 = vmatprep.subr.mxu0 0.0
    %7540 = vmatpush2.msra.mxu0 0.0
    %7541 = vmatprep.subr.mxu0 0.0
    %7542 = vmatpush2.msra.mxu0 0.0
    %7543 = vmatprep.subr.mxu0 0.0
    %7544 = vmatpush2.msra.mxu0 0.0
    %7545 = vmatprep.mubr.f32.mxu0 0.0
    %7546 = vmatmul.mubr.f32.gmra.mxu0 %v6934
    %v7547 = vpop.f32.mrf.mxu0
    %v7548 = vadd.f32 0.0, %v7547
    %v7549 = vpop.f32.mrf.mxu0
    %7550 = vmatprep.mubr.f32.mxu0 0.0
    %7551 = vmatmul.mubr.f32.gmra.mxu0 %v6936
    %v7552 = vpop.f32.mrf.mxu0
    %v7553 = vadd.f32 0.0, %v7552
    %v7554 = vpop.f32.mrf.mxu0
    %7555 = vmatprep.mubr.f32.mxu0 0.0
    %7556 = vmatmul.mubr.f32.gmra.mxu0 %v6938
    %v7557 = vpop.f32.mrf.mxu0
    %v7558 = vadd.f32 0.0, %v7557
    %v7559 = vpop.f32.mrf.mxu0
    %7560 = vmatprep.mubr.f32.mxu0 0.0
    %7561 = vmatmul.mubr.f32.gmra.mxu0 %v6940
    %v7562 = vpop.f32.mrf.mxu0
    %v7563 = vadd.f32 0.0, %v7562
    %v7564 = vpop.f32.mrf.mxu0
    %7565 = vmatprep.mubr.f32.mxu0 0.0
    %7566 = vmatmul.mubr.f32.gmra.mxu0 %v6942
    %v7567 = vpop.f32.mrf.mxu0
    %v7568 = vadd.f32 0.0, %v7567
    %v7569 = vpop.f32.mrf.mxu0
    %7570 = vmatprep.mubr.f32.mxu0 0.0
    %7571 = vmatmul.mubr.f32.gmra.mxu0 %v6944
    %v7572 = vpop.f32.mrf.mxu0
    %v7573 = vadd.f32 0.0, %v7572
    %v7574 = vpop.f32.mrf.mxu0
    %7575 = vmatprep.mubr.f32.mxu0 0.0
    %7576 = vmatmul.mubr.f32.gmra.mxu0 %v6946
    %v7577 = vpop.f32.mrf.mxu0
    %v7578 = vadd.f32 0.0, %v7577
    %v7579 = vpop.f32.mrf.mxu0
    %7580 = vmatprep.mubr.f32.mxu0 0.0
    %7581 = vmatmul.mubr.f32.gmra.mxu0 %v7477
    %v7582 = vpop.f32.mrf.mxu0
    %v7583 = vadd.f32 0.0, %v7582
    %v7584 = vpop.f32.mrf.mxu0
    %7585 = vmatprep.mubr.f32.mxu0 0.0
    %7586 = vmatmul.mubr.f32.gmra.mxu0 %v6950
    %v7587 = vpop.f32.mrf.mxu0
    %v7588 = vadd.f32 0.0, %v7587
    %v7589 = vpop.f32.mrf.mxu0
    %7590 = vmatprep.mubr.f32.mxu0 0.0
    %7591 = vmatmul.mubr.f32.gmra.mxu0 %v6952
    %v7592 = vpop.f32.mrf.mxu0
    %v7593 = vadd.f32 0.0, %v7592
    %v7594 = vpop.f32.mrf.mxu0
    %7595 = vmatprep.mubr.f32.mxu0 0.0
    %7596 = vmatmul.mubr.f32.gmra.mxu0 %v6954
    %v7597 = vpop.f32.mrf.mxu0
    %v7598 = vadd.f32 0.0, %v7597
    %v7599 = vpop.f32.mrf.mxu0
    %7600 = vmatprep.mubr.f32.mxu0 0.0
    %7601 = vmatmul.mubr.f32.gmra.mxu0 %v6956
    %v7602 = vpop.f32.mrf.mxu0
    %v7603 = vadd.f32 0.0, %v7602
    %v7604 = vpop.f32.mrf.mxu0
    %7605 = vmatprep.mubr.f32.mxu0 0.0
    %7606 = vmatmul.mubr.f32.gmra.mxu0 %v6958
    %v7607 = vpop.f32.mrf.mxu0
    %v7608 = vadd.f32 0.0, %v7607
    %v7609 = vpop.f32.mrf.mxu0
    %7610 = vmatprep.mubr.f32.mxu0 0.0
    %7611 = vmatmul.mubr.f32.gmra.mxu0 %v6960
    %v7612 = vpop.f32.mrf.mxu0
    %v7613 = vadd.f32 0.0, %v7612
    %v7614 = vpop.f32.mrf.mxu0
    %7615 = vmatprep.mubr.f32.mxu0 0.0
    %7616 = vmatmul.mubr.f32.gmra.mxu0 %v6962
    %v7617 = vpop.f32.mrf.mxu0
    %v7618 = vadd.f32 0.0, %v7617
    %v7619 = vpop.f32.mrf.mxu0
    %7620 = vmatprep.mubr.f32.mxu0 0.0
    %7621 = vmatmul.mubr.f32.gmra.mxu0 %v7479
    %v7622 = vpop.f32.mrf.mxu0
    %v7623 = vadd.f32 0.0, %v7622
    %v7624 = vpop.f32.mrf.mxu0
    %7625 = vdwg.mxu0
    %v7626 = vadd.f32 %v7453, %v7548
    %v7627 = vadd.f32 %v7454, %v7553
    %v7628 = vadd.f32 %v7455, %v7558
    %v7629 = vadd.f32 %v7456, %v7563
    %v7630 = vadd.f32 %v7457, %v7568
    %v7631 = vadd.f32 %v7458, %v7573
    %v7632 = vadd.f32 %v7459, %v7578
    %v7633 = vadd.f32 %v7460, %v7583
    %v7634 = vadd.f32 %v7461, %v7588
    %v7635 = vadd.f32 %v7462, %v7593
    %v7636 = vadd.f32 %v7463, %v7598
    %v7637 = vadd.f32 %v7464, %v7603
    %v7638 = vadd.f32 %v7465, %v7608
    %v7639 = vadd.f32 %v7466, %v7613
    %v7640 = vadd.f32 %v7467, %v7618
    %v7641 = vadd.f32 %v7468, %v7623
    %s7642 = scalar_lea.vmem %s4, 48
    %v7643 = vld [vmem:[%s7642] sm:$0xff]
    %v7645 = vsel %vm6413, %v6383, 0
    %v7648 = vsel %vm6413, %v6403, 0
    %7650 = vmatprep.subr.mxu0 0.0
    %7651 = vmatpush1.msra.mxu0 0.0
    %7652 = vmatprep.subr.mxu0 0.0
    %7653 = vmatpush1.msra.mxu0 0.0
    %7654 = vmatprep.subr.mxu0 0.0
    %7655 = vmatpush1.msra.mxu0 0.0
    %7656 = vmatprep.subr.mxu0 0.0
    %7657 = vmatpush1.msra.mxu0 0.0
    %7658 = vmatprep.subr.mxu0 0.0
    %7659 = vmatpush1.msra.mxu0 0.0
    %7660 = vmatprep.subr.mxu0 0.0
    %7661 = vmatpush1.msra.mxu0 0.0
    %7662 = vmatprep.subr.mxu0 0.0
    %7663 = vmatpush1.msra.mxu0 0.0
    %7664 = vmatprep.subr.mxu0 0.0
    %7665 = vmatpush1.msra.mxu0 0.0
    %7666 = vmatprep.subr.mxu0 0.0
    %7667 = vmatpush1.msra.mxu0 0.0
    %7668 = vmatprep.subr.mxu0 0.0
    %7669 = vmatpush1.msra.mxu0 0.0
    %7670 = vmatprep.subr.mxu0 0.0
    %7671 = vmatpush1.msra.mxu0 0.0
    %7672 = vmatprep.subr.mxu0 0.0
    %7673 = vmatpush1.msra.mxu0 0.0
    %7674 = vmatprep.subr.mxu0 0.0
    %7675 = vmatpush1.msra.mxu0 0.0
    %7676 = vmatprep.subr.mxu0 0.0
    %7677 = vmatpush1.msra.mxu0 0.0
    %7678 = vmatprep.subr.mxu0 0.0
    %7679 = vmatpush1.msra.mxu0 0.0
    %7680 = vmatprep.subr.mxu0 0.0
    %7681 = vmatpush1.msra.mxu0 %v7643
    %7682 = vmatprep.subr.mxu0 0.0
    %7683 = vmatpush2.msra.mxu0 0.0
    %7684 = vmatprep.subr.mxu0 0.0
    %7685 = vmatpush2.msra.mxu0 0.0
    %7686 = vmatprep.subr.mxu0 0.0
    %7687 = vmatpush2.msra.mxu0 0.0
    %7688 = vmatprep.subr.mxu0 0.0
    %7689 = vmatpush2.msra.mxu0 0.0
    %7690 = vmatprep.subr.mxu0 0.0
    %7691 = vmatpush2.msra.mxu0 0.0
    %7692 = vmatprep.subr.mxu0 0.0
    %7693 = vmatpush2.msra.mxu0 0.0
    %7694 = vmatprep.subr.mxu0 0.0
    %7695 = vmatpush2.msra.mxu0 0.0
    %7696 = vmatprep.subr.mxu0 0.0
    %7697 = vmatpush2.msra.mxu0 0.0
    %7698 = vmatprep.subr.mxu0 0.0
    %7699 = vmatpush2.msra.mxu0 0.0
    %7700 = vmatprep.subr.mxu0 0.0
    %7701 = vmatpush2.msra.mxu0 0.0
    %7702 = vmatprep.subr.mxu0 0.0
    %7703 = vmatpush2.msra.mxu0 0.0
    %7704 = vmatprep.subr.mxu0 0.0
    %7705 = vmatpush2.msra.mxu0 0.0
    %7706 = vmatprep.subr.mxu0 0.0
    %7707 = vmatpush2.msra.mxu0 0.0
    %7708 = vmatprep.subr.mxu0 0.0
    %7709 = vmatpush2.msra.mxu0 0.0
    %7710 = vmatprep.subr.mxu0 0.0
    %7711 = vmatpush2.msra.mxu0 0.0
    %7712 = vmatprep.subr.mxu0 0.0
    %7713 = vmatpush2.msra.mxu0 0.0
    %7714 = vmatprep.mubr.f32.mxu0 0.0
    %7715 = vmatmul.mubr.f32.gmra.mxu0 %v6421
    %v7716 = vpop.f32.mrf.mxu0
    %v7717 = vadd.f32 0.0, %v7716
    %v7718 = vpop.f32.mrf.mxu0
    %7719 = vmatprep.mubr.f32.mxu0 0.0
    %7720 = vmatmul.mubr.f32.gmra.mxu0 %v6424
    %v7721 = vpop.f32.mrf.mxu0
    %v7722 = vadd.f32 0.0, %v7721
    %v7723 = vpop.f32.mrf.mxu0
    %7724 = vmatprep.mubr.f32.mxu0 0.0
    %7725 = vmatmul.mubr.f32.gmra.mxu0 %v6427
    %v7726 = vpop.f32.mrf.mxu0
    %v7727 = vadd.f32 0.0, %v7726
    %v7728 = vpop.f32.mrf.mxu0
    %7729 = vmatprep.mubr.f32.mxu0 0.0
    %7730 = vmatmul.mubr.f32.gmra.mxu0 %v6430
    %v7731 = vpop.f32.mrf.mxu0
    %v7732 = vadd.f32 0.0, %v7731
    %v7733 = vpop.f32.mrf.mxu0
    %7734 = vmatprep.mubr.f32.mxu0 0.0
    %7735 = vmatmul.mubr.f32.gmra.mxu0 %v6433
    %v7736 = vpop.f32.mrf.mxu0
    %v7737 = vadd.f32 0.0, %v7736
    %v7738 = vpop.f32.mrf.mxu0
    %7739 = vmatprep.mubr.f32.mxu0 0.0
    %7740 = vmatmul.mubr.f32.gmra.mxu0 %v6436
    %v7741 = vpop.f32.mrf.mxu0
    %v7742 = vadd.f32 0.0, %v7741
    %v7743 = vpop.f32.mrf.mxu0
    %7744 = vmatprep.mubr.f32.mxu0 0.0
    %7745 = vmatmul.mubr.f32.gmra.mxu0 %v7128
    %v7746 = vpop.f32.mrf.mxu0
    %v7747 = vadd.f32 0.0, %v7746
    %v7748 = vpop.f32.mrf.mxu0
    %7749 = vmatprep.mubr.f32.mxu0 0.0
    %7750 = vmatmul.mubr.f32.gmra.mxu0 %v7645
    %v7751 = vpop.f32.mrf.mxu0
    %v7752 = vadd.f32 0.0, %v7751
    %v7753 = vpop.f32.mrf.mxu0
    %7754 = vmatprep.mubr.f32.mxu0 0.0
    %7755 = vmatmul.mubr.f32.gmra.mxu0 %v6445
    %v7756 = vpop.f32.mrf.mxu0
    %v7757 = vadd.f32 0.0, %v7756
    %v7758 = vpop.f32.mrf.mxu0
    %7759 = vmatprep.mubr.f32.mxu0 0.0
    %7760 = vmatmul.mubr.f32.gmra.mxu0 %v6448
    %v7761 = vpop.f32.mrf.mxu0
    %v7762 = vadd.f32 0.0, %v7761
    %v7763 = vpop.f32.mrf.mxu0
    %7764 = vmatprep.mubr.f32.mxu0 0.0
    %7765 = vmatmul.mubr.f32.gmra.mxu0 %v6451
    %v7766 = vpop.f32.mrf.mxu0
    %v7767 = vadd.f32 0.0, %v7766
    %v7768 = vpop.f32.mrf.mxu0
    %7769 = vmatprep.mubr.f32.mxu0 0.0
    %7770 = vmatmul.mubr.f32.gmra.mxu0 %v6454
    %v7771 = vpop.f32.mrf.mxu0
    %v7772 = vadd.f32 0.0, %v7771
    %v7773 = vpop.f32.mrf.mxu0
    %7774 = vmatprep.mubr.f32.mxu0 0.0
    %7775 = vmatmul.mubr.f32.gmra.mxu0 %v6457
    %v7776 = vpop.f32.mrf.mxu0
    %v7777 = vadd.f32 0.0, %v7776
    %v7778 = vpop.f32.mrf.mxu0
    %7779 = vmatprep.mubr.f32.mxu0 0.0
    %7780 = vmatmul.mubr.f32.gmra.mxu0 %v6460
    %v7781 = vpop.f32.mrf.mxu0
    %v7782 = vadd.f32 0.0, %v7781
    %v7783 = vpop.f32.mrf.mxu0
    %7784 = vmatprep.mubr.f32.mxu0 0.0
    %7785 = vmatmul.mubr.f32.gmra.mxu0 %v7131
    %v7786 = vpop.f32.mrf.mxu0
    %v7787 = vadd.f32 0.0, %v7786
    %v7788 = vpop.f32.mrf.mxu0
    %7789 = vmatprep.mubr.f32.mxu0 0.0
    %7790 = vmatmul.mubr.f32.gmra.mxu0 %v7648
    %v7791 = vpop.f32.mrf.mxu0
    %v7792 = vadd.f32 0.0, %v7791
    %v7793 = vpop.f32.mrf.mxu0
    %7794 = vdwg.mxu0
    %v7795 = vadd.f32 %v7626, %v7717
    %v7796 = vadd.f32 %v7627, %v7722
    %v7797 = vadd.f32 %v7628, %v7727
    %v7798 = vadd.f32 %v7629, %v7732
    %v7799 = vadd.f32 %v7630, %v7737
    %v7800 = vadd.f32 %v7631, %v7742
    %v7801 = vadd.f32 %v7632, %v7747
    %v7802 = vadd.f32 %v7633, %v7752
    %v7803 = vadd.f32 %v7634, %v7757
    %v7804 = vadd.f32 %v7635, %v7762
    %v7805 = vadd.f32 %v7636, %v7767
    %v7806 = vadd.f32 %v7637, %v7772
    %v7807 = vadd.f32 %v7638, %v7777
    %v7808 = vadd.f32 %v7639, %v7782
    %v7809 = vadd.f32 %v7640, %v7787
    %v7810 = vadd.f32 %v7641, %v7792
    %v7813 = vrot.slane %v6383, 1
    %v7814 = vrot.slane %v6384, 1
    %v7815 = vsel %vm241, %v7813, %v7814
    %v7816 = vrot.slane %v6403, 1
    %v7817 = vrot.slane %v6404, 1
    %v7818 = vsel %vm241, %v7816, %v7817
    %s7819 = scalar_lea.vmem %s4, 56
    %v7820 = vld [vmem:[%s7819] sm:$0xff]
    %v7821 = vsel %vm6413, %v7815, 0
    %v7823 = vsel %vm6413, %v7818, 0
    %7825 = vmatprep.subr.mxu0 0.0
    %7826 = vmatpush1.msra.mxu0 0.0
    %7827 = vmatprep.subr.mxu0 0.0
    %7828 = vmatpush1.msra.mxu0 0.0
    %7829 = vmatprep.subr.mxu0 0.0
    %7830 = vmatpush1.msra.mxu0 0.0
    %7831 = vmatprep.subr.mxu0 0.0
    %7832 = vmatpush1.msra.mxu0 0.0
    %7833 = vmatprep.subr.mxu0 0.0
    %7834 = vmatpush1.msra.mxu0 0.0
    %7835 = vmatprep.subr.mxu0 0.0
    %7836 = vmatpush1.msra.mxu0 0.0
    %7837 = vmatprep.subr.mxu0 0.0
    %7838 = vmatpush1.msra.mxu0 0.0
    %7839 = vmatprep.subr.mxu0 0.0
    %7840 = vmatpush1.msra.mxu0 0.0
    %7841 = vmatprep.subr.mxu0 0.0
    %7842 = vmatpush1.msra.mxu0 0.0
    %7843 = vmatprep.subr.mxu0 0.0
    %7844 = vmatpush1.msra.mxu0 0.0
    %7845 = vmatprep.subr.mxu0 0.0
    %7846 = vmatpush1.msra.mxu0 0.0
    %7847 = vmatprep.subr.mxu0 0.0
    %7848 = vmatpush1.msra.mxu0 0.0
    %7849 = vmatprep.subr.mxu0 0.0
    %7850 = vmatpush1.msra.mxu0 0.0
    %7851 = vmatprep.subr.mxu0 0.0
    %7852 = vmatpush1.msra.mxu0 0.0
    %7853 = vmatprep.subr.mxu0 0.0
    %7854 = vmatpush1.msra.mxu0 0.0
    %7855 = vmatprep.subr.mxu0 0.0
    %7856 = vmatpush1.msra.mxu0 %v7820
    %7857 = vmatprep.subr.mxu0 0.0
    %7858 = vmatpush2.msra.mxu0 0.0
    %7859 = vmatprep.subr.mxu0 0.0
    %7860 = vmatpush2.msra.mxu0 0.0
    %7861 = vmatprep.subr.mxu0 0.0
    %7862 = vmatpush2.msra.mxu0 0.0
    %7863 = vmatprep.subr.mxu0 0.0
    %7864 = vmatpush2.msra.mxu0 0.0
    %7865 = vmatprep.subr.mxu0 0.0
    %7866 = vmatpush2.msra.mxu0 0.0
    %7867 = vmatprep.subr.mxu0 0.0
    %7868 = vmatpush2.msra.mxu0 0.0
    %7869 = vmatprep.subr.mxu0 0.0
    %7870 = vmatpush2.msra.mxu0 0.0
    %7871 = vmatprep.subr.mxu0 0.0
    %7872 = vmatpush2.msra.mxu0 0.0
    %7873 = vmatprep.subr.mxu0 0.0
    %7874 = vmatpush2.msra.mxu0 0.0
    %7875 = vmatprep.subr.mxu0 0.0
    %7876 = vmatpush2.msra.mxu0 0.0
    %7877 = vmatprep.subr.mxu0 0.0
    %7878 = vmatpush2.msra.mxu0 0.0
    %7879 = vmatprep.subr.mxu0 0.0
    %7880 = vmatpush2.msra.mxu0 0.0
    %7881 = vmatprep.subr.mxu0 0.0
    %7882 = vmatpush2.msra.mxu0 0.0
    %7883 = vmatprep.subr.mxu0 0.0
    %7884 = vmatpush2.msra.mxu0 0.0
    %7885 = vmatprep.subr.mxu0 0.0
    %7886 = vmatpush2.msra.mxu0 0.0
    %7887 = vmatprep.subr.mxu0 0.0
    %7888 = vmatpush2.msra.mxu0 0.0
    %7889 = vmatprep.mubr.f32.mxu0 0.0
    %7890 = vmatmul.mubr.f32.gmra.mxu0 %v6693
    %v7891 = vpop.f32.mrf.mxu0
    %v7892 = vadd.f32 0.0, %v7891
    %v7893 = vpop.f32.mrf.mxu0
    %7894 = vmatprep.mubr.f32.mxu0 0.0
    %7895 = vmatmul.mubr.f32.gmra.mxu0 %v6695
    %v7896 = vpop.f32.mrf.mxu0
    %v7897 = vadd.f32 0.0, %v7896
    %v7898 = vpop.f32.mrf.mxu0
    %7899 = vmatprep.mubr.f32.mxu0 0.0
    %7900 = vmatmul.mubr.f32.gmra.mxu0 %v6697
    %v7901 = vpop.f32.mrf.mxu0
    %v7902 = vadd.f32 0.0, %v7901
    %v7903 = vpop.f32.mrf.mxu0
    %7904 = vmatprep.mubr.f32.mxu0 0.0
    %7905 = vmatmul.mubr.f32.gmra.mxu0 %v6699
    %v7906 = vpop.f32.mrf.mxu0
    %v7907 = vadd.f32 0.0, %v7906
    %v7908 = vpop.f32.mrf.mxu0
    %7909 = vmatprep.mubr.f32.mxu0 0.0
    %7910 = vmatmul.mubr.f32.gmra.mxu0 %v6701
    %v7911 = vpop.f32.mrf.mxu0
    %v7912 = vadd.f32 0.0, %v7911
    %v7913 = vpop.f32.mrf.mxu0
    %7914 = vmatprep.mubr.f32.mxu0 0.0
    %7915 = vmatmul.mubr.f32.gmra.mxu0 %v6703
    %v7916 = vpop.f32.mrf.mxu0
    %v7917 = vadd.f32 0.0, %v7916
    %v7918 = vpop.f32.mrf.mxu0
    %7919 = vmatprep.mubr.f32.mxu0 0.0
    %7920 = vmatmul.mubr.f32.gmra.mxu0 %v7304
    %v7921 = vpop.f32.mrf.mxu0
    %v7922 = vadd.f32 0.0, %v7921
    %v7923 = vpop.f32.mrf.mxu0
    %7924 = vmatprep.mubr.f32.mxu0 0.0
    %7925 = vmatmul.mubr.f32.gmra.mxu0 %v7821
    %v7926 = vpop.f32.mrf.mxu0
    %v7927 = vadd.f32 0.0, %v7926
    %v7928 = vpop.f32.mrf.mxu0
    %7929 = vmatprep.mubr.f32.mxu0 0.0
    %7930 = vmatmul.mubr.f32.gmra.mxu0 %v6709
    %v7931 = vpop.f32.mrf.mxu0
    %v7932 = vadd.f32 0.0, %v7931
    %v7933 = vpop.f32.mrf.mxu0
    %7934 = vmatprep.mubr.f32.mxu0 0.0
    %7935 = vmatmul.mubr.f32.gmra.mxu0 %v6711
    %v7936 = vpop.f32.mrf.mxu0
    %v7937 = vadd.f32 0.0, %v7936
    %v7938 = vpop.f32.mrf.mxu0
    %7939 = vmatprep.mubr.f32.mxu0 0.0
    %7940 = vmatmul.mubr.f32.gmra.mxu0 %v6713
    %v7941 = vpop.f32.mrf.mxu0
    %v7942 = vadd.f32 0.0, %v7941
    %v7943 = vpop.f32.mrf.mxu0
    %7944 = vmatprep.mubr.f32.mxu0 0.0
    %7945 = vmatmul.mubr.f32.gmra.mxu0 %v6715
    %v7946 = vpop.f32.mrf.mxu0
    %v7947 = vadd.f32 0.0, %v7946
    %v7948 = vpop.f32.mrf.mxu0
    %7949 = vmatprep.mubr.f32.mxu0 0.0
    %7950 = vmatmul.mubr.f32.gmra.mxu0 %v6717
    %v7951 = vpop.f32.mrf.mxu0
    %v7952 = vadd.f32 0.0, %v7951
    %v7953 = vpop.f32.mrf.mxu0
    %7954 = vmatprep.mubr.f32.mxu0 0.0
    %7955 = vmatmul.mubr.f32.gmra.mxu0 %v6719
    %v7956 = vpop.f32.mrf.mxu0
    %v7957 = vadd.f32 0.0, %v7956
    %v7958 = vpop.f32.mrf.mxu0
    %7959 = vmatprep.mubr.f32.mxu0 0.0
    %7960 = vmatmul.mubr.f32.gmra.mxu0 %v7306
    %v7961 = vpop.f32.mrf.mxu0
    %v7962 = vadd.f32 0.0, %v7961
    %v7963 = vpop.f32.mrf.mxu0
    %7964 = vmatprep.mubr.f32.mxu0 0.0
    %7965 = vmatmul.mubr.f32.gmra.mxu0 %v7823
    %v7966 = vpop.f32.mrf.mxu0
    %v7967 = vadd.f32 0.0, %v7966
    %v7968 = vpop.f32.mrf.mxu0
    %7969 = vdwg.mxu0
    %v7970 = vadd.f32 %v7795, %v7892
    %v7971 = vadd.f32 %v7796, %v7897
    %v7972 = vadd.f32 %v7797, %v7902
    %v7973 = vadd.f32 %v7798, %v7907
    %v7974 = vadd.f32 %v7799, %v7912
    %v7975 = vadd.f32 %v7800, %v7917
    %v7976 = vadd.f32 %v7801, %v7922
    %v7977 = vadd.f32 %v7802, %v7927
    %v7978 = vadd.f32 %v7803, %v7932
    %v7979 = vadd.f32 %v7804, %v7937
    %v7980 = vadd.f32 %v7805, %v7942
    %v7981 = vadd.f32 %v7806, %v7947
    %v7982 = vadd.f32 %v7807, %v7952
    %v7983 = vadd.f32 %v7808, %v7957
    %v7984 = vadd.f32 %v7809, %v7962
    %v7985 = vadd.f32 %v7810, %v7967
    %v7986 = vrot.slane %v6383, 2
    %v7987 = vrot.slane %v6384, 2
    %v7988 = vsel %vm1438, %v7986, %v7987
    %v7989 = vrot.slane %v6403, 2
    %v7990 = vrot.slane %v6404, 2
    %v7991 = vsel %vm1438, %v7989, %v7990
    %s7992 = scalar_lea.vmem %s4, 64
    %v7993 = vld [vmem:[%s7992] sm:$0xff]
    %v7994 = vsel %vm6413, %v7988, 0
    %v7996 = vsel %vm6413, %v7991, 0
    %7998 = vmatprep.subr.mxu0 0.0
    %7999 = vmatpush1.msra.mxu0 0.0
    %8000 = vmatprep.subr.mxu0 0.0
    %8001 = vmatpush1.msra.mxu0 0.0
    %8002 = vmatprep.subr.mxu0 0.0
    %8003 = vmatpush1.msra.mxu0 0.0
    %8004 = vmatprep.subr.mxu0 0.0
    %8005 = vmatpush1.msra.mxu0 0.0
    %8006 = vmatprep.subr.mxu0 0.0
    %8007 = vmatpush1.msra.mxu0 0.0
    %8008 = vmatprep.subr.mxu0 0.0
    %8009 = vmatpush1.msra.mxu0 0.0
    %8010 = vmatprep.subr.mxu0 0.0
    %8011 = vmatpush1.msra.mxu0 0.0
    %8012 = vmatprep.subr.mxu0 0.0
    %8013 = vmatpush1.msra.mxu0 0.0
    %8014 = vmatprep.subr.mxu0 0.0
    %8015 = vmatpush1.msra.mxu0 0.0
    %8016 = vmatprep.subr.mxu0 0.0
    %8017 = vmatpush1.msra.mxu0 0.0
    %8018 = vmatprep.subr.mxu0 0.0
    %8019 = vmatpush1.msra.mxu0 0.0
    %8020 = vmatprep.subr.mxu0 0.0
    %8021 = vmatpush1.msra.mxu0 0.0
    %8022 = vmatprep.subr.mxu0 0.0
    %8023 = vmatpush1.msra.mxu0 0.0
    %8024 = vmatprep.subr.mxu0 0.0
    %8025 = vmatpush1.msra.mxu0 0.0
    %8026 = vmatprep.subr.mxu0 0.0
    %8027 = vmatpush1.msra.mxu0 0.0
    %8028 = vmatprep.subr.mxu0 0.0
    %8029 = vmatpush1.msra.mxu0 %v7993
    %8030 = vmatprep.subr.mxu0 0.0
    %8031 = vmatpush2.msra.mxu0 0.0
    %8032 = vmatprep.subr.mxu0 0.0
    %8033 = vmatpush2.msra.mxu0 0.0
    %8034 = vmatprep.subr.mxu0 0.0
    %8035 = vmatpush2.msra.mxu0 0.0
    %8036 = vmatprep.subr.mxu0 0.0
    %8037 = vmatpush2.msra.mxu0 0.0
    %8038 = vmatprep.subr.mxu0 0.0
    %8039 = vmatpush2.msra.mxu0 0.0
    %8040 = vmatprep.subr.mxu0 0.0
    %8041 = vmatpush2.msra.mxu0 0.0
    %8042 = vmatprep.subr.mxu0 0.0
    %8043 = vmatpush2.msra.mxu0 0.0
    %8044 = vmatprep.subr.mxu0 0.0
    %8045 = vmatpush2.msra.mxu0 0.0
    %8046 = vmatprep.subr.mxu0 0.0
    %8047 = vmatpush2.msra.mxu0 0.0
    %8048 = vmatprep.subr.mxu0 0.0
    %8049 = vmatpush2.msra.mxu0 0.0
    %8050 = vmatprep.subr.mxu0 0.0
    %8051 = vmatpush2.msra.mxu0 0.0
    %8052 = vmatprep.subr.mxu0 0.0
    %8053 = vmatpush2.msra.mxu0 0.0
    %8054 = vmatprep.subr.mxu0 0.0
    %8055 = vmatpush2.msra.mxu0 0.0
    %8056 = vmatprep.subr.mxu0 0.0
    %8057 = vmatpush2.msra.mxu0 0.0
    %8058 = vmatprep.subr.mxu0 0.0
    %8059 = vmatpush2.msra.mxu0 0.0
    %8060 = vmatprep.subr.mxu0 0.0
    %8061 = vmatpush2.msra.mxu0 0.0
    %8062 = vmatprep.mubr.f32.mxu0 0.0
    %8063 = vmatmul.mubr.f32.gmra.mxu0 %v6936
    %v8064 = vpop.f32.mrf.mxu0
    %v8065 = vadd.f32 0.0, %v8064
    %v8066 = vpop.f32.mrf.mxu0
    %8067 = vmatprep.mubr.f32.mxu0 0.0
    %8068 = vmatmul.mubr.f32.gmra.mxu0 %v6938
    %v8069 = vpop.f32.mrf.mxu0
    %v8070 = vadd.f32 0.0, %v8069
    %v8071 = vpop.f32.mrf.mxu0
    %8072 = vmatprep.mubr.f32.mxu0 0.0
    %8073 = vmatmul.mubr.f32.gmra.mxu0 %v6940
    %v8074 = vpop.f32.mrf.mxu0
    %v8075 = vadd.f32 0.0, %v8074
    %v8076 = vpop.f32.mrf.mxu0
    %8077 = vmatprep.mubr.f32.mxu0 0.0
    %8078 = vmatmul.mubr.f32.gmra.mxu0 %v6942
    %v8079 = vpop.f32.mrf.mxu0
    %v8080 = vadd.f32 0.0, %v8079
    %v8081 = vpop.f32.mrf.mxu0
    %8082 = vmatprep.mubr.f32.mxu0 0.0
    %8083 = vmatmul.mubr.f32.gmra.mxu0 %v6944
    %v8084 = vpop.f32.mrf.mxu0
    %v8085 = vadd.f32 0.0, %v8084
    %v8086 = vpop.f32.mrf.mxu0
    %8087 = vmatprep.mubr.f32.mxu0 0.0
    %8088 = vmatmul.mubr.f32.gmra.mxu0 %v6946
    %v8089 = vpop.f32.mrf.mxu0
    %v8090 = vadd.f32 0.0, %v8089
    %v8091 = vpop.f32.mrf.mxu0
    %8092 = vmatprep.mubr.f32.mxu0 0.0
    %8093 = vmatmul.mubr.f32.gmra.mxu0 %v7477
    %v8094 = vpop.f32.mrf.mxu0
    %v8095 = vadd.f32 0.0, %v8094
    %v8096 = vpop.f32.mrf.mxu0
    %8097 = vmatprep.mubr.f32.mxu0 0.0
    %8098 = vmatmul.mubr.f32.gmra.mxu0 %v7994
    %v8099 = vpop.f32.mrf.mxu0
    %v8100 = vadd.f32 0.0, %v8099
    %v8101 = vpop.f32.mrf.mxu0
    %8102 = vmatprep.mubr.f32.mxu0 0.0
    %8103 = vmatmul.mubr.f32.gmra.mxu0 %v6952
    %v8104 = vpop.f32.mrf.mxu0
    %v8105 = vadd.f32 0.0, %v8104
    %v8106 = vpop.f32.mrf.mxu0
    %8107 = vmatprep.mubr.f32.mxu0 0.0
    %8108 = vmatmul.mubr.f32.gmra.mxu0 %v6954
    %v8109 = vpop.f32.mrf.mxu0
    %v8110 = vadd.f32 0.0, %v8109
    %v8111 = vpop.f32.mrf.mxu0
    %8112 = vmatprep.mubr.f32.mxu0 0.0
    %8113 = vmatmul.mubr.f32.gmra.mxu0 %v6956
    %v8114 = vpop.f32.mrf.mxu0
    %v8115 = vadd.f32 0.0, %v8114
    %v8116 = vpop.f32.mrf.mxu0
    %8117 = vmatprep.mubr.f32.mxu0 0.0
    %8118 = vmatmul.mubr.f32.gmra.mxu0 %v6958
    %v8119 = vpop.f32.mrf.mxu0
    %v8120 = vadd.f32 0.0, %v8119
    %v8121 = vpop.f32.mrf.mxu0
    %8122 = vmatprep.mubr.f32.mxu0 0.0
    %8123 = vmatmul.mubr.f32.gmra.mxu0 %v6960
    %v8124 = vpop.f32.mrf.mxu0
    %v8125 = vadd.f32 0.0, %v8124
    %v8126 = vpop.f32.mrf.mxu0
    %8127 = vmatprep.mubr.f32.mxu0 0.0
    %8128 = vmatmul.mubr.f32.gmra.mxu0 %v6962
    %v8129 = vpop.f32.mrf.mxu0
    %v8130 = vadd.f32 0.0, %v8129
    %v8131 = vpop.f32.mrf.mxu0
    %8132 = vmatprep.mubr.f32.mxu0 0.0
    %8133 = vmatmul.mubr.f32.gmra.mxu0 %v7479
    %v8134 = vpop.f32.mrf.mxu0
    %v8135 = vadd.f32 0.0, %v8134
    %v8136 = vpop.f32.mrf.mxu0
    %8137 = vmatprep.mubr.f32.mxu0 0.0
    %8138 = vmatmul.mubr.f32.gmra.mxu0 %v7996
    %v8139 = vpop.f32.mrf.mxu0
    %v8140 = vadd.f32 0.0, %v8139
    %v8141 = vpop.f32.mrf.mxu0
    %8142 = vdwg.mxu0
    %v8143 = vadd.f32 %v7970, %v8065
    %v8144 = vadd.f32 %v7971, %v8070
    %v8145 = vadd.f32 %v7972, %v8075
    %v8146 = vadd.f32 %v7973, %v8080
    %v8147 = vadd.f32 %v7974, %v8085
    %v8148 = vadd.f32 %v7975, %v8090
    %v8149 = vadd.f32 %v7976, %v8095
    %v8150 = vadd.f32 %v7977, %v8100
    %v8151 = vadd.f32 %v7978, %v8105
    %v8152 = vadd.f32 %v7979, %v8110
    %v8153 = vadd.f32 %v7980, %v8115
    %v8154 = vadd.f32 %v7981, %v8120
    %v8155 = vadd.f32 %v7982, %v8125
    %v8156 = vadd.f32 %v7983, %v8130
    %v8157 = vadd.f32 %v7984, %v8135
    %v8158 = vadd.f32 %v7985, %v8140
    %v8159 = vmax.f32 %v8143, 0.0
    %v8160 = vmax.f32 %v8144, 0.0
    %v8161 = vmax.f32 %v8145, 0.0
    %v8162 = vmax.f32 %v8146, 0.0
    %v8163 = vmax.f32 %v8147, 0.0
    %v8164 = vmax.f32 %v8148, 0.0
    %v8165 = vmax.f32 %v8149, 0.0
    %v8166 = vmax.f32 %v8150, 0.0
    %v8167 = vmax.f32 %v8151, 0.0
    %v8168 = vmax.f32 %v8152, 0.0
    %v8169 = vmax.f32 %v8153, 0.0
    %v8170 = vmax.f32 %v8154, 0.0
    %v8171 = vmax.f32 %v8155, 0.0
    %v8172 = vmax.f32 %v8156, 0.0
    %v8173 = vmax.f32 %v8157, 0.0
    %v8174 = vmax.f32 %v8158, 0.0
    %v8175 = vmax.f32 %v8159, %v8160
    %v8176 = vmax.f32 %v8161, %v8162
    %v8177 = vmax.f32 %v8163, %v8164
    %v8178 = vmax.f32 %v8165, %v8166
    %v8179 = vmax.f32 %v8167, %v8168
    %v8180 = vmax.f32 %v8169, %v8170
    %v8181 = vmax.f32 %v8171, %v8172
    %v8182 = vmax.f32 %v8173, %v8174
    %v8183 = vmul.u32 %v5244, 32
    %v8184 = vadd.s32 %v8183, 8
    %v8185 = vadd.s32 %v8183, 16
    %v8186 = vadd.s32 %v8183, 24
    %v8187 = vadd.s32 %v8183, 2
    %v8188 = vadd.s32 %v8183, 4
    %v8189 = vadd.s32 %v8183, 6
    %v8190 = vadd.s32 %v8184, 2
    %v8191 = vadd.s32 %v8184, 4
    %v8192 = vadd.s32 %v8184, 6
    %v8193 = vadd.s32 %v8185, 2
    %v8194 = vadd.s32 %v8185, 4
    %v8195 = vadd.s32 %v8185, 6
    %v8196 = vadd.s32 %v8186, 2
    %v8197 = vadd.s32 %v8186, 4
    %v8198 = vadd.s32 %v8186, 6
    %v8199 = vsub.s32 %v5247, %v8183
    %v8200 = vsub.s32 %v5247, %v8187
    %v8201 = vsub.s32 %v5247, %v8188
    %v8202 = vsub.s32 %v5247, %v8189
    %v8203 = vsub.s32 %v5247, %v8184
    %v8204 = vsub.s32 %v5247, %v8190
    %v8205 = vsub.s32 %v5247, %v8191
    %v8206 = vsub.s32 %v5247, %v8192
    %v8207 = vsub.s32 %v5247, %v8185
    %v8208 = vsub.s32 %v5247, %v8193
    %v8209 = vsub.s32 %v5247, %v8194
    %v8210 = vsub.s32 %v5247, %v8195
    %v8211 = vsub.s32 %v5247, %v8186
    %v8212 = vsub.s32 %v5247, %v8196
    %v8213 = vsub.s32 %v5247, %v8197
    %v8214 = vsub.s32 %v5247, %v8198
    %vm8215 = vcmp.eq.s32.totalorder %v8199, 0
    %vm8216 = vcmp.eq.s32.totalorder %v8200, 0
    %vm8217 = vcmp.eq.s32.totalorder %v8201, 0
    %vm8218 = vcmp.eq.s32.totalorder %v8202, 0
    %vm8219 = vcmp.eq.s32.totalorder %v8203, 0
    %vm8220 = vcmp.eq.s32.totalorder %v8204, 0
    %vm8221 = vcmp.eq.s32.totalorder %v8205, 0
    %vm8222 = vcmp.eq.s32.totalorder %v8206, 0
    %vm8223 = vcmp.eq.s32.totalorder %v8207, 0
    %vm8224 = vcmp.eq.s32.totalorder %v8208, 0
    %vm8225 = vcmp.eq.s32.totalorder %v8209, 0
    %vm8226 = vcmp.eq.s32.totalorder %v8210, 0
    %vm8227 = vcmp.eq.s32.totalorder %v8211, 0
    %vm8228 = vcmp.eq.s32.totalorder %v8212, 0
    %vm8229 = vcmp.eq.s32.totalorder %v8213, 0
    %vm8230 = vcmp.eq.s32.totalorder %v8214, 0
    %v8231 = vsel %vm8215, 1.0, 0.0
    %v8232 = vsel %vm8216, 1.0, 0.0
    %v8233 = vsel %vm8217, 1.0, 0.0
    %v8234 = vsel %vm8218, 1.0, 0.0
    %v8235 = vsel %vm8219, 1.0, 0.0
    %v8236 = vsel %vm8220, 1.0, 0.0
    %v8237 = vsel %vm8221, 1.0, 0.0
    %v8238 = vsel %vm8222, 1.0, 0.0
    %v8239 = vsel %vm8223, 1.0, 0.0
    %v8240 = vsel %vm8224, 1.0, 0.0
    %v8241 = vsel %vm8225, 1.0, 0.0
    %v8242 = vsel %vm8226, 1.0, 0.0
    %v8243 = vsel %vm8227, 1.0, 0.0
    %v8244 = vsel %vm8228, 1.0, 0.0
    %v8245 = vsel %vm8229, 1.0, 0.0
    %v8246 = vsel %vm8230, 1.0, 0.0
    %vm8247 = vcmp.eq.s32.totalorder %v8199, 1
    %vm8248 = vcmp.eq.s32.totalorder %v8200, 1
    %vm8249 = vcmp.eq.s32.totalorder %v8201, 1
    %vm8250 = vcmp.eq.s32.totalorder %v8202, 1
    %vm8251 = vcmp.eq.s32.totalorder %v8203, 1
    %vm8252 = vcmp.eq.s32.totalorder %v8204, 1
    %vm8253 = vcmp.eq.s32.totalorder %v8205, 1
    %vm8254 = vcmp.eq.s32.totalorder %v8206, 1
    %vm8255 = vcmp.eq.s32.totalorder %v8207, 1
    %vm8256 = vcmp.eq.s32.totalorder %v8208, 1
    %vm8257 = vcmp.eq.s32.totalorder %v8209, 1
    %vm8258 = vcmp.eq.s32.totalorder %v8210, 1
    %vm8259 = vcmp.eq.s32.totalorder %v8211, 1
    %vm8260 = vcmp.eq.s32.totalorder %v8212, 1
    %vm8261 = vcmp.eq.s32.totalorder %v8213, 1
    %vm8262 = vcmp.eq.s32.totalorder %v8214, 1
    %v8263 = vsel %vm8247, 1.0, 0.0
    %v8264 = vsel %vm8248, 1.0, 0.0
    %v8265 = vsel %vm8249, 1.0, 0.0
    %v8266 = vsel %vm8250, 1.0, 0.0
    %v8267 = vsel %vm8251, 1.0, 0.0
    %v8268 = vsel %vm8252, 1.0, 0.0
    %v8269 = vsel %vm8253, 1.0, 0.0
    %v8270 = vsel %vm8254, 1.0, 0.0
    %v8271 = vsel %vm8255, 1.0, 0.0
    %v8272 = vsel %vm8256, 1.0, 0.0
    %v8273 = vsel %vm8257, 1.0, 0.0
    %v8274 = vsel %vm8258, 1.0, 0.0
    %v8275 = vsel %vm8259, 1.0, 0.0
    %v8276 = vsel %vm8260, 1.0, 0.0
    %v8277 = vsel %vm8261, 1.0, 0.0
    %v8278 = vsel %vm8262, 1.0, 0.0
    %vm8279 = vcmask 523264
    %v8281 = vsel %vm8279, %v8231, 0
    %v8284 = vsel %vm8279, %v8232, 0
    %v8287 = vsel %vm8279, %v8233, 0
    %v8290 = vsel %vm8279, %v8234, 0
    %v8293 = vsel %vm8279, %v8235, 0
    %v8296 = vsel %vm8279, %v8236, 0
    %v8299 = vsel %vm8279, %v8237, 0
    %v8302 = vsel %vm8279, %v8238, 0
    %v8305 = vsel %vm8279, %v8239, 0
    %v8308 = vsel %vm8279, %v8240, 0
    %v8311 = vsel %vm8279, %v8241, 0
    %v8314 = vsel %vm8279, %v8242, 0
    %v8317 = vsel %vm8279, %v8243, 0
    %v8320 = vsel %vm8279, %v8244, 0
    %v8323 = vsel %vm8279, %v8245, 0
    %v8326 = vsel %vm8279, %v8246, 0
    %8328 = vmatprep.subr.mxu0 0.0
    %8329 = vmatpush1.msra.mxu0 0.0
    %8330 = vmatprep.subr.mxu0 0.0
    %8331 = vmatpush1.msra.mxu0 0.0
    %8332 = vmatprep.subr.mxu0 0.0
    %8333 = vmatpush1.msra.mxu0 0.0
    %8334 = vmatprep.subr.mxu0 0.0
    %8335 = vmatpush1.msra.mxu0 0.0
    %8336 = vmatprep.subr.mxu0 0.0
    %8337 = vmatpush1.msra.mxu0 0.0
    %8338 = vmatprep.subr.mxu0 0.0
    %8339 = vmatpush1.msra.mxu0 0.0
    %8340 = vmatprep.subr.mxu0 0.0
    %8341 = vmatpush1.msra.mxu0 0.0
    %8342 = vmatprep.subr.mxu0 0.0
    %8343 = vmatpush1.msra.mxu0 0.0
    %8344 = vmatprep.subr.mxu0 0.0
    %8345 = vmatpush1.msra.mxu0 %v8182
    %8346 = vmatprep.subr.mxu0 0.0
    %8347 = vmatpush1.msra.mxu0 %v8181
    %8348 = vmatprep.subr.mxu0 0.0
    %8349 = vmatpush1.msra.mxu0 %v8180
    %8350 = vmatprep.subr.mxu0 0.0
    %8351 = vmatpush1.msra.mxu0 %v8179
    %8352 = vmatprep.subr.mxu0 0.0
    %8353 = vmatpush1.msra.mxu0 %v8178
    %8354 = vmatprep.subr.mxu0 0.0
    %8355 = vmatpush1.msra.mxu0 %v8177
    %8356 = vmatprep.subr.mxu0 0.0
    %8357 = vmatpush1.msra.mxu0 %v8176
    %8358 = vmatprep.subr.mxu0 0.0
    %8359 = vmatpush1.msra.mxu0 %v8175
    %8360 = vmatprep.subr.mxu0 0.0
    %8361 = vmatpush2.msra.mxu0 0.0
    %8362 = vmatprep.subr.mxu0 0.0
    %8363 = vmatpush2.msra.mxu0 0.0
    %8364 = vmatprep.subr.mxu0 0.0
    %8365 = vmatpush2.msra.mxu0 0.0
    %8366 = vmatprep.subr.mxu0 0.0
    %8367 = vmatpush2.msra.mxu0 0.0
    %8368 = vmatprep.subr.mxu0 0.0
    %8369 = vmatpush2.msra.mxu0 0.0
    %8370 = vmatprep.subr.mxu0 0.0
    %8371 = vmatpush2.msra.mxu0 0.0
    %8372 = vmatprep.subr.mxu0 0.0
    %8373 = vmatpush2.msra.mxu0 0.0
    %8374 = vmatprep.subr.mxu0 0.0
    %8375 = vmatpush2.msra.mxu0 0.0
    %8376 = vmatprep.subr.mxu0 0.0
    %8377 = vmatpush2.msra.mxu0 0.0
    %8378 = vmatprep.subr.mxu0 0.0
    %8379 = vmatpush2.msra.mxu0 0.0
    %8380 = vmatprep.subr.mxu0 0.0
    %8381 = vmatpush2.msra.mxu0 0.0
    %8382 = vmatprep.subr.mxu0 0.0
    %8383 = vmatpush2.msra.mxu0 0.0
    %8384 = vmatprep.subr.mxu0 0.0
    %8385 = vmatpush2.msra.mxu0 0.0
    %8386 = vmatprep.subr.mxu0 0.0
    %8387 = vmatpush2.msra.mxu0 0.0
    %8388 = vmatprep.subr.mxu0 0.0
    %8389 = vmatpush2.msra.mxu0 0.0
    %8390 = vmatprep.subr.mxu0 0.0
    %8391 = vmatpush2.msra.mxu0 0.0
    %8392 = vmatprep.mubr.f32.mxu0 0.0
    %8393 = vmatmul.mubr.f32.gmra.mxu0 %v8281
    %v8394 = vpop.f32.mrf.mxu0
    %v8395 = vadd.f32 0.0, %v8394
    %v8396 = vpop.f32.mrf.mxu0
    %8397 = vmatprep.mubr.f32.mxu0 0.0
    %8398 = vmatmul.mubr.f32.gmra.mxu0 %v8284
    %v8399 = vpop.f32.mrf.mxu0
    %v8400 = vadd.f32 0.0, %v8399
    %v8401 = vpop.f32.mrf.mxu0
    %8402 = vmatprep.mubr.f32.mxu0 0.0
    %8403 = vmatmul.mubr.f32.gmra.mxu0 %v8287
    %v8404 = vpop.f32.mrf.mxu0
    %v8405 = vadd.f32 0.0, %v8404
    %v8406 = vpop.f32.mrf.mxu0
    %8407 = vmatprep.mubr.f32.mxu0 0.0
    %8408 = vmatmul.mubr.f32.gmra.mxu0 %v8290
    %v8409 = vpop.f32.mrf.mxu0
    %v8410 = vadd.f32 0.0, %v8409
    %v8411 = vpop.f32.mrf.mxu0
    %8412 = vmatprep.mubr.f32.mxu0 0.0
    %8413 = vmatmul.mubr.f32.gmra.mxu0 %v8293
    %v8414 = vpop.f32.mrf.mxu0
    %v8415 = vadd.f32 0.0, %v8414
    %v8416 = vpop.f32.mrf.mxu0
    %8417 = vmatprep.mubr.f32.mxu0 0.0
    %8418 = vmatmul.mubr.f32.gmra.mxu0 %v8296
    %v8419 = vpop.f32.mrf.mxu0
    %v8420 = vadd.f32 0.0, %v8419
    %v8421 = vpop.f32.mrf.mxu0
    %8422 = vmatprep.mubr.f32.mxu0 0.0
    %8423 = vmatmul.mubr.f32.gmra.mxu0 %v8299
    %v8424 = vpop.f32.mrf.mxu0
    %v8425 = vadd.f32 0.0, %v8424
    %v8426 = vpop.f32.mrf.mxu0
    %8427 = vmatprep.mubr.f32.mxu0 0.0
    %8428 = vmatmul.mubr.f32.gmra.mxu0 %v8302
    %v8429 = vpop.f32.mrf.mxu0
    %v8430 = vadd.f32 0.0, %v8429
    %v8431 = vpop.f32.mrf.mxu0
    %8432 = vmatprep.mubr.f32.mxu0 0.0
    %8433 = vmatmul.mubr.f32.gmra.mxu0 %v8305
    %v8434 = vpop.f32.mrf.mxu0
    %v8435 = vadd.f32 0.0, %v8434
    %v8436 = vpop.f32.mrf.mxu0
    %8437 = vmatprep.mubr.f32.mxu0 0.0
    %8438 = vmatmul.mubr.f32.gmra.mxu0 %v8308
    %v8439 = vpop.f32.mrf.mxu0
    %v8440 = vadd.f32 0.0, %v8439
    %v8441 = vpop.f32.mrf.mxu0
    %8442 = vmatprep.mubr.f32.mxu0 0.0
    %8443 = vmatmul.mubr.f32.gmra.mxu0 %v8311
    %v8444 = vpop.f32.mrf.mxu0
    %v8445 = vadd.f32 0.0, %v8444
    %v8446 = vpop.f32.mrf.mxu0
    %8447 = vmatprep.mubr.f32.mxu0 0.0
    %8448 = vmatmul.mubr.f32.gmra.mxu0 %v8314
    %v8449 = vpop.f32.mrf.mxu0
    %v8450 = vadd.f32 0.0, %v8449
    %v8451 = vpop.f32.mrf.mxu0
    %8452 = vmatprep.mubr.f32.mxu0 0.0
    %8453 = vmatmul.mubr.f32.gmra.mxu0 %v8317
    %v8454 = vpop.f32.mrf.mxu0
    %v8455 = vadd.f32 0.0, %v8454
    %v8456 = vpop.f32.mrf.mxu0
    %8457 = vmatprep.mubr.f32.mxu0 0.0
    %8458 = vmatmul.mubr.f32.gmra.mxu0 %v8320
    %v8459 = vpop.f32.mrf.mxu0
    %v8460 = vadd.f32 0.0, %v8459
    %v8461 = vpop.f32.mrf.mxu0
    %8462 = vmatprep.mubr.f32.mxu0 0.0
    %8463 = vmatmul.mubr.f32.gmra.mxu0 %v8323
    %v8464 = vpop.f32.mrf.mxu0
    %v8465 = vadd.f32 0.0, %v8464
    %v8466 = vpop.f32.mrf.mxu0
    %8467 = vmatprep.mubr.f32.mxu0 0.0
    %8468 = vmatmul.mubr.f32.gmra.mxu0 %v8326
    %v8469 = vpop.f32.mrf.mxu0
    %v8470 = vadd.f32 0.0, %v8469
    %v8471 = vpop.f32.mrf.mxu0
    %8472 = vdwg.mxu0
    %v8474 = vsel %vm8279, %v8263, 0
    %v8477 = vsel %vm8279, %v8264, 0
    %v8480 = vsel %vm8279, %v8265, 0
    %v8483 = vsel %vm8279, %v8266, 0
    %v8486 = vsel %vm8279, %v8267, 0
    %v8489 = vsel %vm8279, %v8268, 0
    %v8492 = vsel %vm8279, %v8269, 0
    %v8495 = vsel %vm8279, %v8270, 0
    %v8498 = vsel %vm8279, %v8271, 0
    %v8501 = vsel %vm8279, %v8272, 0
    %v8504 = vsel %vm8279, %v8273, 0
    %v8507 = vsel %vm8279, %v8274, 0
    %v8510 = vsel %vm8279, %v8275, 0
    %v8513 = vsel %vm8279, %v8276, 0
    %v8516 = vsel %vm8279, %v8277, 0
    %v8519 = vsel %vm8279, %v8278, 0
    %8521 = vmatprep.subr.mxu0 0.0
    %8522 = vmatpush1.msra.mxu0 0.0
    %8523 = vmatprep.subr.mxu0 0.0
    %8524 = vmatpush1.msra.mxu0 0.0
    %8525 = vmatprep.subr.mxu0 0.0
    %8526 = vmatpush1.msra.mxu0 0.0
    %8527 = vmatprep.subr.mxu0 0.0
    %8528 = vmatpush1.msra.mxu0 0.0
    %8529 = vmatprep.subr.mxu0 0.0
    %8530 = vmatpush1.msra.mxu0 0.0
    %8531 = vmatprep.subr.mxu0 0.0
    %8532 = vmatpush1.msra.mxu0 0.0
    %8533 = vmatprep.subr.mxu0 0.0
    %8534 = vmatpush1.msra.mxu0 0.0
    %8535 = vmatprep.subr.mxu0 0.0
    %8536 = vmatpush1.msra.mxu0 0.0
    %8537 = vmatprep.subr.mxu0 0.0
    %8538 = vmatpush1.msra.mxu0 %v8182
    %8539 = vmatprep.subr.mxu0 0.0
    %8540 = vmatpush1.msra.mxu0 %v8181
    %8541 = vmatprep.subr.mxu0 0.0
    %8542 = vmatpush1.msra.mxu0 %v8180
    %8543 = vmatprep.subr.mxu0 0.0
    %8544 = vmatpush1.msra.mxu0 %v8179
    %8545 = vmatprep.subr.mxu0 0.0
    %8546 = vmatpush1.msra.mxu0 %v8178
    %8547 = vmatprep.subr.mxu0 0.0
    %8548 = vmatpush1.msra.mxu0 %v8177
    %8549 = vmatprep.subr.mxu0 0.0
    %8550 = vmatpush1.msra.mxu0 %v8176
    %8551 = vmatprep.subr.mxu0 0.0
    %8552 = vmatpush1.msra.mxu0 %v8175
    %8553 = vmatprep.subr.mxu0 0.0
    %8554 = vmatpush2.msra.mxu0 0.0
    %8555 = vmatprep.subr.mxu0 0.0
    %8556 = vmatpush2.msra.mxu0 0.0
    %8557 = vmatprep.subr.mxu0 0.0
    %8558 = vmatpush2.msra.mxu0 0.0
    %8559 = vmatprep.subr.mxu0 0.0
    %8560 = vmatpush2.msra.mxu0 0.0
    %8561 = vmatprep.subr.mxu0 0.0
    %8562 = vmatpush2.msra.mxu0 0.0
    %8563 = vmatprep.subr.mxu0 0.0
    %8564 = vmatpush2.msra.mxu0 0.0
    %8565 = vmatprep.subr.mxu0 0.0
    %8566 = vmatpush2.msra.mxu0 0.0
    %8567 = vmatprep.subr.mxu0 0.0
    %8568 = vmatpush2.msra.mxu0 0.0
    %8569 = vmatprep.subr.mxu0 0.0
    %8570 = vmatpush2.msra.mxu0 0.0
    %8571 = vmatprep.subr.mxu0 0.0
    %8572 = vmatpush2.msra.mxu0 0.0
    %8573 = vmatprep.subr.mxu0 0.0
    %8574 = vmatpush2.msra.mxu0 0.0
    %8575 = vmatprep.subr.mxu0 0.0
    %8576 = vmatpush2.msra.mxu0 0.0
    %8577 = vmatprep.subr.mxu0 0.0
    %8578 = vmatpush2.msra.mxu0 0.0
    %8579 = vmatprep.subr.mxu0 0.0
    %8580 = vmatpush2.msra.mxu0 0.0
    %8581 = vmatprep.subr.mxu0 0.0
    %8582 = vmatpush2.msra.mxu0 0.0
    %8583 = vmatprep.subr.mxu0 0.0
    %8584 = vmatpush2.msra.mxu0 0.0
    %8585 = vmatprep.mubr.f32.mxu0 0.0
    %8586 = vmatmul.mubr.f32.gmra.mxu0 %v8474
    %v8587 = vpop.f32.mrf.mxu0
    %v8588 = vadd.f32 0.0, %v8587
    %v8589 = vpop.f32.mrf.mxu0
    %8590 = vmatprep.mubr.f32.mxu0 0.0
    %8591 = vmatmul.mubr.f32.gmra.mxu0 %v8477
    %v8592 = vpop.f32.mrf.mxu0
    %v8593 = vadd.f32 0.0, %v8592
    %v8594 = vpop.f32.mrf.mxu0
    %8595 = vmatprep.mubr.f32.mxu0 0.0
    %8596 = vmatmul.mubr.f32.gmra.mxu0 %v8480
    %v8597 = vpop.f32.mrf.mxu0
    %v8598 = vadd.f32 0.0, %v8597
    %v8599 = vpop.f32.mrf.mxu0
    %8600 = vmatprep.mubr.f32.mxu0 0.0
    %8601 = vmatmul.mubr.f32.gmra.mxu0 %v8483
    %v8602 = vpop.f32.mrf.mxu0
    %v8603 = vadd.f32 0.0, %v8602
    %v8604 = vpop.f32.mrf.mxu0
    %8605 = vmatprep.mubr.f32.mxu0 0.0
    %8606 = vmatmul.mubr.f32.gmra.mxu0 %v8486
    %v8607 = vpop.f32.mrf.mxu0
    %v8608 = vadd.f32 0.0, %v8607
    %v8609 = vpop.f32.mrf.mxu0
    %8610 = vmatprep.mubr.f32.mxu0 0.0
    %8611 = vmatmul.mubr.f32.gmra.mxu0 %v8489
    %v8612 = vpop.f32.mrf.mxu0
    %v8613 = vadd.f32 0.0, %v8612
    %v8614 = vpop.f32.mrf.mxu0
    %8615 = vmatprep.mubr.f32.mxu0 0.0
    %8616 = vmatmul.mubr.f32.gmra.mxu0 %v8492
    %v8617 = vpop.f32.mrf.mxu0
    %v8618 = vadd.f32 0.0, %v8617
    %v8619 = vpop.f32.mrf.mxu0
    %8620 = vmatprep.mubr.f32.mxu0 0.0
    %8621 = vmatmul.mubr.f32.gmra.mxu0 %v8495
    %v8622 = vpop.f32.mrf.mxu0
    %v8623 = vadd.f32 0.0, %v8622
    %v8624 = vpop.f32.mrf.mxu0
    %8625 = vmatprep.mubr.f32.mxu0 0.0
    %8626 = vmatmul.mubr.f32.gmra.mxu0 %v8498
    %v8627 = vpop.f32.mrf.mxu0
    %v8628 = vadd.f32 0.0, %v8627
    %v8629 = vpop.f32.mrf.mxu0
    %8630 = vmatprep.mubr.f32.mxu0 0.0
    %8631 = vmatmul.mubr.f32.gmra.mxu0 %v8501
    %v8632 = vpop.f32.mrf.mxu0
    %v8633 = vadd.f32 0.0, %v8632
    %v8634 = vpop.f32.mrf.mxu0
    %8635 = vmatprep.mubr.f32.mxu0 0.0
    %8636 = vmatmul.mubr.f32.gmra.mxu0 %v8504
    %v8637 = vpop.f32.mrf.mxu0
    %v8638 = vadd.f32 0.0, %v8637
    %v8639 = vpop.f32.mrf.mxu0
    %8640 = vmatprep.mubr.f32.mxu0 0.0
    %8641 = vmatmul.mubr.f32.gmra.mxu0 %v8507
    %v8642 = vpop.f32.mrf.mxu0
    %v8643 = vadd.f32 0.0, %v8642
    %v8644 = vpop.f32.mrf.mxu0
    %8645 = vmatprep.mubr.f32.mxu0 0.0
    %8646 = vmatmul.mubr.f32.gmra.mxu0 %v8510
    %v8647 = vpop.f32.mrf.mxu0
    %v8648 = vadd.f32 0.0, %v8647
    %v8649 = vpop.f32.mrf.mxu0
    %8650 = vmatprep.mubr.f32.mxu0 0.0
    %8651 = vmatmul.mubr.f32.gmra.mxu0 %v8513
    %v8652 = vpop.f32.mrf.mxu0
    %v8653 = vadd.f32 0.0, %v8652
    %v8654 = vpop.f32.mrf.mxu0
    %8655 = vmatprep.mubr.f32.mxu0 0.0
    %8656 = vmatmul.mubr.f32.gmra.mxu0 %v8516
    %v8657 = vpop.f32.mrf.mxu0
    %v8658 = vadd.f32 0.0, %v8657
    %v8659 = vpop.f32.mrf.mxu0
    %8660 = vmatprep.mubr.f32.mxu0 0.0
    %8661 = vmatmul.mubr.f32.gmra.mxu0 %v8519
    %v8662 = vpop.f32.mrf.mxu0
    %v8663 = vadd.f32 0.0, %v8662
    %v8664 = vpop.f32.mrf.mxu0
    %8665 = vdwg.mxu0
    %v8666 = vmax.f32 %v8395, %v8588
    %v8667 = vmax.f32 %v8400, %v8593
    %v8668 = vmax.f32 %v8405, %v8598
    %v8669 = vmax.f32 %v8410, %v8603
    %v8670 = vmax.f32 %v8415, %v8608
    %v8671 = vmax.f32 %v8420, %v8613
    %v8672 = vmax.f32 %v8425, %v8618
    %v8673 = vmax.f32 %v8430, %v8623
    %v8674 = vmax.f32 %v8435, %v8628
    %v8675 = vmax.f32 %v8440, %v8633
    %v8676 = vmax.f32 %v8445, %v8638
    %v8677 = vmax.f32 %v8450, %v8643
    %v8678 = vmax.f32 %v8455, %v8648
    %v8679 = vmax.f32 %v8460, %v8653
    %v8680 = vmax.f32 %v8465, %v8658
    %v8681 = vmax.f32 %v8470, %v8663
    %v8682 = vld [vmem:[%s7] sm:$0x1]
    %v8684 = vlaneseq
    %v8685 = vshrl.u32 %v8684, 7
    %v8686 = vsub.s32 0, %v8685
    %v8687 = vrot.slane %v8682, %v8686
    %v8689 = vld [vmem:[%s6] sm:$0xff]
    %v8690 = vld [vmem:[%s6 + $0x8] sm:$0xff]
    %vm8691 = vcmask 130048
    %v8693 = vsel %vm8691, %v8666, 0
    %8695 = vmatprep.subr.mxu0 0.0
    %8696 = vmatpush1.msra.mxu0 0.0
    %8697 = vmatprep.subr.mxu0 0.0
    %8698 = vmatpush1.msra.mxu0 0.0
    %8699 = vmatprep.subr.mxu0 0.0
    %8700 = vmatpush1.msra.mxu0 0.0
    %8701 = vmatprep.subr.mxu0 0.0
    %8702 = vmatpush1.msra.mxu0 0.0
    %8703 = vmatprep.subr.mxu0 0.0
    %8704 = vmatpush1.msra.mxu0 0.0
    %8705 = vmatprep.subr.mxu0 0.0
    %8706 = vmatpush1.msra.mxu0 0.0
    %8707 = vmatprep.subr.mxu0 0.0
    %8708 = vmatpush1.msra.mxu0 0.0
    %8709 = vmatprep.subr.mxu0 0.0
    %8710 = vmatpush1.msra.mxu0 0.0
    %8711 = vmatprep.subr.mxu0 0.0
    %8712 = vmatpush1.msra.mxu0 0.0
    %8713 = vmatprep.subr.mxu0 0.0
    %8714 = vmatpush1.msra.mxu0 0.0
    %8715 = vmatprep.subr.mxu0 0.0
    %8716 = vmatpush1.msra.mxu0 0.0
    %8717 = vmatprep.subr.mxu0 0.0
    %8718 = vmatpush1.msra.mxu0 0.0
    %8719 = vmatprep.subr.mxu0 0.0
    %8720 = vmatpush1.msra.mxu0 0.0
    %8721 = vmatprep.subr.mxu0 0.0
    %8722 = vmatpush1.msra.mxu0 0.0
    %8723 = vmatprep.subr.mxu0 0.0
    %8724 = vmatpush1.msra.mxu0 %v8690
    %8725 = vmatprep.subr.mxu0 0.0
    %8726 = vmatpush1.msra.mxu0 %v8689
    %8727 = vmatprep.subr.mxu0 0.0
    %8728 = vmatpush2.msra.mxu0 0.0
    %8729 = vmatprep.subr.mxu0 0.0
    %8730 = vmatpush2.msra.mxu0 0.0
    %8731 = vmatprep.subr.mxu0 0.0
    %8732 = vmatpush2.msra.mxu0 0.0
    %8733 = vmatprep.subr.mxu0 0.0
    %8734 = vmatpush2.msra.mxu0 0.0
    %8735 = vmatprep.subr.mxu0 0.0
    %8736 = vmatpush2.msra.mxu0 0.0
    %8737 = vmatprep.subr.mxu0 0.0
    %8738 = vmatpush2.msra.mxu0 0.0
    %8739 = vmatprep.subr.mxu0 0.0
    %8740 = vmatpush2.msra.mxu0 0.0
    %8741 = vmatprep.subr.mxu0 0.0
    %8742 = vmatpush2.msra.mxu0 0.0
    %8743 = vmatprep.subr.mxu0 0.0
    %8744 = vmatpush2.msra.mxu0 0.0
    %8745 = vmatprep.subr.mxu0 0.0
    %8746 = vmatpush2.msra.mxu0 0.0
    %8747 = vmatprep.subr.mxu0 0.0
    %8748 = vmatpush2.msra.mxu0 0.0
    %8749 = vmatprep.subr.mxu0 0.0
    %8750 = vmatpush2.msra.mxu0 0.0
    %8751 = vmatprep.subr.mxu0 0.0
    %8752 = vmatpush2.msra.mxu0 0.0
    %8753 = vmatprep.subr.mxu0 0.0
    %8754 = vmatpush2.msra.mxu0 0.0
    %8755 = vmatprep.subr.mxu0 0.0
    %8756 = vmatpush2.msra.mxu0 0.0
    %8757 = vmatprep.subr.mxu0 0.0
    %8758 = vmatpush2.msra.mxu0 0.0
    %8759 = vmatprep.mubr.f32.mxu0 0.0
    %8760 = vmatmul.mubr.f32.gmra.mxu0 %v8693
    %v8761 = vpop.f32.mrf.mxu0
    %v8762 = vadd.f32 0.0, %v8761
    %v8763 = vpop.f32.mrf.mxu0
    %8764 = vdwg.mxu0
    %v8765 = vadd.f32 %v8687, %v8762
    %s8766 = scalar_lea.vmem %s6, 16
    %v8767 = vld [vmem:[%s8766] sm:$0xff]
    %v8768 = vld [vmem:[%s8766 + $0x8] sm:$0xff]
    %v8770 = vsel %vm8691, %v8667, 0
    %8772 = vmatprep.subr.mxu0 0.0
    %8773 = vmatpush1.msra.mxu0 0.0
    %8774 = vmatprep.subr.mxu0 0.0
    %8775 = vmatpush1.msra.mxu0 0.0
    %8776 = vmatprep.subr.mxu0 0.0
    %8777 = vmatpush1.msra.mxu0 0.0
    %8778 = vmatprep.subr.mxu0 0.0
    %8779 = vmatpush1.msra.mxu0 0.0
    %8780 = vmatprep.subr.mxu0 0.0
    %8781 = vmatpush1.msra.mxu0 0.0
    %8782 = vmatprep.subr.mxu0 0.0
    %8783 = vmatpush1.msra.mxu0 0.0
    %8784 = vmatprep.subr.mxu0 0.0
    %8785 = vmatpush1.msra.mxu0 0.0
    %8786 = vmatprep.subr.mxu0 0.0
    %8787 = vmatpush1.msra.mxu0 0.0
    %8788 = vmatprep.subr.mxu0 0.0
    %8789 = vmatpush1.msra.mxu0 0.0
    %8790 = vmatprep.subr.mxu0 0.0
    %8791 = vmatpush1.msra.mxu0 0.0
    %8792 = vmatprep.subr.mxu0 0.0
    %8793 = vmatpush1.msra.mxu0 0.0
    %8794 = vmatprep.subr.mxu0 0.0
    %8795 = vmatpush1.msra.mxu0 0.0
    %8796 = vmatprep.subr.mxu0 0.0
    %8797 = vmatpush1.msra.mxu0 0.0
    %8798 = vmatprep.subr.mxu0 0.0
    %8799 = vmatpush1.msra.mxu0 0.0
    %8800 = vmatprep.subr.mxu0 0.0
    %8801 = vmatpush1.msra.mxu0 %v8768
    %8802 = vmatprep.subr.mxu0 0.0
    %8803 = vmatpush1.msra.mxu0 %v8767
    %8804 = vmatprep.subr.mxu0 0.0
    %8805 = vmatpush2.msra.mxu0 0.0
    %8806 = vmatprep.subr.mxu0 0.0
    %8807 = vmatpush2.msra.mxu0 0.0
    %8808 = vmatprep.subr.mxu0 0.0
    %8809 = vmatpush2.msra.mxu0 0.0
    %8810 = vmatprep.subr.mxu0 0.0
    %8811 = vmatpush2.msra.mxu0 0.0
    %8812 = vmatprep.subr.mxu0 0.0
    %8813 = vmatpush2.msra.mxu0 0.0
    %8814 = vmatprep.subr.mxu0 0.0
    %8815 = vmatpush2.msra.mxu0 0.0
    %8816 = vmatprep.subr.mxu0 0.0
    %8817 = vmatpush2.msra.mxu0 0.0
    %8818 = vmatprep.subr.mxu0 0.0
    %8819 = vmatpush2.msra.mxu0 0.0
    %8820 = vmatprep.subr.mxu0 0.0
    %8821 = vmatpush2.msra.mxu0 0.0
    %8822 = vmatprep.subr.mxu0 0.0
    %8823 = vmatpush2.msra.mxu0 0.0
    %8824 = vmatprep.subr.mxu0 0.0
    %8825 = vmatpush2.msra.mxu0 0.0
    %8826 = vmatprep.subr.mxu0 0.0
    %8827 = vmatpush2.msra.mxu0 0.0
    %8828 = vmatprep.subr.mxu0 0.0
    %8829 = vmatpush2.msra.mxu0 0.0
    %8830 = vmatprep.subr.mxu0 0.0
    %8831 = vmatpush2.msra.mxu0 0.0
    %8832 = vmatprep.subr.mxu0 0.0
    %8833 = vmatpush2.msra.mxu0 0.0
    %8834 = vmatprep.subr.mxu0 0.0
    %8835 = vmatpush2.msra.mxu0 0.0
    %8836 = vmatprep.mubr.f32.mxu0 0.0
    %8837 = vmatmul.mubr.f32.gmra.mxu0 %v8770
    %v8838 = vpop.f32.mrf.mxu0
    %v8839 = vadd.f32 0.0, %v8838
    %v8840 = vpop.f32.mrf.mxu0
    %8841 = vdwg.mxu0
    %v8842 = vadd.f32 %v8765, %v8839
    %s8843 = scalar_lea.vmem %s6, 32
    %v8844 = vld [vmem:[%s8843] sm:$0xff]
    %v8845 = vld [vmem:[%s8843 + $0x8] sm:$0xff]
    %v8847 = vsel %vm8691, %v8668, 0
    %8849 = vmatprep.subr.mxu0 0.0
    %8850 = vmatpush1.msra.mxu0 0.0
    %8851 = vmatprep.subr.mxu0 0.0
    %8852 = vmatpush1.msra.mxu0 0.0
    %8853 = vmatprep.subr.mxu0 0.0
    %8854 = vmatpush1.msra.mxu0 0.0
    %8855 = vmatprep.subr.mxu0 0.0
    %8856 = vmatpush1.msra.mxu0 0.0
    %8857 = vmatprep.subr.mxu0 0.0
    %8858 = vmatpush1.msra.mxu0 0.0
    %8859 = vmatprep.subr.mxu0 0.0
    %8860 = vmatpush1.msra.mxu0 0.0
    %8861 = vmatprep.subr.mxu0 0.0
    %8862 = vmatpush1.msra.mxu0 0.0
    %8863 = vmatprep.subr.mxu0 0.0
    %8864 = vmatpush1.msra.mxu0 0.0
    %8865 = vmatprep.subr.mxu0 0.0
    %8866 = vmatpush1.msra.mxu0 0.0
    %8867 = vmatprep.subr.mxu0 0.0
    %8868 = vmatpush1.msra.mxu0 0.0
    %8869 = vmatprep.subr.mxu0 0.0
    %8870 = vmatpush1.msra.mxu0 0.0
    %8871 = vmatprep.subr.mxu0 0.0
    %8872 = vmatpush1.msra.mxu0 0.0
    %8873 = vmatprep.subr.mxu0 0.0
    %8874 = vmatpush1.msra.mxu0 0.0
    %8875 = vmatprep.subr.mxu0 0.0
    %8876 = vmatpush1.msra.mxu0 0.0
    %8877 = vmatprep.subr.mxu0 0.0
    %8878 = vmatpush1.msra.mxu0 %v8845
    %8879 = vmatprep.subr.mxu0 0.0
    %8880 = vmatpush1.msra.mxu0 %v8844
    %8881 = vmatprep.subr.mxu0 0.0
    %8882 = vmatpush2.msra.mxu0 0.0
    %8883 = vmatprep.subr.mxu0 0.0
    %8884 = vmatpush2.msra.mxu0 0.0
    %8885 = vmatprep.subr.mxu0 0.0
    %8886 = vmatpush2.msra.mxu0 0.0
    %8887 = vmatprep.subr.mxu0 0.0
    %8888 = vmatpush2.msra.mxu0 0.0
    %8889 = vmatprep.subr.mxu0 0.0
    %8890 = vmatpush2.msra.mxu0 0.0
    %8891 = vmatprep.subr.mxu0 0.0
    %8892 = vmatpush2.msra.mxu0 0.0
    %8893 = vmatprep.subr.mxu0 0.0
    %8894 = vmatpush2.msra.mxu0 0.0
    %8895 = vmatprep.subr.mxu0 0.0
    %8896 = vmatpush2.msra.mxu0 0.0
    %8897 = vmatprep.subr.mxu0 0.0
    %8898 = vmatpush2.msra.mxu0 0.0
    %8899 = vmatprep.subr.mxu0 0.0
    %8900 = vmatpush2.msra.mxu0 0.0
    %8901 = vmatprep.subr.mxu0 0.0
    %8902 = vmatpush2.msra.mxu0 0.0
    %8903 = vmatprep.subr.mxu0 0.0
    %8904 = vmatpush2.msra.mxu0 0.0
    %8905 = vmatprep.subr.mxu0 0.0
    %8906 = vmatpush2.msra.mxu0 0.0
    %8907 = vmatprep.subr.mxu0 0.0
    %8908 = vmatpush2.msra.mxu0 0.0
    %8909 = vmatprep.subr.mxu0 0.0
    %8910 = vmatpush2.msra.mxu0 0.0
    %8911 = vmatprep.subr.mxu0 0.0
    %8912 = vmatpush2.msra.mxu0 0.0
    %8913 = vmatprep.mubr.f32.mxu0 0.0
    %8914 = vmatmul.mubr.f32.gmra.mxu0 %v8847
    %v8915 = vpop.f32.mrf.mxu0
    %v8916 = vadd.f32 0.0, %v8915
    %v8917 = vpop.f32.mrf.mxu0
    %8918 = vdwg.mxu0
    %v8919 = vadd.f32 %v8842, %v8916
    %s8920 = scalar_lea.vmem %s6, 48
    %v8921 = vld [vmem:[%s8920] sm:$0xff]
    %v8922 = vld [vmem:[%s8920 + $0x8] sm:$0xff]
    %v8924 = vsel %vm8691, %v8669, 0
    %8926 = vmatprep.subr.mxu0 0.0
    %8927 = vmatpush1.msra.mxu0 0.0
    %8928 = vmatprep.subr.mxu0 0.0
    %8929 = vmatpush1.msra.mxu0 0.0
    %8930 = vmatprep.subr.mxu0 0.0
    %8931 = vmatpush1.msra.mxu0 0.0
    %8932 = vmatprep.subr.mxu0 0.0
    %8933 = vmatpush1.msra.mxu0 0.0
    %8934 = vmatprep.subr.mxu0 0.0
    %8935 = vmatpush1.msra.mxu0 0.0
    %8936 = vmatprep.subr.mxu0 0.0
    %8937 = vmatpush1.msra.mxu0 0.0
    %8938 = vmatprep.subr.mxu0 0.0
    %8939 = vmatpush1.msra.mxu0 0.0
    %8940 = vmatprep.subr.mxu0 0.0
    %8941 = vmatpush1.msra.mxu0 0.0
    %8942 = vmatprep.subr.mxu0 0.0
    %8943 = vmatpush1.msra.mxu0 0.0
    %8944 = vmatprep.subr.mxu0 0.0
    %8945 = vmatpush1.msra.mxu0 0.0
    %8946 = vmatprep.subr.mxu0 0.0
    %8947 = vmatpush1.msra.mxu0 0.0
    %8948 = vmatprep.subr.mxu0 0.0
    %8949 = vmatpush1.msra.mxu0 0.0
    %8950 = vmatprep.subr.mxu0 0.0
    %8951 = vmatpush1.msra.mxu0 0.0
    %8952 = vmatprep.subr.mxu0 0.0
    %8953 = vmatpush1.msra.mxu0 0.0
    %8954 = vmatprep.subr.mxu0 0.0
    %8955 = vmatpush1.msra.mxu0 %v8922
    %8956 = vmatprep.subr.mxu0 0.0
    %8957 = vmatpush1.msra.mxu0 %v8921
    %8958 = vmatprep.subr.mxu0 0.0
    %8959 = vmatpush2.msra.mxu0 0.0
    %8960 = vmatprep.subr.mxu0 0.0
    %8961 = vmatpush2.msra.mxu0 0.0
    %8962 = vmatprep.subr.mxu0 0.0
    %8963 = vmatpush2.msra.mxu0 0.0
    %8964 = vmatprep.subr.mxu0 0.0
    %8965 = vmatpush2.msra.mxu0 0.0
    %8966 = vmatprep.subr.mxu0 0.0
    %8967 = vmatpush2.msra.mxu0 0.0
    %8968 = vmatprep.subr.mxu0 0.0
    %8969 = vmatpush2.msra.mxu0 0.0
    %8970 = vmatprep.subr.mxu0 0.0
    %8971 = vmatpush2.msra.mxu0 0.0
    %8972 = vmatprep.subr.mxu0 0.0
    %8973 = vmatpush2.msra.mxu0 0.0
    %8974 = vmatprep.subr.mxu0 0.0
    %8975 = vmatpush2.msra.mxu0 0.0
    %8976 = vmatprep.subr.mxu0 0.0
    %8977 = vmatpush2.msra.mxu0 0.0
    %8978 = vmatprep.subr.mxu0 0.0
    %8979 = vmatpush2.msra.mxu0 0.0
    %8980 = vmatprep.subr.mxu0 0.0
    %8981 = vmatpush2.msra.mxu0 0.0
    %8982 = vmatprep.subr.mxu0 0.0
    %8983 = vmatpush2.msra.mxu0 0.0
    %8984 = vmatprep.subr.mxu0 0.0
    %8985 = vmatpush2.msra.mxu0 0.0
    %8986 = vmatprep.subr.mxu0 0.0
    %8987 = vmatpush2.msra.mxu0 0.0
    %8988 = vmatprep.subr.mxu0 0.0
    %8989 = vmatpush2.msra.mxu0 0.0
    %8990 = vmatprep.mubr.f32.mxu0 0.0
    %8991 = vmatmul.mubr.f32.gmra.mxu0 %v8924
    %v8992 = vpop.f32.mrf.mxu0
    %v8993 = vadd.f32 0.0, %v8992
    %v8994 = vpop.f32.mrf.mxu0
    %8995 = vdwg.mxu0
    %v8996 = vadd.f32 %v8919, %v8993
    %s8997 = scalar_lea.vmem %s6, 64
    %v8998 = vld [vmem:[%s8997] sm:$0xff]
    %v8999 = vld [vmem:[%s8997 + $0x8] sm:$0xff]
    %v9001 = vsel %vm8691, %v8670, 0
    %9003 = vmatprep.subr.mxu0 0.0
    %9004 = vmatpush1.msra.mxu0 0.0
    %9005 = vmatprep.subr.mxu0 0.0
    %9006 = vmatpush1.msra.mxu0 0.0
    %9007 = vmatprep.subr.mxu0 0.0
    %9008 = vmatpush1.msra.mxu0 0.0
    %9009 = vmatprep.subr.mxu0 0.0
    %9010 = vmatpush1.msra.mxu0 0.0
    %9011 = vmatprep.subr.mxu0 0.0
    %9012 = vmatpush1.msra.mxu0 0.0
    %9013 = vmatprep.subr.mxu0 0.0
    %9014 = vmatpush1.msra.mxu0 0.0
    %9015 = vmatprep.subr.mxu0 0.0
    %9016 = vmatpush1.msra.mxu0 0.0
    %9017 = vmatprep.subr.mxu0 0.0
    %9018 = vmatpush1.msra.mxu0 0.0
    %9019 = vmatprep.subr.mxu0 0.0
    %9020 = vmatpush1.msra.mxu0 0.0
    %9021 = vmatprep.subr.mxu0 0.0
    %9022 = vmatpush1.msra.mxu0 0.0
    %9023 = vmatprep.subr.mxu0 0.0
    %9024 = vmatpush1.msra.mxu0 0.0
    %9025 = vmatprep.subr.mxu0 0.0
    %9026 = vmatpush1.msra.mxu0 0.0
    %9027 = vmatprep.subr.mxu0 0.0
    %9028 = vmatpush1.msra.mxu0 0.0
    %9029 = vmatprep.subr.mxu0 0.0
    %9030 = vmatpush1.msra.mxu0 0.0
    %9031 = vmatprep.subr.mxu0 0.0
    %9032 = vmatpush1.msra.mxu0 %v8999
    %9033 = vmatprep.subr.mxu0 0.0
    %9034 = vmatpush1.msra.mxu0 %v8998
    %9035 = vmatprep.subr.mxu0 0.0
    %9036 = vmatpush2.msra.mxu0 0.0
    %9037 = vmatprep.subr.mxu0 0.0
    %9038 = vmatpush2.msra.mxu0 0.0
    %9039 = vmatprep.subr.mxu0 0.0
    %9040 = vmatpush2.msra.mxu0 0.0
    %9041 = vmatprep.subr.mxu0 0.0
    %9042 = vmatpush2.msra.mxu0 0.0
    %9043 = vmatprep.subr.mxu0 0.0
    %9044 = vmatpush2.msra.mxu0 0.0
    %9045 = vmatprep.subr.mxu0 0.0
    %9046 = vmatpush2.msra.mxu0 0.0
    %9047 = vmatprep.subr.mxu0 0.0
    %9048 = vmatpush2.msra.mxu0 0.0
    %9049 = vmatprep.subr.mxu0 0.0
    %9050 = vmatpush2.msra.mxu0 0.0
    %9051 = vmatprep.subr.mxu0 0.0
    %9052 = vmatpush2.msra.mxu0 0.0
    %9053 = vmatprep.subr.mxu0 0.0
    %9054 = vmatpush2.msra.mxu0 0.0
    %9055 = vmatprep.subr.mxu0 0.0
    %9056 = vmatpush2.msra.mxu0 0.0
    %9057 = vmatprep.subr.mxu0 0.0
    %9058 = vmatpush2.msra.mxu0 0.0
    %9059 = vmatprep.subr.mxu0 0.0
    %9060 = vmatpush2.msra.mxu0 0.0
    %9061 = vmatprep.subr.mxu0 0.0
    %9062 = vmatpush2.msra.mxu0 0.0
    %9063 = vmatprep.subr.mxu0 0.0
    %9064 = vmatpush2.msra.mxu0 0.0
    %9065 = vmatprep.subr.mxu0 0.0
    %9066 = vmatpush2.msra.mxu0 0.0
    %9067 = vmatprep.mubr.f32.mxu0 0.0
    %9068 = vmatmul.mubr.f32.gmra.mxu0 %v9001
    %v9069 = vpop.f32.mrf.mxu0
    %v9070 = vadd.f32 0.0, %v9069
    %v9071 = vpop.f32.mrf.mxu0
    %9072 = vdwg.mxu0
    %v9073 = vadd.f32 %v8996, %v9070
    %s9074 = scalar_lea.vmem %s6, 80
    %v9075 = vld [vmem:[%s9074] sm:$0xff]
    %v9076 = vld [vmem:[%s9074 + $0x8] sm:$0xff]
    %v9078 = vsel %vm8691, %v8671, 0
    %9080 = vmatprep.subr.mxu0 0.0
    %9081 = vmatpush1.msra.mxu0 0.0
    %9082 = vmatprep.subr.mxu0 0.0
    %9083 = vmatpush1.msra.mxu0 0.0
    %9084 = vmatprep.subr.mxu0 0.0
    %9085 = vmatpush1.msra.mxu0 0.0
    %9086 = vmatprep.subr.mxu0 0.0
    %9087 = vmatpush1.msra.mxu0 0.0
    %9088 = vmatprep.subr.mxu0 0.0
    %9089 = vmatpush1.msra.mxu0 0.0
    %9090 = vmatprep.subr.mxu0 0.0
    %9091 = vmatpush1.msra.mxu0 0.0
    %9092 = vmatprep.subr.mxu0 0.0
    %9093 = vmatpush1.msra.mxu0 0.0
    %9094 = vmatprep.subr.mxu0 0.0
    %9095 = vmatpush1.msra.mxu0 0.0
    %9096 = vmatprep.subr.mxu0 0.0
    %9097 = vmatpush1.msra.mxu0 0.0
    %9098 = vmatprep.subr.mxu0 0.0
    %9099 = vmatpush1.msra.mxu0 0.0
    %9100 = vmatprep.subr.mxu0 0.0
    %9101 = vmatpush1.msra.mxu0 0.0
    %9102 = vmatprep.subr.mxu0 0.0
    %9103 = vmatpush1.msra.mxu0 0.0
    %9104 = vmatprep.subr.mxu0 0.0
    %9105 = vmatpush1.msra.mxu0 0.0
    %9106 = vmatprep.subr.mxu0 0.0
    %9107 = vmatpush1.msra.mxu0 0.0
    %9108 = vmatprep.subr.mxu0 0.0
    %9109 = vmatpush1.msra.mxu0 %v9076
    %9110 = vmatprep.subr.mxu0 0.0
    %9111 = vmatpush1.msra.mxu0 %v9075
    %9112 = vmatprep.subr.mxu0 0.0
    %9113 = vmatpush2.msra.mxu0 0.0
    %9114 = vmatprep.subr.mxu0 0.0
    %9115 = vmatpush2.msra.mxu0 0.0
    %9116 = vmatprep.subr.mxu0 0.0
    %9117 = vmatpush2.msra.mxu0 0.0
    %9118 = vmatprep.subr.mxu0 0.0
    %9119 = vmatpush2.msra.mxu0 0.0
    %9120 = vmatprep.subr.mxu0 0.0
    %9121 = vmatpush2.msra.mxu0 0.0
    %9122 = vmatprep.subr.mxu0 0.0
    %9123 = vmatpush2.msra.mxu0 0.0
    %9124 = vmatprep.subr.mxu0 0.0
    %9125 = vmatpush2.msra.mxu0 0.0
    %9126 = vmatprep.subr.mxu0 0.0
    %9127 = vmatpush2.msra.mxu0 0.0
    %9128 = vmatprep.subr.mxu0 0.0
    %9129 = vmatpush2.msra.mxu0 0.0
    %9130 = vmatprep.subr.mxu0 0.0
    %9131 = vmatpush2.msra.mxu0 0.0
    %9132 = vmatprep.subr.mxu0 0.0
    %9133 = vmatpush2.msra.mxu0 0.0
    %9134 = vmatprep.subr.mxu0 0.0
    %9135 = vmatpush2.msra.mxu0 0.0
    %9136 = vmatprep.subr.mxu0 0.0
    %9137 = vmatpush2.msra.mxu0 0.0
    %9138 = vmatprep.subr.mxu0 0.0
    %9139 = vmatpush2.msra.mxu0 0.0
    %9140 = vmatprep.subr.mxu0 0.0
    %9141 = vmatpush2.msra.mxu0 0.0
    %9142 = vmatprep.subr.mxu0 0.0
    %9143 = vmatpush2.msra.mxu0 0.0
    %9144 = vmatprep.mubr.f32.mxu0 0.0
    %9145 = vmatmul.mubr.f32.gmra.mxu0 %v9078
    %v9146 = vpop.f32.mrf.mxu0
    %v9147 = vadd.f32 0.0, %v9146
    %v9148 = vpop.f32.mrf.mxu0
    %9149 = vdwg.mxu0
    %v9150 = vadd.f32 %v9073, %v9147
    %s9151 = scalar_lea.vmem %s6, 96
    %v9152 = vld [vmem:[%s9151] sm:$0xff]
    %v9153 = vld [vmem:[%s9151 + $0x8] sm:$0xff]
    %v9155 = vsel %vm8691, %v8672, 0
    %9157 = vmatprep.subr.mxu0 0.0
    %9158 = vmatpush1.msra.mxu0 0.0
    %9159 = vmatprep.subr.mxu0 0.0
    %9160 = vmatpush1.msra.mxu0 0.0
    %9161 = vmatprep.subr.mxu0 0.0
    %9162 = vmatpush1.msra.mxu0 0.0
    %9163 = vmatprep.subr.mxu0 0.0
    %9164 = vmatpush1.msra.mxu0 0.0
    %9165 = vmatprep.subr.mxu0 0.0
    %9166 = vmatpush1.msra.mxu0 0.0
    %9167 = vmatprep.subr.mxu0 0.0
    %9168 = vmatpush1.msra.mxu0 0.0
    %9169 = vmatprep.subr.mxu0 0.0
    %9170 = vmatpush1.msra.mxu0 0.0
    %9171 = vmatprep.subr.mxu0 0.0
    %9172 = vmatpush1.msra.mxu0 0.0
    %9173 = vmatprep.subr.mxu0 0.0
    %9174 = vmatpush1.msra.mxu0 0.0
    %9175 = vmatprep.subr.mxu0 0.0
    %9176 = vmatpush1.msra.mxu0 0.0
    %9177 = vmatprep.subr.mxu0 0.0
    %9178 = vmatpush1.msra.mxu0 0.0
    %9179 = vmatprep.subr.mxu0 0.0
    %9180 = vmatpush1.msra.mxu0 0.0
    %9181 = vmatprep.subr.mxu0 0.0
    %9182 = vmatpush1.msra.mxu0 0.0
    %9183 = vmatprep.subr.mxu0 0.0
    %9184 = vmatpush1.msra.mxu0 0.0
    %9185 = vmatprep.subr.mxu0 0.0
    %9186 = vmatpush1.msra.mxu0 %v9153
    %9187 = vmatprep.subr.mxu0 0.0
    %9188 = vmatpush1.msra.mxu0 %v9152
    %9189 = vmatprep.subr.mxu0 0.0
    %9190 = vmatpush2.msra.mxu0 0.0
    %9191 = vmatprep.subr.mxu0 0.0
    %9192 = vmatpush2.msra.mxu0 0.0
    %9193 = vmatprep.subr.mxu0 0.0
    %9194 = vmatpush2.msra.mxu0 0.0
    %9195 = vmatprep.subr.mxu0 0.0
    %9196 = vmatpush2.msra.mxu0 0.0
    %9197 = vmatprep.subr.mxu0 0.0
    %9198 = vmatpush2.msra.mxu0 0.0
    %9199 = vmatprep.subr.mxu0 0.0
    %9200 = vmatpush2.msra.mxu0 0.0
    %9201 = vmatprep.subr.mxu0 0.0
    %9202 = vmatpush2.msra.mxu0 0.0
    %9203 = vmatprep.subr.mxu0 0.0
    %9204 = vmatpush2.msra.mxu0 0.0
    %9205 = vmatprep.subr.mxu0 0.0
    %9206 = vmatpush2.msra.mxu0 0.0
    %9207 = vmatprep.subr.mxu0 0.0
    %9208 = vmatpush2.msra.mxu0 0.0
    %9209 = vmatprep.subr.mxu0 0.0
    %9210 = vmatpush2.msra.mxu0 0.0
    %9211 = vmatprep.subr.mxu0 0.0
    %9212 = vmatpush2.msra.mxu0 0.0
    %9213 = vmatprep.subr.mxu0 0.0
    %9214 = vmatpush2.msra.mxu0 0.0
    %9215 = vmatprep.subr.mxu0 0.0
    %9216 = vmatpush2.msra.mxu0 0.0
    %9217 = vmatprep.subr.mxu0 0.0
    %9218 = vmatpush2.msra.mxu0 0.0
    %9219 = vmatprep.subr.mxu0 0.0
    %9220 = vmatpush2.msra.mxu0 0.0
    %9221 = vmatprep.mubr.f32.mxu0 0.0
    %9222 = vmatmul.mubr.f32.gmra.mxu0 %v9155
    %v9223 = vpop.f32.mrf.mxu0
    %v9224 = vadd.f32 0.0, %v9223
    %v9225 = vpop.f32.mrf.mxu0
    %9226 = vdwg.mxu0
    %v9227 = vadd.f32 %v9150, %v9224
    %s9228 = scalar_lea.vmem %s6, 112
    %v9229 = vld [vmem:[%s9228] sm:$0xff]
    %v9230 = vld [vmem:[%s9228 + $0x8] sm:$0xff]
    %v9232 = vsel %vm8691, %v8673, 0
    %9234 = vmatprep.subr.mxu0 0.0
    %9235 = vmatpush1.msra.mxu0 0.0
    %9236 = vmatprep.subr.mxu0 0.0
    %9237 = vmatpush1.msra.mxu0 0.0
    %9238 = vmatprep.subr.mxu0 0.0
    %9239 = vmatpush1.msra.mxu0 0.0
    %9240 = vmatprep.subr.mxu0 0.0
    %9241 = vmatpush1.msra.mxu0 0.0
    %9242 = vmatprep.subr.mxu0 0.0
    %9243 = vmatpush1.msra.mxu0 0.0
    %9244 = vmatprep.subr.mxu0 0.0
    %9245 = vmatpush1.msra.mxu0 0.0
    %9246 = vmatprep.subr.mxu0 0.0
    %9247 = vmatpush1.msra.mxu0 0.0
    %9248 = vmatprep.subr.mxu0 0.0
    %9249 = vmatpush1.msra.mxu0 0.0
    %9250 = vmatprep.subr.mxu0 0.0
    %9251 = vmatpush1.msra.mxu0 0.0
    %9252 = vmatprep.subr.mxu0 0.0
    %9253 = vmatpush1.msra.mxu0 0.0
    %9254 = vmatprep.subr.mxu0 0.0
    %9255 = vmatpush1.msra.mxu0 0.0
    %9256 = vmatprep.subr.mxu0 0.0
    %9257 = vmatpush1.msra.mxu0 0.0
    %9258 = vmatprep.subr.mxu0 0.0
    %9259 = vmatpush1.msra.mxu0 0.0
    %9260 = vmatprep.subr.mxu0 0.0
    %9261 = vmatpush1.msra.mxu0 0.0
    %9262 = vmatprep.subr.mxu0 0.0
    %9263 = vmatpush1.msra.mxu0 %v9230
    %9264 = vmatprep.subr.mxu0 0.0
    %9265 = vmatpush1.msra.mxu0 %v9229
    %9266 = vmatprep.subr.mxu0 0.0
    %9267 = vmatpush2.msra.mxu0 0.0
    %9268 = vmatprep.subr.mxu0 0.0
    %9269 = vmatpush2.msra.mxu0 0.0
    %9270 = vmatprep.subr.mxu0 0.0
    %9271 = vmatpush2.msra.mxu0 0.0
    %9272 = vmatprep.subr.mxu0 0.0
    %9273 = vmatpush2.msra.mxu0 0.0
    %9274 = vmatprep.subr.mxu0 0.0
    %9275 = vmatpush2.msra.mxu0 0.0
    %9276 = vmatprep.subr.mxu0 0.0
    %9277 = vmatpush2.msra.mxu0 0.0
    %9278 = vmatprep.subr.mxu0 0.0
    %9279 = vmatpush2.msra.mxu0 0.0
    %9280 = vmatprep.subr.mxu0 0.0
    %9281 = vmatpush2.msra.mxu0 0.0
    %9282 = vmatprep.subr.mxu0 0.0
    %9283 = vmatpush2.msra.mxu0 0.0
    %9284 = vmatprep.subr.mxu0 0.0
    %9285 = vmatpush2.msra.mxu0 0.0
    %9286 = vmatprep.subr.mxu0 0.0
    %9287 = vmatpush2.msra.mxu0 0.0
    %9288 = vmatprep.subr.mxu0 0.0
    %9289 = vmatpush2.msra.mxu0 0.0
    %9290 = vmatprep.subr.mxu0 0.0
    %9291 = vmatpush2.msra.mxu0 0.0
    %9292 = vmatprep.subr.mxu0 0.0
    %9293 = vmatpush2.msra.mxu0 0.0
    %9294 = vmatprep.subr.mxu0 0.0
    %9295 = vmatpush2.msra.mxu0 0.0
    %9296 = vmatprep.subr.mxu0 0.0
    %9297 = vmatpush2.msra.mxu0 0.0
    %9298 = vmatprep.mubr.f32.mxu0 0.0
    %9299 = vmatmul.mubr.f32.gmra.mxu0 %v9232
    %v9300 = vpop.f32.mrf.mxu0
    %v9301 = vadd.f32 0.0, %v9300
    %v9302 = vpop.f32.mrf.mxu0
    %9303 = vdwg.mxu0
    %v9304 = vadd.f32 %v9227, %v9301
    %s9305 = scalar_lea.vmem %s6, 128
    %v9306 = vld [vmem:[%s9305] sm:$0xff]
    %v9307 = vld [vmem:[%s9305 + $0x8] sm:$0xff]
    %v9309 = vsel %vm8691, %v8674, 0
    %9311 = vmatprep.subr.mxu0 0.0
    %9312 = vmatpush1.msra.mxu0 0.0
    %9313 = vmatprep.subr.mxu0 0.0
    %9314 = vmatpush1.msra.mxu0 0.0
    %9315 = vmatprep.subr.mxu0 0.0
    %9316 = vmatpush1.msra.mxu0 0.0
    %9317 = vmatprep.subr.mxu0 0.0
    %9318 = vmatpush1.msra.mxu0 0.0
    %9319 = vmatprep.subr.mxu0 0.0
    %9320 = vmatpush1.msra.mxu0 0.0
    %9321 = vmatprep.subr.mxu0 0.0
    %9322 = vmatpush1.msra.mxu0 0.0
    %9323 = vmatprep.subr.mxu0 0.0
    %9324 = vmatpush1.msra.mxu0 0.0
    %9325 = vmatprep.subr.mxu0 0.0
    %9326 = vmatpush1.msra.mxu0 0.0
    %9327 = vmatprep.subr.mxu0 0.0
    %9328 = vmatpush1.msra.mxu0 0.0
    %9329 = vmatprep.subr.mxu0 0.0
    %9330 = vmatpush1.msra.mxu0 0.0
    %9331 = vmatprep.subr.mxu0 0.0
    %9332 = vmatpush1.msra.mxu0 0.0
    %9333 = vmatprep.subr.mxu0 0.0
    %9334 = vmatpush1.msra.mxu0 0.0
    %9335 = vmatprep.subr.mxu0 0.0
    %9336 = vmatpush1.msra.mxu0 0.0
    %9337 = vmatprep.subr.mxu0 0.0
    %9338 = vmatpush1.msra.mxu0 0.0
    %9339 = vmatprep.subr.mxu0 0.0
    %9340 = vmatpush1.msra.mxu0 %v9307
    %9341 = vmatprep.subr.mxu0 0.0
    %9342 = vmatpush1.msra.mxu0 %v9306
    %9343 = vmatprep.subr.mxu0 0.0
    %9344 = vmatpush2.msra.mxu0 0.0
    %9345 = vmatprep.subr.mxu0 0.0
    %9346 = vmatpush2.msra.mxu0 0.0
    %9347 = vmatprep.subr.mxu0 0.0
    %9348 = vmatpush2.msra.mxu0 0.0
    %9349 = vmatprep.subr.mxu0 0.0
    %9350 = vmatpush2.msra.mxu0 0.0
    %9351 = vmatprep.subr.mxu0 0.0
    %9352 = vmatpush2.msra.mxu0 0.0
    %9353 = vmatprep.subr.mxu0 0.0
    %9354 = vmatpush2.msra.mxu0 0.0
    %9355 = vmatprep.subr.mxu0 0.0
    %9356 = vmatpush2.msra.mxu0 0.0
    %9357 = vmatprep.subr.mxu0 0.0
    %9358 = vmatpush2.msra.mxu0 0.0
    %9359 = vmatprep.subr.mxu0 0.0
    %9360 = vmatpush2.msra.mxu0 0.0
    %9361 = vmatprep.subr.mxu0 0.0
    %9362 = vmatpush2.msra.mxu0 0.0
    %9363 = vmatprep.subr.mxu0 0.0
    %9364 = vmatpush2.msra.mxu0 0.0
    %9365 = vmatprep.subr.mxu0 0.0
    %9366 = vmatpush2.msra.mxu0 0.0
    %9367 = vmatprep.subr.mxu0 0.0
    %9368 = vmatpush2.msra.mxu0 0.0
    %9369 = vmatprep.subr.mxu0 0.0
    %9370 = vmatpush2.msra.mxu0 0.0
    %9371 = vmatprep.subr.mxu0 0.0
    %9372 = vmatpush2.msra.mxu0 0.0
    %9373 = vmatprep.subr.mxu0 0.0
    %9374 = vmatpush2.msra.mxu0 0.0
    %9375 = vmatprep.mubr.f32.mxu0 0.0
    %9376 = vmatmul.mubr.f32.gmra.mxu0 %v9309
    %v9377 = vpop.f32.mrf.mxu0
    %v9378 = vadd.f32 0.0, %v9377
    %v9379 = vpop.f32.mrf.mxu0
    %9380 = vdwg.mxu0
    %v9381 = vadd.f32 %v9304, %v9378
    %s9382 = scalar_lea.vmem %s6, 144
    %v9383 = vld [vmem:[%s9382] sm:$0xff]
    %v9384 = vld [vmem:[%s9382 + $0x8] sm:$0xff]
    %v9386 = vsel %vm8691, %v8675, 0
    %9388 = vmatprep.subr.mxu0 0.0
    %9389 = vmatpush1.msra.mxu0 0.0
    %9390 = vmatprep.subr.mxu0 0.0
    %9391 = vmatpush1.msra.mxu0 0.0
    %9392 = vmatprep.subr.mxu0 0.0
    %9393 = vmatpush1.msra.mxu0 0.0
    %9394 = vmatprep.subr.mxu0 0.0
    %9395 = vmatpush1.msra.mxu0 0.0
    %9396 = vmatprep.subr.mxu0 0.0
    %9397 = vmatpush1.msra.mxu0 0.0
    %9398 = vmatprep.subr.mxu0 0.0
    %9399 = vmatpush1.msra.mxu0 0.0
    %9400 = vmatprep.subr.mxu0 0.0
    %9401 = vmatpush1.msra.mxu0 0.0
    %9402 = vmatprep.subr.mxu0 0.0
    %9403 = vmatpush1.msra.mxu0 0.0
    %9404 = vmatprep.subr.mxu0 0.0
    %9405 = vmatpush1.msra.mxu0 0.0
    %9406 = vmatprep.subr.mxu0 0.0
    %9407 = vmatpush1.msra.mxu0 0.0
    %9408 = vmatprep.subr.mxu0 0.0
    %9409 = vmatpush1.msra.mxu0 0.0
    %9410 = vmatprep.subr.mxu0 0.0
    %9411 = vmatpush1.msra.mxu0 0.0
    %9412 = vmatprep.subr.mxu0 0.0
    %9413 = vmatpush1.msra.mxu0 0.0
    %9414 = vmatprep.subr.mxu0 0.0
    %9415 = vmatpush1.msra.mxu0 0.0
    %9416 = vmatprep.subr.mxu0 0.0
    %9417 = vmatpush1.msra.mxu0 %v9384
    %9418 = vmatprep.subr.mxu0 0.0
    %9419 = vmatpush1.msra.mxu0 %v9383
    %9420 = vmatprep.subr.mxu0 0.0
    %9421 = vmatpush2.msra.mxu0 0.0
    %9422 = vmatprep.subr.mxu0 0.0
    %9423 = vmatpush2.msra.mxu0 0.0
    %9424 = vmatprep.subr.mxu0 0.0
    %9425 = vmatpush2.msra.mxu0 0.0
    %9426 = vmatprep.subr.mxu0 0.0
    %9427 = vmatpush2.msra.mxu0 0.0
    %9428 = vmatprep.subr.mxu0 0.0
    %9429 = vmatpush2.msra.mxu0 0.0
    %9430 = vmatprep.subr.mxu0 0.0
    %9431 = vmatpush2.msra.mxu0 0.0
    %9432 = vmatprep.subr.mxu0 0.0
    %9433 = vmatpush2.msra.mxu0 0.0
    %9434 = vmatprep.subr.mxu0 0.0
    %9435 = vmatpush2.msra.mxu0 0.0
    %9436 = vmatprep.subr.mxu0 0.0
    %9437 = vmatpush2.msra.mxu0 0.0
    %9438 = vmatprep.subr.mxu0 0.0
    %9439 = vmatpush2.msra.mxu0 0.0
    %9440 = vmatprep.subr.mxu0 0.0
    %9441 = vmatpush2.msra.mxu0 0.0
    %9442 = vmatprep.subr.mxu0 0.0
    %9443 = vmatpush2.msra.mxu0 0.0
    %9444 = vmatprep.subr.mxu0 0.0
    %9445 = vmatpush2.msra.mxu0 0.0
    %9446 = vmatprep.subr.mxu0 0.0
    %9447 = vmatpush2.msra.mxu0 0.0
    %9448 = vmatprep.subr.mxu0 0.0
    %9449 = vmatpush2.msra.mxu0 0.0
    %9450 = vmatprep.subr.mxu0 0.0
    %9451 = vmatpush2.msra.mxu0 0.0
    %9452 = vmatprep.mubr.f32.mxu0 0.0
    %9453 = vmatmul.mubr.f32.gmra.mxu0 %v9386
    %v9454 = vpop.f32.mrf.mxu0
    %v9455 = vadd.f32 0.0, %v9454
    %v9456 = vpop.f32.mrf.mxu0
    %9457 = vdwg.mxu0
    %v9458 = vadd.f32 %v9381, %v9455
    %s9459 = scalar_lea.vmem %s6, 160
    %v9460 = vld [vmem:[%s9459] sm:$0xff]
    %v9461 = vld [vmem:[%s9459 + $0x8] sm:$0xff]
    %v9463 = vsel %vm8691, %v8676, 0
    %9465 = vmatprep.subr.mxu0 0.0
    %9466 = vmatpush1.msra.mxu0 0.0
    %9467 = vmatprep.subr.mxu0 0.0
    %9468 = vmatpush1.msra.mxu0 0.0
    %9469 = vmatprep.subr.mxu0 0.0
    %9470 = vmatpush1.msra.mxu0 0.0
    %9471 = vmatprep.subr.mxu0 0.0
    %9472 = vmatpush1.msra.mxu0 0.0
    %9473 = vmatprep.subr.mxu0 0.0
    %9474 = vmatpush1.msra.mxu0 0.0
    %9475 = vmatprep.subr.mxu0 0.0
    %9476 = vmatpush1.msra.mxu0 0.0
    %9477 = vmatprep.subr.mxu0 0.0
    %9478 = vmatpush1.msra.mxu0 0.0
    %9479 = vmatprep.subr.mxu0 0.0
    %9480 = vmatpush1.msra.mxu0 0.0
    %9481 = vmatprep.subr.mxu0 0.0
    %9482 = vmatpush1.msra.mxu0 0.0
    %9483 = vmatprep.subr.mxu0 0.0
    %9484 = vmatpush1.msra.mxu0 0.0
    %9485 = vmatprep.subr.mxu0 0.0
    %9486 = vmatpush1.msra.mxu0 0.0
    %9487 = vmatprep.subr.mxu0 0.0
    %9488 = vmatpush1.msra.mxu0 0.0
    %9489 = vmatprep.subr.mxu0 0.0
    %9490 = vmatpush1.msra.mxu0 0.0
    %9491 = vmatprep.subr.mxu0 0.0
    %9492 = vmatpush1.msra.mxu0 0.0
    %9493 = vmatprep.subr.mxu0 0.0
    %9494 = vmatpush1.msra.mxu0 %v9461
    %9495 = vmatprep.subr.mxu0 0.0
    %9496 = vmatpush1.msra.mxu0 %v9460
    %9497 = vmatprep.subr.mxu0 0.0
    %9498 = vmatpush2.msra.mxu0 0.0
    %9499 = vmatprep.subr.mxu0 0.0
    %9500 = vmatpush2.msra.mxu0 0.0
    %9501 = vmatprep.subr.mxu0 0.0
    %9502 = vmatpush2.msra.mxu0 0.0
    %9503 = vmatprep.subr.mxu0 0.0
    %9504 = vmatpush2.msra.mxu0 0.0
    %9505 = vmatprep.subr.mxu0 0.0
    %9506 = vmatpush2.msra.mxu0 0.0
    %9507 = vmatprep.subr.mxu0 0.0
    %9508 = vmatpush2.msra.mxu0 0.0
    %9509 = vmatprep.subr.mxu0 0.0
    %9510 = vmatpush2.msra.mxu0 0.0
    %9511 = vmatprep.subr.mxu0 0.0
    %9512 = vmatpush2.msra.mxu0 0.0
    %9513 = vmatprep.subr.mxu0 0.0
    %9514 = vmatpush2.msra.mxu0 0.0
    %9515 = vmatprep.subr.mxu0 0.0
    %9516 = vmatpush2.msra.mxu0 0.0
    %9517 = vmatprep.subr.mxu0 0.0
    %9518 = vmatpush2.msra.mxu0 0.0
    %9519 = vmatprep.subr.mxu0 0.0
    %9520 = vmatpush2.msra.mxu0 0.0
    %9521 = vmatprep.subr.mxu0 0.0
    %9522 = vmatpush2.msra.mxu0 0.0
    %9523 = vmatprep.subr.mxu0 0.0
    %9524 = vmatpush2.msra.mxu0 0.0
    %9525 = vmatprep.subr.mxu0 0.0
    %9526 = vmatpush2.msra.mxu0 0.0
    %9527 = vmatprep.subr.mxu0 0.0
    %9528 = vmatpush2.msra.mxu0 0.0
    %9529 = vmatprep.mubr.f32.mxu0 0.0
    %9530 = vmatmul.mubr.f32.gmra.mxu0 %v9463
    %v9531 = vpop.f32.mrf.mxu0
    %v9532 = vadd.f32 0.0, %v9531
    %v9533 = vpop.f32.mrf.mxu0
    %9534 = vdwg.mxu0
    %v9535 = vadd.f32 %v9458, %v9532
    %s9536 = scalar_lea.vmem %s6, 176
    %v9537 = vld [vmem:[%s9536] sm:$0xff]
    %v9538 = vld [vmem:[%s9536 + $0x8] sm:$0xff]
    %v9540 = vsel %vm8691, %v8677, 0
    %9542 = vmatprep.subr.mxu0 0.0
    %9543 = vmatpush1.msra.mxu0 0.0
    %9544 = vmatprep.subr.mxu0 0.0
    %9545 = vmatpush1.msra.mxu0 0.0
    %9546 = vmatprep.subr.mxu0 0.0
    %9547 = vmatpush1.msra.mxu0 0.0
    %9548 = vmatprep.subr.mxu0 0.0
    %9549 = vmatpush1.msra.mxu0 0.0
    %9550 = vmatprep.subr.mxu0 0.0
    %9551 = vmatpush1.msra.mxu0 0.0
    %9552 = vmatprep.subr.mxu0 0.0
    %9553 = vmatpush1.msra.mxu0 0.0
    %9554 = vmatprep.subr.mxu0 0.0
    %9555 = vmatpush1.msra.mxu0 0.0
    %9556 = vmatprep.subr.mxu0 0.0
    %9557 = vmatpush1.msra.mxu0 0.0
    %9558 = vmatprep.subr.mxu0 0.0
    %9559 = vmatpush1.msra.mxu0 0.0
    %9560 = vmatprep.subr.mxu0 0.0
    %9561 = vmatpush1.msra.mxu0 0.0
    %9562 = vmatprep.subr.mxu0 0.0
    %9563 = vmatpush1.msra.mxu0 0.0
    %9564 = vmatprep.subr.mxu0 0.0
    %9565 = vmatpush1.msra.mxu0 0.0
    %9566 = vmatprep.subr.mxu0 0.0
    %9567 = vmatpush1.msra.mxu0 0.0
    %9568 = vmatprep.subr.mxu0 0.0
    %9569 = vmatpush1.msra.mxu0 0.0
    %9570 = vmatprep.subr.mxu0 0.0
    %9571 = vmatpush1.msra.mxu0 %v9538
    %9572 = vmatprep.subr.mxu0 0.0
    %9573 = vmatpush1.msra.mxu0 %v9537
    %9574 = vmatprep.subr.mxu0 0.0
    %9575 = vmatpush2.msra.mxu0 0.0
    %9576 = vmatprep.subr.mxu0 0.0
    %9577 = vmatpush2.msra.mxu0 0.0
    %9578 = vmatprep.subr.mxu0 0.0
    %9579 = vmatpush2.msra.mxu0 0.0
    %9580 = vmatprep.subr.mxu0 0.0
    %9581 = vmatpush2.msra.mxu0 0.0
    %9582 = vmatprep.subr.mxu0 0.0
    %9583 = vmatpush2.msra.mxu0 0.0
    %9584 = vmatprep.subr.mxu0 0.0
    %9585 = vmatpush2.msra.mxu0 0.0
    %9586 = vmatprep.subr.mxu0 0.0
    %9587 = vmatpush2.msra.mxu0 0.0
    %9588 = vmatprep.subr.mxu0 0.0
    %9589 = vmatpush2.msra.mxu0 0.0
    %9590 = vmatprep.subr.mxu0 0.0
    %9591 = vmatpush2.msra.mxu0 0.0
    %9592 = vmatprep.subr.mxu0 0.0
    %9593 = vmatpush2.msra.mxu0 0.0
    %9594 = vmatprep.subr.mxu0 0.0
    %9595 = vmatpush2.msra.mxu0 0.0
    %9596 = vmatprep.subr.mxu0 0.0
    %9597 = vmatpush2.msra.mxu0 0.0
    %9598 = vmatprep.subr.mxu0 0.0
    %9599 = vmatpush2.msra.mxu0 0.0
    %9600 = vmatprep.subr.mxu0 0.0
    %9601 = vmatpush2.msra.mxu0 0.0
    %9602 = vmatprep.subr.mxu0 0.0
    %9603 = vmatpush2.msra.mxu0 0.0
    %9604 = vmatprep.subr.mxu0 0.0
    %9605 = vmatpush2.msra.mxu0 0.0
    %9606 = vmatprep.mubr.f32.mxu0 0.0
    %9607 = vmatmul.mubr.f32.gmra.mxu0 %v9540
    %v9608 = vpop.f32.mrf.mxu0
    %v9609 = vadd.f32 0.0, %v9608
    %v9610 = vpop.f32.mrf.mxu0
    %9611 = vdwg.mxu0
    %v9612 = vadd.f32 %v9535, %v9609
    %s9613 = scalar_lea.vmem %s6, 192
    %v9614 = vld [vmem:[%s9613] sm:$0xff]
    %v9615 = vld [vmem:[%s9613 + $0x8] sm:$0xff]
    %v9617 = vsel %vm8691, %v8678, 0
    %9619 = vmatprep.subr.mxu0 0.0
    %9620 = vmatpush1.msra.mxu0 0.0
    %9621 = vmatprep.subr.mxu0 0.0
    %9622 = vmatpush1.msra.mxu0 0.0
    %9623 = vmatprep.subr.mxu0 0.0
    %9624 = vmatpush1.msra.mxu0 0.0
    %9625 = vmatprep.subr.mxu0 0.0
    %9626 = vmatpush1.msra.mxu0 0.0
    %9627 = vmatprep.subr.mxu0 0.0
    %9628 = vmatpush1.msra.mxu0 0.0
    %9629 = vmatprep.subr.mxu0 0.0
    %9630 = vmatpush1.msra.mxu0 0.0
    %9631 = vmatprep.subr.mxu0 0.0
    %9632 = vmatpush1.msra.mxu0 0.0
    %9633 = vmatprep.subr.mxu0 0.0
    %9634 = vmatpush1.msra.mxu0 0.0
    %9635 = vmatprep.subr.mxu0 0.0
    %9636 = vmatpush1.msra.mxu0 0.0
    %9637 = vmatprep.subr.mxu0 0.0
    %9638 = vmatpush1.msra.mxu0 0.0
    %9639 = vmatprep.subr.mxu0 0.0
    %9640 = vmatpush1.msra.mxu0 0.0
    %9641 = vmatprep.subr.mxu0 0.0
    %9642 = vmatpush1.msra.mxu0 0.0
    %9643 = vmatprep.subr.mxu0 0.0
    %9644 = vmatpush1.msra.mxu0 0.0
    %9645 = vmatprep.subr.mxu0 0.0
    %9646 = vmatpush1.msra.mxu0 0.0
    %9647 = vmatprep.subr.mxu0 0.0
    %9648 = vmatpush1.msra.mxu0 %v9615
    %9649 = vmatprep.subr.mxu0 0.0
    %9650 = vmatpush1.msra.mxu0 %v9614
    %9651 = vmatprep.subr.mxu0 0.0
    %9652 = vmatpush2.msra.mxu0 0.0
    %9653 = vmatprep.subr.mxu0 0.0
    %9654 = vmatpush2.msra.mxu0 0.0
    %9655 = vmatprep.subr.mxu0 0.0
    %9656 = vmatpush2.msra.mxu0 0.0
    %9657 = vmatprep.subr.mxu0 0.0
    %9658 = vmatpush2.msra.mxu0 0.0
    %9659 = vmatprep.subr.mxu0 0.0
    %9660 = vmatpush2.msra.mxu0 0.0
    %9661 = vmatprep.subr.mxu0 0.0
    %9662 = vmatpush2.msra.mxu0 0.0
    %9663 = vmatprep.subr.mxu0 0.0
    %9664 = vmatpush2.msra.mxu0 0.0
    %9665 = vmatprep.subr.mxu0 0.0
    %9666 = vmatpush2.msra.mxu0 0.0
    %9667 = vmatprep.subr.mxu0 0.0
    %9668 = vmatpush2.msra.mxu0 0.0
    %9669 = vmatprep.subr.mxu0 0.0
    %9670 = vmatpush2.msra.mxu0 0.0
    %9671 = vmatprep.subr.mxu0 0.0
    %9672 = vmatpush2.msra.mxu0 0.0
    %9673 = vmatprep.subr.mxu0 0.0
    %9674 = vmatpush2.msra.mxu0 0.0
    %9675 = vmatprep.subr.mxu0 0.0
    %9676 = vmatpush2.msra.mxu0 0.0
    %9677 = vmatprep.subr.mxu0 0.0
    %9678 = vmatpush2.msra.mxu0 0.0
    %9679 = vmatprep.subr.mxu0 0.0
    %9680 = vmatpush2.msra.mxu0 0.0
    %9681 = vmatprep.subr.mxu0 0.0
    %9682 = vmatpush2.msra.mxu0 0.0
    %9683 = vmatprep.mubr.f32.mxu0 0.0
    %9684 = vmatmul.mubr.f32.gmra.mxu0 %v9617
    %v9685 = vpop.f32.mrf.mxu0
    %v9686 = vadd.f32 0.0, %v9685
    %v9687 = vpop.f32.mrf.mxu0
    %9688 = vdwg.mxu0
    %v9689 = vadd.f32 %v9612, %v9686
    %s9690 = scalar_lea.vmem %s6, 208
    %v9691 = vld [vmem:[%s9690] sm:$0xff]
    %v9692 = vld [vmem:[%s9690 + $0x8] sm:$0xff]
    %v9694 = vsel %vm8691, %v8679, 0
    %9696 = vmatprep.subr.mxu0 0.0
    %9697 = vmatpush1.msra.mxu0 0.0
    %9698 = vmatprep.subr.mxu0 0.0
    %9699 = vmatpush1.msra.mxu0 0.0
    %9700 = vmatprep.subr.mxu0 0.0
    %9701 = vmatpush1.msra.mxu0 0.0
    %9702 = vmatprep.subr.mxu0 0.0
    %9703 = vmatpush1.msra.mxu0 0.0
    %9704 = vmatprep.subr.mxu0 0.0
    %9705 = vmatpush1.msra.mxu0 0.0
    %9706 = vmatprep.subr.mxu0 0.0
    %9707 = vmatpush1.msra.mxu0 0.0
    %9708 = vmatprep.subr.mxu0 0.0
    %9709 = vmatpush1.msra.mxu0 0.0
    %9710 = vmatprep.subr.mxu0 0.0
    %9711 = vmatpush1.msra.mxu0 0.0
    %9712 = vmatprep.subr.mxu0 0.0
    %9713 = vmatpush1.msra.mxu0 0.0
    %9714 = vmatprep.subr.mxu0 0.0
    %9715 = vmatpush1.msra.mxu0 0.0
    %9716 = vmatprep.subr.mxu0 0.0
    %9717 = vmatpush1.msra.mxu0 0.0
    %9718 = vmatprep.subr.mxu0 0.0
    %9719 = vmatpush1.msra.mxu0 0.0
    %9720 = vmatprep.subr.mxu0 0.0
    %9721 = vmatpush1.msra.mxu0 0.0
    %9722 = vmatprep.subr.mxu0 0.0
    %9723 = vmatpush1.msra.mxu0 0.0
    %9724 = vmatprep.subr.mxu0 0.0
    %9725 = vmatpush1.msra.mxu0 %v9692
    %9726 = vmatprep.subr.mxu0 0.0
    %9727 = vmatpush1.msra.mxu0 %v9691
    %9728 = vmatprep.subr.mxu0 0.0
    %9729 = vmatpush2.msra.mxu0 0.0
    %9730 = vmatprep.subr.mxu0 0.0
    %9731 = vmatpush2.msra.mxu0 0.0
    %9732 = vmatprep.subr.mxu0 0.0
    %9733 = vmatpush2.msra.mxu0 0.0
    %9734 = vmatprep.subr.mxu0 0.0
    %9735 = vmatpush2.msra.mxu0 0.0
    %9736 = vmatprep.subr.mxu0 0.0
    %9737 = vmatpush2.msra.mxu0 0.0
    %9738 = vmatprep.subr.mxu0 0.0
    %9739 = vmatpush2.msra.mxu0 0.0
    %9740 = vmatprep.subr.mxu0 0.0
    %9741 = vmatpush2.msra.mxu0 0.0
    %9742 = vmatprep.subr.mxu0 0.0
    %9743 = vmatpush2.msra.mxu0 0.0
    %9744 = vmatprep.subr.mxu0 0.0
    %9745 = vmatpush2.msra.mxu0 0.0
    %9746 = vmatprep.subr.mxu0 0.0
    %9747 = vmatpush2.msra.mxu0 0.0
    %9748 = vmatprep.subr.mxu0 0.0
    %9749 = vmatpush2.msra.mxu0 0.0
    %9750 = vmatprep.subr.mxu0 0.0
    %9751 = vmatpush2.msra.mxu0 0.0
    %9752 = vmatprep.subr.mxu0 0.0
    %9753 = vmatpush2.msra.mxu0 0.0
    %9754 = vmatprep.subr.mxu0 0.0
    %9755 = vmatpush2.msra.mxu0 0.0
    %9756 = vmatprep.subr.mxu0 0.0
    %9757 = vmatpush2.msra.mxu0 0.0
    %9758 = vmatprep.subr.mxu0 0.0
    %9759 = vmatpush2.msra.mxu0 0.0
    %9760 = vmatprep.mubr.f32.mxu0 0.0
    %9761 = vmatmul.mubr.f32.gmra.mxu0 %v9694
    %v9762 = vpop.f32.mrf.mxu0
    %v9763 = vadd.f32 0.0, %v9762
    %v9764 = vpop.f32.mrf.mxu0
    %9765 = vdwg.mxu0
    %v9766 = vadd.f32 %v9689, %v9763
    %s9767 = scalar_lea.vmem %s6, 224
    %v9768 = vld [vmem:[%s9767] sm:$0xff]
    %v9769 = vld [vmem:[%s9767 + $0x8] sm:$0xff]
    %v9771 = vsel %vm8691, %v8680, 0
    %9773 = vmatprep.subr.mxu0 0.0
    %9774 = vmatpush1.msra.mxu0 0.0
    %9775 = vmatprep.subr.mxu0 0.0
    %9776 = vmatpush1.msra.mxu0 0.0
    %9777 = vmatprep.subr.mxu0 0.0
    %9778 = vmatpush1.msra.mxu0 0.0
    %9779 = vmatprep.subr.mxu0 0.0
    %9780 = vmatpush1.msra.mxu0 0.0
    %9781 = vmatprep.subr.mxu0 0.0
    %9782 = vmatpush1.msra.mxu0 0.0
    %9783 = vmatprep.subr.mxu0 0.0
    %9784 = vmatpush1.msra.mxu0 0.0
    %9785 = vmatprep.subr.mxu0 0.0
    %9786 = vmatpush1.msra.mxu0 0.0
    %9787 = vmatprep.subr.mxu0 0.0
    %9788 = vmatpush1.msra.mxu0 0.0
    %9789 = vmatprep.subr.mxu0 0.0
    %9790 = vmatpush1.msra.mxu0 0.0
    %9791 = vmatprep.subr.mxu0 0.0
    %9792 = vmatpush1.msra.mxu0 0.0
    %9793 = vmatprep.subr.mxu0 0.0
    %9794 = vmatpush1.msra.mxu0 0.0
    %9795 = vmatprep.subr.mxu0 0.0
    %9796 = vmatpush1.msra.mxu0 0.0
    %9797 = vmatprep.subr.mxu0 0.0
    %9798 = vmatpush1.msra.mxu0 0.0
    %9799 = vmatprep.subr.mxu0 0.0
    %9800 = vmatpush1.msra.mxu0 0.0
    %9801 = vmatprep.subr.mxu0 0.0
    %9802 = vmatpush1.msra.mxu0 %v9769
    %9803 = vmatprep.subr.mxu0 0.0
    %9804 = vmatpush1.msra.mxu0 %v9768
    %9805 = vmatprep.subr.mxu0 0.0
    %9806 = vmatpush2.msra.mxu0 0.0
    %9807 = vmatprep.subr.mxu0 0.0
    %9808 = vmatpush2.msra.mxu0 0.0
    %9809 = vmatprep.subr.mxu0 0.0
    %9810 = vmatpush2.msra.mxu0 0.0
    %9811 = vmatprep.subr.mxu0 0.0
    %9812 = vmatpush2.msra.mxu0 0.0
    %9813 = vmatprep.subr.mxu0 0.0
    %9814 = vmatpush2.msra.mxu0 0.0
    %9815 = vmatprep.subr.mxu0 0.0
    %9816 = vmatpush2.msra.mxu0 0.0
    %9817 = vmatprep.subr.mxu0 0.0
    %9818 = vmatpush2.msra.mxu0 0.0
    %9819 = vmatprep.subr.mxu0 0.0
    %9820 = vmatpush2.msra.mxu0 0.0
    %9821 = vmatprep.subr.mxu0 0.0
    %9822 = vmatpush2.msra.mxu0 0.0
    %9823 = vmatprep.subr.mxu0 0.0
    %9824 = vmatpush2.msra.mxu0 0.0
    %9825 = vmatprep.subr.mxu0 0.0
    %9826 = vmatpush2.msra.mxu0 0.0
    %9827 = vmatprep.subr.mxu0 0.0
    %9828 = vmatpush2.msra.mxu0 0.0
    %9829 = vmatprep.subr.mxu0 0.0
    %9830 = vmatpush2.msra.mxu0 0.0
    %9831 = vmatprep.subr.mxu0 0.0
    %9832 = vmatpush2.msra.mxu0 0.0
    %9833 = vmatprep.subr.mxu0 0.0
    %9834 = vmatpush2.msra.mxu0 0.0
    %9835 = vmatprep.subr.mxu0 0.0
    %9836 = vmatpush2.msra.mxu0 0.0
    %9837 = vmatprep.mubr.f32.mxu0 0.0
    %9838 = vmatmul.mubr.f32.gmra.mxu0 %v9771
    %v9839 = vpop.f32.mrf.mxu0
    %v9840 = vadd.f32 0.0, %v9839
    %v9841 = vpop.f32.mrf.mxu0
    %9842 = vdwg.mxu0
    %v9843 = vadd.f32 %v9766, %v9840
    %s9844 = scalar_lea.vmem %s6, 240
    %v9845 = vld [vmem:[%s9844] sm:$0xff]
    %v9846 = vld [vmem:[%s9844 + $0x8] sm:$0xff]
    %v9848 = vsel %vm8691, %v8681, 0
    %9850 = vmatprep.subr.mxu0 0.0
    %9851 = vmatpush1.msra.mxu0 0.0
    %9852 = vmatprep.subr.mxu0 0.0
    %9853 = vmatpush1.msra.mxu0 0.0
    %9854 = vmatprep.subr.mxu0 0.0
    %9855 = vmatpush1.msra.mxu0 0.0
    %9856 = vmatprep.subr.mxu0 0.0
    %9857 = vmatpush1.msra.mxu0 0.0
    %9858 = vmatprep.subr.mxu0 0.0
    %9859 = vmatpush1.msra.mxu0 0.0
    %9860 = vmatprep.subr.mxu0 0.0
    %9861 = vmatpush1.msra.mxu0 0.0
    %9862 = vmatprep.subr.mxu0 0.0
    %9863 = vmatpush1.msra.mxu0 0.0
    %9864 = vmatprep.subr.mxu0 0.0
    %9865 = vmatpush1.msra.mxu0 0.0
    %9866 = vmatprep.subr.mxu0 0.0
    %9867 = vmatpush1.msra.mxu0 0.0
    %9868 = vmatprep.subr.mxu0 0.0
    %9869 = vmatpush1.msra.mxu0 0.0
    %9870 = vmatprep.subr.mxu0 0.0
    %9871 = vmatpush1.msra.mxu0 0.0
    %9872 = vmatprep.subr.mxu0 0.0
    %9873 = vmatpush1.msra.mxu0 0.0
    %9874 = vmatprep.subr.mxu0 0.0
    %9875 = vmatpush1.msra.mxu0 0.0
    %9876 = vmatprep.subr.mxu0 0.0
    %9877 = vmatpush1.msra.mxu0 0.0
    %9878 = vmatprep.subr.mxu0 0.0
    %9879 = vmatpush1.msra.mxu0 %v9846
    %9880 = vmatprep.subr.mxu0 0.0
    %9881 = vmatpush1.msra.mxu0 %v9845
    %9882 = vmatprep.subr.mxu0 0.0
    %9883 = vmatpush2.msra.mxu0 0.0
    %9884 = vmatprep.subr.mxu0 0.0
    %9885 = vmatpush2.msra.mxu0 0.0
    %9886 = vmatprep.subr.mxu0 0.0
    %9887 = vmatpush2.msra.mxu0 0.0
    %9888 = vmatprep.subr.mxu0 0.0
    %9889 = vmatpush2.msra.mxu0 0.0
    %9890 = vmatprep.subr.mxu0 0.0
    %9891 = vmatpush2.msra.mxu0 0.0
    %9892 = vmatprep.subr.mxu0 0.0
    %9893 = vmatpush2.msra.mxu0 0.0
    %9894 = vmatprep.subr.mxu0 0.0
    %9895 = vmatpush2.msra.mxu0 0.0
    %9896 = vmatprep.subr.mxu0 0.0
    %9897 = vmatpush2.msra.mxu0 0.0
    %9898 = vmatprep.subr.mxu0 0.0
    %9899 = vmatpush2.msra.mxu0 0.0
    %9900 = vmatprep.subr.mxu0 0.0
    %9901 = vmatpush2.msra.mxu0 0.0
    %9902 = vmatprep.subr.mxu0 0.0
    %9903 = vmatpush2.msra.mxu0 0.0
    %9904 = vmatprep.subr.mxu0 0.0
    %9905 = vmatpush2.msra.mxu0 0.0
    %9906 = vmatprep.subr.mxu0 0.0
    %9907 = vmatpush2.msra.mxu0 0.0
    %9908 = vmatprep.subr.mxu0 0.0
    %9909 = vmatpush2.msra.mxu0 0.0
    %9910 = vmatprep.subr.mxu0 0.0
    %9911 = vmatpush2.msra.mxu0 0.0
    %9912 = vmatprep.subr.mxu0 0.0
    %9913 = vmatpush2.msra.mxu0 0.0
    %9914 = vmatprep.mubr.f32.mxu0 0.0
    %9915 = vmatmul.mubr.f32.gmra.mxu0 %v9848
    %v9916 = vpop.f32.mrf.mxu0
    %v9917 = vadd.f32 0.0, %v9916
    %v9918 = vpop.f32.mrf.mxu0
    %9919 = vdwg.mxu0
    %v9920 = vadd.f32 %v9843, %v9917
    %v9921 = vmax.f32 %v9920, 0.0
    %v9922 = vld [vmem:[%s8] sm:$0xff]
    %v9923 = vld [vmem:[%s8 + $0x8] sm:$0xff]
    %v9924 = vld [vmem:[%s8 + $0x10] sm:$0xff]
    %v9925 = vld [vmem:[%s8 + $0x18] sm:$0xff]
    %v9926 = vld [vmem:[%s9] sm:$0x1]
    %v9928 = vlaneseq
    %v9929 = vshrl.u32 %v9928, 7
    %v9930 = vsub.s32 0, %v9929
    %v9931 = vrot.slane %v9926, %v9930
    %vm9933 = vcmask 261120
    %v9935 = vsel %vm9933, %v9921, 0
    %9937 = vmatprep.subr.mxu0 0.0
    %9938 = vmatpush1.msra.mxu0 0.0
    %9939 = vmatprep.subr.mxu0 0.0
    %9940 = vmatpush1.msra.mxu0 0.0
    %9941 = vmatprep.subr.mxu0 0.0
    %9942 = vmatpush1.msra.mxu0 0.0
    %9943 = vmatprep.subr.mxu0 0.0
    %9944 = vmatpush1.msra.mxu0 0.0
    %9945 = vmatprep.subr.mxu0 0.0
    %9946 = vmatpush1.msra.mxu0 0.0
    %9947 = vmatprep.subr.mxu0 0.0
    %9948 = vmatpush1.msra.mxu0 0.0
    %9949 = vmatprep.subr.mxu0 0.0
    %9950 = vmatpush1.msra.mxu0 0.0
    %9951 = vmatprep.subr.mxu0 0.0
    %9952 = vmatpush1.msra.mxu0 0.0
    %9953 = vmatprep.subr.mxu0 0.0
    %9954 = vmatpush1.msra.mxu0 0.0
    %9955 = vmatprep.subr.mxu0 0.0
    %9956 = vmatpush1.msra.mxu0 0.0
    %9957 = vmatprep.subr.mxu0 0.0
    %9958 = vmatpush1.msra.mxu0 0.0
    %9959 = vmatprep.subr.mxu0 0.0
    %9960 = vmatpush1.msra.mxu0 0.0
    %9961 = vmatprep.subr.mxu0 0.0
    %9962 = vmatpush1.msra.mxu0 %v9925
    %9963 = vmatprep.subr.mxu0 0.0
    %9964 = vmatpush1.msra.mxu0 %v9924
    %9965 = vmatprep.subr.mxu0 0.0
    %9966 = vmatpush1.msra.mxu0 %v9923
    %9967 = vmatprep.subr.mxu0 0.0
    %9968 = vmatpush1.msra.mxu0 %v9922
    %9969 = vmatprep.subr.mxu0 0.0
    %9970 = vmatpush2.msra.mxu0 0.0
    %9971 = vmatprep.subr.mxu0 0.0
    %9972 = vmatpush2.msra.mxu0 0.0
    %9973 = vmatprep.subr.mxu0 0.0
    %9974 = vmatpush2.msra.mxu0 0.0
    %9975 = vmatprep.subr.mxu0 0.0
    %9976 = vmatpush2.msra.mxu0 0.0
    %9977 = vmatprep.subr.mxu0 0.0
    %9978 = vmatpush2.msra.mxu0 0.0
    %9979 = vmatprep.subr.mxu0 0.0
    %9980 = vmatpush2.msra.mxu0 0.0
    %9981 = vmatprep.subr.mxu0 0.0
    %9982 = vmatpush2.msra.mxu0 0.0
    %9983 = vmatprep.subr.mxu0 0.0
    %9984 = vmatpush2.msra.mxu0 0.0
    %9985 = vmatprep.subr.mxu0 0.0
    %9986 = vmatpush2.msra.mxu0 0.0
    %9987 = vmatprep.subr.mxu0 0.0
    %9988 = vmatpush2.msra.mxu0 0.0
    %9989 = vmatprep.subr.mxu0 0.0
    %9990 = vmatpush2.msra.mxu0 0.0
    %9991 = vmatprep.subr.mxu0 0.0
    %9992 = vmatpush2.msra.mxu0 0.0
    %9993 = vmatprep.subr.mxu0 0.0
    %9994 = vmatpush2.msra.mxu0 0.0
    %9995 = vmatprep.subr.mxu0 0.0
    %9996 = vmatpush2.msra.mxu0 0.0
    %9997 = vmatprep.subr.mxu0 0.0
    %9998 = vmatpush2.msra.mxu0 0.0
    %9999 = vmatprep.subr.mxu0 0.0
    %10000 = vmatpush2.msra.mxu0 0.0
    %10001 = vmatprep.mubr.f32.mxu0 0.0
    %10002 = vmatmul.mubr.f32.gmra.mxu0 %v9935
    %v10003 = vpop.f32.mrf.mxu0
    %v10004 = vadd.f32 %v9931, %v10003
    %v10005 = vpop.f32.mrf.mxu0
    %10006 = vdwg.mxu0
    %vm10007 = vcmask 74752
    %10008 = vst.msk [vmem:[#allocation2] sm:$0x3] %vm10007, %v10004
    // Predicated region
    $region42: #{cnn_forward.1} parent=1 // pred_check
      _
    $region43: #{cnn_forward.1} parent=1 // pred_check_branch
      %10010 = sbr.rel (0) target = $region45
    $region44: #{cnn_forward.1} parent=1 // pred_region
      %s10012 = ssub.s32 32, 32
      %10013 = vsyncadd [#allocation3], %s10012
      %s10015 = sshll.u32 [#allocation2], 4
      %s10016 = int_to_ptr.vmem [resolvable:$true] %s10015
      %10018 = dma.vmem_to_hbm [thread:$0]  %s10016, 32, %s10, [#allocation3]
    $region45: #{cnn_forward.1} parent=1 // pred_fallthru
      _
    // Predicated region
    $region46: #{cnn_forward.1} parent=1 // pred_check
      _
    $region47: #{cnn_forward.1} parent=1 // pred_check_branch
      %10020 = sbr.rel (0) target = $region49
    $region48: #{cnn_forward.1} parent=1 // pred_region
      %10021 = dma.done [#allocation3], 32
    $region49: #{cnn_forward.1} parent=1 // pred_fallthru
      _
    %10022 = vsyncpa [#allocation3], 1

</llo_original>
